<compile_context>
chip_gen: v7x
topology: tpu7x:2x2x1
jax: 0.10.0
libtpu: 0.0.40
codegen_flags: <defaults>
</compile_context>

<pallas_src>
import functools

import jax
import jax.numpy as jnp
from jax import lax
from jax.experimental import pallas as pl
from jax.experimental.pallas import tpu as pltpu

HIDDEN = 128
OUT_PAD = 128   # Linear head output padded to a full lane register.
BPAD = 8        # batch padded to one full sublane group.


# ---------------------------------------------------------------------------
# Fused Pallas kernel: layer0 LSTM -> layer1 LSTM -> Linear head
# ---------------------------------------------------------------------------
def harlstm_kernel(x_ref, wih0_ref, whh0_ref, b0_ref,
                   wih1_ref, whh1_ref, b1_ref,
                   fcw_ref, fcb_ref,
                   out_ref, gx_scr, seq_scr):
    """Shapes (all VMEM-resident; Bp = BPAD = 8, H = 128):
      x_ref    : (T*Bp, C)   bf16  time-major input, flattened in the wrapper
      wih0_ref : (C, 4H)     bf16  layer-0 input->gates  (pre-transposed)
      whh0_ref : (H, 4H)     bf16  layer-0 hidden->gates (pre-transposed)
      b0_ref   : (1, 4H)     f32   layer-0 combined bias (b_ih + b_hh)
      wih1_ref : (H, 4H), whh1_ref : (H, 4H) bf16, b1_ref : (1, 4H) f32  layer 1
      fcw_ref  : (H, OUT_PAD) bf16  Linear weight, lane-padded
      fcb_ref  : (1, OUT_PAD) f32   Linear bias,   lane-padded
      out_ref  : (Bp, OUT_PAD) f32  padded logits
      gx_scr   : (T*Bp, 4H)  f32   pre-projected gates (reused per layer)
      seq_scr  : (T*Bp, H)   f32   layer-0 hidden sequence
    Gate column order is permuted at init to (i, f, o, g): one sigmoid over
    [:, :3H], one tanh over [:, 3H:].
    """
    TB, _ = x_ref.shape
    H = HIDDEN
    B = BPAD
    T = TB // B

    def make_step(whh_ref, write_seq):
        def step(t, carry):
            h, c = carry
            row = pl.multiple_of(t * B, B)
            # Whh read from its ref each step (bounded vreg pressure), bf16
            # operands with f32 accumulation on the MXU.
            gates = gx_scr[pl.ds(row, B), :] + jnp.dot(
                h.astype(jnp.bfloat16), whh_ref[...],
                preferred_element_type=jnp.float32)
            sig = jax.nn.sigmoid(gates[:, 0:3 * H])     # i | f | o in one call
            i = sig[:, 0:H]
            f = sig[:, H:2 * H]
            o = sig[:, 2 * H:3 * H]
            g = jnp.tanh(gates[:, 3 * H:4 * H])
            c_new = f * c + i * g
            h_new = o * jnp.tanh(c_new)
            if write_seq:
                seq_scr[pl.ds(row, B), :] = h_new       # full (8,128) tile
            return (h_new, c_new)
        return step

    zeros = jnp.zeros((B, H), jnp.float32)

    # ---- Layer 0: hoisted input projection (one matmul over all timesteps),
    #      result parked in VMEM scratch, then the recurrence.
    gx_scr[...] = jnp.dot(x_ref[...], wih0_ref[...],
                          preferred_element_type=jnp.float32) + b0_ref[...]
    _ = lax.fori_loop(0, T, make_step(whh0_ref, True), (zeros, zeros),
                      unroll=True)

    # ---- Layer 1: input projection straight off the layer-0 scratch sequence
    #      (no reshape needed: scratch is already (T*Bp, H)).
    gx_scr[...] = jnp.dot(seq_scr[...].astype(jnp.bfloat16), wih1_ref[...],
                          preferred_element_type=jnp.float32) + b1_ref[...]
    h_last, _ = lax.fori_loop(0, T, make_step(whh1_ref, False), (zeros, zeros),
                              unroll=True)

    # ---- Fused Linear head on h[-1] (lane-dense padded output).
    out_ref[...] = jnp.dot(h_last.astype(jnp.bfloat16), fcw_ref[...],
                           preferred_element_type=jnp.float32) + fcb_ref[...]


# ---------------------------------------------------------------------------
# Wrapper: one transpose + batch pad + flatten, then one pallas_call + slice
# ---------------------------------------------------------------------------
def _vmem_spec():
    return pl.BlockSpec(memory_space=pltpu.MemorySpace.VMEM)


@functools.partial(jax.jit, static_argnames=("num_classes",))
def har_lstm_forward(x, kparams, num_classes):
    B, C, T = x.shape
    # (B, C, T) -> time-major (T, B, C), zero-pad the batch to BPAD sublanes,
    # then flatten to 2-D (free XLA relayout done outside the kernel).
    x_tm = jnp.transpose(x, (2, 0, 1)).astype(jnp.float32)          # (T, B, C)
    x_pad = jnp.zeros((T, BPAD, C), jnp.float32).at[:, :B, :].set(x_tm)
    xf = x_pad.reshape(T * BPAD, C).astype(jnp.bfloat16)            # (T*Bp, C)

    p0, p1 = kparams["l0"], kparams["l1"]
    out_pad = pl.pallas_call(
        harlstm_kernel,
        out_shape=jax.ShapeDtypeStruct((BPAD, OUT_PAD), jnp.float32),
        in_specs=[_vmem_spec() for _ in range(9)],
        out_specs=_vmem_spec(),
        scratch_shapes=[
            pltpu.VMEM((T * BPAD, 4 * HIDDEN), jnp.float32),  # gx scratch
            pltpu.VMEM((T * BPAD, HIDDEN), jnp.float32),      # layer-0 seq
        ],
        compiler_params=pltpu.CompilerParams(
            vmem_limit_bytes=32 * 1024 * 1024),
    )(xf,
      p0["wih_t"], p0["whh_t"], p0["b"],
      p1["wih_t"], p1["whh_t"], p1["b"],
      kparams["fc_w_t_pad"], kparams["fc_b_pad"])

    return out_pad[:B, :num_classes]


# ---------------------------------------------------------------------------
# Pure-JAX reference (f32, PyTorch semantics, standard gate order)
# ---------------------------------------------------------------------------
def ref_forward(x, params, num_classes):
    H = HIDDEN
    layer_in = jnp.transpose(x, (2, 0, 1)).astype(jnp.float32)  # (T, B, C)
    B = layer_in.shape[1]
    h_last = None
    for layer in range(2):
        p = params[f"l{layer}"]
        wih_t, whh_t = p["wih"].T, p["whh"].T
        b = (p["bih"] + p["bhh"]).reshape(1, 4 * H)

        def step(carry, x_t, wih_t=wih_t, whh_t=whh_t, b=b):
            h, c = carry
            gates = x_t @ wih_t + h @ whh_t + b
            i = jax.nn.sigmoid(gates[:, :H])
            f = jax.nn.sigmoid(gates[:, H:2 * H])
            g = jnp.tanh(gates[:, 2 * H:3 * H])
            o = jax.nn.sigmoid(gates[:, 3 * H:])
            c = f * c + i * g
            h = o * jnp.tanh(c)
            return (h, c), h

        (h_last, _), seq = lax.scan(
            step,
            (jnp.zeros((B, H), jnp.float32), jnp.zeros((B, H), jnp.float32)),
            layer_in)
        layer_in = seq
    return h_last @ params["fc_w"].T + params["fc_b"]


# ---------------------------------------------------------------------------
# Deterministic parameter init (PyTorch-style uniform(-1/sqrt(H), 1/sqrt(H)))
# and kernel-ready parameter prep (transpose, gate permutation, bf16, padding)
# ---------------------------------------------------------------------------
def init_params(key, init_channels, num_classes):
    H = HIDDEN
    bound = 1.0 / float(jnp.sqrt(H))

    def u(k, shape, b):
        return jax.random.uniform(k, shape, jnp.float32, -b, b)

    params = {}
    for layer in range(2):
        in_size = init_channels if layer == 0 else H
        key, k1, k2, k3, k4 = jax.random.split(key, 5)
        params[f"l{layer}"] = {
            "wih": u(k1, (4 * H, in_size), bound),   # PyTorch weight_ih_l{k}
            "whh": u(k2, (4 * H, H), bound),         # PyTorch weight_hh_l{k}
            "bih": u(k3, (4 * H,), bound),
            "bhh": u(k4, (4 * H,), bound),
        }
    key, kw, kb = jax.random.split(key, 3)
    params["fc_w"] = u(kw, (num_classes, H), bound)  # Linear(128, num_classes)
    params["fc_b"] = u(kb, (num_classes,), bound)
    return params


def _gate_perm():
    H = HIDDEN
    # PyTorch gate order (i, f, g, o)  ->  kernel order (i, f, o, g).
    return jnp.concatenate([
        jnp.arange(0, 2 * H),            # i, f
        jnp.arange(3 * H, 4 * H),        # o
        jnp.arange(2 * H, 3 * H),        # g
    ])


def prepare_kernel_params(params, num_classes):
    H = HIDDEN
    perm = _gate_perm()
    kp = {}
    for layer in range(2):
        p = params[f"l{layer}"]
        kp[f"l{layer}"] = {
            "wih_t": p["wih"].T[:, perm].astype(jnp.bfloat16),   # (in, 4H)
            "whh_t": p["whh"].T[:, perm].astype(jnp.bfloat16),   # (H, 4H)
            "b": (p["bih"] + p["bhh"]).reshape(1, 4 * H)[:, perm],  # f32
        }
    fc_w_t_pad = jnp.zeros((H, OUT_PAD), jnp.float32).at[:, :num_classes].set(
        params["fc_w"].T)
    fc_b_pad = jnp.zeros((1, OUT_PAD), jnp.float32).at[:, :num_classes].set(
        params["fc_b"])
    kp["fc_w_t_pad"] = fc_w_t_pad.astype(jnp.bfloat16)
    kp["fc_b_pad"] = fc_b_pad
    return kp


# ---------------------------------------------------------------------------
if __name__ == "__main__":
    B, C, T = 2, 4, 16          # batch, init_channels, sequence length
    NUM_CLASSES = 6

    key = jax.random.PRNGKey(0)
    key, kx, kp = jax.random.split(key, 3)
    x = jax.random.normal(kx, (B, C, T), jnp.float32)   # (batch, channels, time)
    params = init_params(kp, C, NUM_CLASSES)
    kparams = prepare_kernel_params(params, NUM_CLASSES)

    logits = jax.block_until_ready(har_lstm_forward(x, kparams, NUM_CLASSES))
    ref = jax.block_until_ready(ref_forward(x, params, NUM_CLASSES))

    assert logits.shape == (B, NUM_CLASSES), logits.shape
    max_err = jnp.max(jnp.abs(logits - ref))
    # bf16 weights / matmul operands vs pure-f32 reference -> loosened tolerance.
    assert jnp.allclose(logits, ref, atol=5e-2, rtol=5e-2), (
        f"max abs err {max_err}"
    )
    print("KERNEL_OK")
</pallas_src>

<mosaic_0001>
module attributes {stable_mosaic.version = 11 : i64} {
  func.func @harlstm_kernel(%arg0: memref<128x4xbf16, #tpu.memory_space<vmem>>, %arg1: memref<4x512xbf16, #tpu.memory_space<vmem>>, %arg2: memref<128x512xbf16, #tpu.memory_space<vmem>>, %arg3: memref<1x512xf32, #tpu.memory_space<vmem>>, %arg4: memref<128x512xbf16, #tpu.memory_space<vmem>>, %arg5: memref<128x512xbf16, #tpu.memory_space<vmem>>, %arg6: memref<1x512xf32, #tpu.memory_space<vmem>>, %arg7: memref<128x128xbf16, #tpu.memory_space<vmem>>, %arg8: memref<1x128xf32, #tpu.memory_space<vmem>>, %arg9: memref<8x128xf32, #tpu.memory_space<vmem>>, %arg10: memref<128x512xf32, #tpu.memory_space<vmem>>, %arg11: memref<128x128xf32, #tpu.memory_space<vmem>>) attributes {dimension_semantics = [], scalar_prefetch = 0 : i64, scratch_operands = 2 : i64, tpu.core_type = #tpu.core_type<tc>} {
    %cst = arith.constant 0.000000e+00 : f32
    %0 = vector.broadcast %cst : f32 to vector<8x128xf32>
    %c0 = arith.constant 0 : index
    %c0_0 = arith.constant 0 : index
    %1 = vector.load %arg0[%c0, %c0_0] : memref<128x4xbf16, #tpu.memory_space<vmem>>, vector<128x4xbf16>
    %c0_1 = arith.constant 0 : index
    %c0_2 = arith.constant 0 : index
    %2 = vector.load %arg1[%c0_1, %c0_2] : memref<4x512xbf16, #tpu.memory_space<vmem>>, vector<4x512xbf16>
    %cst_3 = arith.constant dense<0.000000e+00> : vector<128x512xf32>
    %3 = tpu.matmul %1, %2, %cst_3 {dimension_numbers = #tpu.dot_dimension_numbers<[1], [0], [0], [1], [0, 0, 1, 1], [], []>} : vector<128x4xbf16>, vector<4x512xbf16>, vector<128x512xf32> -> vector<128x512xf32>
    %c0_4 = arith.constant 0 : index
    %c0_5 = arith.constant 0 : index
    %4 = vector.load %arg3[%c0_4, %c0_5] : memref<1x512xf32, #tpu.memory_space<vmem>>, vector<1x512xf32>
    %5 = vector.broadcast %4 : vector<1x512xf32> to vector<128x512xf32>
    %6 = arith.addf %3, %5 : vector<128x512xf32>
    %c0_6 = arith.constant 0 : index
    %c0_7 = arith.constant 0 : index
    %7 = vector.load %arg10[%c0_6, %c0_7] : memref<128x512xf32, #tpu.memory_space<vmem>>, vector<128x512xf32>
    tpu.vector_store %arg10[%c0_6, %c0_7], %6 {strides = array<i32>} : memref<128x512xf32, #tpu.memory_space<vmem>>, vector<128x512xf32>,
    %c0_i32 = arith.constant 0 : i32
    %c8_i32 = arith.constant 8 : i32
    %8 = arith.muli %c0_i32, %c8_i32 : i32
    %9 = tpu.assume_multiple %8, 8 : i32
    %10 = arith.index_cast %9 : i32 to index
    %c0_8 = arith.constant 0 : index
    %11 = vector.load %arg10[%10, %c0_8] : memref<128x512xf32, #tpu.memory_space<vmem>>, vector<8x512xf32>
    %12 = arith.truncf %0 : vector<8x128xf32> to vector<8x128xbf16>
    %c0_9 = arith.constant 0 : index
    %c0_10 = arith.constant 0 : index
    %13 = vector.load %arg2[%c0_9, %c0_10] : memref<128x512xbf16, #tpu.memory_space<vmem>>, vector<128x512xbf16>
    %cst_11 = arith.constant dense<0.000000e+00> : vector<8x512xf32>
    %14 = tpu.matmul %12, %13, %cst_11 {dimension_numbers = #tpu.dot_dimension_numbers<[1], [0], [0], [1], [0, 0, 1, 1], [], []>} : vector<8x128xbf16>, vector<128x512xbf16>, vector<8x512xf32> -> vector<8x512xf32>
    %15 = arith.addf %11, %14 : vector<8x512xf32>
    %16 = vector.extract_strided_slice %15 {offsets = [0, 0], sizes = [8, 384], strides = [1, 1]} : vector<8x512xf32> to vector<8x384xf32>
    %17 = arith.negf %16 : vector<8x384xf32>
    %18 = math.exp %17 : vector<8x384xf32>
    %cst_12 = arith.constant 1.000000e+00 : f32
    %19 = vector.broadcast %cst_12 : f32 to vector<8x384xf32>
    %20 = arith.addf %19, %18 : vector<8x384xf32>
    %21 = arith.divf %19, %20 : vector<8x384xf32>
    %22 = vector.extract_strided_slice %21 {offsets = [0, 0], sizes = [8, 128], strides = [1, 1]} : vector<8x384xf32> to vector<8x128xf32>
    %23 = vector.extract_strided_slice %21 {offsets = [0, 128], sizes = [8, 128], strides = [1, 1]} : vector<8x384xf32> to vector<8x128xf32>
    %24 = vector.extract_strided_slice %21 {offsets = [0, 256], sizes = [8, 128], strides = [1, 1]} : vector<8x384xf32> to vector<8x128xf32>
    %25 = vector.extract_strided_slice %15 {offsets = [0, 384], sizes = [8, 128], strides = [1, 1]} : vector<8x512xf32> to vector<8x128xf32>
    %26 = math.tanh %25 : vector<8x128xf32>
    %27 = arith.mulf %23, %0 : vector<8x128xf32>
    %28 = arith.mulf %22, %26 : vector<8x128xf32>
    %29 = arith.addf %27, %28 : vector<8x128xf32>
    %30 = math.tanh %29 : vector<8x128xf32>
    %31 = arith.mulf %24, %30 : vector<8x128xf32>
    %32 = arith.index_cast %9 : i32 to index
    %c0_13 = arith.constant 0 : index
    %33 = vector.load %arg11[%32, %c0_13] : memref<128x128xf32, #tpu.memory_space<vmem>>, vector<8x128xf32>
    tpu.vector_store %arg11[%32, %c0_13], %31 {strides = array<i32>} : memref<128x128xf32, #tpu.memory_space<vmem>>, vector<8x128xf32>,
    %c1_i32 = arith.constant 1 : i32
    %c8_i32_14 = arith.constant 8 : i32
    %34 = arith.muli %c1_i32, %c8_i32_14 : i32
    %35 = tpu.assume_multiple %34, 8 : i32
    %36 = arith.index_cast %35 : i32 to index
    %c0_15 = arith.constant 0 : index
    %37 = vector.load %arg10[%36, %c0_15] : memref<128x512xf32, #tpu.memory_space<vmem>>, vector<8x512xf32>
    %38 = arith.truncf %31 : vector<8x128xf32> to vector<8x128xbf16>
    %c0_16 = arith.constant 0 : index
    %c0_17 = arith.constant 0 : index
    %39 = vector.load %arg2[%c0_16, %c0_17] : memref<128x512xbf16, #tpu.memory_space<vmem>>, vector<128x512xbf16>
    %cst_18 = arith.constant dense<0.000000e+00> : vector<8x512xf32>
    %40 = tpu.matmul %38, %39, %cst_18 {dimension_numbers = #tpu.dot_dimension_numbers<[1], [0], [0], [1], [0, 0, 1, 1], [], []>} : vector<8x128xbf16>, vector<128x512xbf16>, vector<8x512xf32> -> vector<8x512xf32>
    %41 = arith.addf %37, %40 : vector<8x512xf32>
    %42 = vector.extract_strided_slice %41 {offsets = [0, 0], sizes = [8, 384], strides = [1, 1]} : vector<8x512xf32> to vector<8x384xf32>
    %43 = arith.negf %42 : vector<8x384xf32>
    %44 = math.exp %43 : vector<8x384xf32>
    %cst_19 = arith.constant 1.000000e+00 : f32
    %45 = vector.broadcast %cst_19 : f32 to vector<8x384xf32>
    %46 = arith.addf %45, %44 : vector<8x384xf32>
    %47 = arith.divf %45, %46 : vector<8x384xf32>
    %48 = vector.extract_strided_slice %47 {offsets = [0, 0], sizes = [8, 128], strides = [1, 1]} : vector<8x384xf32> to vector<8x128xf32>
    %49 = vector.extract_strided_slice %47 {offsets = [0, 128], sizes = [8, 128], strides = [1, 1]} : vector<8x384xf32> to vector<8x128xf32>
    %50 = vector.extract_strided_slice %47 {offsets = [0, 256], sizes = [8, 128], strides = [1, 1]} : vector<8x384xf32> to vector<8x128xf32>
    %51 = vector.extract_strided_slice %41 {offsets = [0, 384], sizes = [8, 128], strides = [1, 1]} : vector<8x512xf32> to vector<8x128xf32>
    %52 = math.tanh %51 : vector<8x128xf32>
    %53 = arith.mulf %49, %29 : vector<8x128xf32>
    %54 = arith.mulf %48, %52 : vector<8x128xf32>
    %55 = arith.addf %53, %54 : vector<8x128xf32>
    %56 = math.tanh %55 : vector<8x128xf32>
    %57 = arith.mulf %50, %56 : vector<8x128xf32>
    %58 = arith.index_cast %35 : i32 to index
    %c0_20 = arith.constant 0 : index
    %59 = vector.load %arg11[%58, %c0_20] : memref<128x128xf32, #tpu.memory_space<vmem>>, vector<8x128xf32>
    tpu.vector_store %arg11[%58, %c0_20], %57 {strides = array<i32>} : memref<128x128xf32, #tpu.memory_space<vmem>>, vector<8x128xf32>,
    %c2_i32 = arith.constant 2 : i32
    %c8_i32_21 = arith.constant 8 : i32
    %60 = arith.muli %c2_i32, %c8_i32_21 : i32
    %61 = tpu.assume_multiple %60, 8 : i32
    %62 = arith.index_cast %61 : i32 to index
    %c0_22 = arith.constant 0 : index
    %63 = vector.load %arg10[%62, %c0_22] : memref<128x512xf32, #tpu.memory_space<vmem>>, vector<8x512xf32>
    %64 = arith.truncf %57 : vector<8x128xf32> to vector<8x128xbf16>
    %c0_23 = arith.constant 0 : index
    %c0_24 = arith.constant 0 : index
    %65 = vector.load %arg2[%c0_23, %c0_24] : memref<128x512xbf16, #tpu.memory_space<vmem>>, vector<128x512xbf16>
    %cst_25 = arith.constant dense<0.000000e+00> : vector<8x512xf32>
    %66 = tpu.matmul %64, %65, %cst_25 {dimension_numbers = #tpu.dot_dimension_numbers<[1], [0], [0], [1], [0, 0, 1, 1], [], []>} : vector<8x128xbf16>, vector<128x512xbf16>, vector<8x512xf32> -> vector<8x512xf32>
    %67 = arith.addf %63, %66 : vector<8x512xf32>
    %68 = vector.extract_strided_slice %67 {offsets = [0, 0], sizes = [8, 384], strides = [1, 1]} : vector<8x512xf32> to vector<8x384xf32>
    %69 = arith.negf %68 : vector<8x384xf32>
    %70 = math.exp %69 : vector<8x384xf32>
    %cst_26 = arith.constant 1.000000e+00 : f32
    %71 = vector.broadcast %cst_26 : f32 to vector<8x384xf32>
    %72 = arith.addf %71, %70 : vector<8x384xf32>
    %73 = arith.divf %71, %72 : vector<8x384xf32>
    %74 = vector.extract_strided_slice %73 {offsets = [0, 0], sizes = [8, 128], strides = [1, 1]} : vector<8x384xf32> to vector<8x128xf32>
    %75 = vector.extract_strided_slice %73 {offsets = [0, 128], sizes = [8, 128], strides = [1, 1]} : vector<8x384xf32> to vector<8x128xf32>
    %76 = vector.extract_strided_slice %73 {offsets = [0, 256], sizes = [8, 128], strides = [1, 1]} : vector<8x384xf32> to vector<8x128xf32>
    %77 = vector.extract_strided_slice %67 {offsets = [0, 384], sizes = [8, 128], strides = [1, 1]} : vector<8x512xf32> to vector<8x128xf32>
    %78 = math.tanh %77 : vector<8x128xf32>
    %79 = arith.mulf %75, %55 : vector<8x128xf32>
    %80 = arith.mulf %74, %78 : vector<8x128xf32>
    %81 = arith.addf %79, %80 : vector<8x128xf32>
    %82 = math.tanh %81 : vector<8x128xf32>
    %83 = arith.mulf %76, %82 : vector<8x128xf32>
    %84 = arith.index_cast %61 : i32 to index
    %c0_27 = arith.constant 0 : index
    %85 = vector.load %arg11[%84, %c0_27] : memref<128x128xf32, #tpu.memory_space<vmem>>, vector<8x128xf32>
    tpu.vector_store %arg11[%84, %c0_27], %83 {strides = array<i32>} : memref<128x128xf32, #tpu.memory_space<vmem>>, vector<8x128xf32>,
    %c3_i32 = arith.constant 3 : i32
    %c8_i32_28 = arith.constant 8 : i32
    %86 = arith.muli %c3_i32, %c8_i32_28 : i32
    %87 = tpu.assume_multiple %86, 8 : i32
    %88 = arith.index_cast %87 : i32 to index
    %c0_29 = arith.constant 0 : index
    %89 = vector.load %arg10[%88, %c0_29] : memref<128x512xf32, #tpu.memory_space<vmem>>, vector<8x512xf32>
    %90 = arith.truncf %83 : vector<8x128xf32> to vector<8x128xbf16>
    %c0_30 = arith.constant 0 : index
    %c0_31 = arith.constant 0 : index
    %91 = vector.load %arg2[%c0_30, %c0_31] : memref<128x512xbf16, #tpu.memory_space<vmem>>, vector<128x512xbf16>
    %cst_32 = arith.constant dense<0.000000e+00> : vector<8x512xf32>
    %92 = tpu.matmul %90, %91, %cst_32 {dimension_numbers = #tpu.dot_dimension_numbers<[1], [0], [0], [1], [0, 0, 1, 1], [], []>} : vector<8x128xbf16>, vector<128x512xbf16>, vector<8x512xf32> -> vector<8x512xf32>
    %93 = arith.addf %89, %92 : vector<8x512xf32>
    %94 = vector.extract_strided_slice %93 {offsets = [0, 0], sizes = [8, 384], strides = [1, 1]} : vector<8x512xf32> to vector<8x384xf32>
    %95 = arith.negf %94 : vector<8x384xf32>
    %96 = math.exp %95 : vector<8x384xf32>
    %cst_33 = arith.constant 1.000000e+00 : f32
    %97 = vector.broadcast %cst_33 : f32 to vector<8x384xf32>
    %98 = arith.addf %97, %96 : vector<8x384xf32>
    %99 = arith.divf %97, %98 : vector<8x384xf32>
    %100 = vector.extract_strided_slice %99 {offsets = [0, 0], sizes = [8, 128], strides = [1, 1]} : vector<8x384xf32> to vector<8x128xf32>
    %101 = vector.extract_strided_slice %99 {offsets = [0, 128], sizes = [8, 128], strides = [1, 1]} : vector<8x384xf32> to vector<8x128xf32>
    %102 = vector.extract_strided_slice %99 {offsets = [0, 256], sizes = [8, 128], strides = [1, 1]} : vector<8x384xf32> to vector<8x128xf32>
    %103 = vector.extract_strided_slice %93 {offsets = [0, 384], sizes = [8, 128], strides = [1, 1]} : vector<8x512xf32> to vector<8x128xf32>
    %104 = math.tanh %103 : vector<8x128xf32>
    %105 = arith.mulf %101, %81 : vector<8x128xf32>
    %106 = arith.mulf %100, %104 : vector<8x128xf32>
    %107 = arith.addf %105, %106 : vector<8x128xf32>
    %108 = math.tanh %107 : vector<8x128xf32>
    %109 = arith.mulf %102, %108 : vector<8x128xf32>
    %110 = arith.index_cast %87 : i32 to index
    %c0_34 = arith.constant 0 : index
    %111 = vector.load %arg11[%110, %c0_34] : memref<128x128xf32, #tpu.memory_space<vmem>>, vector<8x128xf32>
    tpu.vector_store %arg11[%110, %c0_34], %109 {strides = array<i32>} : memref<128x128xf32, #tpu.memory_space<vmem>>, vector<8x128xf32>,
    %c4_i32 = arith.constant 4 : i32
    %c8_i32_35 = arith.constant 8 : i32
    %112 = arith.muli %c4_i32, %c8_i32_35 : i32
    %113 = tpu.assume_multiple %112, 8 : i32
    %114 = arith.index_cast %113 : i32 to index
    %c0_36 = arith.constant 0 : index
    %115 = vector.load %arg10[%114, %c0_36] : memref<128x512xf32, #tpu.memory_space<vmem>>, vector<8x512xf32>
    %116 = arith.truncf %109 : vector<8x128xf32> to vector<8x128xbf16>
    %c0_37 = arith.constant 0 : index
    %c0_38 = arith.constant 0 : index
    %117 = vector.load %arg2[%c0_37, %c0_38] : memref<128x512xbf16, #tpu.memory_space<vmem>>, vector<128x512xbf16>
    %cst_39 = arith.constant dense<0.000000e+00> : vector<8x512xf32>
    %118 = tpu.matmul %116, %117, %cst_39 {dimension_numbers = #tpu.dot_dimension_numbers<[1], [0], [0], [1], [0, 0, 1, 1], [], []>} : vector<8x128xbf16>, vector<128x512xbf16>, vector<8x512xf32> -> vector<8x512xf32>
    %119 = arith.addf %115, %118 : vector<8x512xf32>
    %120 = vector.extract_strided_slice %119 {offsets = [0, 0], sizes = [8, 384], strides = [1, 1]} : vector<8x512xf32> to vector<8x384xf32>
    %121 = arith.negf %120 : vector<8x384xf32>
    %122 = math.exp %121 : vector<8x384xf32>
    %cst_40 = arith.constant 1.000000e+00 : f32
    %123 = vector.broadcast %cst_40 : f32 to vector<8x384xf32>
    %124 = arith.addf %123, %122 : vector<8x384xf32>
    %125 = arith.divf %123, %124 : vector<8x384xf32>
    %126 = vector.extract_strided_slice %125 {offsets = [0, 0], sizes = [8, 128], strides = [1, 1]} : vector<8x384xf32> to vector<8x128xf32>
    %127 = vector.extract_strided_slice %125 {offsets = [0, 128], sizes = [8, 128], strides = [1, 1]} : vector<8x384xf32> to vector<8x128xf32>
    %128 = vector.extract_strided_slice %125 {offsets = [0, 256], sizes = [8, 128], strides = [1, 1]} : vector<8x384xf32> to vector<8x128xf32>
    %129 = vector.extract_strided_slice %119 {offsets = [0, 384], sizes = [8, 128], strides = [1, 1]} : vector<8x512xf32> to vector<8x128xf32>
    %130 = math.tanh %129 : vector<8x128xf32>
    %131 = arith.mulf %127, %107 : vector<8x128xf32>
    %132 = arith.mulf %126, %130 : vector<8x128xf32>
    %133 = arith.addf %131, %132 : vector<8x128xf32>
    %134 = math.tanh %133 : vector<8x128xf32>
    %135 = arith.mulf %128, %134 : vector<8x128xf32>
    %136 = arith.index_cast %113 : i32 to index
    %c0_41 = arith.constant 0 : index
    %137 = vector.load %arg11[%136, %c0_41] : memref<128x128xf32, #tpu.memory_space<vmem>>, vector<8x128xf32>
    tpu.vector_store %arg11[%136, %c0_41], %135 {strides = array<i32>} : memref<128x128xf32, #tpu.memory_space<vmem>>, vector<8x128xf32>,
    %c5_i32 = arith.constant 5 : i32
    %c8_i32_42 = arith.constant 8 : i32
    %138 = arith.muli %c5_i32, %c8_i32_42 : i32
    %139 = tpu.assume_multiple %138, 8 : i32
    %140 = arith.index_cast %139 : i32 to index
    %c0_43 = arith.constant 0 : index
    %141 = vector.load %arg10[%140, %c0_43] : memref<128x512xf32, #tpu.memory_space<vmem>>, vector<8x512xf32>
    %142 = arith.truncf %135 : vector<8x128xf32> to vector<8x128xbf16>
    %c0_44 = arith.constant 0 : index
    %c0_45 = arith.constant 0 : index
    %143 = vector.load %arg2[%c0_44, %c0_45] : memref<128x512xbf16, #tpu.memory_space<vmem>>, vector<128x512xbf16>
    %cst_46 = arith.constant dense<0.000000e+00> : vector<8x512xf32>
    %144 = tpu.matmul %142, %143, %cst_46 {dimension_numbers = #tpu.dot_dimension_numbers<[1], [0], [0], [1], [0, 0, 1, 1], [], []>} : vector<8x128xbf16>, vector<128x512xbf16>, vector<8x512xf32> -> vector<8x512xf32>
    %145 = arith.addf %141, %144 : vector<8x512xf32>
    %146 = vector.extract_strided_slice %145 {offsets = [0, 0], sizes = [8, 384], strides = [1, 1]} : vector<8x512xf32> to vector<8x384xf32>
    %147 = arith.negf %146 : vector<8x384xf32>
    %148 = math.exp %147 : vector<8x384xf32>
    %cst_47 = arith.constant 1.000000e+00 : f32
    %149 = vector.broadcast %cst_47 : f32 to vector<8x384xf32>
    %150 = arith.addf %149, %148 : vector<8x384xf32>
    %151 = arith.divf %149, %150 : vector<8x384xf32>
    %152 = vector.extract_strided_slice %151 {offsets = [0, 0], sizes = [8, 128], strides = [1, 1]} : vector<8x384xf32> to vector<8x128xf32>
    %153 = vector.extract_strided_slice %151 {offsets = [0, 128], sizes = [8, 128], strides = [1, 1]} : vector<8x384xf32> to vector<8x128xf32>
    %154 = vector.extract_strided_slice %151 {offsets = [0, 256], sizes = [8, 128], strides = [1, 1]} : vector<8x384xf32> to vector<8x128xf32>
    %155 = vector.extract_strided_slice %145 {offsets = [0, 384], sizes = [8, 128], strides = [1, 1]} : vector<8x512xf32> to vector<8x128xf32>
    %156 = math.tanh %155 : vector<8x128xf32>
    %157 = arith.mulf %153, %133 : vector<8x128xf32>
    %158 = arith.mulf %152, %156 : vector<8x128xf32>
    %159 = arith.addf %157, %158 : vector<8x128xf32>
    %160 = math.tanh %159 : vector<8x128xf32>
    %161 = arith.mulf %154, %160 : vector<8x128xf32>
    %162 = arith.index_cast %139 : i32 to index
    %c0_48 = arith.constant 0 : index
    %163 = vector.load %arg11[%162, %c0_48] : memref<128x128xf32, #tpu.memory_space<vmem>>, vector<8x128xf32>
    tpu.vector_store %arg11[%162, %c0_48], %161 {strides = array<i32>} : memref<128x128xf32, #tpu.memory_space<vmem>>, vector<8x128xf32>,
    %c6_i32 = arith.constant 6 : i32
    %c8_i32_49 = arith.constant 8 : i32
    %164 = arith.muli %c6_i32, %c8_i32_49 : i32
    %165 = tpu.assume_multiple %164, 8 : i32
    %166 = arith.index_cast %165 : i32 to index
    %c0_50 = arith.constant 0 : index
    %167 = vector.load %arg10[%166, %c0_50] : memref<128x512xf32, #tpu.memory_space<vmem>>, vector<8x512xf32>
    %168 = arith.truncf %161 : vector<8x128xf32> to vector<8x128xbf16>
    %c0_51 = arith.constant 0 : index
    %c0_52 = arith.constant 0 : index
    %169 = vector.load %arg2[%c0_51, %c0_52] : memref<128x512xbf16, #tpu.memory_space<vmem>>, vector<128x512xbf16>
    %cst_53 = arith.constant dense<0.000000e+00> : vector<8x512xf32>
    %170 = tpu.matmul %168, %169, %cst_53 {dimension_numbers = #tpu.dot_dimension_numbers<[1], [0], [0], [1], [0, 0, 1, 1], [], []>} : vector<8x128xbf16>, vector<128x512xbf16>, vector<8x512xf32> -> vector<8x512xf32>
    %171 = arith.addf %167, %170 : vector<8x512xf32>
    %172 = vector.extract_strided_slice %171 {offsets = [0, 0], sizes = [8, 384], strides = [1, 1]} : vector<8x512xf32> to vector<8x384xf32>
    %173 = arith.negf %172 : vector<8x384xf32>
    %174 = math.exp %173 : vector<8x384xf32>
    %cst_54 = arith.constant 1.000000e+00 : f32
    %175 = vector.broadcast %cst_54 : f32 to vector<8x384xf32>
    %176 = arith.addf %175, %174 : vector<8x384xf32>
    %177 = arith.divf %175, %176 : vector<8x384xf32>
    %178 = vector.extract_strided_slice %177 {offsets = [0, 0], sizes = [8, 128], strides = [1, 1]} : vector<8x384xf32> to vector<8x128xf32>
    %179 = vector.extract_strided_slice %177 {offsets = [0, 128], sizes = [8, 128], strides = [1, 1]} : vector<8x384xf32> to vector<8x128xf32>
    %180 = vector.extract_strided_slice %177 {offsets = [0, 256], sizes = [8, 128], strides = [1, 1]} : vector<8x384xf32> to vector<8x128xf32>
    %181 = vector.extract_strided_slice %171 {offsets = [0, 384], sizes = [8, 128], strides = [1, 1]} : vector<8x512xf32> to vector<8x128xf32>
    %182 = math.tanh %181 : vector<8x128xf32>
    %183 = arith.mulf %179, %159 : vector<8x128xf32>
    %184 = arith.mulf %178, %182 : vector<8x128xf32>
    %185 = arith.addf %183, %184 : vector<8x128xf32>
    %186 = math.tanh %185 : vector<8x128xf32>
    %187 = arith.mulf %180, %186 : vector<8x128xf32>
    %188 = arith.index_cast %165 : i32 to index
    %c0_55 = arith.constant 0 : index
    %189 = vector.load %arg11[%188, %c0_55] : memref<128x128xf32, #tpu.memory_space<vmem>>, vector<8x128xf32>
    tpu.vector_store %arg11[%188, %c0_55], %187 {strides = array<i32>} : memref<128x128xf32, #tpu.memory_space<vmem>>, vector<8x128xf32>,
    %c7_i32 = arith.constant 7 : i32
    %c8_i32_56 = arith.constant 8 : i32
    %190 = arith.muli %c7_i32, %c8_i32_56 : i32
    %191 = tpu.assume_multiple %190, 8 : i32
    %192 = arith.index_cast %191 : i32 to index
    %c0_57 = arith.constant 0 : index
    %193 = vector.load %arg10[%192, %c0_57] : memref<128x512xf32, #tpu.memory_space<vmem>>, vector<8x512xf32>
    %194 = arith.truncf %187 : vector<8x128xf32> to vector<8x128xbf16>
    %c0_58 = arith.constant 0 : index
    %c0_59 = arith.constant 0 : index
    %195 = vector.load %arg2[%c0_58, %c0_59] : memref<128x512xbf16, #tpu.memory_space<vmem>>, vector<128x512xbf16>
    %cst_60 = arith.constant dense<0.000000e+00> : vector<8x512xf32>
    %196 = tpu.matmul %194, %195, %cst_60 {dimension_numbers = #tpu.dot_dimension_numbers<[1], [0], [0], [1], [0, 0, 1, 1], [], []>} : vector<8x128xbf16>, vector<128x512xbf16>, vector<8x512xf32> -> vector<8x512xf32>
    %197 = arith.addf %193, %196 : vector<8x512xf32>
    %198 = vector.extract_strided_slice %197 {offsets = [0, 0], sizes = [8, 384], strides = [1, 1]} : vector<8x512xf32> to vector<8x384xf32>
    %199 = arith.negf %198 : vector<8x384xf32>
    %200 = math.exp %199 : vector<8x384xf32>
    %cst_61 = arith.constant 1.000000e+00 : f32
    %201 = vector.broadcast %cst_61 : f32 to vector<8x384xf32>
    %202 = arith.addf %201, %200 : vector<8x384xf32>
    %203 = arith.divf %201, %202 : vector<8x384xf32>
    %204 = vector.extract_strided_slice %203 {offsets = [0, 0], sizes = [8, 128], strides = [1, 1]} : vector<8x384xf32> to vector<8x128xf32>
    %205 = vector.extract_strided_slice %203 {offsets = [0, 128], sizes = [8, 128], strides = [1, 1]} : vector<8x384xf32> to vector<8x128xf32>
    %206 = vector.extract_strided_slice %203 {offsets = [0, 256], sizes = [8, 128], strides = [1, 1]} : vector<8x384xf32> to vector<8x128xf32>
    %207 = vector.extract_strided_slice %197 {offsets = [0, 384], sizes = [8, 128], strides = [1, 1]} : vector<8x512xf32> to vector<8x128xf32>
    %208 = math.tanh %207 : vector<8x128xf32>
    %209 = arith.mulf %205, %185 : vector<8x128xf32>
    %210 = arith.mulf %204, %208 : vector<8x128xf32>
    %211 = arith.addf %209, %210 : vector<8x128xf32>
    %212 = math.tanh %211 : vector<8x128xf32>
    %213 = arith.mulf %206, %212 : vector<8x128xf32>
    %214 = arith.index_cast %191 : i32 to index
    %c0_62 = arith.constant 0 : index
    %215 = vector.load %arg11[%214, %c0_62] : memref<128x128xf32, #tpu.memory_space<vmem>>, vector<8x128xf32>
    tpu.vector_store %arg11[%214, %c0_62], %213 {strides = array<i32>} : memref<128x128xf32, #tpu.memory_space<vmem>>, vector<8x128xf32>,
    %c8_i32_63 = arith.constant 8 : i32
    %c8_i32_64 = arith.constant 8 : i32
    %216 = arith.muli %c8_i32_63, %c8_i32_64 : i32
    %217 = tpu.assume_multiple %216, 8 : i32
    %218 = arith.index_cast %217 : i32 to index
    %c0_65 = arith.constant 0 : index
    %219 = vector.load %arg10[%218, %c0_65] : memref<128x512xf32, #tpu.memory_space<vmem>>, vector<8x512xf32>
    %220 = arith.truncf %213 : vector<8x128xf32> to vector<8x128xbf16>
    %c0_66 = arith.constant 0 : index
    %c0_67 = arith.constant 0 : index
    %221 = vector.load %arg2[%c0_66, %c0_67] : memref<128x512xbf16, #tpu.memory_space<vmem>>, vector<128x512xbf16>
    %cst_68 = arith.constant dense<0.000000e+00> : vector<8x512xf32>
    %222 = tpu.matmul %220, %221, %cst_68 {dimension_numbers = #tpu.dot_dimension_numbers<[1], [0], [0], [1], [0, 0, 1, 1], [], []>} : vector<8x128xbf16>, vector<128x512xbf16>, vector<8x512xf32> -> vector<8x512xf32>
    %223 = arith.addf %219, %222 : vector<8x512xf32>
    %224 = vector.extract_strided_slice %223 {offsets = [0, 0], sizes = [8, 384], strides = [1, 1]} : vector<8x512xf32> to vector<8x384xf32>
    %225 = arith.negf %224 : vector<8x384xf32>
    %226 = math.exp %225 : vector<8x384xf32>
    %cst_69 = arith.constant 1.000000e+00 : f32
    %227 = vector.broadcast %cst_69 : f32 to vector<8x384xf32>
    %228 = arith.addf %227, %226 : vector<8x384xf32>
    %229 = arith.divf %227, %228 : vector<8x384xf32>
    %230 = vector.extract_strided_slice %229 {offsets = [0, 0], sizes = [8, 128], strides = [1, 1]} : vector<8x384xf32> to vector<8x128xf32>
    %231 = vector.extract_strided_slice %229 {offsets = [0, 128], sizes = [8, 128], strides = [1, 1]} : vector<8x384xf32> to vector<8x128xf32>
    %232 = vector.extract_strided_slice %229 {offsets = [0, 256], sizes = [8, 128], strides = [1, 1]} : vector<8x384xf32> to vector<8x128xf32>
    %233 = vector.extract_strided_slice %223 {offsets = [0, 384], sizes = [8, 128], strides = [1, 1]} : vector<8x512xf32> to vector<8x128xf32>
    %234 = math.tanh %233 : vector<8x128xf32>
    %235 = arith.mulf %231, %211 : vector<8x128xf32>
    %236 = arith.mulf %230, %234 : vector<8x128xf32>
    %237 = arith.addf %235, %236 : vector<8x128xf32>
    %238 = math.tanh %237 : vector<8x128xf32>
    %239 = arith.mulf %232, %238 : vector<8x128xf32>
    %240 = arith.index_cast %217 : i32 to index
    %c0_70 = arith.constant 0 : index
    %241 = vector.load %arg11[%240, %c0_70] : memref<128x128xf32, #tpu.memory_space<vmem>>, vector<8x128xf32>
    tpu.vector_store %arg11[%240, %c0_70], %239 {strides = array<i32>} : memref<128x128xf32, #tpu.memory_space<vmem>>, vector<8x128xf32>,
    %c9_i32 = arith.constant 9 : i32
    %c8_i32_71 = arith.constant 8 : i32
    %242 = arith.muli %c9_i32, %c8_i32_71 : i32
    %243 = tpu.assume_multiple %242, 8 : i32
    %244 = arith.index_cast %243 : i32 to index
    %c0_72 = arith.constant 0 : index
    %245 = vector.load %arg10[%244, %c0_72] : memref<128x512xf32, #tpu.memory_space<vmem>>, vector<8x512xf32>
    %246 = arith.truncf %239 : vector<8x128xf32> to vector<8x128xbf16>
    %c0_73 = arith.constant 0 : index
    %c0_74 = arith.constant 0 : index
    %247 = vector.load %arg2[%c0_73, %c0_74] : memref<128x512xbf16, #tpu.memory_space<vmem>>, vector<128x512xbf16>
    %cst_75 = arith.constant dense<0.000000e+00> : vector<8x512xf32>
    %248 = tpu.matmul %246, %247, %cst_75 {dimension_numbers = #tpu.dot_dimension_numbers<[1], [0], [0], [1], [0, 0, 1, 1], [], []>} : vector<8x128xbf16>, vector<128x512xbf16>, vector<8x512xf32> -> vector<8x512xf32>
    %249 = arith.addf %245, %248 : vector<8x512xf32>
    %250 = vector.extract_strided_slice %249 {offsets = [0, 0], sizes = [8, 384], strides = [1, 1]} : vector<8x512xf32> to vector<8x384xf32>
    %251 = arith.negf %250 : vector<8x384xf32>
    %252 = math.exp %251 : vector<8x384xf32>
    %cst_76 = arith.constant 1.000000e+00 : f32
    %253 = vector.broadcast %cst_76 : f32 to vector<8x384xf32>
    %254 = arith.addf %253, %252 : vector<8x384xf32>
    %255 = arith.divf %253, %254 : vector<8x384xf32>
    %256 = vector.extract_strided_slice %255 {offsets = [0, 0], sizes = [8, 128], strides = [1, 1]} : vector<8x384xf32> to vector<8x128xf32>
    %257 = vector.extract_strided_slice %255 {offsets = [0, 128], sizes = [8, 128], strides = [1, 1]} : vector<8x384xf32> to vector<8x128xf32>
    %258 = vector.extract_strided_slice %255 {offsets = [0, 256], sizes = [8, 128], strides = [1, 1]} : vector<8x384xf32> to vector<8x128xf32>
    %259 = vector.extract_strided_slice %249 {offsets = [0, 384], sizes = [8, 128], strides = [1, 1]} : vector<8x512xf32> to vector<8x128xf32>
    %260 = math.tanh %259 : vector<8x128xf32>
    %261 = arith.mulf %257, %237 : vector<8x128xf32>
    %262 = arith.mulf %256, %260 : vector<8x128xf32>
    %263 = arith.addf %261, %262 : vector<8x128xf32>
    %264 = math.tanh %263 : vector<8x128xf32>
    %265 = arith.mulf %258, %264 : vector<8x128xf32>
    %266 = arith.index_cast %243 : i32 to index
    %c0_77 = arith.constant 0 : index
    %267 = vector.load %arg11[%266, %c0_77] : memref<128x128xf32, #tpu.memory_space<vmem>>, vector<8x128xf32>
    tpu.vector_store %arg11[%266, %c0_77], %265 {strides = array<i32>} : memref<128x128xf32, #tpu.memory_space<vmem>>, vector<8x128xf32>,
    %c10_i32 = arith.constant 10 : i32
    %c8_i32_78 = arith.constant 8 : i32
    %268 = arith.muli %c10_i32, %c8_i32_78 : i32
    %269 = tpu.assume_multiple %268, 8 : i32
    %270 = arith.index_cast %269 : i32 to index
    %c0_79 = arith.constant 0 : index
    %271 = vector.load %arg10[%270, %c0_79] : memref<128x512xf32, #tpu.memory_space<vmem>>, vector<8x512xf32>
    %272 = arith.truncf %265 : vector<8x128xf32> to vector<8x128xbf16>
    %c0_80 = arith.constant 0 : index
    %c0_81 = arith.constant 0 : index
    %273 = vector.load %arg2[%c0_80, %c0_81] : memref<128x512xbf16, #tpu.memory_space<vmem>>, vector<128x512xbf16>
    %cst_82 = arith.constant dense<0.000000e+00> : vector<8x512xf32>
    %274 = tpu.matmul %272, %273, %cst_82 {dimension_numbers = #tpu.dot_dimension_numbers<[1], [0], [0], [1], [0, 0, 1, 1], [], []>} : vector<8x128xbf16>, vector<128x512xbf16>, vector<8x512xf32> -> vector<8x512xf32>
    %275 = arith.addf %271, %274 : vector<8x512xf32>
    %276 = vector.extract_strided_slice %275 {offsets = [0, 0], sizes = [8, 384], strides = [1, 1]} : vector<8x512xf32> to vector<8x384xf32>
    %277 = arith.negf %276 : vector<8x384xf32>
    %278 = math.exp %277 : vector<8x384xf32>
    %cst_83 = arith.constant 1.000000e+00 : f32
    %279 = vector.broadcast %cst_83 : f32 to vector<8x384xf32>
    %280 = arith.addf %279, %278 : vector<8x384xf32>
    %281 = arith.divf %279, %280 : vector<8x384xf32>
    %282 = vector.extract_strided_slice %281 {offsets = [0, 0], sizes = [8, 128], strides = [1, 1]} : vector<8x384xf32> to vector<8x128xf32>
    %283 = vector.extract_strided_slice %281 {offsets = [0, 128], sizes = [8, 128], strides = [1, 1]} : vector<8x384xf32> to vector<8x128xf32>
    %284 = vector.extract_strided_slice %281 {offsets = [0, 256], sizes = [8, 128], strides = [1, 1]} : vector<8x384xf32> to vector<8x128xf32>
    %285 = vector.extract_strided_slice %275 {offsets = [0, 384], sizes = [8, 128], strides = [1, 1]} : vector<8x512xf32> to vector<8x128xf32>
    %286 = math.tanh %285 : vector<8x128xf32>
    %287 = arith.mulf %283, %263 : vector<8x128xf32>
    %288 = arith.mulf %282, %286 : vector<8x128xf32>
    %289 = arith.addf %287, %288 : vector<8x128xf32>
    %290 = math.tanh %289 : vector<8x128xf32>
    %291 = arith.mulf %284, %290 : vector<8x128xf32>
    %292 = arith.index_cast %269 : i32 to index
    %c0_84 = arith.constant 0 : index
    %293 = vector.load %arg11[%292, %c0_84] : memref<128x128xf32, #tpu.memory_space<vmem>>, vector<8x128xf32>
    tpu.vector_store %arg11[%292, %c0_84], %291 {strides = array<i32>} : memref<128x128xf32, #tpu.memory_space<vmem>>, vector<8x128xf32>,
    %c11_i32 = arith.constant 11 : i32
    %c8_i32_85 = arith.constant 8 : i32
    %294 = arith.muli %c11_i32, %c8_i32_85 : i32
    %295 = tpu.assume_multiple %294, 8 : i32
    %296 = arith.index_cast %295 : i32 to index
    %c0_86 = arith.constant 0 : index
    %297 = vector.load %arg10[%296, %c0_86] : memref<128x512xf32, #tpu.memory_space<vmem>>, vector<8x512xf32>
    %298 = arith.truncf %291 : vector<8x128xf32> to vector<8x128xbf16>
    %c0_87 = arith.constant 0 : index
    %c0_88 = arith.constant 0 : index
    %299 = vector.load %arg2[%c0_87, %c0_88] : memref<128x512xbf16, #tpu.memory_space<vmem>>, vector<128x512xbf16>
    %cst_89 = arith.constant dense<0.000000e+00> : vector<8x512xf32>
    %300 = tpu.matmul %298, %299, %cst_89 {dimension_numbers = #tpu.dot_dimension_numbers<[1], [0], [0], [1], [0, 0, 1, 1], [], []>} : vector<8x128xbf16>, vector<128x512xbf16>, vector<8x512xf32> -> vector<8x512xf32>
    %301 = arith.addf %297, %300 : vector<8x512xf32>
    %302 = vector.extract_strided_slice %301 {offsets = [0, 0], sizes = [8, 384], strides = [1, 1]} : vector<8x512xf32> to vector<8x384xf32>
    %303 = arith.negf %302 : vector<8x384xf32>
    %304 = math.exp %303 : vector<8x384xf32>
    %cst_90 = arith.constant 1.000000e+00 : f32
    %305 = vector.broadcast %cst_90 : f32 to vector<8x384xf32>
    %306 = arith.addf %305, %304 : vector<8x384xf32>
    %307 = arith.divf %305, %306 : vector<8x384xf32>
    %308 = vector.extract_strided_slice %307 {offsets = [0, 0], sizes = [8, 128], strides = [1, 1]} : vector<8x384xf32> to vector<8x128xf32>
    %309 = vector.extract_strided_slice %307 {offsets = [0, 128], sizes = [8, 128], strides = [1, 1]} : vector<8x384xf32> to vector<8x128xf32>
    %310 = vector.extract_strided_slice %307 {offsets = [0, 256], sizes = [8, 128], strides = [1, 1]} : vector<8x384xf32> to vector<8x128xf32>
    %311 = vector.extract_strided_slice %301 {offsets = [0, 384], sizes = [8, 128], strides = [1, 1]} : vector<8x512xf32> to vector<8x128xf32>
    %312 = math.tanh %311 : vector<8x128xf32>
    %313 = arith.mulf %309, %289 : vector<8x128xf32>
    %314 = arith.mulf %308, %312 : vector<8x128xf32>
    %315 = arith.addf %313, %314 : vector<8x128xf32>
    %316 = math.tanh %315 : vector<8x128xf32>
    %317 = arith.mulf %310, %316 : vector<8x128xf32>
    %318 = arith.index_cast %295 : i32 to index
    %c0_91 = arith.constant 0 : index
    %319 = vector.load %arg11[%318, %c0_91] : memref<128x128xf32, #tpu.memory_space<vmem>>, vector<8x128xf32>
    tpu.vector_store %arg11[%318, %c0_91], %317 {strides = array<i32>} : memref<128x128xf32, #tpu.memory_space<vmem>>, vector<8x128xf32>,
    %c12_i32 = arith.constant 12 : i32
    %c8_i32_92 = arith.constant 8 : i32
    %320 = arith.muli %c12_i32, %c8_i32_92 : i32
    %321 = tpu.assume_multiple %320, 8 : i32
    %322 = arith.index_cast %321 : i32 to index
    %c0_93 = arith.constant 0 : index
    %323 = vector.load %arg10[%322, %c0_93] : memref<128x512xf32, #tpu.memory_space<vmem>>, vector<8x512xf32>
    %324 = arith.truncf %317 : vector<8x128xf32> to vector<8x128xbf16>
    %c0_94 = arith.constant 0 : index
    %c0_95 = arith.constant 0 : index
    %325 = vector.load %arg2[%c0_94, %c0_95] : memref<128x512xbf16, #tpu.memory_space<vmem>>, vector<128x512xbf16>
    %cst_96 = arith.constant dense<0.000000e+00> : vector<8x512xf32>
    %326 = tpu.matmul %324, %325, %cst_96 {dimension_numbers = #tpu.dot_dimension_numbers<[1], [0], [0], [1], [0, 0, 1, 1], [], []>} : vector<8x128xbf16>, vector<128x512xbf16>, vector<8x512xf32> -> vector<8x512xf32>
    %327 = arith.addf %323, %326 : vector<8x512xf32>
    %328 = vector.extract_strided_slice %327 {offsets = [0, 0], sizes = [8, 384], strides = [1, 1]} : vector<8x512xf32> to vector<8x384xf32>
    %329 = arith.negf %328 : vector<8x384xf32>
    %330 = math.exp %329 : vector<8x384xf32>
    %cst_97 = arith.constant 1.000000e+00 : f32
    %331 = vector.broadcast %cst_97 : f32 to vector<8x384xf32>
    %332 = arith.addf %331, %330 : vector<8x384xf32>
    %333 = arith.divf %331, %332 : vector<8x384xf32>
    %334 = vector.extract_strided_slice %333 {offsets = [0, 0], sizes = [8, 128], strides = [1, 1]} : vector<8x384xf32> to vector<8x128xf32>
    %335 = vector.extract_strided_slice %333 {offsets = [0, 128], sizes = [8, 128], strides = [1, 1]} : vector<8x384xf32> to vector<8x128xf32>
    %336 = vector.extract_strided_slice %333 {offsets = [0, 256], sizes = [8, 128], strides = [1, 1]} : vector<8x384xf32> to vector<8x128xf32>
    %337 = vector.extract_strided_slice %327 {offsets = [0, 384], sizes = [8, 128], strides = [1, 1]} : vector<8x512xf32> to vector<8x128xf32>
    %338 = math.tanh %337 : vector<8x128xf32>
    %339 = arith.mulf %335, %315 : vector<8x128xf32>
    %340 = arith.mulf %334, %338 : vector<8x128xf32>
    %341 = arith.addf %339, %340 : vector<8x128xf32>
    %342 = math.tanh %341 : vector<8x128xf32>
    %343 = arith.mulf %336, %342 : vector<8x128xf32>
    %344 = arith.index_cast %321 : i32 to index
    %c0_98 = arith.constant 0 : index
    %345 = vector.load %arg11[%344, %c0_98] : memref<128x128xf32, #tpu.memory_space<vmem>>, vector<8x128xf32>
    tpu.vector_store %arg11[%344, %c0_98], %343 {strides = array<i32>} : memref<128x128xf32, #tpu.memory_space<vmem>>, vector<8x128xf32>,
    %c13_i32 = arith.constant 13 : i32
    %c8_i32_99 = arith.constant 8 : i32
    %346 = arith.muli %c13_i32, %c8_i32_99 : i32
    %347 = tpu.assume_multiple %346, 8 : i32
    %348 = arith.index_cast %347 : i32 to index
    %c0_100 = arith.constant 0 : index
    %349 = vector.load %arg10[%348, %c0_100] : memref<128x512xf32, #tpu.memory_space<vmem>>, vector<8x512xf32>
    %350 = arith.truncf %343 : vector<8x128xf32> to vector<8x128xbf16>
    %c0_101 = arith.constant 0 : index
    %c0_102 = arith.constant 0 : index
    %351 = vector.load %arg2[%c0_101, %c0_102] : memref<128x512xbf16, #tpu.memory_space<vmem>>, vector<128x512xbf16>
    %cst_103 = arith.constant dense<0.000000e+00> : vector<8x512xf32>
    %352 = tpu.matmul %350, %351, %cst_103 {dimension_numbers = #tpu.dot_dimension_numbers<[1], [0], [0], [1], [0, 0, 1, 1], [], []>} : vector<8x128xbf16>, vector<128x512xbf16>, vector<8x512xf32> -> vector<8x512xf32>
    %353 = arith.addf %349, %352 : vector<8x512xf32>
    %354 = vector.extract_strided_slice %353 {offsets = [0, 0], sizes = [8, 384], strides = [1, 1]} : vector<8x512xf32> to vector<8x384xf32>
    %355 = arith.negf %354 : vector<8x384xf32>
    %356 = math.exp %355 : vector<8x384xf32>
    %cst_104 = arith.constant 1.000000e+00 : f32
    %357 = vector.broadcast %cst_104 : f32 to vector<8x384xf32>
    %358 = arith.addf %357, %356 : vector<8x384xf32>
    %359 = arith.divf %357, %358 : vector<8x384xf32>
    %360 = vector.extract_strided_slice %359 {offsets = [0, 0], sizes = [8, 128], strides = [1, 1]} : vector<8x384xf32> to vector<8x128xf32>
    %361 = vector.extract_strided_slice %359 {offsets = [0, 128], sizes = [8, 128], strides = [1, 1]} : vector<8x384xf32> to vector<8x128xf32>
    %362 = vector.extract_strided_slice %359 {offsets = [0, 256], sizes = [8, 128], strides = [1, 1]} : vector<8x384xf32> to vector<8x128xf32>
    %363 = vector.extract_strided_slice %353 {offsets = [0, 384], sizes = [8, 128], strides = [1, 1]} : vector<8x512xf32> to vector<8x128xf32>
    %364 = math.tanh %363 : vector<8x128xf32>
    %365 = arith.mulf %361, %341 : vector<8x128xf32>
    %366 = arith.mulf %360, %364 : vector<8x128xf32>
    %367 = arith.addf %365, %366 : vector<8x128xf32>
    %368 = math.tanh %367 : vector<8x128xf32>
    %369 = arith.mulf %362, %368 : vector<8x128xf32>
    %370 = arith.index_cast %347 : i32 to index
    %c0_105 = arith.constant 0 : index
    %371 = vector.load %arg11[%370, %c0_105] : memref<128x128xf32, #tpu.memory_space<vmem>>, vector<8x128xf32>
    tpu.vector_store %arg11[%370, %c0_105], %369 {strides = array<i32>} : memref<128x128xf32, #tpu.memory_space<vmem>>, vector<8x128xf32>,
    %c14_i32 = arith.constant 14 : i32
    %c8_i32_106 = arith.constant 8 : i32
    %372 = arith.muli %c14_i32, %c8_i32_106 : i32
    %373 = tpu.assume_multiple %372, 8 : i32
    %374 = arith.index_cast %373 : i32 to index
    %c0_107 = arith.constant 0 : index
    %375 = vector.load %arg10[%374, %c0_107] : memref<128x512xf32, #tpu.memory_space<vmem>>, vector<8x512xf32>
    %376 = arith.truncf %369 : vector<8x128xf32> to vector<8x128xbf16>
    %c0_108 = arith.constant 0 : index
    %c0_109 = arith.constant 0 : index
    %377 = vector.load %arg2[%c0_108, %c0_109] : memref<128x512xbf16, #tpu.memory_space<vmem>>, vector<128x512xbf16>
    %cst_110 = arith.constant dense<0.000000e+00> : vector<8x512xf32>
    %378 = tpu.matmul %376, %377, %cst_110 {dimension_numbers = #tpu.dot_dimension_numbers<[1], [0], [0], [1], [0, 0, 1, 1], [], []>} : vector<8x128xbf16>, vector<128x512xbf16>, vector<8x512xf32> -> vector<8x512xf32>
    %379 = arith.addf %375, %378 : vector<8x512xf32>
    %380 = vector.extract_strided_slice %379 {offsets = [0, 0], sizes = [8, 384], strides = [1, 1]} : vector<8x512xf32> to vector<8x384xf32>
    %381 = arith.negf %380 : vector<8x384xf32>
    %382 = math.exp %381 : vector<8x384xf32>
    %cst_111 = arith.constant 1.000000e+00 : f32
    %383 = vector.broadcast %cst_111 : f32 to vector<8x384xf32>
    %384 = arith.addf %383, %382 : vector<8x384xf32>
    %385 = arith.divf %383, %384 : vector<8x384xf32>
    %386 = vector.extract_strided_slice %385 {offsets = [0, 0], sizes = [8, 128], strides = [1, 1]} : vector<8x384xf32> to vector<8x128xf32>
    %387 = vector.extract_strided_slice %385 {offsets = [0, 128], sizes = [8, 128], strides = [1, 1]} : vector<8x384xf32> to vector<8x128xf32>
    %388 = vector.extract_strided_slice %385 {offsets = [0, 256], sizes = [8, 128], strides = [1, 1]} : vector<8x384xf32> to vector<8x128xf32>
    %389 = vector.extract_strided_slice %379 {offsets = [0, 384], sizes = [8, 128], strides = [1, 1]} : vector<8x512xf32> to vector<8x128xf32>
    %390 = math.tanh %389 : vector<8x128xf32>
    %391 = arith.mulf %387, %367 : vector<8x128xf32>
    %392 = arith.mulf %386, %390 : vector<8x128xf32>
    %393 = arith.addf %391, %392 : vector<8x128xf32>
    %394 = math.tanh %393 : vector<8x128xf32>
    %395 = arith.mulf %388, %394 : vector<8x128xf32>
    %396 = arith.index_cast %373 : i32 to index
    %c0_112 = arith.constant 0 : index
    %397 = vector.load %arg11[%396, %c0_112] : memref<128x128xf32, #tpu.memory_space<vmem>>, vector<8x128xf32>
    tpu.vector_store %arg11[%396, %c0_112], %395 {strides = array<i32>} : memref<128x128xf32, #tpu.memory_space<vmem>>, vector<8x128xf32>,
    %c15_i32 = arith.constant 15 : i32
    %c8_i32_113 = arith.constant 8 : i32
    %398 = arith.muli %c15_i32, %c8_i32_113 : i32
    %399 = tpu.assume_multiple %398, 8 : i32
    %400 = arith.index_cast %399 : i32 to index
    %c0_114 = arith.constant 0 : index
    %401 = vector.load %arg10[%400, %c0_114] : memref<128x512xf32, #tpu.memory_space<vmem>>, vector<8x512xf32>
    %402 = arith.truncf %395 : vector<8x128xf32> to vector<8x128xbf16>
    %c0_115 = arith.constant 0 : index
    %c0_116 = arith.constant 0 : index
    %403 = vector.load %arg2[%c0_115, %c0_116] : memref<128x512xbf16, #tpu.memory_space<vmem>>, vector<128x512xbf16>
    %cst_117 = arith.constant dense<0.000000e+00> : vector<8x512xf32>
    %404 = tpu.matmul %402, %403, %cst_117 {dimension_numbers = #tpu.dot_dimension_numbers<[1], [0], [0], [1], [0, 0, 1, 1], [], []>} : vector<8x128xbf16>, vector<128x512xbf16>, vector<8x512xf32> -> vector<8x512xf32>
    %405 = arith.addf %401, %404 : vector<8x512xf32>
    %406 = vector.extract_strided_slice %405 {offsets = [0, 0], sizes = [8, 384], strides = [1, 1]} : vector<8x512xf32> to vector<8x384xf32>
    %407 = arith.negf %406 : vector<8x384xf32>
    %408 = math.exp %407 : vector<8x384xf32>
    %cst_118 = arith.constant 1.000000e+00 : f32
    %409 = vector.broadcast %cst_118 : f32 to vector<8x384xf32>
    %410 = arith.addf %409, %408 : vector<8x384xf32>
    %411 = arith.divf %409, %410 : vector<8x384xf32>
    %412 = vector.extract_strided_slice %411 {offsets = [0, 0], sizes = [8, 128], strides = [1, 1]} : vector<8x384xf32> to vector<8x128xf32>
    %413 = vector.extract_strided_slice %411 {offsets = [0, 128], sizes = [8, 128], strides = [1, 1]} : vector<8x384xf32> to vector<8x128xf32>
    %414 = vector.extract_strided_slice %411 {offsets = [0, 256], sizes = [8, 128], strides = [1, 1]} : vector<8x384xf32> to vector<8x128xf32>
    %415 = vector.extract_strided_slice %405 {offsets = [0, 384], sizes = [8, 128], strides = [1, 1]} : vector<8x512xf32> to vector<8x128xf32>
    %416 = math.tanh %415 : vector<8x128xf32>
    %417 = arith.mulf %413, %393 : vector<8x128xf32>
    %418 = arith.mulf %412, %416 : vector<8x128xf32>
    %419 = arith.addf %417, %418 : vector<8x128xf32>
    %420 = math.tanh %419 : vector<8x128xf32>
    %421 = arith.mulf %414, %420 : vector<8x128xf32>
    %422 = arith.index_cast %399 : i32 to index
    %c0_119 = arith.constant 0 : index
    %423 = vector.load %arg11[%422, %c0_119] : memref<128x128xf32, #tpu.memory_space<vmem>>, vector<8x128xf32>
    tpu.vector_store %arg11[%422, %c0_119], %421 {strides = array<i32>} : memref<128x128xf32, #tpu.memory_space<vmem>>, vector<8x128xf32>,
    %c16_i32 = arith.constant 16 : i32
    %c0_120 = arith.constant 0 : index
    %c0_121 = arith.constant 0 : index
    %424 = vector.load %arg11[%c0_120, %c0_121] : memref<128x128xf32, #tpu.memory_space<vmem>>, vector<128x128xf32>
    %425 = arith.truncf %424 : vector<128x128xf32> to vector<128x128xbf16>
    %c0_122 = arith.constant 0 : index
    %c0_123 = arith.constant 0 : index
    %426 = vector.load %arg4[%c0_122, %c0_123] : memref<128x512xbf16, #tpu.memory_space<vmem>>, vector<128x512xbf16>
    %cst_124 = arith.constant dense<0.000000e+00> : vector<128x512xf32>
    %427 = tpu.matmul %425, %426, %cst_124 {dimension_numbers = #tpu.dot_dimension_numbers<[1], [0], [0], [1], [0, 0, 1, 1], [], []>} : vector<128x128xbf16>, vector<128x512xbf16>, vector<128x512xf32> -> vector<128x512xf32>
    %c0_125 = arith.constant 0 : index
    %c0_126 = arith.constant 0 : index
    %428 = vector.load %arg6[%c0_125, %c0_126] : memref<1x512xf32, #tpu.memory_space<vmem>>, vector<1x512xf32>
    %429 = vector.broadcast %428 : vector<1x512xf32> to vector<128x512xf32>
    %430 = arith.addf %427, %429 : vector<128x512xf32>
    %c0_127 = arith.constant 0 : index
    %c0_128 = arith.constant 0 : index
    %431 = vector.load %arg10[%c0_127, %c0_128] : memref<128x512xf32, #tpu.memory_space<vmem>>, vector<128x512xf32>
    tpu.vector_store %arg10[%c0_127, %c0_128], %430 {strides = array<i32>} : memref<128x512xf32, #tpu.memory_space<vmem>>, vector<128x512xf32>,
    %c0_i32_129 = arith.constant 0 : i32
    %c8_i32_130 = arith.constant 8 : i32
    %432 = arith.muli %c0_i32_129, %c8_i32_130 : i32
    %433 = tpu.assume_multiple %432, 8 : i32
    %434 = arith.index_cast %433 : i32 to index
    %c0_131 = arith.constant 0 : index
    %435 = vector.load %arg10[%434, %c0_131] : memref<128x512xf32, #tpu.memory_space<vmem>>, vector<8x512xf32>
    %436 = arith.truncf %0 : vector<8x128xf32> to vector<8x128xbf16>
    %c0_132 = arith.constant 0 : index
    %c0_133 = arith.constant 0 : index
    %437 = vector.load %arg5[%c0_132, %c0_133] : memref<128x512xbf16, #tpu.memory_space<vmem>>, vector<128x512xbf16>
    %cst_134 = arith.constant dense<0.000000e+00> : vector<8x512xf32>
    %438 = tpu.matmul %436, %437, %cst_134 {dimension_numbers = #tpu.dot_dimension_numbers<[1], [0], [0], [1], [0, 0, 1, 1], [], []>} : vector<8x128xbf16>, vector<128x512xbf16>, vector<8x512xf32> -> vector<8x512xf32>
    %439 = arith.addf %435, %438 : vector<8x512xf32>
    %440 = vector.extract_strided_slice %439 {offsets = [0, 0], sizes = [8, 384], strides = [1, 1]} : vector<8x512xf32> to vector<8x384xf32>
    %441 = arith.negf %440 : vector<8x384xf32>
    %442 = math.exp %441 : vector<8x384xf32>
    %cst_135 = arith.constant 1.000000e+00 : f32
    %443 = vector.broadcast %cst_135 : f32 to vector<8x384xf32>
    %444 = arith.addf %443, %442 : vector<8x384xf32>
    %445 = arith.divf %443, %444 : vector<8x384xf32>
    %446 = vector.extract_strided_slice %445 {offsets = [0, 0], sizes = [8, 128], strides = [1, 1]} : vector<8x384xf32> to vector<8x128xf32>
    %447 = vector.extract_strided_slice %445 {offsets = [0, 128], sizes = [8, 128], strides = [1, 1]} : vector<8x384xf32> to vector<8x128xf32>
    %448 = vector.extract_strided_slice %445 {offsets = [0, 256], sizes = [8, 128], strides = [1, 1]} : vector<8x384xf32> to vector<8x128xf32>
    %449 = vector.extract_strided_slice %439 {offsets = [0, 384], sizes = [8, 128], strides = [1, 1]} : vector<8x512xf32> to vector<8x128xf32>
    %450 = math.tanh %449 : vector<8x128xf32>
    %451 = arith.mulf %447, %0 : vector<8x128xf32>
    %452 = arith.mulf %446, %450 : vector<8x128xf32>
    %453 = arith.addf %451, %452 : vector<8x128xf32>
    %454 = math.tanh %453 : vector<8x128xf32>
    %455 = arith.mulf %448, %454 : vector<8x128xf32>
    %c1_i32_136 = arith.constant 1 : i32
    %c8_i32_137 = arith.constant 8 : i32
    %456 = arith.muli %c1_i32_136, %c8_i32_137 : i32
    %457 = tpu.assume_multiple %456, 8 : i32
    %458 = arith.index_cast %457 : i32 to index
    %c0_138 = arith.constant 0 : index
    %459 = vector.load %arg10[%458, %c0_138] : memref<128x512xf32, #tpu.memory_space<vmem>>, vector<8x512xf32>
    %460 = arith.truncf %455 : vector<8x128xf32> to vector<8x128xbf16>
    %c0_139 = arith.constant 0 : index
    %c0_140 = arith.constant 0 : index
    %461 = vector.load %arg5[%c0_139, %c0_140] : memref<128x512xbf16, #tpu.memory_space<vmem>>, vector<128x512xbf16>
    %cst_141 = arith.constant dense<0.000000e+00> : vector<8x512xf32>
    %462 = tpu.matmul %460, %461, %cst_141 {dimension_numbers = #tpu.dot_dimension_numbers<[1], [0], [0], [1], [0, 0, 1, 1], [], []>} : vector<8x128xbf16>, vector<128x512xbf16>, vector<8x512xf32> -> vector<8x512xf32>
    %463 = arith.addf %459, %462 : vector<8x512xf32>
    %464 = vector.extract_strided_slice %463 {offsets = [0, 0], sizes = [8, 384], strides = [1, 1]} : vector<8x512xf32> to vector<8x384xf32>
    %465 = arith.negf %464 : vector<8x384xf32>
    %466 = math.exp %465 : vector<8x384xf32>
    %cst_142 = arith.constant 1.000000e+00 : f32
    %467 = vector.broadcast %cst_142 : f32 to vector<8x384xf32>
    %468 = arith.addf %467, %466 : vector<8x384xf32>
    %469 = arith.divf %467, %468 : vector<8x384xf32>
    %470 = vector.extract_strided_slice %469 {offsets = [0, 0], sizes = [8, 128], strides = [1, 1]} : vector<8x384xf32> to vector<8x128xf32>
    %471 = vector.extract_strided_slice %469 {offsets = [0, 128], sizes = [8, 128], strides = [1, 1]} : vector<8x384xf32> to vector<8x128xf32>
    %472 = vector.extract_strided_slice %469 {offsets = [0, 256], sizes = [8, 128], strides = [1, 1]} : vector<8x384xf32> to vector<8x128xf32>
    %473 = vector.extract_strided_slice %463 {offsets = [0, 384], sizes = [8, 128], strides = [1, 1]} : vector<8x512xf32> to vector<8x128xf32>
    %474 = math.tanh %473 : vector<8x128xf32>
    %475 = arith.mulf %471, %453 : vector<8x128xf32>
    %476 = arith.mulf %470, %474 : vector<8x128xf32>
    %477 = arith.addf %475, %476 : vector<8x128xf32>
    %478 = math.tanh %477 : vector<8x128xf32>
    %479 = arith.mulf %472, %478 : vector<8x128xf32>
    %c2_i32_143 = arith.constant 2 : i32
    %c8_i32_144 = arith.constant 8 : i32
    %480 = arith.muli %c2_i32_143, %c8_i32_144 : i32
    %481 = tpu.assume_multiple %480, 8 : i32
    %482 = arith.index_cast %481 : i32 to index
    %c0_145 = arith.constant 0 : index
    %483 = vector.load %arg10[%482, %c0_145] : memref<128x512xf32, #tpu.memory_space<vmem>>, vector<8x512xf32>
    %484 = arith.truncf %479 : vector<8x128xf32> to vector<8x128xbf16>
    %c0_146 = arith.constant 0 : index
    %c0_147 = arith.constant 0 : index
    %485 = vector.load %arg5[%c0_146, %c0_147] : memref<128x512xbf16, #tpu.memory_space<vmem>>, vector<128x512xbf16>
    %cst_148 = arith.constant dense<0.000000e+00> : vector<8x512xf32>
    %486 = tpu.matmul %484, %485, %cst_148 {dimension_numbers = #tpu.dot_dimension_numbers<[1], [0], [0], [1], [0, 0, 1, 1], [], []>} : vector<8x128xbf16>, vector<128x512xbf16>, vector<8x512xf32> -> vector<8x512xf32>
    %487 = arith.addf %483, %486 : vector<8x512xf32>
    %488 = vector.extract_strided_slice %487 {offsets = [0, 0], sizes = [8, 384], strides = [1, 1]} : vector<8x512xf32> to vector<8x384xf32>
    %489 = arith.negf %488 : vector<8x384xf32>
    %490 = math.exp %489 : vector<8x384xf32>
    %cst_149 = arith.constant 1.000000e+00 : f32
    %491 = vector.broadcast %cst_149 : f32 to vector<8x384xf32>
    %492 = arith.addf %491, %490 : vector<8x384xf32>
    %493 = arith.divf %491, %492 : vector<8x384xf32>
    %494 = vector.extract_strided_slice %493 {offsets = [0, 0], sizes = [8, 128], strides = [1, 1]} : vector<8x384xf32> to vector<8x128xf32>
    %495 = vector.extract_strided_slice %493 {offsets = [0, 128], sizes = [8, 128], strides = [1, 1]} : vector<8x384xf32> to vector<8x128xf32>
    %496 = vector.extract_strided_slice %493 {offsets = [0, 256], sizes = [8, 128], strides = [1, 1]} : vector<8x384xf32> to vector<8x128xf32>
    %497 = vector.extract_strided_slice %487 {offsets = [0, 384], sizes = [8, 128], strides = [1, 1]} : vector<8x512xf32> to vector<8x128xf32>
    %498 = math.tanh %497 : vector<8x128xf32>
    %499 = arith.mulf %495, %477 : vector<8x128xf32>
    %500 = arith.mulf %494, %498 : vector<8x128xf32>
    %501 = arith.addf %499, %500 : vector<8x128xf32>
    %502 = math.tanh %501 : vector<8x128xf32>
    %503 = arith.mulf %496, %502 : vector<8x128xf32>
    %c3_i32_150 = arith.constant 3 : i32
    %c8_i32_151 = arith.constant 8 : i32
    %504 = arith.muli %c3_i32_150, %c8_i32_151 : i32
    %505 = tpu.assume_multiple %504, 8 : i32
    %506 = arith.index_cast %505 : i32 to index
    %c0_152 = arith.constant 0 : index
    %507 = vector.load %arg10[%506, %c0_152] : memref<128x512xf32, #tpu.memory_space<vmem>>, vector<8x512xf32>
    %508 = arith.truncf %503 : vector<8x128xf32> to vector<8x128xbf16>
    %c0_153 = arith.constant 0 : index
    %c0_154 = arith.constant 0 : index
    %509 = vector.load %arg5[%c0_153, %c0_154] : memref<128x512xbf16, #tpu.memory_space<vmem>>, vector<128x512xbf16>
    %cst_155 = arith.constant dense<0.000000e+00> : vector<8x512xf32>
    %510 = tpu.matmul %508, %509, %cst_155 {dimension_numbers = #tpu.dot_dimension_numbers<[1], [0], [0], [1], [0, 0, 1, 1], [], []>} : vector<8x128xbf16>, vector<128x512xbf16>, vector<8x512xf32> -> vector<8x512xf32>
    %511 = arith.addf %507, %510 : vector<8x512xf32>
    %512 = vector.extract_strided_slice %511 {offsets = [0, 0], sizes = [8, 384], strides = [1, 1]} : vector<8x512xf32> to vector<8x384xf32>
    %513 = arith.negf %512 : vector<8x384xf32>
    %514 = math.exp %513 : vector<8x384xf32>
    %cst_156 = arith.constant 1.000000e+00 : f32
    %515 = vector.broadcast %cst_156 : f32 to vector<8x384xf32>
    %516 = arith.addf %515, %514 : vector<8x384xf32>
    %517 = arith.divf %515, %516 : vector<8x384xf32>
    %518 = vector.extract_strided_slice %517 {offsets = [0, 0], sizes = [8, 128], strides = [1, 1]} : vector<8x384xf32> to vector<8x128xf32>
    %519 = vector.extract_strided_slice %517 {offsets = [0, 128], sizes = [8, 128], strides = [1, 1]} : vector<8x384xf32> to vector<8x128xf32>
    %520 = vector.extract_strided_slice %517 {offsets = [0, 256], sizes = [8, 128], strides = [1, 1]} : vector<8x384xf32> to vector<8x128xf32>
    %521 = vector.extract_strided_slice %511 {offsets = [0, 384], sizes = [8, 128], strides = [1, 1]} : vector<8x512xf32> to vector<8x128xf32>
    %522 = math.tanh %521 : vector<8x128xf32>
    %523 = arith.mulf %519, %501 : vector<8x128xf32>
    %524 = arith.mulf %518, %522 : vector<8x128xf32>
    %525 = arith.addf %523, %524 : vector<8x128xf32>
    %526 = math.tanh %525 : vector<8x128xf32>
    %527 = arith.mulf %520, %526 : vector<8x128xf32>
    %c4_i32_157 = arith.constant 4 : i32
    %c8_i32_158 = arith.constant 8 : i32
    %528 = arith.muli %c4_i32_157, %c8_i32_158 : i32
    %529 = tpu.assume_multiple %528, 8 : i32
    %530 = arith.index_cast %529 : i32 to index
    %c0_159 = arith.constant 0 : index
    %531 = vector.load %arg10[%530, %c0_159] : memref<128x512xf32, #tpu.memory_space<vmem>>, vector<8x512xf32>
    %532 = arith.truncf %527 : vector<8x128xf32> to vector<8x128xbf16>
    %c0_160 = arith.constant 0 : index
    %c0_161 = arith.constant 0 : index
    %533 = vector.load %arg5[%c0_160, %c0_161] : memref<128x512xbf16, #tpu.memory_space<vmem>>, vector<128x512xbf16>
    %cst_162 = arith.constant dense<0.000000e+00> : vector<8x512xf32>
    %534 = tpu.matmul %532, %533, %cst_162 {dimension_numbers = #tpu.dot_dimension_numbers<[1], [0], [0], [1], [0, 0, 1, 1], [], []>} : vector<8x128xbf16>, vector<128x512xbf16>, vector<8x512xf32> -> vector<8x512xf32>
    %535 = arith.addf %531, %534 : vector<8x512xf32>
    %536 = vector.extract_strided_slice %535 {offsets = [0, 0], sizes = [8, 384], strides = [1, 1]} : vector<8x512xf32> to vector<8x384xf32>
    %537 = arith.negf %536 : vector<8x384xf32>
    %538 = math.exp %537 : vector<8x384xf32>
    %cst_163 = arith.constant 1.000000e+00 : f32
    %539 = vector.broadcast %cst_163 : f32 to vector<8x384xf32>
    %540 = arith.addf %539, %538 : vector<8x384xf32>
    %541 = arith.divf %539, %540 : vector<8x384xf32>
    %542 = vector.extract_strided_slice %541 {offsets = [0, 0], sizes = [8, 128], strides = [1, 1]} : vector<8x384xf32> to vector<8x128xf32>
    %543 = vector.extract_strided_slice %541 {offsets = [0, 128], sizes = [8, 128], strides = [1, 1]} : vector<8x384xf32> to vector<8x128xf32>
    %544 = vector.extract_strided_slice %541 {offsets = [0, 256], sizes = [8, 128], strides = [1, 1]} : vector<8x384xf32> to vector<8x128xf32>
    %545 = vector.extract_strided_slice %535 {offsets = [0, 384], sizes = [8, 128], strides = [1, 1]} : vector<8x512xf32> to vector<8x128xf32>
    %546 = math.tanh %545 : vector<8x128xf32>
    %547 = arith.mulf %543, %525 : vector<8x128xf32>
    %548 = arith.mulf %542, %546 : vector<8x128xf32>
    %549 = arith.addf %547, %548 : vector<8x128xf32>
    %550 = math.tanh %549 : vector<8x128xf32>
    %551 = arith.mulf %544, %550 : vector<8x128xf32>
    %c5_i32_164 = arith.constant 5 : i32
    %c8_i32_165 = arith.constant 8 : i32
    %552 = arith.muli %c5_i32_164, %c8_i32_165 : i32
    %553 = tpu.assume_multiple %552, 8 : i32
    %554 = arith.index_cast %553 : i32 to index
    %c0_166 = arith.constant 0 : index
    %555 = vector.load %arg10[%554, %c0_166] : memref<128x512xf32, #tpu.memory_space<vmem>>, vector<8x512xf32>
    %556 = arith.truncf %551 : vector<8x128xf32> to vector<8x128xbf16>
    %c0_167 = arith.constant 0 : index
    %c0_168 = arith.constant 0 : index
    %557 = vector.load %arg5[%c0_167, %c0_168] : memref<128x512xbf16, #tpu.memory_space<vmem>>, vector<128x512xbf16>
    %cst_169 = arith.constant dense<0.000000e+00> : vector<8x512xf32>
    %558 = tpu.matmul %556, %557, %cst_169 {dimension_numbers = #tpu.dot_dimension_numbers<[1], [0], [0], [1], [0, 0, 1, 1], [], []>} : vector<8x128xbf16>, vector<128x512xbf16>, vector<8x512xf32> -> vector<8x512xf32>
    %559 = arith.addf %555, %558 : vector<8x512xf32>
    %560 = vector.extract_strided_slice %559 {offsets = [0, 0], sizes = [8, 384], strides = [1, 1]} : vector<8x512xf32> to vector<8x384xf32>
    %561 = arith.negf %560 : vector<8x384xf32>
    %562 = math.exp %561 : vector<8x384xf32>
    %cst_170 = arith.constant 1.000000e+00 : f32
    %563 = vector.broadcast %cst_170 : f32 to vector<8x384xf32>
    %564 = arith.addf %563, %562 : vector<8x384xf32>
    %565 = arith.divf %563, %564 : vector<8x384xf32>
    %566 = vector.extract_strided_slice %565 {offsets = [0, 0], sizes = [8, 128], strides = [1, 1]} : vector<8x384xf32> to vector<8x128xf32>
    %567 = vector.extract_strided_slice %565 {offsets = [0, 128], sizes = [8, 128], strides = [1, 1]} : vector<8x384xf32> to vector<8x128xf32>
    %568 = vector.extract_strided_slice %565 {offsets = [0, 256], sizes = [8, 128], strides = [1, 1]} : vector<8x384xf32> to vector<8x128xf32>
    %569 = vector.extract_strided_slice %559 {offsets = [0, 384], sizes = [8, 128], strides = [1, 1]} : vector<8x512xf32> to vector<8x128xf32>
    %570 = math.tanh %569 : vector<8x128xf32>
    %571 = arith.mulf %567, %549 : vector<8x128xf32>
    %572 = arith.mulf %566, %570 : vector<8x128xf32>
    %573 = arith.addf %571, %572 : vector<8x128xf32>
    %574 = math.tanh %573 : vector<8x128xf32>
    %575 = arith.mulf %568, %574 : vector<8x128xf32>
    %c6_i32_171 = arith.constant 6 : i32
    %c8_i32_172 = arith.constant 8 : i32
    %576 = arith.muli %c6_i32_171, %c8_i32_172 : i32
    %577 = tpu.assume_multiple %576, 8 : i32
    %578 = arith.index_cast %577 : i32 to index
    %c0_173 = arith.constant 0 : index
    %579 = vector.load %arg10[%578, %c0_173] : memref<128x512xf32, #tpu.memory_space<vmem>>, vector<8x512xf32>
    %580 = arith.truncf %575 : vector<8x128xf32> to vector<8x128xbf16>
    %c0_174 = arith.constant 0 : index
    %c0_175 = arith.constant 0 : index
    %581 = vector.load %arg5[%c0_174, %c0_175] : memref<128x512xbf16, #tpu.memory_space<vmem>>, vector<128x512xbf16>
    %cst_176 = arith.constant dense<0.000000e+00> : vector<8x512xf32>
    %582 = tpu.matmul %580, %581, %cst_176 {dimension_numbers = #tpu.dot_dimension_numbers<[1], [0], [0], [1], [0, 0, 1, 1], [], []>} : vector<8x128xbf16>, vector<128x512xbf16>, vector<8x512xf32> -> vector<8x512xf32>
    %583 = arith.addf %579, %582 : vector<8x512xf32>
    %584 = vector.extract_strided_slice %583 {offsets = [0, 0], sizes = [8, 384], strides = [1, 1]} : vector<8x512xf32> to vector<8x384xf32>
    %585 = arith.negf %584 : vector<8x384xf32>
    %586 = math.exp %585 : vector<8x384xf32>
    %cst_177 = arith.constant 1.000000e+00 : f32
    %587 = vector.broadcast %cst_177 : f32 to vector<8x384xf32>
    %588 = arith.addf %587, %586 : vector<8x384xf32>
    %589 = arith.divf %587, %588 : vector<8x384xf32>
    %590 = vector.extract_strided_slice %589 {offsets = [0, 0], sizes = [8, 128], strides = [1, 1]} : vector<8x384xf32> to vector<8x128xf32>
    %591 = vector.extract_strided_slice %589 {offsets = [0, 128], sizes = [8, 128], strides = [1, 1]} : vector<8x384xf32> to vector<8x128xf32>
    %592 = vector.extract_strided_slice %589 {offsets = [0, 256], sizes = [8, 128], strides = [1, 1]} : vector<8x384xf32> to vector<8x128xf32>
    %593 = vector.extract_strided_slice %583 {offsets = [0, 384], sizes = [8, 128], strides = [1, 1]} : vector<8x512xf32> to vector<8x128xf32>
    %594 = math.tanh %593 : vector<8x128xf32>
    %595 = arith.mulf %591, %573 : vector<8x128xf32>
    %596 = arith.mulf %590, %594 : vector<8x128xf32>
    %597 = arith.addf %595, %596 : vector<8x128xf32>
    %598 = math.tanh %597 : vector<8x128xf32>
    %599 = arith.mulf %592, %598 : vector<8x128xf32>
    %c7_i32_178 = arith.constant 7 : i32
    %c8_i32_179 = arith.constant 8 : i32
    %600 = arith.muli %c7_i32_178, %c8_i32_179 : i32
    %601 = tpu.assume_multiple %600, 8 : i32
    %602 = arith.index_cast %601 : i32 to index
    %c0_180 = arith.constant 0 : index
    %603 = vector.load %arg10[%602, %c0_180] : memref<128x512xf32, #tpu.memory_space<vmem>>, vector<8x512xf32>
    %604 = arith.truncf %599 : vector<8x128xf32> to vector<8x128xbf16>
    %c0_181 = arith.constant 0 : index
    %c0_182 = arith.constant 0 : index
    %605 = vector.load %arg5[%c0_181, %c0_182] : memref<128x512xbf16, #tpu.memory_space<vmem>>, vector<128x512xbf16>
    %cst_183 = arith.constant dense<0.000000e+00> : vector<8x512xf32>
    %606 = tpu.matmul %604, %605, %cst_183 {dimension_numbers = #tpu.dot_dimension_numbers<[1], [0], [0], [1], [0, 0, 1, 1], [], []>} : vector<8x128xbf16>, vector<128x512xbf16>, vector<8x512xf32> -> vector<8x512xf32>
    %607 = arith.addf %603, %606 : vector<8x512xf32>
    %608 = vector.extract_strided_slice %607 {offsets = [0, 0], sizes = [8, 384], strides = [1, 1]} : vector<8x512xf32> to vector<8x384xf32>
    %609 = arith.negf %608 : vector<8x384xf32>
    %610 = math.exp %609 : vector<8x384xf32>
    %cst_184 = arith.constant 1.000000e+00 : f32
    %611 = vector.broadcast %cst_184 : f32 to vector<8x384xf32>
    %612 = arith.addf %611, %610 : vector<8x384xf32>
    %613 = arith.divf %611, %612 : vector<8x384xf32>
    %614 = vector.extract_strided_slice %613 {offsets = [0, 0], sizes = [8, 128], strides = [1, 1]} : vector<8x384xf32> to vector<8x128xf32>
    %615 = vector.extract_strided_slice %613 {offsets = [0, 128], sizes = [8, 128], strides = [1, 1]} : vector<8x384xf32> to vector<8x128xf32>
    %616 = vector.extract_strided_slice %613 {offsets = [0, 256], sizes = [8, 128], strides = [1, 1]} : vector<8x384xf32> to vector<8x128xf32>
    %617 = vector.extract_strided_slice %607 {offsets = [0, 384], sizes = [8, 128], strides = [1, 1]} : vector<8x512xf32> to vector<8x128xf32>
    %618 = math.tanh %617 : vector<8x128xf32>
    %619 = arith.mulf %615, %597 : vector<8x128xf32>
    %620 = arith.mulf %614, %618 : vector<8x128xf32>
    %621 = arith.addf %619, %620 : vector<8x128xf32>
    %622 = math.tanh %621 : vector<8x128xf32>
    %623 = arith.mulf %616, %622 : vector<8x128xf32>
    %c8_i32_185 = arith.constant 8 : i32
    %c8_i32_186 = arith.constant 8 : i32
    %624 = arith.muli %c8_i32_185, %c8_i32_186 : i32
    %625 = tpu.assume_multiple %624, 8 : i32
    %626 = arith.index_cast %625 : i32 to index
    %c0_187 = arith.constant 0 : index
    %627 = vector.load %arg10[%626, %c0_187] : memref<128x512xf32, #tpu.memory_space<vmem>>, vector<8x512xf32>
    %628 = arith.truncf %623 : vector<8x128xf32> to vector<8x128xbf16>
    %c0_188 = arith.constant 0 : index
    %c0_189 = arith.constant 0 : index
    %629 = vector.load %arg5[%c0_188, %c0_189] : memref<128x512xbf16, #tpu.memory_space<vmem>>, vector<128x512xbf16>
    %cst_190 = arith.constant dense<0.000000e+00> : vector<8x512xf32>
    %630 = tpu.matmul %628, %629, %cst_190 {dimension_numbers = #tpu.dot_dimension_numbers<[1], [0], [0], [1], [0, 0, 1, 1], [], []>} : vector<8x128xbf16>, vector<128x512xbf16>, vector<8x512xf32> -> vector<8x512xf32>
    %631 = arith.addf %627, %630 : vector<8x512xf32>
    %632 = vector.extract_strided_slice %631 {offsets = [0, 0], sizes = [8, 384], strides = [1, 1]} : vector<8x512xf32> to vector<8x384xf32>
    %633 = arith.negf %632 : vector<8x384xf32>
    %634 = math.exp %633 : vector<8x384xf32>
    %cst_191 = arith.constant 1.000000e+00 : f32
    %635 = vector.broadcast %cst_191 : f32 to vector<8x384xf32>
    %636 = arith.addf %635, %634 : vector<8x384xf32>
    %637 = arith.divf %635, %636 : vector<8x384xf32>
    %638 = vector.extract_strided_slice %637 {offsets = [0, 0], sizes = [8, 128], strides = [1, 1]} : vector<8x384xf32> to vector<8x128xf32>
    %639 = vector.extract_strided_slice %637 {offsets = [0, 128], sizes = [8, 128], strides = [1, 1]} : vector<8x384xf32> to vector<8x128xf32>
    %640 = vector.extract_strided_slice %637 {offsets = [0, 256], sizes = [8, 128], strides = [1, 1]} : vector<8x384xf32> to vector<8x128xf32>
    %641 = vector.extract_strided_slice %631 {offsets = [0, 384], sizes = [8, 128], strides = [1, 1]} : vector<8x512xf32> to vector<8x128xf32>
    %642 = math.tanh %641 : vector<8x128xf32>
    %643 = arith.mulf %639, %621 : vector<8x128xf32>
    %644 = arith.mulf %638, %642 : vector<8x128xf32>
    %645 = arith.addf %643, %644 : vector<8x128xf32>
    %646 = math.tanh %645 : vector<8x128xf32>
    %647 = arith.mulf %640, %646 : vector<8x128xf32>
    %c9_i32_192 = arith.constant 9 : i32
    %c8_i32_193 = arith.constant 8 : i32
    %648 = arith.muli %c9_i32_192, %c8_i32_193 : i32
    %649 = tpu.assume_multiple %648, 8 : i32
    %650 = arith.index_cast %649 : i32 to index
    %c0_194 = arith.constant 0 : index
    %651 = vector.load %arg10[%650, %c0_194] : memref<128x512xf32, #tpu.memory_space<vmem>>, vector<8x512xf32>
    %652 = arith.truncf %647 : vector<8x128xf32> to vector<8x128xbf16>
    %c0_195 = arith.constant 0 : index
    %c0_196 = arith.constant 0 : index
    %653 = vector.load %arg5[%c0_195, %c0_196] : memref<128x512xbf16, #tpu.memory_space<vmem>>, vector<128x512xbf16>
    %cst_197 = arith.constant dense<0.000000e+00> : vector<8x512xf32>
    %654 = tpu.matmul %652, %653, %cst_197 {dimension_numbers = #tpu.dot_dimension_numbers<[1], [0], [0], [1], [0, 0, 1, 1], [], []>} : vector<8x128xbf16>, vector<128x512xbf16>, vector<8x512xf32> -> vector<8x512xf32>
    %655 = arith.addf %651, %654 : vector<8x512xf32>
    %656 = vector.extract_strided_slice %655 {offsets = [0, 0], sizes = [8, 384], strides = [1, 1]} : vector<8x512xf32> to vector<8x384xf32>
    %657 = arith.negf %656 : vector<8x384xf32>
    %658 = math.exp %657 : vector<8x384xf32>
    %cst_198 = arith.constant 1.000000e+00 : f32
    %659 = vector.broadcast %cst_198 : f32 to vector<8x384xf32>
    %660 = arith.addf %659, %658 : vector<8x384xf32>
    %661 = arith.divf %659, %660 : vector<8x384xf32>
    %662 = vector.extract_strided_slice %661 {offsets = [0, 0], sizes = [8, 128], strides = [1, 1]} : vector<8x384xf32> to vector<8x128xf32>
    %663 = vector.extract_strided_slice %661 {offsets = [0, 128], sizes = [8, 128], strides = [1, 1]} : vector<8x384xf32> to vector<8x128xf32>
    %664 = vector.extract_strided_slice %661 {offsets = [0, 256], sizes = [8, 128], strides = [1, 1]} : vector<8x384xf32> to vector<8x128xf32>
    %665 = vector.extract_strided_slice %655 {offsets = [0, 384], sizes = [8, 128], strides = [1, 1]} : vector<8x512xf32> to vector<8x128xf32>
    %666 = math.tanh %665 : vector<8x128xf32>
    %667 = arith.mulf %663, %645 : vector<8x128xf32>
    %668 = arith.mulf %662, %666 : vector<8x128xf32>
    %669 = arith.addf %667, %668 : vector<8x128xf32>
    %670 = math.tanh %669 : vector<8x128xf32>
    %671 = arith.mulf %664, %670 : vector<8x128xf32>
    %c10_i32_199 = arith.constant 10 : i32
    %c8_i32_200 = arith.constant 8 : i32
    %672 = arith.muli %c10_i32_199, %c8_i32_200 : i32
    %673 = tpu.assume_multiple %672, 8 : i32
    %674 = arith.index_cast %673 : i32 to index
    %c0_201 = arith.constant 0 : index
    %675 = vector.load %arg10[%674, %c0_201] : memref<128x512xf32, #tpu.memory_space<vmem>>, vector<8x512xf32>
    %676 = arith.truncf %671 : vector<8x128xf32> to vector<8x128xbf16>
    %c0_202 = arith.constant 0 : index
    %c0_203 = arith.constant 0 : index
    %677 = vector.load %arg5[%c0_202, %c0_203] : memref<128x512xbf16, #tpu.memory_space<vmem>>, vector<128x512xbf16>
    %cst_204 = arith.constant dense<0.000000e+00> : vector<8x512xf32>
    %678 = tpu.matmul %676, %677, %cst_204 {dimension_numbers = #tpu.dot_dimension_numbers<[1], [0], [0], [1], [0, 0, 1, 1], [], []>} : vector<8x128xbf16>, vector<128x512xbf16>, vector<8x512xf32> -> vector<8x512xf32>
    %679 = arith.addf %675, %678 : vector<8x512xf32>
    %680 = vector.extract_strided_slice %679 {offsets = [0, 0], sizes = [8, 384], strides = [1, 1]} : vector<8x512xf32> to vector<8x384xf32>
    %681 = arith.negf %680 : vector<8x384xf32>
    %682 = math.exp %681 : vector<8x384xf32>
    %cst_205 = arith.constant 1.000000e+00 : f32
    %683 = vector.broadcast %cst_205 : f32 to vector<8x384xf32>
    %684 = arith.addf %683, %682 : vector<8x384xf32>
    %685 = arith.divf %683, %684 : vector<8x384xf32>
    %686 = vector.extract_strided_slice %685 {offsets = [0, 0], sizes = [8, 128], strides = [1, 1]} : vector<8x384xf32> to vector<8x128xf32>
    %687 = vector.extract_strided_slice %685 {offsets = [0, 128], sizes = [8, 128], strides = [1, 1]} : vector<8x384xf32> to vector<8x128xf32>
    %688 = vector.extract_strided_slice %685 {offsets = [0, 256], sizes = [8, 128], strides = [1, 1]} : vector<8x384xf32> to vector<8x128xf32>
    %689 = vector.extract_strided_slice %679 {offsets = [0, 384], sizes = [8, 128], strides = [1, 1]} : vector<8x512xf32> to vector<8x128xf32>
    %690 = math.tanh %689 : vector<8x128xf32>
    %691 = arith.mulf %687, %669 : vector<8x128xf32>
    %692 = arith.mulf %686, %690 : vector<8x128xf32>
    %693 = arith.addf %691, %692 : vector<8x128xf32>
    %694 = math.tanh %693 : vector<8x128xf32>
    %695 = arith.mulf %688, %694 : vector<8x128xf32>
    %c11_i32_206 = arith.constant 11 : i32
    %c8_i32_207 = arith.constant 8 : i32
    %696 = arith.muli %c11_i32_206, %c8_i32_207 : i32
    %697 = tpu.assume_multiple %696, 8 : i32
    %698 = arith.index_cast %697 : i32 to index
    %c0_208 = arith.constant 0 : index
    %699 = vector.load %arg10[%698, %c0_208] : memref<128x512xf32, #tpu.memory_space<vmem>>, vector<8x512xf32>
    %700 = arith.truncf %695 : vector<8x128xf32> to vector<8x128xbf16>
    %c0_209 = arith.constant 0 : index
    %c0_210 = arith.constant 0 : index
    %701 = vector.load %arg5[%c0_209, %c0_210] : memref<128x512xbf16, #tpu.memory_space<vmem>>, vector<128x512xbf16>
    %cst_211 = arith.constant dense<0.000000e+00> : vector<8x512xf32>
    %702 = tpu.matmul %700, %701, %cst_211 {dimension_numbers = #tpu.dot_dimension_numbers<[1], [0], [0], [1], [0, 0, 1, 1], [], []>} : vector<8x128xbf16>, vector<128x512xbf16>, vector<8x512xf32> -> vector<8x512xf32>
    %703 = arith.addf %699, %702 : vector<8x512xf32>
    %704 = vector.extract_strided_slice %703 {offsets = [0, 0], sizes = [8, 384], strides = [1, 1]} : vector<8x512xf32> to vector<8x384xf32>
    %705 = arith.negf %704 : vector<8x384xf32>
    %706 = math.exp %705 : vector<8x384xf32>
    %cst_212 = arith.constant 1.000000e+00 : f32
    %707 = vector.broadcast %cst_212 : f32 to vector<8x384xf32>
    %708 = arith.addf %707, %706 : vector<8x384xf32>
    %709 = arith.divf %707, %708 : vector<8x384xf32>
    %710 = vector.extract_strided_slice %709 {offsets = [0, 0], sizes = [8, 128], strides = [1, 1]} : vector<8x384xf32> to vector<8x128xf32>
    %711 = vector.extract_strided_slice %709 {offsets = [0, 128], sizes = [8, 128], strides = [1, 1]} : vector<8x384xf32> to vector<8x128xf32>
    %712 = vector.extract_strided_slice %709 {offsets = [0, 256], sizes = [8, 128], strides = [1, 1]} : vector<8x384xf32> to vector<8x128xf32>
    %713 = vector.extract_strided_slice %703 {offsets = [0, 384], sizes = [8, 128], strides = [1, 1]} : vector<8x512xf32> to vector<8x128xf32>
    %714 = math.tanh %713 : vector<8x128xf32>
    %715 = arith.mulf %711, %693 : vector<8x128xf32>
    %716 = arith.mulf %710, %714 : vector<8x128xf32>
    %717 = arith.addf %715, %716 : vector<8x128xf32>
    %718 = math.tanh %717 : vector<8x128xf32>
    %719 = arith.mulf %712, %718 : vector<8x128xf32>
    %c12_i32_213 = arith.constant 12 : i32
    %c8_i32_214 = arith.constant 8 : i32
    %720 = arith.muli %c12_i32_213, %c8_i32_214 : i32
    %721 = tpu.assume_multiple %720, 8 : i32
    %722 = arith.index_cast %721 : i32 to index
    %c0_215 = arith.constant 0 : index
    %723 = vector.load %arg10[%722, %c0_215] : memref<128x512xf32, #tpu.memory_space<vmem>>, vector<8x512xf32>
    %724 = arith.truncf %719 : vector<8x128xf32> to vector<8x128xbf16>
    %c0_216 = arith.constant 0 : index
    %c0_217 = arith.constant 0 : index
    %725 = vector.load %arg5[%c0_216, %c0_217] : memref<128x512xbf16, #tpu.memory_space<vmem>>, vector<128x512xbf16>
    %cst_218 = arith.constant dense<0.000000e+00> : vector<8x512xf32>
    %726 = tpu.matmul %724, %725, %cst_218 {dimension_numbers = #tpu.dot_dimension_numbers<[1], [0], [0], [1], [0, 0, 1, 1], [], []>} : vector<8x128xbf16>, vector<128x512xbf16>, vector<8x512xf32> -> vector<8x512xf32>
    %727 = arith.addf %723, %726 : vector<8x512xf32>
    %728 = vector.extract_strided_slice %727 {offsets = [0, 0], sizes = [8, 384], strides = [1, 1]} : vector<8x512xf32> to vector<8x384xf32>
    %729 = arith.negf %728 : vector<8x384xf32>
    %730 = math.exp %729 : vector<8x384xf32>
    %cst_219 = arith.constant 1.000000e+00 : f32
    %731 = vector.broadcast %cst_219 : f32 to vector<8x384xf32>
    %732 = arith.addf %731, %730 : vector<8x384xf32>
    %733 = arith.divf %731, %732 : vector<8x384xf32>
    %734 = vector.extract_strided_slice %733 {offsets = [0, 0], sizes = [8, 128], strides = [1, 1]} : vector<8x384xf32> to vector<8x128xf32>
    %735 = vector.extract_strided_slice %733 {offsets = [0, 128], sizes = [8, 128], strides = [1, 1]} : vector<8x384xf32> to vector<8x128xf32>
    %736 = vector.extract_strided_slice %733 {offsets = [0, 256], sizes = [8, 128], strides = [1, 1]} : vector<8x384xf32> to vector<8x128xf32>
    %737 = vector.extract_strided_slice %727 {offsets = [0, 384], sizes = [8, 128], strides = [1, 1]} : vector<8x512xf32> to vector<8x128xf32>
    %738 = math.tanh %737 : vector<8x128xf32>
    %739 = arith.mulf %735, %717 : vector<8x128xf32>
    %740 = arith.mulf %734, %738 : vector<8x128xf32>
    %741 = arith.addf %739, %740 : vector<8x128xf32>
    %742 = math.tanh %741 : vector<8x128xf32>
    %743 = arith.mulf %736, %742 : vector<8x128xf32>
    %c13_i32_220 = arith.constant 13 : i32
    %c8_i32_221 = arith.constant 8 : i32
    %744 = arith.muli %c13_i32_220, %c8_i32_221 : i32
    %745 = tpu.assume_multiple %744, 8 : i32
    %746 = arith.index_cast %745 : i32 to index
    %c0_222 = arith.constant 0 : index
    %747 = vector.load %arg10[%746, %c0_222] : memref<128x512xf32, #tpu.memory_space<vmem>>, vector<8x512xf32>
    %748 = arith.truncf %743 : vector<8x128xf32> to vector<8x128xbf16>
    %c0_223 = arith.constant 0 : index
    %c0_224 = arith.constant 0 : index
    %749 = vector.load %arg5[%c0_223, %c0_224] : memref<128x512xbf16, #tpu.memory_space<vmem>>, vector<128x512xbf16>
    %cst_225 = arith.constant dense<0.000000e+00> : vector<8x512xf32>
    %750 = tpu.matmul %748, %749, %cst_225 {dimension_numbers = #tpu.dot_dimension_numbers<[1], [0], [0], [1], [0, 0, 1, 1], [], []>} : vector<8x128xbf16>, vector<128x512xbf16>, vector<8x512xf32> -> vector<8x512xf32>
    %751 = arith.addf %747, %750 : vector<8x512xf32>
    %752 = vector.extract_strided_slice %751 {offsets = [0, 0], sizes = [8, 384], strides = [1, 1]} : vector<8x512xf32> to vector<8x384xf32>
    %753 = arith.negf %752 : vector<8x384xf32>
    %754 = math.exp %753 : vector<8x384xf32>
    %cst_226 = arith.constant 1.000000e+00 : f32
    %755 = vector.broadcast %cst_226 : f32 to vector<8x384xf32>
    %756 = arith.addf %755, %754 : vector<8x384xf32>
    %757 = arith.divf %755, %756 : vector<8x384xf32>
    %758 = vector.extract_strided_slice %757 {offsets = [0, 0], sizes = [8, 128], strides = [1, 1]} : vector<8x384xf32> to vector<8x128xf32>
    %759 = vector.extract_strided_slice %757 {offsets = [0, 128], sizes = [8, 128], strides = [1, 1]} : vector<8x384xf32> to vector<8x128xf32>
    %760 = vector.extract_strided_slice %757 {offsets = [0, 256], sizes = [8, 128], strides = [1, 1]} : vector<8x384xf32> to vector<8x128xf32>
    %761 = vector.extract_strided_slice %751 {offsets = [0, 384], sizes = [8, 128], strides = [1, 1]} : vector<8x512xf32> to vector<8x128xf32>
    %762 = math.tanh %761 : vector<8x128xf32>
    %763 = arith.mulf %759, %741 : vector<8x128xf32>
    %764 = arith.mulf %758, %762 : vector<8x128xf32>
    %765 = arith.addf %763, %764 : vector<8x128xf32>
    %766 = math.tanh %765 : vector<8x128xf32>
    %767 = arith.mulf %760, %766 : vector<8x128xf32>
    %c14_i32_227 = arith.constant 14 : i32
    %c8_i32_228 = arith.constant 8 : i32
    %768 = arith.muli %c14_i32_227, %c8_i32_228 : i32
    %769 = tpu.assume_multiple %768, 8 : i32
    %770 = arith.index_cast %769 : i32 to index
    %c0_229 = arith.constant 0 : index
    %771 = vector.load %arg10[%770, %c0_229] : memref<128x512xf32, #tpu.memory_space<vmem>>, vector<8x512xf32>
    %772 = arith.truncf %767 : vector<8x128xf32> to vector<8x128xbf16>
    %c0_230 = arith.constant 0 : index
    %c0_231 = arith.constant 0 : index
    %773 = vector.load %arg5[%c0_230, %c0_231] : memref<128x512xbf16, #tpu.memory_space<vmem>>, vector<128x512xbf16>
    %cst_232 = arith.constant dense<0.000000e+00> : vector<8x512xf32>
    %774 = tpu.matmul %772, %773, %cst_232 {dimension_numbers = #tpu.dot_dimension_numbers<[1], [0], [0], [1], [0, 0, 1, 1], [], []>} : vector<8x128xbf16>, vector<128x512xbf16>, vector<8x512xf32> -> vector<8x512xf32>
    %775 = arith.addf %771, %774 : vector<8x512xf32>
    %776 = vector.extract_strided_slice %775 {offsets = [0, 0], sizes = [8, 384], strides = [1, 1]} : vector<8x512xf32> to vector<8x384xf32>
    %777 = arith.negf %776 : vector<8x384xf32>
    %778 = math.exp %777 : vector<8x384xf32>
    %cst_233 = arith.constant 1.000000e+00 : f32
    %779 = vector.broadcast %cst_233 : f32 to vector<8x384xf32>
    %780 = arith.addf %779, %778 : vector<8x384xf32>
    %781 = arith.divf %779, %780 : vector<8x384xf32>
    %782 = vector.extract_strided_slice %781 {offsets = [0, 0], sizes = [8, 128], strides = [1, 1]} : vector<8x384xf32> to vector<8x128xf32>
    %783 = vector.extract_strided_slice %781 {offsets = [0, 128], sizes = [8, 128], strides = [1, 1]} : vector<8x384xf32> to vector<8x128xf32>
    %784 = vector.extract_strided_slice %781 {offsets = [0, 256], sizes = [8, 128], strides = [1, 1]} : vector<8x384xf32> to vector<8x128xf32>
    %785 = vector.extract_strided_slice %775 {offsets = [0, 384], sizes = [8, 128], strides = [1, 1]} : vector<8x512xf32> to vector<8x128xf32>
    %786 = math.tanh %785 : vector<8x128xf32>
    %787 = arith.mulf %783, %765 : vector<8x128xf32>
    %788 = arith.mulf %782, %786 : vector<8x128xf32>
    %789 = arith.addf %787, %788 : vector<8x128xf32>
    %790 = math.tanh %789 : vector<8x128xf32>
    %791 = arith.mulf %784, %790 : vector<8x128xf32>
    %c15_i32_234 = arith.constant 15 : i32
    %c8_i32_235 = arith.constant 8 : i32
    %792 = arith.muli %c15_i32_234, %c8_i32_235 : i32
    %793 = tpu.assume_multiple %792, 8 : i32
    %794 = arith.index_cast %793 : i32 to index
    %c0_236 = arith.constant 0 : index
    %795 = vector.load %arg10[%794, %c0_236] : memref<128x512xf32, #tpu.memory_space<vmem>>, vector<8x512xf32>
    %796 = arith.truncf %791 : vector<8x128xf32> to vector<8x128xbf16>
    %c0_237 = arith.constant 0 : index
    %c0_238 = arith.constant 0 : index
    %797 = vector.load %arg5[%c0_237, %c0_238] : memref<128x512xbf16, #tpu.memory_space<vmem>>, vector<128x512xbf16>
    %cst_239 = arith.constant dense<0.000000e+00> : vector<8x512xf32>
    %798 = tpu.matmul %796, %797, %cst_239 {dimension_numbers = #tpu.dot_dimension_numbers<[1], [0], [0], [1], [0, 0, 1, 1], [], []>} : vector<8x128xbf16>, vector<128x512xbf16>, vector<8x512xf32> -> vector<8x512xf32>
    %799 = arith.addf %795, %798 : vector<8x512xf32>
    %800 = vector.extract_strided_slice %799 {offsets = [0, 0], sizes = [8, 384], strides = [1, 1]} : vector<8x512xf32> to vector<8x384xf32>
    %801 = arith.negf %800 : vector<8x384xf32>
    %802 = math.exp %801 : vector<8x384xf32>
    %cst_240 = arith.constant 1.000000e+00 : f32
    %803 = vector.broadcast %cst_240 : f32 to vector<8x384xf32>
    %804 = arith.addf %803, %802 : vector<8x384xf32>
    %805 = arith.divf %803, %804 : vector<8x384xf32>
    %806 = vector.extract_strided_slice %805 {offsets = [0, 0], sizes = [8, 128], strides = [1, 1]} : vector<8x384xf32> to vector<8x128xf32>
    %807 = vector.extract_strided_slice %805 {offsets = [0, 128], sizes = [8, 128], strides = [1, 1]} : vector<8x384xf32> to vector<8x128xf32>
    %808 = vector.extract_strided_slice %805 {offsets = [0, 256], sizes = [8, 128], strides = [1, 1]} : vector<8x384xf32> to vector<8x128xf32>
    %809 = vector.extract_strided_slice %799 {offsets = [0, 384], sizes = [8, 128], strides = [1, 1]} : vector<8x512xf32> to vector<8x128xf32>
    %810 = math.tanh %809 : vector<8x128xf32>
    %811 = arith.mulf %807, %789 : vector<8x128xf32>
    %812 = arith.mulf %806, %810 : vector<8x128xf32>
    %813 = arith.addf %811, %812 : vector<8x128xf32>
    %814 = math.tanh %813 : vector<8x128xf32>
    %815 = arith.mulf %808, %814 : vector<8x128xf32>
    %c16_i32_241 = arith.constant 16 : i32
    %816 = arith.truncf %815 : vector<8x128xf32> to vector<8x128xbf16>
    %c0_242 = arith.constant 0 : index
    %c0_243 = arith.constant 0 : index
    %817 = vector.load %arg7[%c0_242, %c0_243] : memref<128x128xbf16, #tpu.memory_space<vmem>>, vector<128x128xbf16>
    %cst_244 = arith.constant dense<0.000000e+00> : vector<8x128xf32>
    %818 = tpu.matmul %816, %817, %cst_244 {dimension_numbers = #tpu.dot_dimension_numbers<[1], [0], [0], [1], [0, 0, 1, 1], [], []>} : vector<8x128xbf16>, vector<128x128xbf16>, vector<8x128xf32> -> vector<8x128xf32>
    %c0_245 = arith.constant 0 : index
    %c0_246 = arith.constant 0 : index
    %819 = vector.load %arg8[%c0_245, %c0_246] : memref<1x128xf32, #tpu.memory_space<vmem>>, vector<1x128xf32>
    %820 = vector.broadcast %819 : vector<1x128xf32> to vector<8x128xf32>
    %821 = arith.addf %818, %820 : vector<8x128xf32>
    %c0_247 = arith.constant 0 : index
    %c0_248 = arith.constant 0 : index
    %822 = vector.load %arg9[%c0_247, %c0_248] : memref<8x128xf32, #tpu.memory_space<vmem>>, vector<8x128xf32>
    tpu.vector_store %arg9[%c0_247, %c0_248], %821 {strides = array<i32>} : memref<8x128xf32, #tpu.memory_space<vmem>>, vector<8x128xf32>,
    return
  }
}

</mosaic_0001>

<llo_original>
// kernel: har_lstm_forward.1
$region0: #{har_lstm_forward.1}
  #allocation0 [shape = 'u32[]', space=smem, size = 0x4, offset = 0x4, fixed_abs, tag = 'smem constant byte address 0x4 - core index']
  #allocation1 [shape = 'u32[144,128]{1,0:T(1,128)}', space=vmem, size = 0x12000, scoped, tag = 'internal scratch']
  #allocation2 [shape = 'f32[128,512]{1,0:T(8,128)}', space=vmem, size = 0x40000, scoped, tag = 'scratch operand']
  #allocation3 [shape = 'f32[128,128]{1,0:T(8,128)}', space=vmem, size = 0x10000, scoped, tag = 'scratch operand']
  %s0 = inlined_call_operand.vmem [shape: bf16[128,4], index: 0, kind: input, shape index: {}]
  %s1 = inlined_call_operand.vmem [shape: bf16[4,512], index: 1, kind: input, shape index: {}]
  %s2 = inlined_call_operand.hbm [shape: bf16[128,512], index: 2, kind: input, shape index: {}]
  %s3 = inlined_call_operand.vmem [shape: f32[1,512], index: 3, kind: input, shape index: {}]
  %s4 = inlined_call_operand.hbm [shape: bf16[128,512], index: 4, kind: input, shape index: {}]
  %s5 = inlined_call_operand.hbm [shape: bf16[128,512], index: 5, kind: input, shape index: {}]
  %s6 = inlined_call_operand.vmem [shape: f32[1,512], index: 6, kind: input, shape index: {}]
  %s7 = inlined_call_operand.vmem [shape: bf16[128,128], index: 7, kind: input, shape index: {}]
  %s8 = inlined_call_operand.vmem [shape: f32[1,128], index: 8, kind: input, shape index: {}]
  %s9 = inlined_call_operand.vmem [shape: f32[8,128], index: 9, kind: output, shape index: {}]
  %s10 = sld [smem:[#allocation0]]
  $region58: #{har_lstm_forward.1} parent=0
    _
  %s12 = ssub.s32 1, %s10
  %s13 = scalar_select 0, %s12, %s10
  $region1: #{har_lstm_forward.1} parent=0
    #allocation4 [shape = 'u8[131072]{0}', space=vmem, size = 0x20000, scoped, tag = 'input window, operand 2, single buffered']
    #allocation5 [shape = 's32[1]{0}', space=sflag, size = 0x4, scoped, tag = 'scoped memory for har_lstm_forward.1']
    #allocation6 [shape = 'u8[131072]{0}', space=vmem, size = 0x20000, scoped, tag = 'input window, operand 4, single buffered']
    #allocation7 [shape = 's32[1]{0}', space=sflag, size = 0x4, scoped, tag = 'scoped memory for har_lstm_forward.1']
    #allocation8 [shape = 'u8[131072]{0}', space=vmem, size = 0x20000, scoped, tag = 'input window, operand 5, single buffered']
    %14 = vsyncpa [#allocation5], 0
    %15 = vsyncpa [#allocation7], 0
    // Predicated region
    $region2: #{har_lstm_forward.1} parent=1 // pred_check
      _
    $region3: #{har_lstm_forward.1} parent=1 // pred_check_branch
      %17 = sbr.rel (0) target = $region5
    $region4: #{har_lstm_forward.1} parent=1 // pred_region
      _
    $region5: #{har_lstm_forward.1} parent=1 // pred_fallthru
      _
    // Predicated region
    $region6: #{har_lstm_forward.1} parent=1 // pred_check
      _
    $region7: #{har_lstm_forward.1} parent=1 // pred_check_branch
      %19 = sbr.rel (0) target = $region9
    $region8: #{har_lstm_forward.1} parent=1 // pred_region
      _
    $region9: #{har_lstm_forward.1} parent=1 // pred_fallthru
      _
    // Predicated region
    $region10: #{har_lstm_forward.1} parent=1 // pred_check
      _
    $region11: #{har_lstm_forward.1} parent=1 // pred_check_branch
      %21 = sbr.rel (0) target = $region13
    $region12: #{har_lstm_forward.1} parent=1 // pred_region
      %s23 = ssub.s32 4096, 4096
      %24 = vsyncadd [#allocation5], %s23
      %s25 = sshll.u32 [#allocation4], 4
      %s26 = int_to_ptr.vmem [resolvable:$true] %s25
      %31 = dma.hbm_to_vmem [thread:$0]  %s2, 4096, %s26, [#allocation5], 256, 256, 16
    $region13: #{har_lstm_forward.1} parent=1 // pred_fallthru
      _
    // Predicated region
    $region14: #{har_lstm_forward.1} parent=1 // pred_check
      _
    $region15: #{har_lstm_forward.1} parent=1 // pred_check_branch
      %33 = sbr.rel (0) target = $region17
    $region16: #{har_lstm_forward.1} parent=1 // pred_region
      _
    $region17: #{har_lstm_forward.1} parent=1 // pred_fallthru
      _
    // Predicated region
    $region18: #{har_lstm_forward.1} parent=1 // pred_check
      _
    $region19: #{har_lstm_forward.1} parent=1 // pred_check_branch
      %35 = sbr.rel (0) target = $region21
    $region20: #{har_lstm_forward.1} parent=1 // pred_region
      %s37 = ssub.s32 4096, 4096
      %38 = vsyncadd [#allocation7], %s37
      %s39 = sshll.u32 [#allocation6], 4
      %s40 = int_to_ptr.vmem [resolvable:$true] %s39
      %45 = dma.hbm_to_vmem [thread:$0]  %s4, 4096, %s40, [#allocation7], 256, 256, 16
    $region21: #{har_lstm_forward.1} parent=1 // pred_fallthru
      _
    // Predicated region
    $region22: #{har_lstm_forward.1} parent=1 // pred_check
      _
    $region23: #{har_lstm_forward.1} parent=1 // pred_check_branch
      %47 = sbr.rel (0) target = $region25
    $region24: #{har_lstm_forward.1} parent=1 // pred_region
      %s49 = ssub.s32 4096, 4096
      %50 = vsyncadd [#allocation7], %s49
      %s51 = sshll.u32 [#allocation8], 4
      %s52 = int_to_ptr.vmem [resolvable:$true] %s51
      %57 = dma.hbm_to_vmem [thread:$0]  %s5, 4096, %s52, [#allocation7], 256, 256, 16
    $region25: #{har_lstm_forward.1} parent=1 // pred_fallthru
      _
    // Predicated region
    $region26: #{har_lstm_forward.1} parent=1 // pred_check
      _
    $region27: #{har_lstm_forward.1} parent=1 // pred_check_branch
      %59 = sbr.rel (0) target = $region29
    $region28: #{har_lstm_forward.1} parent=1 // pred_region
      _
    $region29: #{har_lstm_forward.1} parent=1 // pred_fallthru
      _
    // Predicated region
    $region30: #{har_lstm_forward.1} parent=1 // pred_check
      _
    $region31: #{har_lstm_forward.1} parent=1 // pred_check_branch
      %61 = sbr.rel (0) target = $region33
    $region32: #{har_lstm_forward.1} parent=1 // pred_region
      _
    $region33: #{har_lstm_forward.1} parent=1 // pred_fallthru
      _
    // Predicated region
    $region34: #{har_lstm_forward.1} parent=1 // pred_check
      _
    $region35: #{har_lstm_forward.1} parent=1 // pred_check_branch
      %63 = sbr.rel (0) target = $region37
    $region36: #{har_lstm_forward.1} parent=1 // pred_region
      _
    $region37: #{har_lstm_forward.1} parent=1 // pred_fallthru
      _
    // Predicated region
    $region38: #{har_lstm_forward.1} parent=1 // pred_check
      _
    $region39: #{har_lstm_forward.1} parent=1 // pred_check_branch
      %65 = sbr.rel (0) target = $region41
    $region40: #{har_lstm_forward.1} parent=1 // pred_region
      %66 = dma.done [#allocation5], 4096
    $region41: #{har_lstm_forward.1} parent=1 // pred_fallthru
      _
    // Predicated region
    $region42: #{har_lstm_forward.1} parent=1 // pred_check
      _
    $region43: #{har_lstm_forward.1} parent=1 // pred_check_branch
      %68 = sbr.rel (0) target = $region45
    $region44: #{har_lstm_forward.1} parent=1 // pred_region
      %69 = dma.done [#allocation7], 4096
    $region45: #{har_lstm_forward.1} parent=1 // pred_fallthru
      _
    // Predicated region
    $region46: #{har_lstm_forward.1} parent=1 // pred_check
      _
    $region47: #{har_lstm_forward.1} parent=1 // pred_check_branch
      %71 = sbr.rel (0) target = $region49
    $region48: #{har_lstm_forward.1} parent=1 // pred_region
      %72 = dma.done [#allocation7], 4096
    $region49: #{har_lstm_forward.1} parent=1 // pred_fallthru
      _
    %v74 = vld [vmem:[%s0] sm:$0xf]
    %v75 = vld [vmem:[%s0 + $0x4] sm:$0xf]
    %v76 = vld [vmem:[%s0 + $0x8] sm:$0xf]
    %v77 = vld [vmem:[%s0 + $0xc] sm:$0xf]
    %v78 = vld [vmem:[%s0 + $0x10] sm:$0xf]
    %v79 = vld [vmem:[%s0 + $0x14] sm:$0xf]
    %v80 = vld [vmem:[%s0 + $0x18] sm:$0xf]
    %v81 = vld [vmem:[%s0 + $0x1c] sm:$0xf]
    %v82 = vld [vmem:[%s0 + $0x20] sm:$0xf]
    %v83 = vld [vmem:[%s0 + $0x24] sm:$0xf]
    %v84 = vld [vmem:[%s0 + $0x28] sm:$0xf]
    %v85 = vld [vmem:[%s0 + $0x2c] sm:$0xf]
    %v86 = vld [vmem:[%s0 + $0x30] sm:$0xf]
    %v87 = vld [vmem:[%s0 + $0x34] sm:$0xf]
    %v88 = vld [vmem:[%s0 + $0x38] sm:$0xf]
    %v89 = vld [vmem:[%s0 + $0x3c] sm:$0xf]
    %v90 = vld [vmem:[%s1] sm:$0xff]
    %v91 = vld [vmem:[%s3] sm:$0xf]
    %v93 = vlaneseq
    %v94 = vshrl.u32 %v93, 7
    %v95 = vsub.s32 0, %v94
    %v96 = vrot.slane %v91, %v95
    %v97 = vlaneseq
    %v98 = vshrl.u32 %v97, 7
    %v99 = vsub.s32 1, %v98
    %v100 = vrot.slane %v91, %v99
    %v101 = vlaneseq
    %v102 = vshrl.u32 %v101, 7
    %v103 = vsub.s32 2, %v102
    %v104 = vrot.slane %v91, %v103
    %v105 = vlaneseq
    %v106 = vshrl.u32 %v105, 7
    %v107 = vsub.s32 3, %v106
    %v108 = vrot.slane %v91, %v107
    %v129 = vunpack.c.l.b16 %v74
    %v130 = vunpack.c.l.b16 %v75
    %v131 = vunpack.c.l.b16 %v76
    %v132 = vunpack.c.l.b16 %v77
    %v133 = vunpack.c.l.b16 %v78
    %v134 = vunpack.c.l.b16 %v79
    %v135 = vunpack.c.l.b16 %v80
    %v136 = vunpack.c.l.b16 %v81
    %v137 = vunpack.c.l.b16 %v82
    %v138 = vunpack.c.l.b16 %v83
    %v139 = vunpack.c.l.b16 %v84
    %v140 = vunpack.c.l.b16 %v85
    %v141 = vunpack.c.l.b16 %v86
    %v142 = vunpack.c.l.b16 %v87
    %v143 = vunpack.c.l.b16 %v88
    %v144 = vunpack.c.l.b16 %v89
    %v145 = vpack.c.b16 %v130, %v129
    %v146 = vpack.c.b16 %v132, %v131
    %v147 = vpack.c.b16 %v134, %v133
    %v148 = vpack.c.b16 %v136, %v135
    %v149 = vpack.c.b16 %v138, %v137
    %v150 = vpack.c.b16 %v140, %v139
    %v151 = vpack.c.b16 %v142, %v141
    %v152 = vpack.c.b16 %v144, %v143
    %v154 = vcombine.high %v90, %v90
    %v156 = vunpack.c.l.s4 1983009808
    %v157 = vunpack.c.0.s8 %v156
    %v158 = vlaneseq
    %v159 = vshrl.u32 %v158, 7
    %v160 = vsub.s32 %v157, %v159
    %v161 = vrot.slane %v90, %v160
    %v163 = vunpack.c.l.s4 1983009808
    %v164 = vunpack.c.0.s8 %v163
    %v165 = vlaneseq
    %v166 = vshrl.u32 %v165, 7
    %v167 = vsub.s32 %v164, %v166
    %v168 = vrot.slane %v154, %v167
    %v169 = vcombine.high %v161, %v161
    %v170 = vcombine.high %v168, %v168
    %vm171 = vcmask 31744
    %v173 = vsel %vm171, %v145, 0
    %v176 = vsel %vm171, %v146, 0
    %v179 = vsel %vm171, %v147, 0
    %v182 = vsel %vm171, %v148, 0
    %v185 = vsel %vm171, %v149, 0
    %v188 = vsel %vm171, %v150, 0
    %v191 = vsel %vm171, %v151, 0
    %v194 = vsel %vm171, %v152, 0
    %vm196 = vcmask 1041408
    %v198 = vsel %vm196, %v161, 0
    %v201 = vsel %vm196, %v169, 0
    %v204 = vsel %vm196, %v168, 0
    %v207 = vsel %vm196, %v170, 0
    %209 = vmatprep.subr.bf16.mxu0 %v201
    %210 = vmatpush1.bf16.msra.mxu0 %v198
    %211 = vmatprep.subr.bf16.mxu0 0
    %212 = vmatpush1.bf16.msra.mxu0 0
    %213 = vmatprep.subr.bf16.mxu0 0
    %214 = vmatpush1.bf16.msra.mxu0 0
    %215 = vmatprep.subr.bf16.mxu0 0
    %216 = vmatpush1.bf16.msra.mxu0 0
    %217 = vmatprep.subr.bf16.mxu0 0
    %218 = vmatpush1.bf16.msra.mxu0 0
    %219 = vmatprep.subr.bf16.mxu0 0
    %220 = vmatpush1.bf16.msra.mxu0 0
    %221 = vmatprep.subr.bf16.mxu0 0
    %222 = vmatpush1.bf16.msra.mxu0 0
    %223 = vmatprep.subr.bf16.mxu0 0
    %224 = vmatpush1.bf16.msra.mxu0 0
    %225 = vmatprep.subr.bf16.mxu0 0
    %226 = vmatpush1.bf16.msra.mxu0 0
    %227 = vmatprep.subr.bf16.mxu0 0
    %228 = vmatpush1.bf16.msra.mxu0 0
    %229 = vmatprep.subr.bf16.mxu0 0
    %230 = vmatpush1.bf16.msra.mxu0 0
    %231 = vmatprep.subr.bf16.mxu0 0
    %232 = vmatpush1.bf16.msra.mxu0 0
    %233 = vmatprep.subr.bf16.mxu0 0
    %234 = vmatpush1.bf16.msra.mxu0 0
    %235 = vmatprep.subr.bf16.mxu0 0
    %236 = vmatpush1.bf16.msra.mxu0 0
    %237 = vmatprep.subr.bf16.mxu0 0
    %238 = vmatpush1.bf16.msra.mxu0 0
    %239 = vmatprep.subr.bf16.mxu0 0
    %240 = vmatpush1.bf16.msra.mxu0 0
    %241 = vmatprep.mubr.bf16.mxu0 0
    %242 = vmatmul.mubr.bf16.gmra.mrb[0].mxu0 %v173
    %v243 = vpop.f32.mrb[0].mxu0
    %v244 = vadd.f32 %v96, %v243
    %v245 = vpop.f32.mrb[0].mxu0
    %v246 = vadd.f32 %v100, %v245
    %v247 = vpop.f32.mrb[0].mxu0
    %v248 = vadd.f32 %v96, %v247
    %v249 = vpop.f32.mrb[0].mxu0
    %v250 = vadd.f32 %v100, %v249
    %251 = vmatprep.mubr.bf16.mxu0 0
    %252 = vmatmul.mubr.bf16.gmra.mrb[0].mxu0 %v176
    %v253 = vpop.f32.mrb[0].mxu0
    %v254 = vadd.f32 %v96, %v253
    %v255 = vpop.f32.mrb[0].mxu0
    %v256 = vadd.f32 %v100, %v255
    %v257 = vpop.f32.mrb[0].mxu0
    %v258 = vadd.f32 %v96, %v257
    %v259 = vpop.f32.mrb[0].mxu0
    %v260 = vadd.f32 %v100, %v259
    %261 = vmatprep.mubr.bf16.mxu0 0
    %262 = vmatmul.mubr.bf16.gmra.mrb[0].mxu0 %v179
    %v263 = vpop.f32.mrb[0].mxu0
    %v264 = vadd.f32 %v96, %v263
    %v265 = vpop.f32.mrb[0].mxu0
    %v266 = vadd.f32 %v100, %v265
    %v267 = vpop.f32.mrb[0].mxu0
    %v268 = vadd.f32 %v96, %v267
    %v269 = vpop.f32.mrb[0].mxu0
    %v270 = vadd.f32 %v100, %v269
    %271 = vmatprep.mubr.bf16.mxu0 0
    %272 = vmatmul.mubr.bf16.gmra.mrb[0].mxu0 %v182
    %v273 = vpop.f32.mrb[0].mxu0
    %v274 = vadd.f32 %v96, %v273
    %v275 = vpop.f32.mrb[0].mxu0
    %v276 = vadd.f32 %v100, %v275
    %v277 = vpop.f32.mrb[0].mxu0
    %v278 = vadd.f32 %v96, %v277
    %v279 = vpop.f32.mrb[0].mxu0
    %v280 = vadd.f32 %v100, %v279
    %281 = vmatprep.mubr.bf16.mxu0 0
    %282 = vmatmul.mubr.bf16.gmra.mrb[0].mxu0 %v185
    %v283 = vpop.f32.mrb[0].mxu0
    %v284 = vadd.f32 %v96, %v283
    %v285 = vpop.f32.mrb[0].mxu0
    %v286 = vadd.f32 %v100, %v285
    %v287 = vpop.f32.mrb[0].mxu0
    %v288 = vadd.f32 %v96, %v287
    %v289 = vpop.f32.mrb[0].mxu0
    %v290 = vadd.f32 %v100, %v289
    %291 = vmatprep.mubr.bf16.mxu0 0
    %292 = vmatmul.mubr.bf16.gmra.mrb[0].mxu0 %v188
    %v293 = vpop.f32.mrb[0].mxu0
    %v294 = vadd.f32 %v96, %v293
    %v295 = vpop.f32.mrb[0].mxu0
    %v296 = vadd.f32 %v100, %v295
    %v297 = vpop.f32.mrb[0].mxu0
    %v298 = vadd.f32 %v96, %v297
    %v299 = vpop.f32.mrb[0].mxu0
    %v300 = vadd.f32 %v100, %v299
    %301 = vmatprep.mubr.bf16.mxu0 0
    %302 = vmatmul.mubr.bf16.gmra.mrb[0].mxu0 %v191
    %v303 = vpop.f32.mrb[0].mxu0
    %v304 = vadd.f32 %v96, %v303
    %v305 = vpop.f32.mrb[0].mxu0
    %v306 = vadd.f32 %v100, %v305
    %v307 = vpop.f32.mrb[0].mxu0
    %v308 = vadd.f32 %v96, %v307
    %v309 = vpop.f32.mrb[0].mxu0
    %v310 = vadd.f32 %v100, %v309
    %311 = vmatprep.mubr.bf16.mxu0 0
    %312 = vmatmul.mubr.bf16.gmra.mrb[0].mxu0 %v194
    %v313 = vpop.f32.mrb[0].mxu0
    %v314 = vadd.f32 %v96, %v313
    %v315 = vpop.f32.mrb[0].mxu0
    %v316 = vadd.f32 %v100, %v315
    %v317 = vpop.f32.mrb[0].mxu0
    %v318 = vadd.f32 %v96, %v317
    %v319 = vpop.f32.mrb[0].mxu0
    %v320 = vadd.f32 %v100, %v319
    %321 = vdwg.mxu0
    %322 = vmatprep.subr.bf16.mxu0 %v207
    %323 = vmatpush1.bf16.msra.mxu0 %v204
    %324 = vmatprep.subr.bf16.mxu0 0
    %325 = vmatpush1.bf16.msra.mxu0 0
    %326 = vmatprep.subr.bf16.mxu0 0
    %327 = vmatpush1.bf16.msra.mxu0 0
    %328 = vmatprep.subr.bf16.mxu0 0
    %329 = vmatpush1.bf16.msra.mxu0 0
    %330 = vmatprep.subr.bf16.mxu0 0
    %331 = vmatpush1.bf16.msra.mxu0 0
    %332 = vmatprep.subr.bf16.mxu0 0
    %333 = vmatpush1.bf16.msra.mxu0 0
    %334 = vmatprep.subr.bf16.mxu0 0
    %335 = vmatpush1.bf16.msra.mxu0 0
    %336 = vmatprep.subr.bf16.mxu0 0
    %337 = vmatpush1.bf16.msra.mxu0 0
    %338 = vmatprep.subr.bf16.mxu0 0
    %339 = vmatpush1.bf16.msra.mxu0 0
    %340 = vmatprep.subr.bf16.mxu0 0
    %341 = vmatpush1.bf16.msra.mxu0 0
    %342 = vmatprep.subr.bf16.mxu0 0
    %343 = vmatpush1.bf16.msra.mxu0 0
    %344 = vmatprep.subr.bf16.mxu0 0
    %345 = vmatpush1.bf16.msra.mxu0 0
    %346 = vmatprep.subr.bf16.mxu0 0
    %347 = vmatpush1.bf16.msra.mxu0 0
    %348 = vmatprep.subr.bf16.mxu0 0
    %349 = vmatpush1.bf16.msra.mxu0 0
    %350 = vmatprep.subr.bf16.mxu0 0
    %351 = vmatpush1.bf16.msra.mxu0 0
    %352 = vmatprep.subr.bf16.mxu0 0
    %353 = vmatpush1.bf16.msra.mxu0 0
    %354 = vmatprep.mubr.bf16.mxu0 0
    %355 = vmatmul.mubr.bf16.gmra.mrb[0].mxu0 %v173
    %v356 = vpop.f32.mrb[0].mxu0
    %v357 = vadd.f32 %v104, %v356
    %v358 = vpop.f32.mrb[0].mxu0
    %v359 = vadd.f32 %v108, %v358
    %v360 = vpop.f32.mrb[0].mxu0
    %v361 = vadd.f32 %v104, %v360
    %v362 = vpop.f32.mrb[0].mxu0
    %v363 = vadd.f32 %v108, %v362
    %364 = vmatprep.mubr.bf16.mxu0 0
    %365 = vmatmul.mubr.bf16.gmra.mrb[0].mxu0 %v176
    %v366 = vpop.f32.mrb[0].mxu0
    %v367 = vadd.f32 %v104, %v366
    %v368 = vpop.f32.mrb[0].mxu0
    %v369 = vadd.f32 %v108, %v368
    %v370 = vpop.f32.mrb[0].mxu0
    %v371 = vadd.f32 %v104, %v370
    %v372 = vpop.f32.mrb[0].mxu0
    %v373 = vadd.f32 %v108, %v372
    %374 = vmatprep.mubr.bf16.mxu0 0
    %375 = vmatmul.mubr.bf16.gmra.mrb[0].mxu0 %v179
    %v376 = vpop.f32.mrb[0].mxu0
    %v377 = vadd.f32 %v104, %v376
    %v378 = vpop.f32.mrb[0].mxu0
    %v379 = vadd.f32 %v108, %v378
    %v380 = vpop.f32.mrb[0].mxu0
    %v381 = vadd.f32 %v104, %v380
    %v382 = vpop.f32.mrb[0].mxu0
    %v383 = vadd.f32 %v108, %v382
    %384 = vmatprep.mubr.bf16.mxu0 0
    %385 = vmatmul.mubr.bf16.gmra.mrb[0].mxu0 %v182
    %v386 = vpop.f32.mrb[0].mxu0
    %v387 = vadd.f32 %v104, %v386
    %v388 = vpop.f32.mrb[0].mxu0
    %v389 = vadd.f32 %v108, %v388
    %v390 = vpop.f32.mrb[0].mxu0
    %v391 = vadd.f32 %v104, %v390
    %v392 = vpop.f32.mrb[0].mxu0
    %v393 = vadd.f32 %v108, %v392
    %394 = vmatprep.mubr.bf16.mxu0 0
    %395 = vmatmul.mubr.bf16.gmra.mrb[0].mxu0 %v185
    %v396 = vpop.f32.mrb[0].mxu0
    %v397 = vadd.f32 %v104, %v396
    %v398 = vpop.f32.mrb[0].mxu0
    %v399 = vadd.f32 %v108, %v398
    %v400 = vpop.f32.mrb[0].mxu0
    %v401 = vadd.f32 %v104, %v400
    %v402 = vpop.f32.mrb[0].mxu0
    %v403 = vadd.f32 %v108, %v402
    %404 = vmatprep.mubr.bf16.mxu0 0
    %405 = vmatmul.mubr.bf16.gmra.mrb[0].mxu0 %v188
    %v406 = vpop.f32.mrb[0].mxu0
    %v407 = vadd.f32 %v104, %v406
    %v408 = vpop.f32.mrb[0].mxu0
    %v409 = vadd.f32 %v108, %v408
    %v410 = vpop.f32.mrb[0].mxu0
    %v411 = vadd.f32 %v104, %v410
    %v412 = vpop.f32.mrb[0].mxu0
    %v413 = vadd.f32 %v108, %v412
    %414 = vmatprep.mubr.bf16.mxu0 0
    %415 = vmatmul.mubr.bf16.gmra.mrb[0].mxu0 %v191
    %v416 = vpop.f32.mrb[0].mxu0
    %v417 = vadd.f32 %v104, %v416
    %v418 = vpop.f32.mrb[0].mxu0
    %v419 = vadd.f32 %v108, %v418
    %v420 = vpop.f32.mrb[0].mxu0
    %v421 = vadd.f32 %v104, %v420
    %v422 = vpop.f32.mrb[0].mxu0
    %v423 = vadd.f32 %v108, %v422
    %424 = vmatprep.mubr.bf16.mxu0 0
    %425 = vmatmul.mubr.bf16.gmra.mrb[0].mxu0 %v194
    %v426 = vpop.f32.mrb[0].mxu0
    %v427 = vadd.f32 %v104, %v426
    %v428 = vpop.f32.mrb[0].mxu0
    %v429 = vadd.f32 %v108, %v428
    %v430 = vpop.f32.mrb[0].mxu0
    %v431 = vadd.f32 %v104, %v430
    %v432 = vpop.f32.mrb[0].mxu0
    %v433 = vadd.f32 %v108, %v432
    %434 = vdwg.mxu0
    %435 = vst [vmem:[#allocation2] sm:$0xff] %v244
    %436 = vst [vmem:[#allocation2 + $0x8] sm:$0xff] %v246
    %437 = vst [vmem:[#allocation2 + $0x10] sm:$0xff] %v357
    %438 = vst [vmem:[#allocation2 + $0x18] sm:$0xff] %v359
    %439 = vst [vmem:[#allocation2 + $0x20] sm:$0xff] %v248
    %440 = vst [vmem:[#allocation2 + $0x28] sm:$0xff] %v250
    %441 = vst [vmem:[#allocation2 + $0x30] sm:$0xff] %v361
    %442 = vst [vmem:[#allocation2 + $0x38] sm:$0xff] %v363
    %443 = vst [vmem:[#allocation2 + $0x40] sm:$0xff] %v254
    %444 = vst [vmem:[#allocation2 + $0x48] sm:$0xff] %v256
    %445 = vst [vmem:[#allocation2 + $0x50] sm:$0xff] %v367
    %446 = vst [vmem:[#allocation2 + $0x58] sm:$0xff] %v369
    %447 = vst [vmem:[#allocation2 + $0x60] sm:$0xff] %v258
    %448 = vst [vmem:[#allocation2 + $0x68] sm:$0xff] %v260
    %449 = vst [vmem:[#allocation2 + $0x70] sm:$0xff] %v371
    %450 = vst [vmem:[#allocation2 + $0x78] sm:$0xff] %v373
    %451 = vst [vmem:[#allocation2 + $0x80] sm:$0xff] %v264
    %452 = vst [vmem:[#allocation2 + $0x88] sm:$0xff] %v266
    %453 = vst [vmem:[#allocation2 + $0x90] sm:$0xff] %v377
    %454 = vst [vmem:[#allocation2 + $0x98] sm:$0xff] %v379
    %455 = vst [vmem:[#allocation2 + $0xa0] sm:$0xff] %v268
    %456 = vst [vmem:[#allocation2 + $0xa8] sm:$0xff] %v270
    %457 = vst [vmem:[#allocation2 + $0xb0] sm:$0xff] %v381
    %458 = vst [vmem:[#allocation2 + $0xb8] sm:$0xff] %v383
    %459 = vst [vmem:[#allocation2 + $0xc0] sm:$0xff] %v274
    %460 = vst [vmem:[#allocation2 + $0xc8] sm:$0xff] %v276
    %461 = vst [vmem:[#allocation2 + $0xd0] sm:$0xff] %v387
    %462 = vst [vmem:[#allocation2 + $0xd8] sm:$0xff] %v389
    %463 = vst [vmem:[#allocation2 + $0xe0] sm:$0xff] %v278
    %464 = vst [vmem:[#allocation2 + $0xe8] sm:$0xff] %v280
    %465 = vst [vmem:[#allocation2 + $0xf0] sm:$0xff] %v391
    %466 = vst [vmem:[#allocation2 + $0xf8] sm:$0xff] %v393
    %467 = vst [vmem:[#allocation2 + $0x100] sm:$0xff] %v284
    %468 = vst [vmem:[#allocation2 + $0x108] sm:$0xff] %v286
    %469 = vst [vmem:[#allocation2 + $0x110] sm:$0xff] %v397
    %470 = vst [vmem:[#allocation2 + $0x118] sm:$0xff] %v399
    %471 = vst [vmem:[#allocation2 + $0x120] sm:$0xff] %v288
    %472 = vst [vmem:[#allocation2 + $0x128] sm:$0xff] %v290
    %473 = vst [vmem:[#allocation2 + $0x130] sm:$0xff] %v401
    %474 = vst [vmem:[#allocation2 + $0x138] sm:$0xff] %v403
    %475 = vst [vmem:[#allocation2 + $0x140] sm:$0xff] %v294
    %476 = vst [vmem:[#allocation2 + $0x148] sm:$0xff] %v296
    %477 = vst [vmem:[#allocation2 + $0x150] sm:$0xff] %v407
    %478 = vst [vmem:[#allocation2 + $0x158] sm:$0xff] %v409
    %479 = vst [vmem:[#allocation2 + $0x160] sm:$0xff] %v298
    %480 = vst [vmem:[#allocation2 + $0x168] sm:$0xff] %v300
    %481 = vst [vmem:[#allocation2 + $0x170] sm:$0xff] %v411
    %482 = vst [vmem:[#allocation2 + $0x178] sm:$0xff] %v413
    %483 = vst [vmem:[#allocation2 + $0x180] sm:$0xff] %v304
    %484 = vst [vmem:[#allocation2 + $0x188] sm:$0xff] %v306
    %485 = vst [vmem:[#allocation2 + $0x190] sm:$0xff] %v417
    %486 = vst [vmem:[#allocation2 + $0x198] sm:$0xff] %v419
    %487 = vst [vmem:[#allocation2 + $0x1a0] sm:$0xff] %v308
    %488 = vst [vmem:[#allocation2 + $0x1a8] sm:$0xff] %v310
    %489 = vst [vmem:[#allocation2 + $0x1b0] sm:$0xff] %v421
    %490 = vst [vmem:[#allocation2 + $0x1b8] sm:$0xff] %v423
    %491 = vst [vmem:[#allocation2 + $0x1c0] sm:$0xff] %v314
    %492 = vst [vmem:[#allocation2 + $0x1c8] sm:$0xff] %v316
    %493 = vst [vmem:[#allocation2 + $0x1d0] sm:$0xff] %v427
    %494 = vst [vmem:[#allocation2 + $0x1d8] sm:$0xff] %v429
    %495 = vst [vmem:[#allocation2 + $0x1e0] sm:$0xff] %v318
    %496 = vst [vmem:[#allocation2 + $0x1e8] sm:$0xff] %v320
    %497 = vst [vmem:[#allocation2 + $0x1f0] sm:$0xff] %v431
    %498 = vst [vmem:[#allocation2 + $0x1f8] sm:$0xff] %v433
    %s499 = smul.u32 0, 4
    %s500 = smul.addr %s499, 8
    %s501 = scalar_lea.vmem [#allocation2], %s500
    %v502 = vld [vmem:[%s501] sm:$0xff]
    %v503 = vld [vmem:[%s501 + $0x8] sm:$0xff]
    %v504 = vld [vmem:[%s501 + $0x10] sm:$0xff]
    %v505 = vld [vmem:[%s501 + $0x18] sm:$0xff]
    %v506 = vld [vmem:[#allocation4] sm:$0xff]
    %v507 = vld [vmem:[#allocation4 + $0x8] sm:$0xff]
    %v508 = vld [vmem:[#allocation4 + $0x10] sm:$0xff]
    %v509 = vld [vmem:[#allocation4 + $0x18] sm:$0xff]
    %v510 = vld [vmem:[#allocation4 + $0x20] sm:$0xff]
    %v511 = vld [vmem:[#allocation4 + $0x28] sm:$0xff]
    %v512 = vld [vmem:[#allocation4 + $0x30] sm:$0xff]
    %v513 = vld [vmem:[#allocation4 + $0x38] sm:$0xff]
    %v514 = vld [vmem:[#allocation4 + $0x40] sm:$0xff]
    %v515 = vld [vmem:[#allocation4 + $0x48] sm:$0xff]
    %v516 = vld [vmem:[#allocation4 + $0x50] sm:$0xff]
    %v517 = vld [vmem:[#allocation4 + $0x58] sm:$0xff]
    %v518 = vld [vmem:[#allocation4 + $0x60] sm:$0xff]
    %v519 = vld [vmem:[#allocation4 + $0x68] sm:$0xff]
    %v520 = vld [vmem:[#allocation4 + $0x70] sm:$0xff]
    %v521 = vld [vmem:[#allocation4 + $0x78] sm:$0xff]
    %v522 = vld [vmem:[#allocation4 + $0x80] sm:$0xff]
    %v523 = vld [vmem:[#allocation4 + $0x88] sm:$0xff]
    %v524 = vld [vmem:[#allocation4 + $0x90] sm:$0xff]
    %v525 = vld [vmem:[#allocation4 + $0x98] sm:$0xff]
    %v526 = vld [vmem:[#allocation4 + $0xa0] sm:$0xff]
    %v527 = vld [vmem:[#allocation4 + $0xa8] sm:$0xff]
    %v528 = vld [vmem:[#allocation4 + $0xb0] sm:$0xff]
    %v529 = vld [vmem:[#allocation4 + $0xb8] sm:$0xff]
    %v530 = vld [vmem:[#allocation4 + $0xc0] sm:$0xff]
    %v531 = vld [vmem:[#allocation4 + $0xc8] sm:$0xff]
    %v532 = vld [vmem:[#allocation4 + $0xd0] sm:$0xff]
    %v533 = vld [vmem:[#allocation4 + $0xd8] sm:$0xff]
    %v534 = vld [vmem:[#allocation4 + $0xe0] sm:$0xff]
    %v535 = vld [vmem:[#allocation4 + $0xe8] sm:$0xff]
    %v536 = vld [vmem:[#allocation4 + $0xf0] sm:$0xff]
    %v537 = vld [vmem:[#allocation4 + $0xf8] sm:$0xff]
    %v570 = vunpack.c.l.b16 %v506
    %v571 = vunpack.c.h.b16 %v506
    %v572 = vunpack.c.l.b16 %v507
    %v573 = vunpack.c.h.b16 %v507
    %v574 = vunpack.c.l.b16 %v508
    %v575 = vunpack.c.h.b16 %v508
    %v576 = vunpack.c.l.b16 %v509
    %v577 = vunpack.c.h.b16 %v509
    %v578 = vunpack.c.l.b16 %v510
    %v579 = vunpack.c.h.b16 %v510
    %v580 = vunpack.c.l.b16 %v511
    %v581 = vunpack.c.h.b16 %v511
    %v582 = vunpack.c.l.b16 %v512
    %v583 = vunpack.c.h.b16 %v512
    %v584 = vunpack.c.l.b16 %v513
    %v585 = vunpack.c.h.b16 %v513
    %v586 = vunpack.c.l.b16 %v514
    %v587 = vunpack.c.h.b16 %v514
    %v588 = vunpack.c.l.b16 %v515
    %v589 = vunpack.c.h.b16 %v515
    %v590 = vunpack.c.l.b16 %v516
    %v591 = vunpack.c.h.b16 %v516
    %v592 = vunpack.c.l.b16 %v517
    %v593 = vunpack.c.h.b16 %v517
    %v594 = vunpack.c.l.b16 %v518
    %v595 = vunpack.c.h.b16 %v518
    %v596 = vunpack.c.l.b16 %v519
    %v597 = vunpack.c.h.b16 %v519
    %v598 = vunpack.c.l.b16 %v520
    %v599 = vunpack.c.h.b16 %v520
    %v600 = vunpack.c.l.b16 %v521
    %v601 = vunpack.c.h.b16 %v521
    %v602 = vunpack.c.l.b16 %v522
    %v603 = vunpack.c.h.b16 %v522
    %v604 = vunpack.c.l.b16 %v523
    %v605 = vunpack.c.h.b16 %v523
    %v606 = vunpack.c.l.b16 %v524
    %v607 = vunpack.c.h.b16 %v524
    %v608 = vunpack.c.l.b16 %v525
    %v609 = vunpack.c.h.b16 %v525
    %v610 = vunpack.c.l.b16 %v526
    %v611 = vunpack.c.h.b16 %v526
    %v612 = vunpack.c.l.b16 %v527
    %v613 = vunpack.c.h.b16 %v527
    %v614 = vunpack.c.l.b16 %v528
    %v615 = vunpack.c.h.b16 %v528
    %v616 = vunpack.c.l.b16 %v529
    %v617 = vunpack.c.h.b16 %v529
    %v618 = vunpack.c.l.b16 %v530
    %v619 = vunpack.c.h.b16 %v530
    %v620 = vunpack.c.l.b16 %v531
    %v621 = vunpack.c.h.b16 %v531
    %v622 = vunpack.c.l.b16 %v532
    %v623 = vunpack.c.h.b16 %v532
    %v624 = vunpack.c.l.b16 %v533
    %v625 = vunpack.c.h.b16 %v533
    %v626 = vunpack.c.l.b16 %v534
    %v627 = vunpack.c.h.b16 %v534
    %v628 = vunpack.c.l.b16 %v535
    %v629 = vunpack.c.h.b16 %v535
    %v630 = vunpack.c.l.b16 %v536
    %v631 = vunpack.c.h.b16 %v536
    %v632 = vunpack.c.l.b16 %v537
    %v633 = vunpack.c.h.b16 %v537
    %v634 = vpack.c.b16 %v574, %v570
    %v635 = vpack.c.b16 %v575, %v571
    %v636 = vpack.c.b16 %v576, %v572
    %v637 = vpack.c.b16 %v577, %v573
    %v638 = vpack.c.b16 %v582, %v578
    %v639 = vpack.c.b16 %v583, %v579
    %v640 = vpack.c.b16 %v584, %v580
    %v641 = vpack.c.b16 %v585, %v581
    %v642 = vpack.c.b16 %v590, %v586
    %v643 = vpack.c.b16 %v591, %v587
    %v644 = vpack.c.b16 %v592, %v588
    %v645 = vpack.c.b16 %v593, %v589
    %v646 = vpack.c.b16 %v598, %v594
    %v647 = vpack.c.b16 %v599, %v595
    %v648 = vpack.c.b16 %v600, %v596
    %v649 = vpack.c.b16 %v601, %v597
    %v650 = vpack.c.b16 %v606, %v602
    %v651 = vpack.c.b16 %v607, %v603
    %v652 = vpack.c.b16 %v608, %v604
    %v653 = vpack.c.b16 %v609, %v605
    %v654 = vpack.c.b16 %v614, %v610
    %v655 = vpack.c.b16 %v615, %v611
    %v656 = vpack.c.b16 %v616, %v612
    %v657 = vpack.c.b16 %v617, %v613
    %v658 = vpack.c.b16 %v622, %v618
    %v659 = vpack.c.b16 %v623, %v619
    %v660 = vpack.c.b16 %v624, %v620
    %v661 = vpack.c.b16 %v625, %v621
    %v662 = vpack.c.b16 %v630, %v626
    %v663 = vpack.c.b16 %v631, %v627
    %v664 = vpack.c.b16 %v632, %v628
    %v665 = vpack.c.b16 %v633, %v629
    %698 = vmatprep.subr.bf16.mxu0 %v635
    %699 = vmatpush1.bf16.msra.mxu0 %v634
    %700 = vmatprep.subr.bf16.mxu0 %v639
    %701 = vmatpush1.bf16.msra.mxu0 %v638
    %702 = vmatprep.subr.bf16.mxu0 %v643
    %703 = vmatpush1.bf16.msra.mxu0 %v642
    %704 = vmatprep.subr.bf16.mxu0 %v647
    %705 = vmatpush1.bf16.msra.mxu0 %v646
    %706 = vmatprep.subr.bf16.mxu0 %v651
    %707 = vmatpush1.bf16.msra.mxu0 %v650
    %708 = vmatprep.subr.bf16.mxu0 %v655
    %709 = vmatpush1.bf16.msra.mxu0 %v654
    %710 = vmatprep.subr.bf16.mxu0 %v659
    %711 = vmatpush1.bf16.msra.mxu0 %v658
    %712 = vmatprep.subr.bf16.mxu0 %v663
    %713 = vmatpush1.bf16.msra.mxu0 %v662
    %714 = vmatprep.subr.bf16.mxu0 0
    %715 = vmatpush1.bf16.msra.mxu0 0
    %716 = vmatprep.subr.bf16.mxu0 0
    %717 = vmatpush1.bf16.msra.mxu0 0
    %718 = vmatprep.subr.bf16.mxu0 0
    %719 = vmatpush1.bf16.msra.mxu0 0
    %720 = vmatprep.subr.bf16.mxu0 0
    %721 = vmatpush1.bf16.msra.mxu0 0
    %722 = vmatprep.subr.bf16.mxu0 0
    %723 = vmatpush1.bf16.msra.mxu0 0
    %724 = vmatprep.subr.bf16.mxu0 0
    %725 = vmatpush1.bf16.msra.mxu0 0
    %726 = vmatprep.subr.bf16.mxu0 0
    %727 = vmatpush1.bf16.msra.mxu0 0
    %728 = vmatprep.subr.bf16.mxu0 0
    %729 = vmatpush1.bf16.msra.mxu0 0
    %730 = vmatprep.mubr.bf16.mxu0 0
    %731 = vmatmul.mubr.bf16.gmra.mrb[0].mxu0 0
    %v732 = vpop.f32.mrb[0].mxu0
    %v733 = vadd.f32 0.0, %v732
    %v734 = vpop.f32.mrb[0].mxu0
    %v735 = vadd.f32 0.0, %v734
    %v736 = vpop.f32.mrb[0].mxu0
    %v737 = vpop.f32.mrb[0].mxu0
    %738 = vdwg.mxu0
    %739 = vmatprep.subr.bf16.mxu0 %v637
    %740 = vmatpush1.bf16.msra.mxu0 %v636
    %741 = vmatprep.subr.bf16.mxu0 %v641
    %742 = vmatpush1.bf16.msra.mxu0 %v640
    %743 = vmatprep.subr.bf16.mxu0 %v645
    %744 = vmatpush1.bf16.msra.mxu0 %v644
    %745 = vmatprep.subr.bf16.mxu0 %v649
    %746 = vmatpush1.bf16.msra.mxu0 %v648
    %747 = vmatprep.subr.bf16.mxu0 %v653
    %748 = vmatpush1.bf16.msra.mxu0 %v652
    %749 = vmatprep.subr.bf16.mxu0 %v657
    %750 = vmatpush1.bf16.msra.mxu0 %v656
    %751 = vmatprep.subr.bf16.mxu0 %v661
    %752 = vmatpush1.bf16.msra.mxu0 %v660
    %753 = vmatprep.subr.bf16.mxu0 %v665
    %754 = vmatpush1.bf16.msra.mxu0 %v664
    %755 = vmatprep.subr.bf16.mxu0 0
    %756 = vmatpush1.bf16.msra.mxu0 0
    %757 = vmatprep.subr.bf16.mxu0 0
    %758 = vmatpush1.bf16.msra.mxu0 0
    %759 = vmatprep.subr.bf16.mxu0 0
    %760 = vmatpush1.bf16.msra.mxu0 0
    %761 = vmatprep.subr.bf16.mxu0 0
    %762 = vmatpush1.bf16.msra.mxu0 0
    %763 = vmatprep.subr.bf16.mxu0 0
    %764 = vmatpush1.bf16.msra.mxu0 0
    %765 = vmatprep.subr.bf16.mxu0 0
    %766 = vmatpush1.bf16.msra.mxu0 0
    %767 = vmatprep.subr.bf16.mxu0 0
    %768 = vmatpush1.bf16.msra.mxu0 0
    %769 = vmatprep.subr.bf16.mxu0 0
    %770 = vmatpush1.bf16.msra.mxu0 0
    %771 = vmatprep.mubr.bf16.mxu0 0
    %772 = vmatmul.mubr.bf16.gmra.mrb[0].mxu0 0
    %v773 = vpop.f32.mrb[0].mxu0
    %v774 = vadd.f32 0.0, %v773
    %v775 = vpop.f32.mrb[0].mxu0
    %v776 = vadd.f32 0.0, %v775
    %v777 = vpop.f32.mrb[0].mxu0
    %v778 = vpop.f32.mrb[0].mxu0
    %779 = vdwg.mxu0
    %v780 = vadd.f32 %v502, %v733
    %v781 = vadd.f32 %v503, %v735
    %v782 = vadd.f32 %v504, %v774
    %v783 = vadd.f32 %v505, %v776
    %v784 = vxor.u32 %v780, 2147483648
    %v785 = vxor.u32 %v781, 2147483648
    %v786 = vxor.u32 %v782, 2147483648
    %v787 = vmul.f32 %v784, 1.442695
    %v788 = vpow.pop %v787
    %v789 = vmul.f32 %v785, 1.442695
    %v790 = vpow.pop %v789
    %v791 = vmul.f32 %v786, 1.442695
    %v792 = vpow.pop %v791
    %v793 = vadd.f32 %v788, 1.0
    %v794 = vadd.f32 %v790, 1.0
    %v795 = vadd.f32 %v792, 1.0
    %v796 = vrcp.pop %v793
    %v797 = vmul.f32 1.0, %v796
    %v798 = vrcp.pop %v794
    %v799 = vmul.f32 1.0, %v798
    %v800 = vrcp.pop %v795
    %v801 = vmul.f32 1.0, %v800
    %v802 = vtanh.pop %v783
    %v803 = vmul.f32 %v799, 0.0
    %v804 = vmul.f32 %v797, %v802
    %v805 = vadd.f32 %v803, %v804
    %v806 = vtanh.pop %v805
    %v807 = vmul.f32 %v801, %v806
    %808 = vst [vmem:[#allocation3] sm:$0xff] %v807
    %s809 = smul.u32 1, 4
    %s810 = smul.addr %s809, 8
    %s811 = scalar_lea.vmem [#allocation2], %s810
    %v812 = vld [vmem:[%s811] sm:$0xff]
    %v813 = vld [vmem:[%s811 + $0x8] sm:$0xff]
    %v814 = vld [vmem:[%s811 + $0x10] sm:$0xff]
    %v815 = vld [vmem:[%s811 + $0x18] sm:$0xff]
    %v816 = vpack.c.bf16 %v807, %v807
    %v817 = vld [vmem:[#allocation4] sm:$0xff]
    %v818 = vld [vmem:[#allocation4 + $0x8] sm:$0xff]
    %v819 = vld [vmem:[#allocation4 + $0x10] sm:$0xff]
    %v820 = vld [vmem:[#allocation4 + $0x18] sm:$0xff]
    %v821 = vld [vmem:[#allocation4 + $0x20] sm:$0xff]
    %v822 = vld [vmem:[#allocation4 + $0x28] sm:$0xff]
    %v823 = vld [vmem:[#allocation4 + $0x30] sm:$0xff]
    %v824 = vld [vmem:[#allocation4 + $0x38] sm:$0xff]
    %v825 = vld [vmem:[#allocation4 + $0x40] sm:$0xff]
    %v826 = vld [vmem:[#allocation4 + $0x48] sm:$0xff]
    %v827 = vld [vmem:[#allocation4 + $0x50] sm:$0xff]
    %v828 = vld [vmem:[#allocation4 + $0x58] sm:$0xff]
    %v829 = vld [vmem:[#allocation4 + $0x60] sm:$0xff]
    %v830 = vld [vmem:[#allocation4 + $0x68] sm:$0xff]
    %v831 = vld [vmem:[#allocation4 + $0x70] sm:$0xff]
    %v832 = vld [vmem:[#allocation4 + $0x78] sm:$0xff]
    %v833 = vld [vmem:[#allocation4 + $0x80] sm:$0xff]
    %v834 = vld [vmem:[#allocation4 + $0x88] sm:$0xff]
    %v835 = vld [vmem:[#allocation4 + $0x90] sm:$0xff]
    %v836 = vld [vmem:[#allocation4 + $0x98] sm:$0xff]
    %v837 = vld [vmem:[#allocation4 + $0xa0] sm:$0xff]
    %v838 = vld [vmem:[#allocation4 + $0xa8] sm:$0xff]
    %v839 = vld [vmem:[#allocation4 + $0xb0] sm:$0xff]
    %v840 = vld [vmem:[#allocation4 + $0xb8] sm:$0xff]
    %v841 = vld [vmem:[#allocation4 + $0xc0] sm:$0xff]
    %v842 = vld [vmem:[#allocation4 + $0xc8] sm:$0xff]
    %v843 = vld [vmem:[#allocation4 + $0xd0] sm:$0xff]
    %v844 = vld [vmem:[#allocation4 + $0xd8] sm:$0xff]
    %v845 = vld [vmem:[#allocation4 + $0xe0] sm:$0xff]
    %v846 = vld [vmem:[#allocation4 + $0xe8] sm:$0xff]
    %v847 = vld [vmem:[#allocation4 + $0xf0] sm:$0xff]
    %v848 = vld [vmem:[#allocation4 + $0xf8] sm:$0xff]
    %v881 = vunpack.c.l.b16 %v817
    %v882 = vunpack.c.h.b16 %v817
    %v883 = vunpack.c.l.b16 %v818
    %v884 = vunpack.c.h.b16 %v818
    %v885 = vunpack.c.l.b16 %v819
    %v886 = vunpack.c.h.b16 %v819
    %v887 = vunpack.c.l.b16 %v820
    %v888 = vunpack.c.h.b16 %v820
    %v889 = vunpack.c.l.b16 %v821
    %v890 = vunpack.c.h.b16 %v821
    %v891 = vunpack.c.l.b16 %v822
    %v892 = vunpack.c.h.b16 %v822
    %v893 = vunpack.c.l.b16 %v823
    %v894 = vunpack.c.h.b16 %v823
    %v895 = vunpack.c.l.b16 %v824
    %v896 = vunpack.c.h.b16 %v824
    %v897 = vunpack.c.l.b16 %v825
    %v898 = vunpack.c.h.b16 %v825
    %v899 = vunpack.c.l.b16 %v826
    %v900 = vunpack.c.h.b16 %v826
    %v901 = vunpack.c.l.b16 %v827
    %v902 = vunpack.c.h.b16 %v827
    %v903 = vunpack.c.l.b16 %v828
    %v904 = vunpack.c.h.b16 %v828
    %v905 = vunpack.c.l.b16 %v829
    %v906 = vunpack.c.h.b16 %v829
    %v907 = vunpack.c.l.b16 %v830
    %v908 = vunpack.c.h.b16 %v830
    %v909 = vunpack.c.l.b16 %v831
    %v910 = vunpack.c.h.b16 %v831
    %v911 = vunpack.c.l.b16 %v832
    %v912 = vunpack.c.h.b16 %v832
    %v913 = vunpack.c.l.b16 %v833
    %v914 = vunpack.c.h.b16 %v833
    %v915 = vunpack.c.l.b16 %v834
    %v916 = vunpack.c.h.b16 %v834
    %v917 = vunpack.c.l.b16 %v835
    %v918 = vunpack.c.h.b16 %v835
    %v919 = vunpack.c.l.b16 %v836
    %v920 = vunpack.c.h.b16 %v836
    %v921 = vunpack.c.l.b16 %v837
    %v922 = vunpack.c.h.b16 %v837
    %v923 = vunpack.c.l.b16 %v838
    %v924 = vunpack.c.h.b16 %v838
    %v925 = vunpack.c.l.b16 %v839
    %v926 = vunpack.c.h.b16 %v839
    %v927 = vunpack.c.l.b16 %v840
    %v928 = vunpack.c.h.b16 %v840
    %v929 = vunpack.c.l.b16 %v841
    %v930 = vunpack.c.h.b16 %v841
    %v931 = vunpack.c.l.b16 %v842
    %v932 = vunpack.c.h.b16 %v842
    %v933 = vunpack.c.l.b16 %v843
    %v934 = vunpack.c.h.b16 %v843
    %v935 = vunpack.c.l.b16 %v844
    %v936 = vunpack.c.h.b16 %v844
    %v937 = vunpack.c.l.b16 %v845
    %v938 = vunpack.c.h.b16 %v845
    %v939 = vunpack.c.l.b16 %v846
    %v940 = vunpack.c.h.b16 %v846
    %v941 = vunpack.c.l.b16 %v847
    %v942 = vunpack.c.h.b16 %v847
    %v943 = vunpack.c.l.b16 %v848
    %v944 = vunpack.c.h.b16 %v848
    %v945 = vpack.c.b16 %v885, %v881
    %v946 = vpack.c.b16 %v886, %v882
    %v947 = vpack.c.b16 %v887, %v883
    %v948 = vpack.c.b16 %v888, %v884
    %v949 = vpack.c.b16 %v893, %v889
    %v950 = vpack.c.b16 %v894, %v890
    %v951 = vpack.c.b16 %v895, %v891
    %v952 = vpack.c.b16 %v896, %v892
    %v953 = vpack.c.b16 %v901, %v897
    %v954 = vpack.c.b16 %v902, %v898
    %v955 = vpack.c.b16 %v903, %v899
    %v956 = vpack.c.b16 %v904, %v900
    %v957 = vpack.c.b16 %v909, %v905
    %v958 = vpack.c.b16 %v910, %v906
    %v959 = vpack.c.b16 %v911, %v907
    %v960 = vpack.c.b16 %v912, %v908
    %v961 = vpack.c.b16 %v917, %v913
    %v962 = vpack.c.b16 %v918, %v914
    %v963 = vpack.c.b16 %v919, %v915
    %v964 = vpack.c.b16 %v920, %v916
    %v965 = vpack.c.b16 %v925, %v921
    %v966 = vpack.c.b16 %v926, %v922
    %v967 = vpack.c.b16 %v927, %v923
    %v968 = vpack.c.b16 %v928, %v924
    %v969 = vpack.c.b16 %v933, %v929
    %v970 = vpack.c.b16 %v934, %v930
    %v971 = vpack.c.b16 %v935, %v931
    %v972 = vpack.c.b16 %v936, %v932
    %v973 = vpack.c.b16 %v941, %v937
    %v974 = vpack.c.b16 %v942, %v938
    %v975 = vpack.c.b16 %v943, %v939
    %v976 = vpack.c.b16 %v944, %v940
    %1009 = vmatprep.subr.bf16.mxu0 %v946
    %1010 = vmatpush1.bf16.msra.mxu0 %v945
    %1011 = vmatprep.subr.bf16.mxu0 %v950
    %1012 = vmatpush1.bf16.msra.mxu0 %v949
    %1013 = vmatprep.subr.bf16.mxu0 %v954
    %1014 = vmatpush1.bf16.msra.mxu0 %v953
    %1015 = vmatprep.subr.bf16.mxu0 %v958
    %1016 = vmatpush1.bf16.msra.mxu0 %v957
    %1017 = vmatprep.subr.bf16.mxu0 %v962
    %1018 = vmatpush1.bf16.msra.mxu0 %v961
    %1019 = vmatprep.subr.bf16.mxu0 %v966
    %1020 = vmatpush1.bf16.msra.mxu0 %v965
    %1021 = vmatprep.subr.bf16.mxu0 %v970
    %1022 = vmatpush1.bf16.msra.mxu0 %v969
    %1023 = vmatprep.subr.bf16.mxu0 %v974
    %1024 = vmatpush1.bf16.msra.mxu0 %v973
    %1025 = vmatprep.subr.bf16.mxu0 0
    %1026 = vmatpush1.bf16.msra.mxu0 0
    %1027 = vmatprep.subr.bf16.mxu0 0
    %1028 = vmatpush1.bf16.msra.mxu0 0
    %1029 = vmatprep.subr.bf16.mxu0 0
    %1030 = vmatpush1.bf16.msra.mxu0 0
    %1031 = vmatprep.subr.bf16.mxu0 0
    %1032 = vmatpush1.bf16.msra.mxu0 0
    %1033 = vmatprep.subr.bf16.mxu0 0
    %1034 = vmatpush1.bf16.msra.mxu0 0
    %1035 = vmatprep.subr.bf16.mxu0 0
    %1036 = vmatpush1.bf16.msra.mxu0 0
    %1037 = vmatprep.subr.bf16.mxu0 0
    %1038 = vmatpush1.bf16.msra.mxu0 0
    %1039 = vmatprep.subr.bf16.mxu0 0
    %1040 = vmatpush1.bf16.msra.mxu0 0
    %1041 = vmatprep.mubr.bf16.mxu0 0
    %1042 = vmatmul.mubr.bf16.gmra.mrb[0].mxu0 %v816
    %v1043 = vpop.f32.mrb[0].mxu0
    %v1044 = vadd.f32 0.0, %v1043
    %v1045 = vpop.f32.mrb[0].mxu0
    %v1046 = vadd.f32 0.0, %v1045
    %v1047 = vpop.f32.mrb[0].mxu0
    %v1048 = vpop.f32.mrb[0].mxu0
    %1049 = vdwg.mxu0
    %1050 = vmatprep.subr.bf16.mxu0 %v948
    %1051 = vmatpush1.bf16.msra.mxu0 %v947
    %1052 = vmatprep.subr.bf16.mxu0 %v952
    %1053 = vmatpush1.bf16.msra.mxu0 %v951
    %1054 = vmatprep.subr.bf16.mxu0 %v956
    %1055 = vmatpush1.bf16.msra.mxu0 %v955
    %1056 = vmatprep.subr.bf16.mxu0 %v960
    %1057 = vmatpush1.bf16.msra.mxu0 %v959
    %1058 = vmatprep.subr.bf16.mxu0 %v964
    %1059 = vmatpush1.bf16.msra.mxu0 %v963
    %1060 = vmatprep.subr.bf16.mxu0 %v968
    %1061 = vmatpush1.bf16.msra.mxu0 %v967
    %1062 = vmatprep.subr.bf16.mxu0 %v972
    %1063 = vmatpush1.bf16.msra.mxu0 %v971
    %1064 = vmatprep.subr.bf16.mxu0 %v976
    %1065 = vmatpush1.bf16.msra.mxu0 %v975
    %1066 = vmatprep.subr.bf16.mxu0 0
    %1067 = vmatpush1.bf16.msra.mxu0 0
    %1068 = vmatprep.subr.bf16.mxu0 0
    %1069 = vmatpush1.bf16.msra.mxu0 0
    %1070 = vmatprep.subr.bf16.mxu0 0
    %1071 = vmatpush1.bf16.msra.mxu0 0
    %1072 = vmatprep.subr.bf16.mxu0 0
    %1073 = vmatpush1.bf16.msra.mxu0 0
    %1074 = vmatprep.subr.bf16.mxu0 0
    %1075 = vmatpush1.bf16.msra.mxu0 0
    %1076 = vmatprep.subr.bf16.mxu0 0
    %1077 = vmatpush1.bf16.msra.mxu0 0
    %1078 = vmatprep.subr.bf16.mxu0 0
    %1079 = vmatpush1.bf16.msra.mxu0 0
    %1080 = vmatprep.subr.bf16.mxu0 0
    %1081 = vmatpush1.bf16.msra.mxu0 0
    %1082 = vmatprep.mubr.bf16.mxu0 0
    %1083 = vmatmul.mubr.bf16.gmra.mrb[0].mxu0 %v816
    %v1084 = vpop.f32.mrb[0].mxu0
    %v1085 = vadd.f32 0.0, %v1084
    %v1086 = vpop.f32.mrb[0].mxu0
    %v1087 = vadd.f32 0.0, %v1086
    %v1088 = vpop.f32.mrb[0].mxu0
    %v1089 = vpop.f32.mrb[0].mxu0
    %1090 = vdwg.mxu0
    %v1091 = vadd.f32 %v812, %v1044
    %v1092 = vadd.f32 %v813, %v1046
    %v1093 = vadd.f32 %v814, %v1085
    %v1094 = vadd.f32 %v815, %v1087
    %v1095 = vxor.u32 %v1091, 2147483648
    %v1096 = vxor.u32 %v1092, 2147483648
    %v1097 = vxor.u32 %v1093, 2147483648
    %v1098 = vmul.f32 %v1095, 1.442695
    %v1099 = vpow.pop %v1098
    %v1100 = vmul.f32 %v1096, 1.442695
    %v1101 = vpow.pop %v1100
    %v1102 = vmul.f32 %v1097, 1.442695
    %v1103 = vpow.pop %v1102
    %v1104 = vadd.f32 %v1099, 1.0
    %v1105 = vadd.f32 %v1101, 1.0
    %v1106 = vadd.f32 %v1103, 1.0
    %v1107 = vrcp.pop %v1104
    %v1108 = vmul.f32 1.0, %v1107
    %v1109 = vrcp.pop %v1105
    %v1110 = vmul.f32 1.0, %v1109
    %v1111 = vrcp.pop %v1106
    %v1112 = vmul.f32 1.0, %v1111
    %v1113 = vtanh.pop %v1094
    %v1114 = vmul.f32 %v1110, %v805
    %v1115 = vmul.f32 %v1108, %v1113
    %v1116 = vadd.f32 %v1114, %v1115
    %v1117 = vtanh.pop %v1116
    %v1118 = vmul.f32 %v1112, %v1117
    %s1119 = scalar_lea.vmem [#allocation3], 8
    %1120 = vst [vmem:[%s1119] sm:$0xff] %v1118
    %s1121 = smul.u32 2, 4
    %s1122 = smul.addr %s1121, 8
    %s1123 = scalar_lea.vmem [#allocation2], %s1122
    %v1124 = vld [vmem:[%s1123] sm:$0xff]
    %v1125 = vld [vmem:[%s1123 + $0x8] sm:$0xff]
    %v1126 = vld [vmem:[%s1123 + $0x10] sm:$0xff]
    %v1127 = vld [vmem:[%s1123 + $0x18] sm:$0xff]
    %v1128 = vpack.c.bf16 %v1118, %v1118
    %v1129 = vld [vmem:[#allocation4] sm:$0xff]
    %v1130 = vld [vmem:[#allocation4 + $0x8] sm:$0xff]
    %v1131 = vld [vmem:[#allocation4 + $0x10] sm:$0xff]
    %v1132 = vld [vmem:[#allocation4 + $0x18] sm:$0xff]
    %v1133 = vld [vmem:[#allocation4 + $0x20] sm:$0xff]
    %v1134 = vld [vmem:[#allocation4 + $0x28] sm:$0xff]
    %v1135 = vld [vmem:[#allocation4 + $0x30] sm:$0xff]
    %v1136 = vld [vmem:[#allocation4 + $0x38] sm:$0xff]
    %v1137 = vld [vmem:[#allocation4 + $0x40] sm:$0xff]
    %v1138 = vld [vmem:[#allocation4 + $0x48] sm:$0xff]
    %v1139 = vld [vmem:[#allocation4 + $0x50] sm:$0xff]
    %v1140 = vld [vmem:[#allocation4 + $0x58] sm:$0xff]
    %v1141 = vld [vmem:[#allocation4 + $0x60] sm:$0xff]
    %v1142 = vld [vmem:[#allocation4 + $0x68] sm:$0xff]
    %v1143 = vld [vmem:[#allocation4 + $0x70] sm:$0xff]
    %v1144 = vld [vmem:[#allocation4 + $0x78] sm:$0xff]
    %v1145 = vld [vmem:[#allocation4 + $0x80] sm:$0xff]
    %v1146 = vld [vmem:[#allocation4 + $0x88] sm:$0xff]
    %v1147 = vld [vmem:[#allocation4 + $0x90] sm:$0xff]
    %v1148 = vld [vmem:[#allocation4 + $0x98] sm:$0xff]
    %v1149 = vld [vmem:[#allocation4 + $0xa0] sm:$0xff]
    %v1150 = vld [vmem:[#allocation4 + $0xa8] sm:$0xff]
    %v1151 = vld [vmem:[#allocation4 + $0xb0] sm:$0xff]
    %v1152 = vld [vmem:[#allocation4 + $0xb8] sm:$0xff]
    %v1153 = vld [vmem:[#allocation4 + $0xc0] sm:$0xff]
    %v1154 = vld [vmem:[#allocation4 + $0xc8] sm:$0xff]
    %v1155 = vld [vmem:[#allocation4 + $0xd0] sm:$0xff]
    %v1156 = vld [vmem:[#allocation4 + $0xd8] sm:$0xff]
    %v1157 = vld [vmem:[#allocation4 + $0xe0] sm:$0xff]
    %v1158 = vld [vmem:[#allocation4 + $0xe8] sm:$0xff]
    %v1159 = vld [vmem:[#allocation4 + $0xf0] sm:$0xff]
    %v1160 = vld [vmem:[#allocation4 + $0xf8] sm:$0xff]
    %v1193 = vunpack.c.l.b16 %v1129
    %v1194 = vunpack.c.h.b16 %v1129
    %v1195 = vunpack.c.l.b16 %v1130
    %v1196 = vunpack.c.h.b16 %v1130
    %v1197 = vunpack.c.l.b16 %v1131
    %v1198 = vunpack.c.h.b16 %v1131
    %v1199 = vunpack.c.l.b16 %v1132
    %v1200 = vunpack.c.h.b16 %v1132
    %v1201 = vunpack.c.l.b16 %v1133
    %v1202 = vunpack.c.h.b16 %v1133
    %v1203 = vunpack.c.l.b16 %v1134
    %v1204 = vunpack.c.h.b16 %v1134
    %v1205 = vunpack.c.l.b16 %v1135
    %v1206 = vunpack.c.h.b16 %v1135
    %v1207 = vunpack.c.l.b16 %v1136
    %v1208 = vunpack.c.h.b16 %v1136
    %v1209 = vunpack.c.l.b16 %v1137
    %v1210 = vunpack.c.h.b16 %v1137
    %v1211 = vunpack.c.l.b16 %v1138
    %v1212 = vunpack.c.h.b16 %v1138
    %v1213 = vunpack.c.l.b16 %v1139
    %v1214 = vunpack.c.h.b16 %v1139
    %v1215 = vunpack.c.l.b16 %v1140
    %v1216 = vunpack.c.h.b16 %v1140
    %v1217 = vunpack.c.l.b16 %v1141
    %v1218 = vunpack.c.h.b16 %v1141
    %v1219 = vunpack.c.l.b16 %v1142
    %v1220 = vunpack.c.h.b16 %v1142
    %v1221 = vunpack.c.l.b16 %v1143
    %v1222 = vunpack.c.h.b16 %v1143
    %v1223 = vunpack.c.l.b16 %v1144
    %v1224 = vunpack.c.h.b16 %v1144
    %v1225 = vunpack.c.l.b16 %v1145
    %v1226 = vunpack.c.h.b16 %v1145
    %v1227 = vunpack.c.l.b16 %v1146
    %v1228 = vunpack.c.h.b16 %v1146
    %v1229 = vunpack.c.l.b16 %v1147
    %v1230 = vunpack.c.h.b16 %v1147
    %v1231 = vunpack.c.l.b16 %v1148
    %v1232 = vunpack.c.h.b16 %v1148
    %v1233 = vunpack.c.l.b16 %v1149
    %v1234 = vunpack.c.h.b16 %v1149
    %v1235 = vunpack.c.l.b16 %v1150
    %v1236 = vunpack.c.h.b16 %v1150
    %v1237 = vunpack.c.l.b16 %v1151
    %v1238 = vunpack.c.h.b16 %v1151
    %v1239 = vunpack.c.l.b16 %v1152
    %v1240 = vunpack.c.h.b16 %v1152
    %v1241 = vunpack.c.l.b16 %v1153
    %v1242 = vunpack.c.h.b16 %v1153
    %v1243 = vunpack.c.l.b16 %v1154
    %v1244 = vunpack.c.h.b16 %v1154
    %v1245 = vunpack.c.l.b16 %v1155
    %v1246 = vunpack.c.h.b16 %v1155
    %v1247 = vunpack.c.l.b16 %v1156
    %v1248 = vunpack.c.h.b16 %v1156
    %v1249 = vunpack.c.l.b16 %v1157
    %v1250 = vunpack.c.h.b16 %v1157
    %v1251 = vunpack.c.l.b16 %v1158
    %v1252 = vunpack.c.h.b16 %v1158
    %v1253 = vunpack.c.l.b16 %v1159
    %v1254 = vunpack.c.h.b16 %v1159
    %v1255 = vunpack.c.l.b16 %v1160
    %v1256 = vunpack.c.h.b16 %v1160
    %v1257 = vpack.c.b16 %v1197, %v1193
    %v1258 = vpack.c.b16 %v1198, %v1194
    %v1259 = vpack.c.b16 %v1199, %v1195
    %v1260 = vpack.c.b16 %v1200, %v1196
    %v1261 = vpack.c.b16 %v1205, %v1201
    %v1262 = vpack.c.b16 %v1206, %v1202
    %v1263 = vpack.c.b16 %v1207, %v1203
    %v1264 = vpack.c.b16 %v1208, %v1204
    %v1265 = vpack.c.b16 %v1213, %v1209
    %v1266 = vpack.c.b16 %v1214, %v1210
    %v1267 = vpack.c.b16 %v1215, %v1211
    %v1268 = vpack.c.b16 %v1216, %v1212
    %v1269 = vpack.c.b16 %v1221, %v1217
    %v1270 = vpack.c.b16 %v1222, %v1218
    %v1271 = vpack.c.b16 %v1223, %v1219
    %v1272 = vpack.c.b16 %v1224, %v1220
    %v1273 = vpack.c.b16 %v1229, %v1225
    %v1274 = vpack.c.b16 %v1230, %v1226
    %v1275 = vpack.c.b16 %v1231, %v1227
    %v1276 = vpack.c.b16 %v1232, %v1228
    %v1277 = vpack.c.b16 %v1237, %v1233
    %v1278 = vpack.c.b16 %v1238, %v1234
    %v1279 = vpack.c.b16 %v1239, %v1235
    %v1280 = vpack.c.b16 %v1240, %v1236
    %v1281 = vpack.c.b16 %v1245, %v1241
    %v1282 = vpack.c.b16 %v1246, %v1242
    %v1283 = vpack.c.b16 %v1247, %v1243
    %v1284 = vpack.c.b16 %v1248, %v1244
    %v1285 = vpack.c.b16 %v1253, %v1249
    %v1286 = vpack.c.b16 %v1254, %v1250
    %v1287 = vpack.c.b16 %v1255, %v1251
    %v1288 = vpack.c.b16 %v1256, %v1252
    %1321 = vmatprep.subr.bf16.mxu0 %v1258
    %1322 = vmatpush1.bf16.msra.mxu0 %v1257
    %1323 = vmatprep.subr.bf16.mxu0 %v1262
    %1324 = vmatpush1.bf16.msra.mxu0 %v1261
    %1325 = vmatprep.subr.bf16.mxu0 %v1266
    %1326 = vmatpush1.bf16.msra.mxu0 %v1265
    %1327 = vmatprep.subr.bf16.mxu0 %v1270
    %1328 = vmatpush1.bf16.msra.mxu0 %v1269
    %1329 = vmatprep.subr.bf16.mxu0 %v1274
    %1330 = vmatpush1.bf16.msra.mxu0 %v1273
    %1331 = vmatprep.subr.bf16.mxu0 %v1278
    %1332 = vmatpush1.bf16.msra.mxu0 %v1277
    %1333 = vmatprep.subr.bf16.mxu0 %v1282
    %1334 = vmatpush1.bf16.msra.mxu0 %v1281
    %1335 = vmatprep.subr.bf16.mxu0 %v1286
    %1336 = vmatpush1.bf16.msra.mxu0 %v1285
    %1337 = vmatprep.subr.bf16.mxu0 0
    %1338 = vmatpush1.bf16.msra.mxu0 0
    %1339 = vmatprep.subr.bf16.mxu0 0
    %1340 = vmatpush1.bf16.msra.mxu0 0
    %1341 = vmatprep.subr.bf16.mxu0 0
    %1342 = vmatpush1.bf16.msra.mxu0 0
    %1343 = vmatprep.subr.bf16.mxu0 0
    %1344 = vmatpush1.bf16.msra.mxu0 0
    %1345 = vmatprep.subr.bf16.mxu0 0
    %1346 = vmatpush1.bf16.msra.mxu0 0
    %1347 = vmatprep.subr.bf16.mxu0 0
    %1348 = vmatpush1.bf16.msra.mxu0 0
    %1349 = vmatprep.subr.bf16.mxu0 0
    %1350 = vmatpush1.bf16.msra.mxu0 0
    %1351 = vmatprep.subr.bf16.mxu0 0
    %1352 = vmatpush1.bf16.msra.mxu0 0
    %1353 = vmatprep.mubr.bf16.mxu0 0
    %1354 = vmatmul.mubr.bf16.gmra.mrb[0].mxu0 %v1128
    %v1355 = vpop.f32.mrb[0].mxu0
    %v1356 = vadd.f32 0.0, %v1355
    %v1357 = vpop.f32.mrb[0].mxu0
    %v1358 = vadd.f32 0.0, %v1357
    %v1359 = vpop.f32.mrb[0].mxu0
    %v1360 = vpop.f32.mrb[0].mxu0
    %1361 = vdwg.mxu0
    %1362 = vmatprep.subr.bf16.mxu0 %v1260
    %1363 = vmatpush1.bf16.msra.mxu0 %v1259
    %1364 = vmatprep.subr.bf16.mxu0 %v1264
    %1365 = vmatpush1.bf16.msra.mxu0 %v1263
    %1366 = vmatprep.subr.bf16.mxu0 %v1268
    %1367 = vmatpush1.bf16.msra.mxu0 %v1267
    %1368 = vmatprep.subr.bf16.mxu0 %v1272
    %1369 = vmatpush1.bf16.msra.mxu0 %v1271
    %1370 = vmatprep.subr.bf16.mxu0 %v1276
    %1371 = vmatpush1.bf16.msra.mxu0 %v1275
    %1372 = vmatprep.subr.bf16.mxu0 %v1280
    %1373 = vmatpush1.bf16.msra.mxu0 %v1279
    %1374 = vmatprep.subr.bf16.mxu0 %v1284
    %1375 = vmatpush1.bf16.msra.mxu0 %v1283
    %1376 = vmatprep.subr.bf16.mxu0 %v1288
    %1377 = vmatpush1.bf16.msra.mxu0 %v1287
    %1378 = vmatprep.subr.bf16.mxu0 0
    %1379 = vmatpush1.bf16.msra.mxu0 0
    %1380 = vmatprep.subr.bf16.mxu0 0
    %1381 = vmatpush1.bf16.msra.mxu0 0
    %1382 = vmatprep.subr.bf16.mxu0 0
    %1383 = vmatpush1.bf16.msra.mxu0 0
    %1384 = vmatprep.subr.bf16.mxu0 0
    %1385 = vmatpush1.bf16.msra.mxu0 0
    %1386 = vmatprep.subr.bf16.mxu0 0
    %1387 = vmatpush1.bf16.msra.mxu0 0
    %1388 = vmatprep.subr.bf16.mxu0 0
    %1389 = vmatpush1.bf16.msra.mxu0 0
    %1390 = vmatprep.subr.bf16.mxu0 0
    %1391 = vmatpush1.bf16.msra.mxu0 0
    %1392 = vmatprep.subr.bf16.mxu0 0
    %1393 = vmatpush1.bf16.msra.mxu0 0
    %1394 = vmatprep.mubr.bf16.mxu0 0
    %1395 = vmatmul.mubr.bf16.gmra.mrb[0].mxu0 %v1128
    %v1396 = vpop.f32.mrb[0].mxu0
    %v1397 = vadd.f32 0.0, %v1396
    %v1398 = vpop.f32.mrb[0].mxu0
    %v1399 = vadd.f32 0.0, %v1398
    %v1400 = vpop.f32.mrb[0].mxu0
    %v1401 = vpop.f32.mrb[0].mxu0
    %1402 = vdwg.mxu0
    %v1403 = vadd.f32 %v1124, %v1356
    %v1404 = vadd.f32 %v1125, %v1358
    %v1405 = vadd.f32 %v1126, %v1397
    %v1406 = vadd.f32 %v1127, %v1399
    %v1407 = vxor.u32 %v1403, 2147483648
    %v1408 = vxor.u32 %v1404, 2147483648
    %v1409 = vxor.u32 %v1405, 2147483648
    %v1410 = vmul.f32 %v1407, 1.442695
    %v1411 = vpow.pop %v1410
    %v1412 = vmul.f32 %v1408, 1.442695
    %v1413 = vpow.pop %v1412
    %v1414 = vmul.f32 %v1409, 1.442695
    %v1415 = vpow.pop %v1414
    %v1416 = vadd.f32 %v1411, 1.0
    %v1417 = vadd.f32 %v1413, 1.0
    %v1418 = vadd.f32 %v1415, 1.0
    %v1419 = vrcp.pop %v1416
    %v1420 = vmul.f32 1.0, %v1419
    %v1421 = vrcp.pop %v1417
    %v1422 = vmul.f32 1.0, %v1421
    %v1423 = vrcp.pop %v1418
    %v1424 = vmul.f32 1.0, %v1423
    %v1425 = vtanh.pop %v1406
    %v1426 = vmul.f32 %v1422, %v1116
    %v1427 = vmul.f32 %v1420, %v1425
    %v1428 = vadd.f32 %v1426, %v1427
    %v1429 = vtanh.pop %v1428
    %v1430 = vmul.f32 %v1424, %v1429
    %s1431 = scalar_lea.vmem [#allocation3], 16
    %1432 = vst [vmem:[%s1431] sm:$0xff] %v1430
    %s1433 = smul.u32 3, 4
    %s1434 = smul.addr %s1433, 8
    %s1435 = scalar_lea.vmem [#allocation2], %s1434
    %v1436 = vld [vmem:[%s1435] sm:$0xff]
    %v1437 = vld [vmem:[%s1435 + $0x8] sm:$0xff]
    %v1438 = vld [vmem:[%s1435 + $0x10] sm:$0xff]
    %v1439 = vld [vmem:[%s1435 + $0x18] sm:$0xff]
    %v1440 = vpack.c.bf16 %v1430, %v1430
    %v1441 = vld [vmem:[#allocation4] sm:$0xff]
    %v1442 = vld [vmem:[#allocation4 + $0x8] sm:$0xff]
    %v1443 = vld [vmem:[#allocation4 + $0x10] sm:$0xff]
    %v1444 = vld [vmem:[#allocation4 + $0x18] sm:$0xff]
    %v1445 = vld [vmem:[#allocation4 + $0x20] sm:$0xff]
    %v1446 = vld [vmem:[#allocation4 + $0x28] sm:$0xff]
    %v1447 = vld [vmem:[#allocation4 + $0x30] sm:$0xff]
    %v1448 = vld [vmem:[#allocation4 + $0x38] sm:$0xff]
    %v1449 = vld [vmem:[#allocation4 + $0x40] sm:$0xff]
    %v1450 = vld [vmem:[#allocation4 + $0x48] sm:$0xff]
    %v1451 = vld [vmem:[#allocation4 + $0x50] sm:$0xff]
    %v1452 = vld [vmem:[#allocation4 + $0x58] sm:$0xff]
    %v1453 = vld [vmem:[#allocation4 + $0x60] sm:$0xff]
    %v1454 = vld [vmem:[#allocation4 + $0x68] sm:$0xff]
    %v1455 = vld [vmem:[#allocation4 + $0x70] sm:$0xff]
    %v1456 = vld [vmem:[#allocation4 + $0x78] sm:$0xff]
    %v1457 = vld [vmem:[#allocation4 + $0x80] sm:$0xff]
    %v1458 = vld [vmem:[#allocation4 + $0x88] sm:$0xff]
    %v1459 = vld [vmem:[#allocation4 + $0x90] sm:$0xff]
    %v1460 = vld [vmem:[#allocation4 + $0x98] sm:$0xff]
    %v1461 = vld [vmem:[#allocation4 + $0xa0] sm:$0xff]
    %v1462 = vld [vmem:[#allocation4 + $0xa8] sm:$0xff]
    %v1463 = vld [vmem:[#allocation4 + $0xb0] sm:$0xff]
    %v1464 = vld [vmem:[#allocation4 + $0xb8] sm:$0xff]
    %v1465 = vld [vmem:[#allocation4 + $0xc0] sm:$0xff]
    %v1466 = vld [vmem:[#allocation4 + $0xc8] sm:$0xff]
    %v1467 = vld [vmem:[#allocation4 + $0xd0] sm:$0xff]
    %v1468 = vld [vmem:[#allocation4 + $0xd8] sm:$0xff]
    %v1469 = vld [vmem:[#allocation4 + $0xe0] sm:$0xff]
    %v1470 = vld [vmem:[#allocation4 + $0xe8] sm:$0xff]
    %v1471 = vld [vmem:[#allocation4 + $0xf0] sm:$0xff]
    %v1472 = vld [vmem:[#allocation4 + $0xf8] sm:$0xff]
    %v1505 = vunpack.c.l.b16 %v1441
    %v1506 = vunpack.c.h.b16 %v1441
    %v1507 = vunpack.c.l.b16 %v1442
    %v1508 = vunpack.c.h.b16 %v1442
    %v1509 = vunpack.c.l.b16 %v1443
    %v1510 = vunpack.c.h.b16 %v1443
    %v1511 = vunpack.c.l.b16 %v1444
    %v1512 = vunpack.c.h.b16 %v1444
    %v1513 = vunpack.c.l.b16 %v1445
    %v1514 = vunpack.c.h.b16 %v1445
    %v1515 = vunpack.c.l.b16 %v1446
    %v1516 = vunpack.c.h.b16 %v1446
    %v1517 = vunpack.c.l.b16 %v1447
    %v1518 = vunpack.c.h.b16 %v1447
    %v1519 = vunpack.c.l.b16 %v1448
    %v1520 = vunpack.c.h.b16 %v1448
    %v1521 = vunpack.c.l.b16 %v1449
    %v1522 = vunpack.c.h.b16 %v1449
    %v1523 = vunpack.c.l.b16 %v1450
    %v1524 = vunpack.c.h.b16 %v1450
    %v1525 = vunpack.c.l.b16 %v1451
    %v1526 = vunpack.c.h.b16 %v1451
    %v1527 = vunpack.c.l.b16 %v1452
    %v1528 = vunpack.c.h.b16 %v1452
    %v1529 = vunpack.c.l.b16 %v1453
    %v1530 = vunpack.c.h.b16 %v1453
    %v1531 = vunpack.c.l.b16 %v1454
    %v1532 = vunpack.c.h.b16 %v1454
    %v1533 = vunpack.c.l.b16 %v1455
    %v1534 = vunpack.c.h.b16 %v1455
    %v1535 = vunpack.c.l.b16 %v1456
    %v1536 = vunpack.c.h.b16 %v1456
    %v1537 = vunpack.c.l.b16 %v1457
    %v1538 = vunpack.c.h.b16 %v1457
    %v1539 = vunpack.c.l.b16 %v1458
    %v1540 = vunpack.c.h.b16 %v1458
    %v1541 = vunpack.c.l.b16 %v1459
    %v1542 = vunpack.c.h.b16 %v1459
    %v1543 = vunpack.c.l.b16 %v1460
    %v1544 = vunpack.c.h.b16 %v1460
    %v1545 = vunpack.c.l.b16 %v1461
    %v1546 = vunpack.c.h.b16 %v1461
    %v1547 = vunpack.c.l.b16 %v1462
    %v1548 = vunpack.c.h.b16 %v1462
    %v1549 = vunpack.c.l.b16 %v1463
    %v1550 = vunpack.c.h.b16 %v1463
    %v1551 = vunpack.c.l.b16 %v1464
    %v1552 = vunpack.c.h.b16 %v1464
    %v1553 = vunpack.c.l.b16 %v1465
    %v1554 = vunpack.c.h.b16 %v1465
    %v1555 = vunpack.c.l.b16 %v1466
    %v1556 = vunpack.c.h.b16 %v1466
    %v1557 = vunpack.c.l.b16 %v1467
    %v1558 = vunpack.c.h.b16 %v1467
    %v1559 = vunpack.c.l.b16 %v1468
    %v1560 = vunpack.c.h.b16 %v1468
    %v1561 = vunpack.c.l.b16 %v1469
    %v1562 = vunpack.c.h.b16 %v1469
    %v1563 = vunpack.c.l.b16 %v1470
    %v1564 = vunpack.c.h.b16 %v1470
    %v1565 = vunpack.c.l.b16 %v1471
    %v1566 = vunpack.c.h.b16 %v1471
    %v1567 = vunpack.c.l.b16 %v1472
    %v1568 = vunpack.c.h.b16 %v1472
    %v1569 = vpack.c.b16 %v1509, %v1505
    %v1570 = vpack.c.b16 %v1510, %v1506
    %v1571 = vpack.c.b16 %v1511, %v1507
    %v1572 = vpack.c.b16 %v1512, %v1508
    %v1573 = vpack.c.b16 %v1517, %v1513
    %v1574 = vpack.c.b16 %v1518, %v1514
    %v1575 = vpack.c.b16 %v1519, %v1515
    %v1576 = vpack.c.b16 %v1520, %v1516
    %v1577 = vpack.c.b16 %v1525, %v1521
    %v1578 = vpack.c.b16 %v1526, %v1522
    %v1579 = vpack.c.b16 %v1527, %v1523
    %v1580 = vpack.c.b16 %v1528, %v1524
    %v1581 = vpack.c.b16 %v1533, %v1529
    %v1582 = vpack.c.b16 %v1534, %v1530
    %v1583 = vpack.c.b16 %v1535, %v1531
    %v1584 = vpack.c.b16 %v1536, %v1532
    %v1585 = vpack.c.b16 %v1541, %v1537
    %v1586 = vpack.c.b16 %v1542, %v1538
    %v1587 = vpack.c.b16 %v1543, %v1539
    %v1588 = vpack.c.b16 %v1544, %v1540
    %v1589 = vpack.c.b16 %v1549, %v1545
    %v1590 = vpack.c.b16 %v1550, %v1546
    %v1591 = vpack.c.b16 %v1551, %v1547
    %v1592 = vpack.c.b16 %v1552, %v1548
    %v1593 = vpack.c.b16 %v1557, %v1553
    %v1594 = vpack.c.b16 %v1558, %v1554
    %v1595 = vpack.c.b16 %v1559, %v1555
    %v1596 = vpack.c.b16 %v1560, %v1556
    %v1597 = vpack.c.b16 %v1565, %v1561
    %v1598 = vpack.c.b16 %v1566, %v1562
    %v1599 = vpack.c.b16 %v1567, %v1563
    %v1600 = vpack.c.b16 %v1568, %v1564
    %1633 = vmatprep.subr.bf16.mxu0 %v1570
    %1634 = vmatpush1.bf16.msra.mxu0 %v1569
    %1635 = vmatprep.subr.bf16.mxu0 %v1574
    %1636 = vmatpush1.bf16.msra.mxu0 %v1573
    %1637 = vmatprep.subr.bf16.mxu0 %v1578
    %1638 = vmatpush1.bf16.msra.mxu0 %v1577
    %1639 = vmatprep.subr.bf16.mxu0 %v1582
    %1640 = vmatpush1.bf16.msra.mxu0 %v1581
    %1641 = vmatprep.subr.bf16.mxu0 %v1586
    %1642 = vmatpush1.bf16.msra.mxu0 %v1585
    %1643 = vmatprep.subr.bf16.mxu0 %v1590
    %1644 = vmatpush1.bf16.msra.mxu0 %v1589
    %1645 = vmatprep.subr.bf16.mxu0 %v1594
    %1646 = vmatpush1.bf16.msra.mxu0 %v1593
    %1647 = vmatprep.subr.bf16.mxu0 %v1598
    %1648 = vmatpush1.bf16.msra.mxu0 %v1597
    %1649 = vmatprep.subr.bf16.mxu0 0
    %1650 = vmatpush1.bf16.msra.mxu0 0
    %1651 = vmatprep.subr.bf16.mxu0 0
    %1652 = vmatpush1.bf16.msra.mxu0 0
    %1653 = vmatprep.subr.bf16.mxu0 0
    %1654 = vmatpush1.bf16.msra.mxu0 0
    %1655 = vmatprep.subr.bf16.mxu0 0
    %1656 = vmatpush1.bf16.msra.mxu0 0
    %1657 = vmatprep.subr.bf16.mxu0 0
    %1658 = vmatpush1.bf16.msra.mxu0 0
    %1659 = vmatprep.subr.bf16.mxu0 0
    %1660 = vmatpush1.bf16.msra.mxu0 0
    %1661 = vmatprep.subr.bf16.mxu0 0
    %1662 = vmatpush1.bf16.msra.mxu0 0
    %1663 = vmatprep.subr.bf16.mxu0 0
    %1664 = vmatpush1.bf16.msra.mxu0 0
    %1665 = vmatprep.mubr.bf16.mxu0 0
    %1666 = vmatmul.mubr.bf16.gmra.mrb[0].mxu0 %v1440
    %v1667 = vpop.f32.mrb[0].mxu0
    %v1668 = vadd.f32 0.0, %v1667
    %v1669 = vpop.f32.mrb[0].mxu0
    %v1670 = vadd.f32 0.0, %v1669
    %v1671 = vpop.f32.mrb[0].mxu0
    %v1672 = vpop.f32.mrb[0].mxu0
    %1673 = vdwg.mxu0
    %1674 = vmatprep.subr.bf16.mxu0 %v1572
    %1675 = vmatpush1.bf16.msra.mxu0 %v1571
    %1676 = vmatprep.subr.bf16.mxu0 %v1576
    %1677 = vmatpush1.bf16.msra.mxu0 %v1575
    %1678 = vmatprep.subr.bf16.mxu0 %v1580
    %1679 = vmatpush1.bf16.msra.mxu0 %v1579
    %1680 = vmatprep.subr.bf16.mxu0 %v1584
    %1681 = vmatpush1.bf16.msra.mxu0 %v1583
    %1682 = vmatprep.subr.bf16.mxu0 %v1588
    %1683 = vmatpush1.bf16.msra.mxu0 %v1587
    %1684 = vmatprep.subr.bf16.mxu0 %v1592
    %1685 = vmatpush1.bf16.msra.mxu0 %v1591
    %1686 = vmatprep.subr.bf16.mxu0 %v1596
    %1687 = vmatpush1.bf16.msra.mxu0 %v1595
    %1688 = vmatprep.subr.bf16.mxu0 %v1600
    %1689 = vmatpush1.bf16.msra.mxu0 %v1599
    %1690 = vmatprep.subr.bf16.mxu0 0
    %1691 = vmatpush1.bf16.msra.mxu0 0
    %1692 = vmatprep.subr.bf16.mxu0 0
    %1693 = vmatpush1.bf16.msra.mxu0 0
    %1694 = vmatprep.subr.bf16.mxu0 0
    %1695 = vmatpush1.bf16.msra.mxu0 0
    %1696 = vmatprep.subr.bf16.mxu0 0
    %1697 = vmatpush1.bf16.msra.mxu0 0
    %1698 = vmatprep.subr.bf16.mxu0 0
    %1699 = vmatpush1.bf16.msra.mxu0 0
    %1700 = vmatprep.subr.bf16.mxu0 0
    %1701 = vmatpush1.bf16.msra.mxu0 0
    %1702 = vmatprep.subr.bf16.mxu0 0
    %1703 = vmatpush1.bf16.msra.mxu0 0
    %1704 = vmatprep.subr.bf16.mxu0 0
    %1705 = vmatpush1.bf16.msra.mxu0 0
    %1706 = vmatprep.mubr.bf16.mxu0 0
    %1707 = vmatmul.mubr.bf16.gmra.mrb[0].mxu0 %v1440
    %v1708 = vpop.f32.mrb[0].mxu0
    %v1709 = vadd.f32 0.0, %v1708
    %v1710 = vpop.f32.mrb[0].mxu0
    %v1711 = vadd.f32 0.0, %v1710
    %v1712 = vpop.f32.mrb[0].mxu0
    %v1713 = vpop.f32.mrb[0].mxu0
    %1714 = vdwg.mxu0
    %v1715 = vadd.f32 %v1436, %v1668
    %v1716 = vadd.f32 %v1437, %v1670
    %v1717 = vadd.f32 %v1438, %v1709
    %v1718 = vadd.f32 %v1439, %v1711
    %v1719 = vxor.u32 %v1715, 2147483648
    %v1720 = vxor.u32 %v1716, 2147483648
    %v1721 = vxor.u32 %v1717, 2147483648
    %v1722 = vmul.f32 %v1719, 1.442695
    %v1723 = vpow.pop %v1722
    %v1724 = vmul.f32 %v1720, 1.442695
    %v1725 = vpow.pop %v1724
    %v1726 = vmul.f32 %v1721, 1.442695
    %v1727 = vpow.pop %v1726
    %v1728 = vadd.f32 %v1723, 1.0
    %v1729 = vadd.f32 %v1725, 1.0
    %v1730 = vadd.f32 %v1727, 1.0
    %v1731 = vrcp.pop %v1728
    %v1732 = vmul.f32 1.0, %v1731
    %v1733 = vrcp.pop %v1729
    %v1734 = vmul.f32 1.0, %v1733
    %v1735 = vrcp.pop %v1730
    %v1736 = vmul.f32 1.0, %v1735
    %v1737 = vtanh.pop %v1718
    %v1738 = vmul.f32 %v1734, %v1428
    %v1739 = vmul.f32 %v1732, %v1737
    %v1740 = vadd.f32 %v1738, %v1739
    %v1741 = vtanh.pop %v1740
    %v1742 = vmul.f32 %v1736, %v1741
    %s1743 = scalar_lea.vmem [#allocation3], 24
    %1744 = vst [vmem:[%s1743] sm:$0xff] %v1742
    %s1745 = smul.u32 4, 4
    %s1746 = smul.addr %s1745, 8
    %s1747 = scalar_lea.vmem [#allocation2], %s1746
    %v1748 = vld [vmem:[%s1747] sm:$0xff]
    %v1749 = vld [vmem:[%s1747 + $0x8] sm:$0xff]
    %v1750 = vld [vmem:[%s1747 + $0x10] sm:$0xff]
    %v1751 = vld [vmem:[%s1747 + $0x18] sm:$0xff]
    %v1752 = vpack.c.bf16 %v1742, %v1742
    %v1753 = vld [vmem:[#allocation4] sm:$0xff]
    %v1754 = vld [vmem:[#allocation4 + $0x8] sm:$0xff]
    %v1755 = vld [vmem:[#allocation4 + $0x10] sm:$0xff]
    %v1756 = vld [vmem:[#allocation4 + $0x18] sm:$0xff]
    %v1757 = vld [vmem:[#allocation4 + $0x20] sm:$0xff]
    %v1758 = vld [vmem:[#allocation4 + $0x28] sm:$0xff]
    %v1759 = vld [vmem:[#allocation4 + $0x30] sm:$0xff]
    %v1760 = vld [vmem:[#allocation4 + $0x38] sm:$0xff]
    %v1761 = vld [vmem:[#allocation4 + $0x40] sm:$0xff]
    %v1762 = vld [vmem:[#allocation4 + $0x48] sm:$0xff]
    %v1763 = vld [vmem:[#allocation4 + $0x50] sm:$0xff]
    %v1764 = vld [vmem:[#allocation4 + $0x58] sm:$0xff]
    %v1765 = vld [vmem:[#allocation4 + $0x60] sm:$0xff]
    %v1766 = vld [vmem:[#allocation4 + $0x68] sm:$0xff]
    %v1767 = vld [vmem:[#allocation4 + $0x70] sm:$0xff]
    %v1768 = vld [vmem:[#allocation4 + $0x78] sm:$0xff]
    %v1769 = vld [vmem:[#allocation4 + $0x80] sm:$0xff]
    %v1770 = vld [vmem:[#allocation4 + $0x88] sm:$0xff]
    %v1771 = vld [vmem:[#allocation4 + $0x90] sm:$0xff]
    %v1772 = vld [vmem:[#allocation4 + $0x98] sm:$0xff]
    %v1773 = vld [vmem:[#allocation4 + $0xa0] sm:$0xff]
    %v1774 = vld [vmem:[#allocation4 + $0xa8] sm:$0xff]
    %v1775 = vld [vmem:[#allocation4 + $0xb0] sm:$0xff]
    %v1776 = vld [vmem:[#allocation4 + $0xb8] sm:$0xff]
    %v1777 = vld [vmem:[#allocation4 + $0xc0] sm:$0xff]
    %v1778 = vld [vmem:[#allocation4 + $0xc8] sm:$0xff]
    %v1779 = vld [vmem:[#allocation4 + $0xd0] sm:$0xff]
    %v1780 = vld [vmem:[#allocation4 + $0xd8] sm:$0xff]
    %v1781 = vld [vmem:[#allocation4 + $0xe0] sm:$0xff]
    %v1782 = vld [vmem:[#allocation4 + $0xe8] sm:$0xff]
    %v1783 = vld [vmem:[#allocation4 + $0xf0] sm:$0xff]
    %v1784 = vld [vmem:[#allocation4 + $0xf8] sm:$0xff]
    %v1817 = vunpack.c.l.b16 %v1753
    %v1818 = vunpack.c.h.b16 %v1753
    %v1819 = vunpack.c.l.b16 %v1754
    %v1820 = vunpack.c.h.b16 %v1754
    %v1821 = vunpack.c.l.b16 %v1755
    %v1822 = vunpack.c.h.b16 %v1755
    %v1823 = vunpack.c.l.b16 %v1756
    %v1824 = vunpack.c.h.b16 %v1756
    %v1825 = vunpack.c.l.b16 %v1757
    %v1826 = vunpack.c.h.b16 %v1757
    %v1827 = vunpack.c.l.b16 %v1758
    %v1828 = vunpack.c.h.b16 %v1758
    %v1829 = vunpack.c.l.b16 %v1759
    %v1830 = vunpack.c.h.b16 %v1759
    %v1831 = vunpack.c.l.b16 %v1760
    %v1832 = vunpack.c.h.b16 %v1760
    %v1833 = vunpack.c.l.b16 %v1761
    %v1834 = vunpack.c.h.b16 %v1761
    %v1835 = vunpack.c.l.b16 %v1762
    %v1836 = vunpack.c.h.b16 %v1762
    %v1837 = vunpack.c.l.b16 %v1763
    %v1838 = vunpack.c.h.b16 %v1763
    %v1839 = vunpack.c.l.b16 %v1764
    %v1840 = vunpack.c.h.b16 %v1764
    %v1841 = vunpack.c.l.b16 %v1765
    %v1842 = vunpack.c.h.b16 %v1765
    %v1843 = vunpack.c.l.b16 %v1766
    %v1844 = vunpack.c.h.b16 %v1766
    %v1845 = vunpack.c.l.b16 %v1767
    %v1846 = vunpack.c.h.b16 %v1767
    %v1847 = vunpack.c.l.b16 %v1768
    %v1848 = vunpack.c.h.b16 %v1768
    %v1849 = vunpack.c.l.b16 %v1769
    %v1850 = vunpack.c.h.b16 %v1769
    %v1851 = vunpack.c.l.b16 %v1770
    %v1852 = vunpack.c.h.b16 %v1770
    %v1853 = vunpack.c.l.b16 %v1771
    %v1854 = vunpack.c.h.b16 %v1771
    %v1855 = vunpack.c.l.b16 %v1772
    %v1856 = vunpack.c.h.b16 %v1772
    %v1857 = vunpack.c.l.b16 %v1773
    %v1858 = vunpack.c.h.b16 %v1773
    %v1859 = vunpack.c.l.b16 %v1774
    %v1860 = vunpack.c.h.b16 %v1774
    %v1861 = vunpack.c.l.b16 %v1775
    %v1862 = vunpack.c.h.b16 %v1775
    %v1863 = vunpack.c.l.b16 %v1776
    %v1864 = vunpack.c.h.b16 %v1776
    %v1865 = vunpack.c.l.b16 %v1777
    %v1866 = vunpack.c.h.b16 %v1777
    %v1867 = vunpack.c.l.b16 %v1778
    %v1868 = vunpack.c.h.b16 %v1778
    %v1869 = vunpack.c.l.b16 %v1779
    %v1870 = vunpack.c.h.b16 %v1779
    %v1871 = vunpack.c.l.b16 %v1780
    %v1872 = vunpack.c.h.b16 %v1780
    %v1873 = vunpack.c.l.b16 %v1781
    %v1874 = vunpack.c.h.b16 %v1781
    %v1875 = vunpack.c.l.b16 %v1782
    %v1876 = vunpack.c.h.b16 %v1782
    %v1877 = vunpack.c.l.b16 %v1783
    %v1878 = vunpack.c.h.b16 %v1783
    %v1879 = vunpack.c.l.b16 %v1784
    %v1880 = vunpack.c.h.b16 %v1784
    %v1881 = vpack.c.b16 %v1821, %v1817
    %v1882 = vpack.c.b16 %v1822, %v1818
    %v1883 = vpack.c.b16 %v1823, %v1819
    %v1884 = vpack.c.b16 %v1824, %v1820
    %v1885 = vpack.c.b16 %v1829, %v1825
    %v1886 = vpack.c.b16 %v1830, %v1826
    %v1887 = vpack.c.b16 %v1831, %v1827
    %v1888 = vpack.c.b16 %v1832, %v1828
    %v1889 = vpack.c.b16 %v1837, %v1833
    %v1890 = vpack.c.b16 %v1838, %v1834
    %v1891 = vpack.c.b16 %v1839, %v1835
    %v1892 = vpack.c.b16 %v1840, %v1836
    %v1893 = vpack.c.b16 %v1845, %v1841
    %v1894 = vpack.c.b16 %v1846, %v1842
    %v1895 = vpack.c.b16 %v1847, %v1843
    %v1896 = vpack.c.b16 %v1848, %v1844
    %v1897 = vpack.c.b16 %v1853, %v1849
    %v1898 = vpack.c.b16 %v1854, %v1850
    %v1899 = vpack.c.b16 %v1855, %v1851
    %v1900 = vpack.c.b16 %v1856, %v1852
    %v1901 = vpack.c.b16 %v1861, %v1857
    %v1902 = vpack.c.b16 %v1862, %v1858
    %v1903 = vpack.c.b16 %v1863, %v1859
    %v1904 = vpack.c.b16 %v1864, %v1860
    %v1905 = vpack.c.b16 %v1869, %v1865
    %v1906 = vpack.c.b16 %v1870, %v1866
    %v1907 = vpack.c.b16 %v1871, %v1867
    %v1908 = vpack.c.b16 %v1872, %v1868
    %v1909 = vpack.c.b16 %v1877, %v1873
    %v1910 = vpack.c.b16 %v1878, %v1874
    %v1911 = vpack.c.b16 %v1879, %v1875
    %v1912 = vpack.c.b16 %v1880, %v1876
    %1945 = vmatprep.subr.bf16.mxu0 %v1882
    %1946 = vmatpush1.bf16.msra.mxu0 %v1881
    %1947 = vmatprep.subr.bf16.mxu0 %v1886
    %1948 = vmatpush1.bf16.msra.mxu0 %v1885
    %1949 = vmatprep.subr.bf16.mxu0 %v1890
    %1950 = vmatpush1.bf16.msra.mxu0 %v1889
    %1951 = vmatprep.subr.bf16.mxu0 %v1894
    %1952 = vmatpush1.bf16.msra.mxu0 %v1893
    %1953 = vmatprep.subr.bf16.mxu0 %v1898
    %1954 = vmatpush1.bf16.msra.mxu0 %v1897
    %1955 = vmatprep.subr.bf16.mxu0 %v1902
    %1956 = vmatpush1.bf16.msra.mxu0 %v1901
    %1957 = vmatprep.subr.bf16.mxu0 %v1906
    %1958 = vmatpush1.bf16.msra.mxu0 %v1905
    %1959 = vmatprep.subr.bf16.mxu0 %v1910
    %1960 = vmatpush1.bf16.msra.mxu0 %v1909
    %1961 = vmatprep.subr.bf16.mxu0 0
    %1962 = vmatpush1.bf16.msra.mxu0 0
    %1963 = vmatprep.subr.bf16.mxu0 0
    %1964 = vmatpush1.bf16.msra.mxu0 0
    %1965 = vmatprep.subr.bf16.mxu0 0
    %1966 = vmatpush1.bf16.msra.mxu0 0
    %1967 = vmatprep.subr.bf16.mxu0 0
    %1968 = vmatpush1.bf16.msra.mxu0 0
    %1969 = vmatprep.subr.bf16.mxu0 0
    %1970 = vmatpush1.bf16.msra.mxu0 0
    %1971 = vmatprep.subr.bf16.mxu0 0
    %1972 = vmatpush1.bf16.msra.mxu0 0
    %1973 = vmatprep.subr.bf16.mxu0 0
    %1974 = vmatpush1.bf16.msra.mxu0 0
    %1975 = vmatprep.subr.bf16.mxu0 0
    %1976 = vmatpush1.bf16.msra.mxu0 0
    %1977 = vmatprep.mubr.bf16.mxu0 0
    %1978 = vmatmul.mubr.bf16.gmra.mrb[0].mxu0 %v1752
    %v1979 = vpop.f32.mrb[0].mxu0
    %v1980 = vadd.f32 0.0, %v1979
    %v1981 = vpop.f32.mrb[0].mxu0
    %v1982 = vadd.f32 0.0, %v1981
    %v1983 = vpop.f32.mrb[0].mxu0
    %v1984 = vpop.f32.mrb[0].mxu0
    %1985 = vdwg.mxu0
    %1986 = vmatprep.subr.bf16.mxu0 %v1884
    %1987 = vmatpush1.bf16.msra.mxu0 %v1883
    %1988 = vmatprep.subr.bf16.mxu0 %v1888
    %1989 = vmatpush1.bf16.msra.mxu0 %v1887
    %1990 = vmatprep.subr.bf16.mxu0 %v1892
    %1991 = vmatpush1.bf16.msra.mxu0 %v1891
    %1992 = vmatprep.subr.bf16.mxu0 %v1896
    %1993 = vmatpush1.bf16.msra.mxu0 %v1895
    %1994 = vmatprep.subr.bf16.mxu0 %v1900
    %1995 = vmatpush1.bf16.msra.mxu0 %v1899
    %1996 = vmatprep.subr.bf16.mxu0 %v1904
    %1997 = vmatpush1.bf16.msra.mxu0 %v1903
    %1998 = vmatprep.subr.bf16.mxu0 %v1908
    %1999 = vmatpush1.bf16.msra.mxu0 %v1907
    %2000 = vmatprep.subr.bf16.mxu0 %v1912
    %2001 = vmatpush1.bf16.msra.mxu0 %v1911
    %2002 = vmatprep.subr.bf16.mxu0 0
    %2003 = vmatpush1.bf16.msra.mxu0 0
    %2004 = vmatprep.subr.bf16.mxu0 0
    %2005 = vmatpush1.bf16.msra.mxu0 0
    %2006 = vmatprep.subr.bf16.mxu0 0
    %2007 = vmatpush1.bf16.msra.mxu0 0
    %2008 = vmatprep.subr.bf16.mxu0 0
    %2009 = vmatpush1.bf16.msra.mxu0 0
    %2010 = vmatprep.subr.bf16.mxu0 0
    %2011 = vmatpush1.bf16.msra.mxu0 0
    %2012 = vmatprep.subr.bf16.mxu0 0
    %2013 = vmatpush1.bf16.msra.mxu0 0
    %2014 = vmatprep.subr.bf16.mxu0 0
    %2015 = vmatpush1.bf16.msra.mxu0 0
    %2016 = vmatprep.subr.bf16.mxu0 0
    %2017 = vmatpush1.bf16.msra.mxu0 0
    %2018 = vmatprep.mubr.bf16.mxu0 0
    %2019 = vmatmul.mubr.bf16.gmra.mrb[0].mxu0 %v1752
    %v2020 = vpop.f32.mrb[0].mxu0
    %v2021 = vadd.f32 0.0, %v2020
    %v2022 = vpop.f32.mrb[0].mxu0
    %v2023 = vadd.f32 0.0, %v2022
    %v2024 = vpop.f32.mrb[0].mxu0
    %v2025 = vpop.f32.mrb[0].mxu0
    %2026 = vdwg.mxu0
    %v2027 = vadd.f32 %v1748, %v1980
    %v2028 = vadd.f32 %v1749, %v1982
    %v2029 = vadd.f32 %v1750, %v2021
    %v2030 = vadd.f32 %v1751, %v2023
    %v2031 = vxor.u32 %v2027, 2147483648
    %v2032 = vxor.u32 %v2028, 2147483648
    %v2033 = vxor.u32 %v2029, 2147483648
    %v2034 = vmul.f32 %v2031, 1.442695
    %v2035 = vpow.pop %v2034
    %v2036 = vmul.f32 %v2032, 1.442695
    %v2037 = vpow.pop %v2036
    %v2038 = vmul.f32 %v2033, 1.442695
    %v2039 = vpow.pop %v2038
    %v2040 = vadd.f32 %v2035, 1.0
    %v2041 = vadd.f32 %v2037, 1.0
    %v2042 = vadd.f32 %v2039, 1.0
    %v2043 = vrcp.pop %v2040
    %v2044 = vmul.f32 1.0, %v2043
    %v2045 = vrcp.pop %v2041
    %v2046 = vmul.f32 1.0, %v2045
    %v2047 = vrcp.pop %v2042
    %v2048 = vmul.f32 1.0, %v2047
    %v2049 = vtanh.pop %v2030
    %v2050 = vmul.f32 %v2046, %v1740
    %v2051 = vmul.f32 %v2044, %v2049
    %v2052 = vadd.f32 %v2050, %v2051
    %v2053 = vtanh.pop %v2052
    %v2054 = vmul.f32 %v2048, %v2053
    %s2055 = scalar_lea.vmem [#allocation3], 32
    %2056 = vst [vmem:[%s2055] sm:$0xff] %v2054
    %s2057 = smul.u32 5, 4
    %s2058 = smul.addr %s2057, 8
    %s2059 = scalar_lea.vmem [#allocation2], %s2058
    %v2060 = vld [vmem:[%s2059] sm:$0xff]
    %v2061 = vld [vmem:[%s2059 + $0x8] sm:$0xff]
    %v2062 = vld [vmem:[%s2059 + $0x10] sm:$0xff]
    %v2063 = vld [vmem:[%s2059 + $0x18] sm:$0xff]
    %v2064 = vpack.c.bf16 %v2054, %v2054
    %v2065 = vld [vmem:[#allocation4] sm:$0xff]
    %v2066 = vld [vmem:[#allocation4 + $0x8] sm:$0xff]
    %v2067 = vld [vmem:[#allocation4 + $0x10] sm:$0xff]
    %v2068 = vld [vmem:[#allocation4 + $0x18] sm:$0xff]
    %v2069 = vld [vmem:[#allocation4 + $0x20] sm:$0xff]
    %v2070 = vld [vmem:[#allocation4 + $0x28] sm:$0xff]
    %v2071 = vld [vmem:[#allocation4 + $0x30] sm:$0xff]
    %v2072 = vld [vmem:[#allocation4 + $0x38] sm:$0xff]
    %v2073 = vld [vmem:[#allocation4 + $0x40] sm:$0xff]
    %v2074 = vld [vmem:[#allocation4 + $0x48] sm:$0xff]
    %v2075 = vld [vmem:[#allocation4 + $0x50] sm:$0xff]
    %v2076 = vld [vmem:[#allocation4 + $0x58] sm:$0xff]
    %v2077 = vld [vmem:[#allocation4 + $0x60] sm:$0xff]
    %v2078 = vld [vmem:[#allocation4 + $0x68] sm:$0xff]
    %v2079 = vld [vmem:[#allocation4 + $0x70] sm:$0xff]
    %v2080 = vld [vmem:[#allocation4 + $0x78] sm:$0xff]
    %v2081 = vld [vmem:[#allocation4 + $0x80] sm:$0xff]
    %v2082 = vld [vmem:[#allocation4 + $0x88] sm:$0xff]
    %v2083 = vld [vmem:[#allocation4 + $0x90] sm:$0xff]
    %v2084 = vld [vmem:[#allocation4 + $0x98] sm:$0xff]
    %v2085 = vld [vmem:[#allocation4 + $0xa0] sm:$0xff]
    %v2086 = vld [vmem:[#allocation4 + $0xa8] sm:$0xff]
    %v2087 = vld [vmem:[#allocation4 + $0xb0] sm:$0xff]
    %v2088 = vld [vmem:[#allocation4 + $0xb8] sm:$0xff]
    %v2089 = vld [vmem:[#allocation4 + $0xc0] sm:$0xff]
    %v2090 = vld [vmem:[#allocation4 + $0xc8] sm:$0xff]
    %v2091 = vld [vmem:[#allocation4 + $0xd0] sm:$0xff]
    %v2092 = vld [vmem:[#allocation4 + $0xd8] sm:$0xff]
    %v2093 = vld [vmem:[#allocation4 + $0xe0] sm:$0xff]
    %v2094 = vld [vmem:[#allocation4 + $0xe8] sm:$0xff]
    %v2095 = vld [vmem:[#allocation4 + $0xf0] sm:$0xff]
    %v2096 = vld [vmem:[#allocation4 + $0xf8] sm:$0xff]
    %v2129 = vunpack.c.l.b16 %v2065
    %v2130 = vunpack.c.h.b16 %v2065
    %v2131 = vunpack.c.l.b16 %v2066
    %v2132 = vunpack.c.h.b16 %v2066
    %v2133 = vunpack.c.l.b16 %v2067
    %v2134 = vunpack.c.h.b16 %v2067
    %v2135 = vunpack.c.l.b16 %v2068
    %v2136 = vunpack.c.h.b16 %v2068
    %v2137 = vunpack.c.l.b16 %v2069
    %v2138 = vunpack.c.h.b16 %v2069
    %v2139 = vunpack.c.l.b16 %v2070
    %v2140 = vunpack.c.h.b16 %v2070
    %v2141 = vunpack.c.l.b16 %v2071
    %v2142 = vunpack.c.h.b16 %v2071
    %v2143 = vunpack.c.l.b16 %v2072
    %v2144 = vunpack.c.h.b16 %v2072
    %v2145 = vunpack.c.l.b16 %v2073
    %v2146 = vunpack.c.h.b16 %v2073
    %v2147 = vunpack.c.l.b16 %v2074
    %v2148 = vunpack.c.h.b16 %v2074
    %v2149 = vunpack.c.l.b16 %v2075
    %v2150 = vunpack.c.h.b16 %v2075
    %v2151 = vunpack.c.l.b16 %v2076
    %v2152 = vunpack.c.h.b16 %v2076
    %v2153 = vunpack.c.l.b16 %v2077
    %v2154 = vunpack.c.h.b16 %v2077
    %v2155 = vunpack.c.l.b16 %v2078
    %v2156 = vunpack.c.h.b16 %v2078
    %v2157 = vunpack.c.l.b16 %v2079
    %v2158 = vunpack.c.h.b16 %v2079
    %v2159 = vunpack.c.l.b16 %v2080
    %v2160 = vunpack.c.h.b16 %v2080
    %v2161 = vunpack.c.l.b16 %v2081
    %v2162 = vunpack.c.h.b16 %v2081
    %v2163 = vunpack.c.l.b16 %v2082
    %v2164 = vunpack.c.h.b16 %v2082
    %v2165 = vunpack.c.l.b16 %v2083
    %v2166 = vunpack.c.h.b16 %v2083
    %v2167 = vunpack.c.l.b16 %v2084
    %v2168 = vunpack.c.h.b16 %v2084
    %v2169 = vunpack.c.l.b16 %v2085
    %v2170 = vunpack.c.h.b16 %v2085
    %v2171 = vunpack.c.l.b16 %v2086
    %v2172 = vunpack.c.h.b16 %v2086
    %v2173 = vunpack.c.l.b16 %v2087
    %v2174 = vunpack.c.h.b16 %v2087
    %v2175 = vunpack.c.l.b16 %v2088
    %v2176 = vunpack.c.h.b16 %v2088
    %v2177 = vunpack.c.l.b16 %v2089
    %v2178 = vunpack.c.h.b16 %v2089
    %v2179 = vunpack.c.l.b16 %v2090
    %v2180 = vunpack.c.h.b16 %v2090
    %v2181 = vunpack.c.l.b16 %v2091
    %v2182 = vunpack.c.h.b16 %v2091
    %v2183 = vunpack.c.l.b16 %v2092
    %v2184 = vunpack.c.h.b16 %v2092
    %v2185 = vunpack.c.l.b16 %v2093
    %v2186 = vunpack.c.h.b16 %v2093
    %v2187 = vunpack.c.l.b16 %v2094
    %v2188 = vunpack.c.h.b16 %v2094
    %v2189 = vunpack.c.l.b16 %v2095
    %v2190 = vunpack.c.h.b16 %v2095
    %v2191 = vunpack.c.l.b16 %v2096
    %v2192 = vunpack.c.h.b16 %v2096
    %v2193 = vpack.c.b16 %v2133, %v2129
    %v2194 = vpack.c.b16 %v2134, %v2130
    %v2195 = vpack.c.b16 %v2135, %v2131
    %v2196 = vpack.c.b16 %v2136, %v2132
    %v2197 = vpack.c.b16 %v2141, %v2137
    %v2198 = vpack.c.b16 %v2142, %v2138
    %v2199 = vpack.c.b16 %v2143, %v2139
    %v2200 = vpack.c.b16 %v2144, %v2140
    %v2201 = vpack.c.b16 %v2149, %v2145
    %v2202 = vpack.c.b16 %v2150, %v2146
    %v2203 = vpack.c.b16 %v2151, %v2147
    %v2204 = vpack.c.b16 %v2152, %v2148
    %v2205 = vpack.c.b16 %v2157, %v2153
    %v2206 = vpack.c.b16 %v2158, %v2154
    %v2207 = vpack.c.b16 %v2159, %v2155
    %v2208 = vpack.c.b16 %v2160, %v2156
    %v2209 = vpack.c.b16 %v2165, %v2161
    %v2210 = vpack.c.b16 %v2166, %v2162
    %v2211 = vpack.c.b16 %v2167, %v2163
    %v2212 = vpack.c.b16 %v2168, %v2164
    %v2213 = vpack.c.b16 %v2173, %v2169
    %v2214 = vpack.c.b16 %v2174, %v2170
    %v2215 = vpack.c.b16 %v2175, %v2171
    %v2216 = vpack.c.b16 %v2176, %v2172
    %v2217 = vpack.c.b16 %v2181, %v2177
    %v2218 = vpack.c.b16 %v2182, %v2178
    %v2219 = vpack.c.b16 %v2183, %v2179
    %v2220 = vpack.c.b16 %v2184, %v2180
    %v2221 = vpack.c.b16 %v2189, %v2185
    %v2222 = vpack.c.b16 %v2190, %v2186
    %v2223 = vpack.c.b16 %v2191, %v2187
    %v2224 = vpack.c.b16 %v2192, %v2188
    %2257 = vmatprep.subr.bf16.mxu0 %v2194
    %2258 = vmatpush1.bf16.msra.mxu0 %v2193
    %2259 = vmatprep.subr.bf16.mxu0 %v2198
    %2260 = vmatpush1.bf16.msra.mxu0 %v2197
    %2261 = vmatprep.subr.bf16.mxu0 %v2202
    %2262 = vmatpush1.bf16.msra.mxu0 %v2201
    %2263 = vmatprep.subr.bf16.mxu0 %v2206
    %2264 = vmatpush1.bf16.msra.mxu0 %v2205
    %2265 = vmatprep.subr.bf16.mxu0 %v2210
    %2266 = vmatpush1.bf16.msra.mxu0 %v2209
    %2267 = vmatprep.subr.bf16.mxu0 %v2214
    %2268 = vmatpush1.bf16.msra.mxu0 %v2213
    %2269 = vmatprep.subr.bf16.mxu0 %v2218
    %2270 = vmatpush1.bf16.msra.mxu0 %v2217
    %2271 = vmatprep.subr.bf16.mxu0 %v2222
    %2272 = vmatpush1.bf16.msra.mxu0 %v2221
    %2273 = vmatprep.subr.bf16.mxu0 0
    %2274 = vmatpush1.bf16.msra.mxu0 0
    %2275 = vmatprep.subr.bf16.mxu0 0
    %2276 = vmatpush1.bf16.msra.mxu0 0
    %2277 = vmatprep.subr.bf16.mxu0 0
    %2278 = vmatpush1.bf16.msra.mxu0 0
    %2279 = vmatprep.subr.bf16.mxu0 0
    %2280 = vmatpush1.bf16.msra.mxu0 0
    %2281 = vmatprep.subr.bf16.mxu0 0
    %2282 = vmatpush1.bf16.msra.mxu0 0
    %2283 = vmatprep.subr.bf16.mxu0 0
    %2284 = vmatpush1.bf16.msra.mxu0 0
    %2285 = vmatprep.subr.bf16.mxu0 0
    %2286 = vmatpush1.bf16.msra.mxu0 0
    %2287 = vmatprep.subr.bf16.mxu0 0
    %2288 = vmatpush1.bf16.msra.mxu0 0
    %2289 = vmatprep.mubr.bf16.mxu0 0
    %2290 = vmatmul.mubr.bf16.gmra.mrb[0].mxu0 %v2064
    %v2291 = vpop.f32.mrb[0].mxu0
    %v2292 = vadd.f32 0.0, %v2291
    %v2293 = vpop.f32.mrb[0].mxu0
    %v2294 = vadd.f32 0.0, %v2293
    %v2295 = vpop.f32.mrb[0].mxu0
    %v2296 = vpop.f32.mrb[0].mxu0
    %2297 = vdwg.mxu0
    %2298 = vmatprep.subr.bf16.mxu0 %v2196
    %2299 = vmatpush1.bf16.msra.mxu0 %v2195
    %2300 = vmatprep.subr.bf16.mxu0 %v2200
    %2301 = vmatpush1.bf16.msra.mxu0 %v2199
    %2302 = vmatprep.subr.bf16.mxu0 %v2204
    %2303 = vmatpush1.bf16.msra.mxu0 %v2203
    %2304 = vmatprep.subr.bf16.mxu0 %v2208
    %2305 = vmatpush1.bf16.msra.mxu0 %v2207
    %2306 = vmatprep.subr.bf16.mxu0 %v2212
    %2307 = vmatpush1.bf16.msra.mxu0 %v2211
    %2308 = vmatprep.subr.bf16.mxu0 %v2216
    %2309 = vmatpush1.bf16.msra.mxu0 %v2215
    %2310 = vmatprep.subr.bf16.mxu0 %v2220
    %2311 = vmatpush1.bf16.msra.mxu0 %v2219
    %2312 = vmatprep.subr.bf16.mxu0 %v2224
    %2313 = vmatpush1.bf16.msra.mxu0 %v2223
    %2314 = vmatprep.subr.bf16.mxu0 0
    %2315 = vmatpush1.bf16.msra.mxu0 0
    %2316 = vmatprep.subr.bf16.mxu0 0
    %2317 = vmatpush1.bf16.msra.mxu0 0
    %2318 = vmatprep.subr.bf16.mxu0 0
    %2319 = vmatpush1.bf16.msra.mxu0 0
    %2320 = vmatprep.subr.bf16.mxu0 0
    %2321 = vmatpush1.bf16.msra.mxu0 0
    %2322 = vmatprep.subr.bf16.mxu0 0
    %2323 = vmatpush1.bf16.msra.mxu0 0
    %2324 = vmatprep.subr.bf16.mxu0 0
    %2325 = vmatpush1.bf16.msra.mxu0 0
    %2326 = vmatprep.subr.bf16.mxu0 0
    %2327 = vmatpush1.bf16.msra.mxu0 0
    %2328 = vmatprep.subr.bf16.mxu0 0
    %2329 = vmatpush1.bf16.msra.mxu0 0
    %2330 = vmatprep.mubr.bf16.mxu0 0
    %2331 = vmatmul.mubr.bf16.gmra.mrb[0].mxu0 %v2064
    %v2332 = vpop.f32.mrb[0].mxu0
    %v2333 = vadd.f32 0.0, %v2332
    %v2334 = vpop.f32.mrb[0].mxu0
    %v2335 = vadd.f32 0.0, %v2334
    %v2336 = vpop.f32.mrb[0].mxu0
    %v2337 = vpop.f32.mrb[0].mxu0
    %2338 = vdwg.mxu0
    %v2339 = vadd.f32 %v2060, %v2292
    %v2340 = vadd.f32 %v2061, %v2294
    %v2341 = vadd.f32 %v2062, %v2333
    %v2342 = vadd.f32 %v2063, %v2335
    %v2343 = vxor.u32 %v2339, 2147483648
    %v2344 = vxor.u32 %v2340, 2147483648
    %v2345 = vxor.u32 %v2341, 2147483648
    %v2346 = vmul.f32 %v2343, 1.442695
    %v2347 = vpow.pop %v2346
    %v2348 = vmul.f32 %v2344, 1.442695
    %v2349 = vpow.pop %v2348
    %v2350 = vmul.f32 %v2345, 1.442695
    %v2351 = vpow.pop %v2350
    %v2352 = vadd.f32 %v2347, 1.0
    %v2353 = vadd.f32 %v2349, 1.0
    %v2354 = vadd.f32 %v2351, 1.0
    %v2355 = vrcp.pop %v2352
    %v2356 = vmul.f32 1.0, %v2355
    %v2357 = vrcp.pop %v2353
    %v2358 = vmul.f32 1.0, %v2357
    %v2359 = vrcp.pop %v2354
    %v2360 = vmul.f32 1.0, %v2359
    %v2361 = vtanh.pop %v2342
    %v2362 = vmul.f32 %v2358, %v2052
    %v2363 = vmul.f32 %v2356, %v2361
    %v2364 = vadd.f32 %v2362, %v2363
    %v2365 = vtanh.pop %v2364
    %v2366 = vmul.f32 %v2360, %v2365
    %s2367 = scalar_lea.vmem [#allocation3], 40
    %2368 = vst [vmem:[%s2367] sm:$0xff] %v2366
    %s2369 = smul.u32 6, 4
    %s2370 = smul.addr %s2369, 8
    %s2371 = scalar_lea.vmem [#allocation2], %s2370
    %v2372 = vld [vmem:[%s2371] sm:$0xff]
    %v2373 = vld [vmem:[%s2371 + $0x8] sm:$0xff]
    %v2374 = vld [vmem:[%s2371 + $0x10] sm:$0xff]
    %v2375 = vld [vmem:[%s2371 + $0x18] sm:$0xff]
    %v2376 = vpack.c.bf16 %v2366, %v2366
    %v2377 = vld [vmem:[#allocation4] sm:$0xff]
    %v2378 = vld [vmem:[#allocation4 + $0x8] sm:$0xff]
    %v2379 = vld [vmem:[#allocation4 + $0x10] sm:$0xff]
    %v2380 = vld [vmem:[#allocation4 + $0x18] sm:$0xff]
    %v2381 = vld [vmem:[#allocation4 + $0x20] sm:$0xff]
    %v2382 = vld [vmem:[#allocation4 + $0x28] sm:$0xff]
    %v2383 = vld [vmem:[#allocation4 + $0x30] sm:$0xff]
    %v2384 = vld [vmem:[#allocation4 + $0x38] sm:$0xff]
    %v2385 = vld [vmem:[#allocation4 + $0x40] sm:$0xff]
    %v2386 = vld [vmem:[#allocation4 + $0x48] sm:$0xff]
    %v2387 = vld [vmem:[#allocation4 + $0x50] sm:$0xff]
    %v2388 = vld [vmem:[#allocation4 + $0x58] sm:$0xff]
    %v2389 = vld [vmem:[#allocation4 + $0x60] sm:$0xff]
    %v2390 = vld [vmem:[#allocation4 + $0x68] sm:$0xff]
    %v2391 = vld [vmem:[#allocation4 + $0x70] sm:$0xff]
    %v2392 = vld [vmem:[#allocation4 + $0x78] sm:$0xff]
    %v2393 = vld [vmem:[#allocation4 + $0x80] sm:$0xff]
    %v2394 = vld [vmem:[#allocation4 + $0x88] sm:$0xff]
    %v2395 = vld [vmem:[#allocation4 + $0x90] sm:$0xff]
    %v2396 = vld [vmem:[#allocation4 + $0x98] sm:$0xff]
    %v2397 = vld [vmem:[#allocation4 + $0xa0] sm:$0xff]
    %v2398 = vld [vmem:[#allocation4 + $0xa8] sm:$0xff]
    %v2399 = vld [vmem:[#allocation4 + $0xb0] sm:$0xff]
    %v2400 = vld [vmem:[#allocation4 + $0xb8] sm:$0xff]
    %v2401 = vld [vmem:[#allocation4 + $0xc0] sm:$0xff]
    %v2402 = vld [vmem:[#allocation4 + $0xc8] sm:$0xff]
    %v2403 = vld [vmem:[#allocation4 + $0xd0] sm:$0xff]
    %v2404 = vld [vmem:[#allocation4 + $0xd8] sm:$0xff]
    %v2405 = vld [vmem:[#allocation4 + $0xe0] sm:$0xff]
    %v2406 = vld [vmem:[#allocation4 + $0xe8] sm:$0xff]
    %v2407 = vld [vmem:[#allocation4 + $0xf0] sm:$0xff]
    %v2408 = vld [vmem:[#allocation4 + $0xf8] sm:$0xff]
    %v2441 = vunpack.c.l.b16 %v2377
    %v2442 = vunpack.c.h.b16 %v2377
    %v2443 = vunpack.c.l.b16 %v2378
    %v2444 = vunpack.c.h.b16 %v2378
    %v2445 = vunpack.c.l.b16 %v2379
    %v2446 = vunpack.c.h.b16 %v2379
    %v2447 = vunpack.c.l.b16 %v2380
    %v2448 = vunpack.c.h.b16 %v2380
    %v2449 = vunpack.c.l.b16 %v2381
    %v2450 = vunpack.c.h.b16 %v2381
    %v2451 = vunpack.c.l.b16 %v2382
    %v2452 = vunpack.c.h.b16 %v2382
    %v2453 = vunpack.c.l.b16 %v2383
    %v2454 = vunpack.c.h.b16 %v2383
    %v2455 = vunpack.c.l.b16 %v2384
    %v2456 = vunpack.c.h.b16 %v2384
    %v2457 = vunpack.c.l.b16 %v2385
    %v2458 = vunpack.c.h.b16 %v2385
    %v2459 = vunpack.c.l.b16 %v2386
    %v2460 = vunpack.c.h.b16 %v2386
    %v2461 = vunpack.c.l.b16 %v2387
    %v2462 = vunpack.c.h.b16 %v2387
    %v2463 = vunpack.c.l.b16 %v2388
    %v2464 = vunpack.c.h.b16 %v2388
    %v2465 = vunpack.c.l.b16 %v2389
    %v2466 = vunpack.c.h.b16 %v2389
    %v2467 = vunpack.c.l.b16 %v2390
    %v2468 = vunpack.c.h.b16 %v2390
    %v2469 = vunpack.c.l.b16 %v2391
    %v2470 = vunpack.c.h.b16 %v2391
    %v2471 = vunpack.c.l.b16 %v2392
    %v2472 = vunpack.c.h.b16 %v2392
    %v2473 = vunpack.c.l.b16 %v2393
    %v2474 = vunpack.c.h.b16 %v2393
    %v2475 = vunpack.c.l.b16 %v2394
    %v2476 = vunpack.c.h.b16 %v2394
    %v2477 = vunpack.c.l.b16 %v2395
    %v2478 = vunpack.c.h.b16 %v2395
    %v2479 = vunpack.c.l.b16 %v2396
    %v2480 = vunpack.c.h.b16 %v2396
    %v2481 = vunpack.c.l.b16 %v2397
    %v2482 = vunpack.c.h.b16 %v2397
    %v2483 = vunpack.c.l.b16 %v2398
    %v2484 = vunpack.c.h.b16 %v2398
    %v2485 = vunpack.c.l.b16 %v2399
    %v2486 = vunpack.c.h.b16 %v2399
    %v2487 = vunpack.c.l.b16 %v2400
    %v2488 = vunpack.c.h.b16 %v2400
    %v2489 = vunpack.c.l.b16 %v2401
    %v2490 = vunpack.c.h.b16 %v2401
    %v2491 = vunpack.c.l.b16 %v2402
    %v2492 = vunpack.c.h.b16 %v2402
    %v2493 = vunpack.c.l.b16 %v2403
    %v2494 = vunpack.c.h.b16 %v2403
    %v2495 = vunpack.c.l.b16 %v2404
    %v2496 = vunpack.c.h.b16 %v2404
    %v2497 = vunpack.c.l.b16 %v2405
    %v2498 = vunpack.c.h.b16 %v2405
    %v2499 = vunpack.c.l.b16 %v2406
    %v2500 = vunpack.c.h.b16 %v2406
    %v2501 = vunpack.c.l.b16 %v2407
    %v2502 = vunpack.c.h.b16 %v2407
    %v2503 = vunpack.c.l.b16 %v2408
    %v2504 = vunpack.c.h.b16 %v2408
    %v2505 = vpack.c.b16 %v2445, %v2441
    %v2506 = vpack.c.b16 %v2446, %v2442
    %v2507 = vpack.c.b16 %v2447, %v2443
    %v2508 = vpack.c.b16 %v2448, %v2444
    %v2509 = vpack.c.b16 %v2453, %v2449
    %v2510 = vpack.c.b16 %v2454, %v2450
    %v2511 = vpack.c.b16 %v2455, %v2451
    %v2512 = vpack.c.b16 %v2456, %v2452
    %v2513 = vpack.c.b16 %v2461, %v2457
    %v2514 = vpack.c.b16 %v2462, %v2458
    %v2515 = vpack.c.b16 %v2463, %v2459
    %v2516 = vpack.c.b16 %v2464, %v2460
    %v2517 = vpack.c.b16 %v2469, %v2465
    %v2518 = vpack.c.b16 %v2470, %v2466
    %v2519 = vpack.c.b16 %v2471, %v2467
    %v2520 = vpack.c.b16 %v2472, %v2468
    %v2521 = vpack.c.b16 %v2477, %v2473
    %v2522 = vpack.c.b16 %v2478, %v2474
    %v2523 = vpack.c.b16 %v2479, %v2475
    %v2524 = vpack.c.b16 %v2480, %v2476
    %v2525 = vpack.c.b16 %v2485, %v2481
    %v2526 = vpack.c.b16 %v2486, %v2482
    %v2527 = vpack.c.b16 %v2487, %v2483
    %v2528 = vpack.c.b16 %v2488, %v2484
    %v2529 = vpack.c.b16 %v2493, %v2489
    %v2530 = vpack.c.b16 %v2494, %v2490
    %v2531 = vpack.c.b16 %v2495, %v2491
    %v2532 = vpack.c.b16 %v2496, %v2492
    %v2533 = vpack.c.b16 %v2501, %v2497
    %v2534 = vpack.c.b16 %v2502, %v2498
    %v2535 = vpack.c.b16 %v2503, %v2499
    %v2536 = vpack.c.b16 %v2504, %v2500
    %2569 = vmatprep.subr.bf16.mxu0 %v2506
    %2570 = vmatpush1.bf16.msra.mxu0 %v2505
    %2571 = vmatprep.subr.bf16.mxu0 %v2510
    %2572 = vmatpush1.bf16.msra.mxu0 %v2509
    %2573 = vmatprep.subr.bf16.mxu0 %v2514
    %2574 = vmatpush1.bf16.msra.mxu0 %v2513
    %2575 = vmatprep.subr.bf16.mxu0 %v2518
    %2576 = vmatpush1.bf16.msra.mxu0 %v2517
    %2577 = vmatprep.subr.bf16.mxu0 %v2522
    %2578 = vmatpush1.bf16.msra.mxu0 %v2521
    %2579 = vmatprep.subr.bf16.mxu0 %v2526
    %2580 = vmatpush1.bf16.msra.mxu0 %v2525
    %2581 = vmatprep.subr.bf16.mxu0 %v2530
    %2582 = vmatpush1.bf16.msra.mxu0 %v2529
    %2583 = vmatprep.subr.bf16.mxu0 %v2534
    %2584 = vmatpush1.bf16.msra.mxu0 %v2533
    %2585 = vmatprep.subr.bf16.mxu0 0
    %2586 = vmatpush1.bf16.msra.mxu0 0
    %2587 = vmatprep.subr.bf16.mxu0 0
    %2588 = vmatpush1.bf16.msra.mxu0 0
    %2589 = vmatprep.subr.bf16.mxu0 0
    %2590 = vmatpush1.bf16.msra.mxu0 0
    %2591 = vmatprep.subr.bf16.mxu0 0
    %2592 = vmatpush1.bf16.msra.mxu0 0
    %2593 = vmatprep.subr.bf16.mxu0 0
    %2594 = vmatpush1.bf16.msra.mxu0 0
    %2595 = vmatprep.subr.bf16.mxu0 0
    %2596 = vmatpush1.bf16.msra.mxu0 0
    %2597 = vmatprep.subr.bf16.mxu0 0
    %2598 = vmatpush1.bf16.msra.mxu0 0
    %2599 = vmatprep.subr.bf16.mxu0 0
    %2600 = vmatpush1.bf16.msra.mxu0 0
    %2601 = vmatprep.mubr.bf16.mxu0 0
    %2602 = vmatmul.mubr.bf16.gmra.mrb[0].mxu0 %v2376
    %v2603 = vpop.f32.mrb[0].mxu0
    %v2604 = vadd.f32 0.0, %v2603
    %v2605 = vpop.f32.mrb[0].mxu0
    %v2606 = vadd.f32 0.0, %v2605
    %v2607 = vpop.f32.mrb[0].mxu0
    %v2608 = vpop.f32.mrb[0].mxu0
    %2609 = vdwg.mxu0
    %2610 = vmatprep.subr.bf16.mxu0 %v2508
    %2611 = vmatpush1.bf16.msra.mxu0 %v2507
    %2612 = vmatprep.subr.bf16.mxu0 %v2512
    %2613 = vmatpush1.bf16.msra.mxu0 %v2511
    %2614 = vmatprep.subr.bf16.mxu0 %v2516
    %2615 = vmatpush1.bf16.msra.mxu0 %v2515
    %2616 = vmatprep.subr.bf16.mxu0 %v2520
    %2617 = vmatpush1.bf16.msra.mxu0 %v2519
    %2618 = vmatprep.subr.bf16.mxu0 %v2524
    %2619 = vmatpush1.bf16.msra.mxu0 %v2523
    %2620 = vmatprep.subr.bf16.mxu0 %v2528
    %2621 = vmatpush1.bf16.msra.mxu0 %v2527
    %2622 = vmatprep.subr.bf16.mxu0 %v2532
    %2623 = vmatpush1.bf16.msra.mxu0 %v2531
    %2624 = vmatprep.subr.bf16.mxu0 %v2536
    %2625 = vmatpush1.bf16.msra.mxu0 %v2535
    %2626 = vmatprep.subr.bf16.mxu0 0
    %2627 = vmatpush1.bf16.msra.mxu0 0
    %2628 = vmatprep.subr.bf16.mxu0 0
    %2629 = vmatpush1.bf16.msra.mxu0 0
    %2630 = vmatprep.subr.bf16.mxu0 0
    %2631 = vmatpush1.bf16.msra.mxu0 0
    %2632 = vmatprep.subr.bf16.mxu0 0
    %2633 = vmatpush1.bf16.msra.mxu0 0
    %2634 = vmatprep.subr.bf16.mxu0 0
    %2635 = vmatpush1.bf16.msra.mxu0 0
    %2636 = vmatprep.subr.bf16.mxu0 0
    %2637 = vmatpush1.bf16.msra.mxu0 0
    %2638 = vmatprep.subr.bf16.mxu0 0
    %2639 = vmatpush1.bf16.msra.mxu0 0
    %2640 = vmatprep.subr.bf16.mxu0 0
    %2641 = vmatpush1.bf16.msra.mxu0 0
    %2642 = vmatprep.mubr.bf16.mxu0 0
    %2643 = vmatmul.mubr.bf16.gmra.mrb[0].mxu0 %v2376
    %v2644 = vpop.f32.mrb[0].mxu0
    %v2645 = vadd.f32 0.0, %v2644
    %v2646 = vpop.f32.mrb[0].mxu0
    %v2647 = vadd.f32 0.0, %v2646
    %v2648 = vpop.f32.mrb[0].mxu0
    %v2649 = vpop.f32.mrb[0].mxu0
    %2650 = vdwg.mxu0
    %v2651 = vadd.f32 %v2372, %v2604
    %v2652 = vadd.f32 %v2373, %v2606
    %v2653 = vadd.f32 %v2374, %v2645
    %v2654 = vadd.f32 %v2375, %v2647
    %v2655 = vxor.u32 %v2651, 2147483648
    %v2656 = vxor.u32 %v2652, 2147483648
    %v2657 = vxor.u32 %v2653, 2147483648
    %v2658 = vmul.f32 %v2655, 1.442695
    %v2659 = vpow.pop %v2658
    %v2660 = vmul.f32 %v2656, 1.442695
    %v2661 = vpow.pop %v2660
    %v2662 = vmul.f32 %v2657, 1.442695
    %v2663 = vpow.pop %v2662
    %v2664 = vadd.f32 %v2659, 1.0
    %v2665 = vadd.f32 %v2661, 1.0
    %v2666 = vadd.f32 %v2663, 1.0
    %v2667 = vrcp.pop %v2664
    %v2668 = vmul.f32 1.0, %v2667
    %v2669 = vrcp.pop %v2665
    %v2670 = vmul.f32 1.0, %v2669
    %v2671 = vrcp.pop %v2666
    %v2672 = vmul.f32 1.0, %v2671
    %v2673 = vtanh.pop %v2654
    %v2674 = vmul.f32 %v2670, %v2364
    %v2675 = vmul.f32 %v2668, %v2673
    %v2676 = vadd.f32 %v2674, %v2675
    %v2677 = vtanh.pop %v2676
    %v2678 = vmul.f32 %v2672, %v2677
    %s2679 = scalar_lea.vmem [#allocation3], 48
    %2680 = vst [vmem:[%s2679] sm:$0xff] %v2678
    %s2681 = smul.u32 7, 4
    %s2682 = smul.addr %s2681, 8
    %s2683 = scalar_lea.vmem [#allocation2], %s2682
    %v2684 = vld [vmem:[%s2683] sm:$0xff]
    %v2685 = vld [vmem:[%s2683 + $0x8] sm:$0xff]
    %v2686 = vld [vmem:[%s2683 + $0x10] sm:$0xff]
    %v2687 = vld [vmem:[%s2683 + $0x18] sm:$0xff]
    %v2688 = vpack.c.bf16 %v2678, %v2678
    %v2689 = vld [vmem:[#allocation4] sm:$0xff]
    %v2690 = vld [vmem:[#allocation4 + $0x8] sm:$0xff]
    %v2691 = vld [vmem:[#allocation4 + $0x10] sm:$0xff]
    %v2692 = vld [vmem:[#allocation4 + $0x18] sm:$0xff]
    %v2693 = vld [vmem:[#allocation4 + $0x20] sm:$0xff]
    %v2694 = vld [vmem:[#allocation4 + $0x28] sm:$0xff]
    %v2695 = vld [vmem:[#allocation4 + $0x30] sm:$0xff]
    %v2696 = vld [vmem:[#allocation4 + $0x38] sm:$0xff]
    %v2697 = vld [vmem:[#allocation4 + $0x40] sm:$0xff]
    %v2698 = vld [vmem:[#allocation4 + $0x48] sm:$0xff]
    %v2699 = vld [vmem:[#allocation4 + $0x50] sm:$0xff]
    %v2700 = vld [vmem:[#allocation4 + $0x58] sm:$0xff]
    %v2701 = vld [vmem:[#allocation4 + $0x60] sm:$0xff]
    %v2702 = vld [vmem:[#allocation4 + $0x68] sm:$0xff]
    %v2703 = vld [vmem:[#allocation4 + $0x70] sm:$0xff]
    %v2704 = vld [vmem:[#allocation4 + $0x78] sm:$0xff]
    %v2705 = vld [vmem:[#allocation4 + $0x80] sm:$0xff]
    %v2706 = vld [vmem:[#allocation4 + $0x88] sm:$0xff]
    %v2707 = vld [vmem:[#allocation4 + $0x90] sm:$0xff]
    %v2708 = vld [vmem:[#allocation4 + $0x98] sm:$0xff]
    %v2709 = vld [vmem:[#allocation4 + $0xa0] sm:$0xff]
    %v2710 = vld [vmem:[#allocation4 + $0xa8] sm:$0xff]
    %v2711 = vld [vmem:[#allocation4 + $0xb0] sm:$0xff]
    %v2712 = vld [vmem:[#allocation4 + $0xb8] sm:$0xff]
    %v2713 = vld [vmem:[#allocation4 + $0xc0] sm:$0xff]
    %v2714 = vld [vmem:[#allocation4 + $0xc8] sm:$0xff]
    %v2715 = vld [vmem:[#allocation4 + $0xd0] sm:$0xff]
    %v2716 = vld [vmem:[#allocation4 + $0xd8] sm:$0xff]
    %v2717 = vld [vmem:[#allocation4 + $0xe0] sm:$0xff]
    %v2718 = vld [vmem:[#allocation4 + $0xe8] sm:$0xff]
    %v2719 = vld [vmem:[#allocation4 + $0xf0] sm:$0xff]
    %v2720 = vld [vmem:[#allocation4 + $0xf8] sm:$0xff]
    %v2753 = vunpack.c.l.b16 %v2689
    %v2754 = vunpack.c.h.b16 %v2689
    %v2755 = vunpack.c.l.b16 %v2690
    %v2756 = vunpack.c.h.b16 %v2690
    %v2757 = vunpack.c.l.b16 %v2691
    %v2758 = vunpack.c.h.b16 %v2691
    %v2759 = vunpack.c.l.b16 %v2692
    %v2760 = vunpack.c.h.b16 %v2692
    %v2761 = vunpack.c.l.b16 %v2693
    %v2762 = vunpack.c.h.b16 %v2693
    %v2763 = vunpack.c.l.b16 %v2694
    %v2764 = vunpack.c.h.b16 %v2694
    %v2765 = vunpack.c.l.b16 %v2695
    %v2766 = vunpack.c.h.b16 %v2695
    %v2767 = vunpack.c.l.b16 %v2696
    %v2768 = vunpack.c.h.b16 %v2696
    %v2769 = vunpack.c.l.b16 %v2697
    %v2770 = vunpack.c.h.b16 %v2697
    %v2771 = vunpack.c.l.b16 %v2698
    %v2772 = vunpack.c.h.b16 %v2698
    %v2773 = vunpack.c.l.b16 %v2699
    %v2774 = vunpack.c.h.b16 %v2699
    %v2775 = vunpack.c.l.b16 %v2700
    %v2776 = vunpack.c.h.b16 %v2700
    %v2777 = vunpack.c.l.b16 %v2701
    %v2778 = vunpack.c.h.b16 %v2701
    %v2779 = vunpack.c.l.b16 %v2702
    %v2780 = vunpack.c.h.b16 %v2702
    %v2781 = vunpack.c.l.b16 %v2703
    %v2782 = vunpack.c.h.b16 %v2703
    %v2783 = vunpack.c.l.b16 %v2704
    %v2784 = vunpack.c.h.b16 %v2704
    %v2785 = vunpack.c.l.b16 %v2705
    %v2786 = vunpack.c.h.b16 %v2705
    %v2787 = vunpack.c.l.b16 %v2706
    %v2788 = vunpack.c.h.b16 %v2706
    %v2789 = vunpack.c.l.b16 %v2707
    %v2790 = vunpack.c.h.b16 %v2707
    %v2791 = vunpack.c.l.b16 %v2708
    %v2792 = vunpack.c.h.b16 %v2708
    %v2793 = vunpack.c.l.b16 %v2709
    %v2794 = vunpack.c.h.b16 %v2709
    %v2795 = vunpack.c.l.b16 %v2710
    %v2796 = vunpack.c.h.b16 %v2710
    %v2797 = vunpack.c.l.b16 %v2711
    %v2798 = vunpack.c.h.b16 %v2711
    %v2799 = vunpack.c.l.b16 %v2712
    %v2800 = vunpack.c.h.b16 %v2712
    %v2801 = vunpack.c.l.b16 %v2713
    %v2802 = vunpack.c.h.b16 %v2713
    %v2803 = vunpack.c.l.b16 %v2714
    %v2804 = vunpack.c.h.b16 %v2714
    %v2805 = vunpack.c.l.b16 %v2715
    %v2806 = vunpack.c.h.b16 %v2715
    %v2807 = vunpack.c.l.b16 %v2716
    %v2808 = vunpack.c.h.b16 %v2716
    %v2809 = vunpack.c.l.b16 %v2717
    %v2810 = vunpack.c.h.b16 %v2717
    %v2811 = vunpack.c.l.b16 %v2718
    %v2812 = vunpack.c.h.b16 %v2718
    %v2813 = vunpack.c.l.b16 %v2719
    %v2814 = vunpack.c.h.b16 %v2719
    %v2815 = vunpack.c.l.b16 %v2720
    %v2816 = vunpack.c.h.b16 %v2720
    %v2817 = vpack.c.b16 %v2757, %v2753
    %v2818 = vpack.c.b16 %v2758, %v2754
    %v2819 = vpack.c.b16 %v2759, %v2755
    %v2820 = vpack.c.b16 %v2760, %v2756
    %v2821 = vpack.c.b16 %v2765, %v2761
    %v2822 = vpack.c.b16 %v2766, %v2762
    %v2823 = vpack.c.b16 %v2767, %v2763
    %v2824 = vpack.c.b16 %v2768, %v2764
    %v2825 = vpack.c.b16 %v2773, %v2769
    %v2826 = vpack.c.b16 %v2774, %v2770
    %v2827 = vpack.c.b16 %v2775, %v2771
    %v2828 = vpack.c.b16 %v2776, %v2772
    %v2829 = vpack.c.b16 %v2781, %v2777
    %v2830 = vpack.c.b16 %v2782, %v2778
    %v2831 = vpack.c.b16 %v2783, %v2779
    %v2832 = vpack.c.b16 %v2784, %v2780
    %v2833 = vpack.c.b16 %v2789, %v2785
    %v2834 = vpack.c.b16 %v2790, %v2786
    %v2835 = vpack.c.b16 %v2791, %v2787
    %v2836 = vpack.c.b16 %v2792, %v2788
    %v2837 = vpack.c.b16 %v2797, %v2793
    %v2838 = vpack.c.b16 %v2798, %v2794
    %v2839 = vpack.c.b16 %v2799, %v2795
    %v2840 = vpack.c.b16 %v2800, %v2796
    %v2841 = vpack.c.b16 %v2805, %v2801
    %v2842 = vpack.c.b16 %v2806, %v2802
    %v2843 = vpack.c.b16 %v2807, %v2803
    %v2844 = vpack.c.b16 %v2808, %v2804
    %v2845 = vpack.c.b16 %v2813, %v2809
    %v2846 = vpack.c.b16 %v2814, %v2810
    %v2847 = vpack.c.b16 %v2815, %v2811
    %v2848 = vpack.c.b16 %v2816, %v2812
    %2881 = vmatprep.subr.bf16.mxu0 %v2818
    %2882 = vmatpush1.bf16.msra.mxu0 %v2817
    %2883 = vmatprep.subr.bf16.mxu0 %v2822
    %2884 = vmatpush1.bf16.msra.mxu0 %v2821
    %2885 = vmatprep.subr.bf16.mxu0 %v2826
    %2886 = vmatpush1.bf16.msra.mxu0 %v2825
    %2887 = vmatprep.subr.bf16.mxu0 %v2830
    %2888 = vmatpush1.bf16.msra.mxu0 %v2829
    %2889 = vmatprep.subr.bf16.mxu0 %v2834
    %2890 = vmatpush1.bf16.msra.mxu0 %v2833
    %2891 = vmatprep.subr.bf16.mxu0 %v2838
    %2892 = vmatpush1.bf16.msra.mxu0 %v2837
    %2893 = vmatprep.subr.bf16.mxu0 %v2842
    %2894 = vmatpush1.bf16.msra.mxu0 %v2841
    %2895 = vmatprep.subr.bf16.mxu0 %v2846
    %2896 = vmatpush1.bf16.msra.mxu0 %v2845
    %2897 = vmatprep.subr.bf16.mxu0 0
    %2898 = vmatpush1.bf16.msra.mxu0 0
    %2899 = vmatprep.subr.bf16.mxu0 0
    %2900 = vmatpush1.bf16.msra.mxu0 0
    %2901 = vmatprep.subr.bf16.mxu0 0
    %2902 = vmatpush1.bf16.msra.mxu0 0
    %2903 = vmatprep.subr.bf16.mxu0 0
    %2904 = vmatpush1.bf16.msra.mxu0 0
    %2905 = vmatprep.subr.bf16.mxu0 0
    %2906 = vmatpush1.bf16.msra.mxu0 0
    %2907 = vmatprep.subr.bf16.mxu0 0
    %2908 = vmatpush1.bf16.msra.mxu0 0
    %2909 = vmatprep.subr.bf16.mxu0 0
    %2910 = vmatpush1.bf16.msra.mxu0 0
    %2911 = vmatprep.subr.bf16.mxu0 0
    %2912 = vmatpush1.bf16.msra.mxu0 0
    %2913 = vmatprep.mubr.bf16.mxu0 0
    %2914 = vmatmul.mubr.bf16.gmra.mrb[0].mxu0 %v2688
    %v2915 = vpop.f32.mrb[0].mxu0
    %v2916 = vadd.f32 0.0, %v2915
    %v2917 = vpop.f32.mrb[0].mxu0
    %v2918 = vadd.f32 0.0, %v2917
    %v2919 = vpop.f32.mrb[0].mxu0
    %v2920 = vpop.f32.mrb[0].mxu0
    %2921 = vdwg.mxu0
    %2922 = vmatprep.subr.bf16.mxu0 %v2820
    %2923 = vmatpush1.bf16.msra.mxu0 %v2819
    %2924 = vmatprep.subr.bf16.mxu0 %v2824
    %2925 = vmatpush1.bf16.msra.mxu0 %v2823
    %2926 = vmatprep.subr.bf16.mxu0 %v2828
    %2927 = vmatpush1.bf16.msra.mxu0 %v2827
    %2928 = vmatprep.subr.bf16.mxu0 %v2832
    %2929 = vmatpush1.bf16.msra.mxu0 %v2831
    %2930 = vmatprep.subr.bf16.mxu0 %v2836
    %2931 = vmatpush1.bf16.msra.mxu0 %v2835
    %2932 = vmatprep.subr.bf16.mxu0 %v2840
    %2933 = vmatpush1.bf16.msra.mxu0 %v2839
    %2934 = vmatprep.subr.bf16.mxu0 %v2844
    %2935 = vmatpush1.bf16.msra.mxu0 %v2843
    %2936 = vmatprep.subr.bf16.mxu0 %v2848
    %2937 = vmatpush1.bf16.msra.mxu0 %v2847
    %2938 = vmatprep.subr.bf16.mxu0 0
    %2939 = vmatpush1.bf16.msra.mxu0 0
    %2940 = vmatprep.subr.bf16.mxu0 0
    %2941 = vmatpush1.bf16.msra.mxu0 0
    %2942 = vmatprep.subr.bf16.mxu0 0
    %2943 = vmatpush1.bf16.msra.mxu0 0
    %2944 = vmatprep.subr.bf16.mxu0 0
    %2945 = vmatpush1.bf16.msra.mxu0 0
    %2946 = vmatprep.subr.bf16.mxu0 0
    %2947 = vmatpush1.bf16.msra.mxu0 0
    %2948 = vmatprep.subr.bf16.mxu0 0
    %2949 = vmatpush1.bf16.msra.mxu0 0
    %2950 = vmatprep.subr.bf16.mxu0 0
    %2951 = vmatpush1.bf16.msra.mxu0 0
    %2952 = vmatprep.subr.bf16.mxu0 0
    %2953 = vmatpush1.bf16.msra.mxu0 0
    %2954 = vmatprep.mubr.bf16.mxu0 0
    %2955 = vmatmul.mubr.bf16.gmra.mrb[0].mxu0 %v2688
    %v2956 = vpop.f32.mrb[0].mxu0
    %v2957 = vadd.f32 0.0, %v2956
    %v2958 = vpop.f32.mrb[0].mxu0
    %v2959 = vadd.f32 0.0, %v2958
    %v2960 = vpop.f32.mrb[0].mxu0
    %v2961 = vpop.f32.mrb[0].mxu0
    %2962 = vdwg.mxu0
    %v2963 = vadd.f32 %v2684, %v2916
    %v2964 = vadd.f32 %v2685, %v2918
    %v2965 = vadd.f32 %v2686, %v2957
    %v2966 = vadd.f32 %v2687, %v2959
    %v2967 = vxor.u32 %v2963, 2147483648
    %v2968 = vxor.u32 %v2964, 2147483648
    %v2969 = vxor.u32 %v2965, 2147483648
    %v2970 = vmul.f32 %v2967, 1.442695
    %v2971 = vpow.pop %v2970
    %v2972 = vmul.f32 %v2968, 1.442695
    %v2973 = vpow.pop %v2972
    %v2974 = vmul.f32 %v2969, 1.442695
    %v2975 = vpow.pop %v2974
    %v2976 = vadd.f32 %v2971, 1.0
    %v2977 = vadd.f32 %v2973, 1.0
    %v2978 = vadd.f32 %v2975, 1.0
    %v2979 = vrcp.pop %v2976
    %v2980 = vmul.f32 1.0, %v2979
    %v2981 = vrcp.pop %v2977
    %v2982 = vmul.f32 1.0, %v2981
    %v2983 = vrcp.pop %v2978
    %v2984 = vmul.f32 1.0, %v2983
    %v2985 = vtanh.pop %v2966
    %v2986 = vmul.f32 %v2982, %v2676
    %v2987 = vmul.f32 %v2980, %v2985
    %v2988 = vadd.f32 %v2986, %v2987
    %v2989 = vtanh.pop %v2988
    %v2990 = vmul.f32 %v2984, %v2989
    %s2991 = scalar_lea.vmem [#allocation3], 56
    %2992 = vst [vmem:[%s2991] sm:$0xff] %v2990
    %s2993 = smul.u32 8, 4
    %s2994 = smul.addr %s2993, 8
    %s2995 = scalar_lea.vmem [#allocation2], %s2994
    %v2996 = vld [vmem:[%s2995] sm:$0xff]
    %v2997 = vld [vmem:[%s2995 + $0x8] sm:$0xff]
    %v2998 = vld [vmem:[%s2995 + $0x10] sm:$0xff]
    %v2999 = vld [vmem:[%s2995 + $0x18] sm:$0xff]
    %v3000 = vpack.c.bf16 %v2990, %v2990
    %v3001 = vld [vmem:[#allocation4] sm:$0xff]
    %v3002 = vld [vmem:[#allocation4 + $0x8] sm:$0xff]
    %v3003 = vld [vmem:[#allocation4 + $0x10] sm:$0xff]
    %v3004 = vld [vmem:[#allocation4 + $0x18] sm:$0xff]
    %v3005 = vld [vmem:[#allocation4 + $0x20] sm:$0xff]
    %v3006 = vld [vmem:[#allocation4 + $0x28] sm:$0xff]
    %v3007 = vld [vmem:[#allocation4 + $0x30] sm:$0xff]
    %v3008 = vld [vmem:[#allocation4 + $0x38] sm:$0xff]
    %v3009 = vld [vmem:[#allocation4 + $0x40] sm:$0xff]
    %v3010 = vld [vmem:[#allocation4 + $0x48] sm:$0xff]
    %v3011 = vld [vmem:[#allocation4 + $0x50] sm:$0xff]
    %v3012 = vld [vmem:[#allocation4 + $0x58] sm:$0xff]
    %v3013 = vld [vmem:[#allocation4 + $0x60] sm:$0xff]
    %v3014 = vld [vmem:[#allocation4 + $0x68] sm:$0xff]
    %v3015 = vld [vmem:[#allocation4 + $0x70] sm:$0xff]
    %v3016 = vld [vmem:[#allocation4 + $0x78] sm:$0xff]
    %v3017 = vld [vmem:[#allocation4 + $0x80] sm:$0xff]
    %v3018 = vld [vmem:[#allocation4 + $0x88] sm:$0xff]
    %v3019 = vld [vmem:[#allocation4 + $0x90] sm:$0xff]
    %v3020 = vld [vmem:[#allocation4 + $0x98] sm:$0xff]
    %v3021 = vld [vmem:[#allocation4 + $0xa0] sm:$0xff]
    %v3022 = vld [vmem:[#allocation4 + $0xa8] sm:$0xff]
    %v3023 = vld [vmem:[#allocation4 + $0xb0] sm:$0xff]
    %v3024 = vld [vmem:[#allocation4 + $0xb8] sm:$0xff]
    %v3025 = vld [vmem:[#allocation4 + $0xc0] sm:$0xff]
    %v3026 = vld [vmem:[#allocation4 + $0xc8] sm:$0xff]
    %v3027 = vld [vmem:[#allocation4 + $0xd0] sm:$0xff]
    %v3028 = vld [vmem:[#allocation4 + $0xd8] sm:$0xff]
    %v3029 = vld [vmem:[#allocation4 + $0xe0] sm:$0xff]
    %v3030 = vld [vmem:[#allocation4 + $0xe8] sm:$0xff]
    %v3031 = vld [vmem:[#allocation4 + $0xf0] sm:$0xff]
    %v3032 = vld [vmem:[#allocation4 + $0xf8] sm:$0xff]
    %v3065 = vunpack.c.l.b16 %v3001
    %v3066 = vunpack.c.h.b16 %v3001
    %v3067 = vunpack.c.l.b16 %v3002
    %v3068 = vunpack.c.h.b16 %v3002
    %v3069 = vunpack.c.l.b16 %v3003
    %v3070 = vunpack.c.h.b16 %v3003
    %v3071 = vunpack.c.l.b16 %v3004
    %v3072 = vunpack.c.h.b16 %v3004
    %v3073 = vunpack.c.l.b16 %v3005
    %v3074 = vunpack.c.h.b16 %v3005
    %v3075 = vunpack.c.l.b16 %v3006
    %v3076 = vunpack.c.h.b16 %v3006
    %v3077 = vunpack.c.l.b16 %v3007
    %v3078 = vunpack.c.h.b16 %v3007
    %v3079 = vunpack.c.l.b16 %v3008
    %v3080 = vunpack.c.h.b16 %v3008
    %v3081 = vunpack.c.l.b16 %v3009
    %v3082 = vunpack.c.h.b16 %v3009
    %v3083 = vunpack.c.l.b16 %v3010
    %v3084 = vunpack.c.h.b16 %v3010
    %v3085 = vunpack.c.l.b16 %v3011
    %v3086 = vunpack.c.h.b16 %v3011
    %v3087 = vunpack.c.l.b16 %v3012
    %v3088 = vunpack.c.h.b16 %v3012
    %v3089 = vunpack.c.l.b16 %v3013
    %v3090 = vunpack.c.h.b16 %v3013
    %v3091 = vunpack.c.l.b16 %v3014
    %v3092 = vunpack.c.h.b16 %v3014
    %v3093 = vunpack.c.l.b16 %v3015
    %v3094 = vunpack.c.h.b16 %v3015
    %v3095 = vunpack.c.l.b16 %v3016
    %v3096 = vunpack.c.h.b16 %v3016
    %v3097 = vunpack.c.l.b16 %v3017
    %v3098 = vunpack.c.h.b16 %v3017
    %v3099 = vunpack.c.l.b16 %v3018
    %v3100 = vunpack.c.h.b16 %v3018
    %v3101 = vunpack.c.l.b16 %v3019
    %v3102 = vunpack.c.h.b16 %v3019
    %v3103 = vunpack.c.l.b16 %v3020
    %v3104 = vunpack.c.h.b16 %v3020
    %v3105 = vunpack.c.l.b16 %v3021
    %v3106 = vunpack.c.h.b16 %v3021
    %v3107 = vunpack.c.l.b16 %v3022
    %v3108 = vunpack.c.h.b16 %v3022
    %v3109 = vunpack.c.l.b16 %v3023
    %v3110 = vunpack.c.h.b16 %v3023
    %v3111 = vunpack.c.l.b16 %v3024
    %v3112 = vunpack.c.h.b16 %v3024
    %v3113 = vunpack.c.l.b16 %v3025
    %v3114 = vunpack.c.h.b16 %v3025
    %v3115 = vunpack.c.l.b16 %v3026
    %v3116 = vunpack.c.h.b16 %v3026
    %v3117 = vunpack.c.l.b16 %v3027
    %v3118 = vunpack.c.h.b16 %v3027
    %v3119 = vunpack.c.l.b16 %v3028
    %v3120 = vunpack.c.h.b16 %v3028
    %v3121 = vunpack.c.l.b16 %v3029
    %v3122 = vunpack.c.h.b16 %v3029
    %v3123 = vunpack.c.l.b16 %v3030
    %v3124 = vunpack.c.h.b16 %v3030
    %v3125 = vunpack.c.l.b16 %v3031
    %v3126 = vunpack.c.h.b16 %v3031
    %v3127 = vunpack.c.l.b16 %v3032
    %v3128 = vunpack.c.h.b16 %v3032
    %v3129 = vpack.c.b16 %v3069, %v3065
    %v3130 = vpack.c.b16 %v3070, %v3066
    %v3131 = vpack.c.b16 %v3071, %v3067
    %v3132 = vpack.c.b16 %v3072, %v3068
    %v3133 = vpack.c.b16 %v3077, %v3073
    %v3134 = vpack.c.b16 %v3078, %v3074
    %v3135 = vpack.c.b16 %v3079, %v3075
    %v3136 = vpack.c.b16 %v3080, %v3076
    %v3137 = vpack.c.b16 %v3085, %v3081
    %v3138 = vpack.c.b16 %v3086, %v3082
    %v3139 = vpack.c.b16 %v3087, %v3083
    %v3140 = vpack.c.b16 %v3088, %v3084
    %v3141 = vpack.c.b16 %v3093, %v3089
    %v3142 = vpack.c.b16 %v3094, %v3090
    %v3143 = vpack.c.b16 %v3095, %v3091
    %v3144 = vpack.c.b16 %v3096, %v3092
    %v3145 = vpack.c.b16 %v3101, %v3097
    %v3146 = vpack.c.b16 %v3102, %v3098
    %v3147 = vpack.c.b16 %v3103, %v3099
    %v3148 = vpack.c.b16 %v3104, %v3100
    %v3149 = vpack.c.b16 %v3109, %v3105
    %v3150 = vpack.c.b16 %v3110, %v3106
    %v3151 = vpack.c.b16 %v3111, %v3107
    %v3152 = vpack.c.b16 %v3112, %v3108
    %v3153 = vpack.c.b16 %v3117, %v3113
    %v3154 = vpack.c.b16 %v3118, %v3114
    %v3155 = vpack.c.b16 %v3119, %v3115
    %v3156 = vpack.c.b16 %v3120, %v3116
    %v3157 = vpack.c.b16 %v3125, %v3121
    %v3158 = vpack.c.b16 %v3126, %v3122
    %v3159 = vpack.c.b16 %v3127, %v3123
    %v3160 = vpack.c.b16 %v3128, %v3124
    %3193 = vmatprep.subr.bf16.mxu0 %v3130
    %3194 = vmatpush1.bf16.msra.mxu0 %v3129
    %3195 = vmatprep.subr.bf16.mxu0 %v3134
    %3196 = vmatpush1.bf16.msra.mxu0 %v3133
    %3197 = vmatprep.subr.bf16.mxu0 %v3138
    %3198 = vmatpush1.bf16.msra.mxu0 %v3137
    %3199 = vmatprep.subr.bf16.mxu0 %v3142
    %3200 = vmatpush1.bf16.msra.mxu0 %v3141
    %3201 = vmatprep.subr.bf16.mxu0 %v3146
    %3202 = vmatpush1.bf16.msra.mxu0 %v3145
    %3203 = vmatprep.subr.bf16.mxu0 %v3150
    %3204 = vmatpush1.bf16.msra.mxu0 %v3149
    %3205 = vmatprep.subr.bf16.mxu0 %v3154
    %3206 = vmatpush1.bf16.msra.mxu0 %v3153
    %3207 = vmatprep.subr.bf16.mxu0 %v3158
    %3208 = vmatpush1.bf16.msra.mxu0 %v3157
    %3209 = vmatprep.subr.bf16.mxu0 0
    %3210 = vmatpush1.bf16.msra.mxu0 0
    %3211 = vmatprep.subr.bf16.mxu0 0
    %3212 = vmatpush1.bf16.msra.mxu0 0
    %3213 = vmatprep.subr.bf16.mxu0 0
    %3214 = vmatpush1.bf16.msra.mxu0 0
    %3215 = vmatprep.subr.bf16.mxu0 0
    %3216 = vmatpush1.bf16.msra.mxu0 0
    %3217 = vmatprep.subr.bf16.mxu0 0
    %3218 = vmatpush1.bf16.msra.mxu0 0
    %3219 = vmatprep.subr.bf16.mxu0 0
    %3220 = vmatpush1.bf16.msra.mxu0 0
    %3221 = vmatprep.subr.bf16.mxu0 0
    %3222 = vmatpush1.bf16.msra.mxu0 0
    %3223 = vmatprep.subr.bf16.mxu0 0
    %3224 = vmatpush1.bf16.msra.mxu0 0
    %3225 = vmatprep.mubr.bf16.mxu0 0
    %3226 = vmatmul.mubr.bf16.gmra.mrb[0].mxu0 %v3000
    %v3227 = vpop.f32.mrb[0].mxu0
    %v3228 = vadd.f32 0.0, %v3227
    %v3229 = vpop.f32.mrb[0].mxu0
    %v3230 = vadd.f32 0.0, %v3229
    %v3231 = vpop.f32.mrb[0].mxu0
    %v3232 = vpop.f32.mrb[0].mxu0
    %3233 = vdwg.mxu0
    %3234 = vmatprep.subr.bf16.mxu0 %v3132
    %3235 = vmatpush1.bf16.msra.mxu0 %v3131
    %3236 = vmatprep.subr.bf16.mxu0 %v3136
    %3237 = vmatpush1.bf16.msra.mxu0 %v3135
    %3238 = vmatprep.subr.bf16.mxu0 %v3140
    %3239 = vmatpush1.bf16.msra.mxu0 %v3139
    %3240 = vmatprep.subr.bf16.mxu0 %v3144
    %3241 = vmatpush1.bf16.msra.mxu0 %v3143
    %3242 = vmatprep.subr.bf16.mxu0 %v3148
    %3243 = vmatpush1.bf16.msra.mxu0 %v3147
    %3244 = vmatprep.subr.bf16.mxu0 %v3152
    %3245 = vmatpush1.bf16.msra.mxu0 %v3151
    %3246 = vmatprep.subr.bf16.mxu0 %v3156
    %3247 = vmatpush1.bf16.msra.mxu0 %v3155
    %3248 = vmatprep.subr.bf16.mxu0 %v3160
    %3249 = vmatpush1.bf16.msra.mxu0 %v3159
    %3250 = vmatprep.subr.bf16.mxu0 0
    %3251 = vmatpush1.bf16.msra.mxu0 0
    %3252 = vmatprep.subr.bf16.mxu0 0
    %3253 = vmatpush1.bf16.msra.mxu0 0
    %3254 = vmatprep.subr.bf16.mxu0 0
    %3255 = vmatpush1.bf16.msra.mxu0 0
    %3256 = vmatprep.subr.bf16.mxu0 0
    %3257 = vmatpush1.bf16.msra.mxu0 0
    %3258 = vmatprep.subr.bf16.mxu0 0
    %3259 = vmatpush1.bf16.msra.mxu0 0
    %3260 = vmatprep.subr.bf16.mxu0 0
    %3261 = vmatpush1.bf16.msra.mxu0 0
    %3262 = vmatprep.subr.bf16.mxu0 0
    %3263 = vmatpush1.bf16.msra.mxu0 0
    %3264 = vmatprep.subr.bf16.mxu0 0
    %3265 = vmatpush1.bf16.msra.mxu0 0
    %3266 = vmatprep.mubr.bf16.mxu0 0
    %3267 = vmatmul.mubr.bf16.gmra.mrb[0].mxu0 %v3000
    %v3268 = vpop.f32.mrb[0].mxu0
    %v3269 = vadd.f32 0.0, %v3268
    %v3270 = vpop.f32.mrb[0].mxu0
    %v3271 = vadd.f32 0.0, %v3270
    %v3272 = vpop.f32.mrb[0].mxu0
    %v3273 = vpop.f32.mrb[0].mxu0
    %3274 = vdwg.mxu0
    %v3275 = vadd.f32 %v2996, %v3228
    %v3276 = vadd.f32 %v2997, %v3230
    %v3277 = vadd.f32 %v2998, %v3269
    %v3278 = vadd.f32 %v2999, %v3271
    %v3279 = vxor.u32 %v3275, 2147483648
    %v3280 = vxor.u32 %v3276, 2147483648
    %v3281 = vxor.u32 %v3277, 2147483648
    %v3282 = vmul.f32 %v3279, 1.442695
    %v3283 = vpow.pop %v3282
    %v3284 = vmul.f32 %v3280, 1.442695
    %v3285 = vpow.pop %v3284
    %v3286 = vmul.f32 %v3281, 1.442695
    %v3287 = vpow.pop %v3286
    %v3288 = vadd.f32 %v3283, 1.0
    %v3289 = vadd.f32 %v3285, 1.0
    %v3290 = vadd.f32 %v3287, 1.0
    %v3291 = vrcp.pop %v3288
    %v3292 = vmul.f32 1.0, %v3291
    %v3293 = vrcp.pop %v3289
    %v3294 = vmul.f32 1.0, %v3293
    %v3295 = vrcp.pop %v3290
    %v3296 = vmul.f32 1.0, %v3295
    %v3297 = vtanh.pop %v3278
    %v3298 = vmul.f32 %v3294, %v2988
    %v3299 = vmul.f32 %v3292, %v3297
    %v3300 = vadd.f32 %v3298, %v3299
    %v3301 = vtanh.pop %v3300
    %v3302 = vmul.f32 %v3296, %v3301
    %s3303 = scalar_lea.vmem [#allocation3], 64
    %3304 = vst [vmem:[%s3303] sm:$0xff] %v3302
    %s3305 = smul.u32 9, 4
    %s3306 = smul.addr %s3305, 8
    %s3307 = scalar_lea.vmem [#allocation2], %s3306
    %v3308 = vld [vmem:[%s3307] sm:$0xff]
    %v3309 = vld [vmem:[%s3307 + $0x8] sm:$0xff]
    %v3310 = vld [vmem:[%s3307 + $0x10] sm:$0xff]
    %v3311 = vld [vmem:[%s3307 + $0x18] sm:$0xff]
    %v3312 = vpack.c.bf16 %v3302, %v3302
    %v3313 = vld [vmem:[#allocation4] sm:$0xff]
    %v3314 = vld [vmem:[#allocation4 + $0x8] sm:$0xff]
    %v3315 = vld [vmem:[#allocation4 + $0x10] sm:$0xff]
    %v3316 = vld [vmem:[#allocation4 + $0x18] sm:$0xff]
    %v3317 = vld [vmem:[#allocation4 + $0x20] sm:$0xff]
    %v3318 = vld [vmem:[#allocation4 + $0x28] sm:$0xff]
    %v3319 = vld [vmem:[#allocation4 + $0x30] sm:$0xff]
    %v3320 = vld [vmem:[#allocation4 + $0x38] sm:$0xff]
    %v3321 = vld [vmem:[#allocation4 + $0x40] sm:$0xff]
    %v3322 = vld [vmem:[#allocation4 + $0x48] sm:$0xff]
    %v3323 = vld [vmem:[#allocation4 + $0x50] sm:$0xff]
    %v3324 = vld [vmem:[#allocation4 + $0x58] sm:$0xff]
    %v3325 = vld [vmem:[#allocation4 + $0x60] sm:$0xff]
    %v3326 = vld [vmem:[#allocation4 + $0x68] sm:$0xff]
    %v3327 = vld [vmem:[#allocation4 + $0x70] sm:$0xff]
    %v3328 = vld [vmem:[#allocation4 + $0x78] sm:$0xff]
    %v3329 = vld [vmem:[#allocation4 + $0x80] sm:$0xff]
    %v3330 = vld [vmem:[#allocation4 + $0x88] sm:$0xff]
    %v3331 = vld [vmem:[#allocation4 + $0x90] sm:$0xff]
    %v3332 = vld [vmem:[#allocation4 + $0x98] sm:$0xff]
    %v3333 = vld [vmem:[#allocation4 + $0xa0] sm:$0xff]
    %v3334 = vld [vmem:[#allocation4 + $0xa8] sm:$0xff]
    %v3335 = vld [vmem:[#allocation4 + $0xb0] sm:$0xff]
    %v3336 = vld [vmem:[#allocation4 + $0xb8] sm:$0xff]
    %v3337 = vld [vmem:[#allocation4 + $0xc0] sm:$0xff]
    %v3338 = vld [vmem:[#allocation4 + $0xc8] sm:$0xff]
    %v3339 = vld [vmem:[#allocation4 + $0xd0] sm:$0xff]
    %v3340 = vld [vmem:[#allocation4 + $0xd8] sm:$0xff]
    %v3341 = vld [vmem:[#allocation4 + $0xe0] sm:$0xff]
    %v3342 = vld [vmem:[#allocation4 + $0xe8] sm:$0xff]
    %v3343 = vld [vmem:[#allocation4 + $0xf0] sm:$0xff]
    %v3344 = vld [vmem:[#allocation4 + $0xf8] sm:$0xff]
    %v3377 = vunpack.c.l.b16 %v3313
    %v3378 = vunpack.c.h.b16 %v3313
    %v3379 = vunpack.c.l.b16 %v3314
    %v3380 = vunpack.c.h.b16 %v3314
    %v3381 = vunpack.c.l.b16 %v3315
    %v3382 = vunpack.c.h.b16 %v3315
    %v3383 = vunpack.c.l.b16 %v3316
    %v3384 = vunpack.c.h.b16 %v3316
    %v3385 = vunpack.c.l.b16 %v3317
    %v3386 = vunpack.c.h.b16 %v3317
    %v3387 = vunpack.c.l.b16 %v3318
    %v3388 = vunpack.c.h.b16 %v3318
    %v3389 = vunpack.c.l.b16 %v3319
    %v3390 = vunpack.c.h.b16 %v3319
    %v3391 = vunpack.c.l.b16 %v3320
    %v3392 = vunpack.c.h.b16 %v3320
    %v3393 = vunpack.c.l.b16 %v3321
    %v3394 = vunpack.c.h.b16 %v3321
    %v3395 = vunpack.c.l.b16 %v3322
    %v3396 = vunpack.c.h.b16 %v3322
    %v3397 = vunpack.c.l.b16 %v3323
    %v3398 = vunpack.c.h.b16 %v3323
    %v3399 = vunpack.c.l.b16 %v3324
    %v3400 = vunpack.c.h.b16 %v3324
    %v3401 = vunpack.c.l.b16 %v3325
    %v3402 = vunpack.c.h.b16 %v3325
    %v3403 = vunpack.c.l.b16 %v3326
    %v3404 = vunpack.c.h.b16 %v3326
    %v3405 = vunpack.c.l.b16 %v3327
    %v3406 = vunpack.c.h.b16 %v3327
    %v3407 = vunpack.c.l.b16 %v3328
    %v3408 = vunpack.c.h.b16 %v3328
    %v3409 = vunpack.c.l.b16 %v3329
    %v3410 = vunpack.c.h.b16 %v3329
    %v3411 = vunpack.c.l.b16 %v3330
    %v3412 = vunpack.c.h.b16 %v3330
    %v3413 = vunpack.c.l.b16 %v3331
    %v3414 = vunpack.c.h.b16 %v3331
    %v3415 = vunpack.c.l.b16 %v3332
    %v3416 = vunpack.c.h.b16 %v3332
    %v3417 = vunpack.c.l.b16 %v3333
    %v3418 = vunpack.c.h.b16 %v3333
    %v3419 = vunpack.c.l.b16 %v3334
    %v3420 = vunpack.c.h.b16 %v3334
    %v3421 = vunpack.c.l.b16 %v3335
    %v3422 = vunpack.c.h.b16 %v3335
    %v3423 = vunpack.c.l.b16 %v3336
    %v3424 = vunpack.c.h.b16 %v3336
    %v3425 = vunpack.c.l.b16 %v3337
    %v3426 = vunpack.c.h.b16 %v3337
    %v3427 = vunpack.c.l.b16 %v3338
    %v3428 = vunpack.c.h.b16 %v3338
    %v3429 = vunpack.c.l.b16 %v3339
    %v3430 = vunpack.c.h.b16 %v3339
    %v3431 = vunpack.c.l.b16 %v3340
    %v3432 = vunpack.c.h.b16 %v3340
    %v3433 = vunpack.c.l.b16 %v3341
    %v3434 = vunpack.c.h.b16 %v3341
    %v3435 = vunpack.c.l.b16 %v3342
    %v3436 = vunpack.c.h.b16 %v3342
    %v3437 = vunpack.c.l.b16 %v3343
    %v3438 = vunpack.c.h.b16 %v3343
    %v3439 = vunpack.c.l.b16 %v3344
    %v3440 = vunpack.c.h.b16 %v3344
    %v3441 = vpack.c.b16 %v3381, %v3377
    %v3442 = vpack.c.b16 %v3382, %v3378
    %v3443 = vpack.c.b16 %v3383, %v3379
    %v3444 = vpack.c.b16 %v3384, %v3380
    %v3445 = vpack.c.b16 %v3389, %v3385
    %v3446 = vpack.c.b16 %v3390, %v3386
    %v3447 = vpack.c.b16 %v3391, %v3387
    %v3448 = vpack.c.b16 %v3392, %v3388
    %v3449 = vpack.c.b16 %v3397, %v3393
    %v3450 = vpack.c.b16 %v3398, %v3394
    %v3451 = vpack.c.b16 %v3399, %v3395
    %v3452 = vpack.c.b16 %v3400, %v3396
    %v3453 = vpack.c.b16 %v3405, %v3401
    %v3454 = vpack.c.b16 %v3406, %v3402
    %v3455 = vpack.c.b16 %v3407, %v3403
    %v3456 = vpack.c.b16 %v3408, %v3404
    %v3457 = vpack.c.b16 %v3413, %v3409
    %v3458 = vpack.c.b16 %v3414, %v3410
    %v3459 = vpack.c.b16 %v3415, %v3411
    %v3460 = vpack.c.b16 %v3416, %v3412
    %v3461 = vpack.c.b16 %v3421, %v3417
    %v3462 = vpack.c.b16 %v3422, %v3418
    %v3463 = vpack.c.b16 %v3423, %v3419
    %v3464 = vpack.c.b16 %v3424, %v3420
    %v3465 = vpack.c.b16 %v3429, %v3425
    %v3466 = vpack.c.b16 %v3430, %v3426
    %v3467 = vpack.c.b16 %v3431, %v3427
    %v3468 = vpack.c.b16 %v3432, %v3428
    %v3469 = vpack.c.b16 %v3437, %v3433
    %v3470 = vpack.c.b16 %v3438, %v3434
    %v3471 = vpack.c.b16 %v3439, %v3435
    %v3472 = vpack.c.b16 %v3440, %v3436
    %3505 = vmatprep.subr.bf16.mxu0 %v3442
    %3506 = vmatpush1.bf16.msra.mxu0 %v3441
    %3507 = vmatprep.subr.bf16.mxu0 %v3446
    %3508 = vmatpush1.bf16.msra.mxu0 %v3445
    %3509 = vmatprep.subr.bf16.mxu0 %v3450
    %3510 = vmatpush1.bf16.msra.mxu0 %v3449
    %3511 = vmatprep.subr.bf16.mxu0 %v3454
    %3512 = vmatpush1.bf16.msra.mxu0 %v3453
    %3513 = vmatprep.subr.bf16.mxu0 %v3458
    %3514 = vmatpush1.bf16.msra.mxu0 %v3457
    %3515 = vmatprep.subr.bf16.mxu0 %v3462
    %3516 = vmatpush1.bf16.msra.mxu0 %v3461
    %3517 = vmatprep.subr.bf16.mxu0 %v3466
    %3518 = vmatpush1.bf16.msra.mxu0 %v3465
    %3519 = vmatprep.subr.bf16.mxu0 %v3470
    %3520 = vmatpush1.bf16.msra.mxu0 %v3469
    %3521 = vmatprep.subr.bf16.mxu0 0
    %3522 = vmatpush1.bf16.msra.mxu0 0
    %3523 = vmatprep.subr.bf16.mxu0 0
    %3524 = vmatpush1.bf16.msra.mxu0 0
    %3525 = vmatprep.subr.bf16.mxu0 0
    %3526 = vmatpush1.bf16.msra.mxu0 0
    %3527 = vmatprep.subr.bf16.mxu0 0
    %3528 = vmatpush1.bf16.msra.mxu0 0
    %3529 = vmatprep.subr.bf16.mxu0 0
    %3530 = vmatpush1.bf16.msra.mxu0 0
    %3531 = vmatprep.subr.bf16.mxu0 0
    %3532 = vmatpush1.bf16.msra.mxu0 0
    %3533 = vmatprep.subr.bf16.mxu0 0
    %3534 = vmatpush1.bf16.msra.mxu0 0
    %3535 = vmatprep.subr.bf16.mxu0 0
    %3536 = vmatpush1.bf16.msra.mxu0 0
    %3537 = vmatprep.mubr.bf16.mxu0 0
    %3538 = vmatmul.mubr.bf16.gmra.mrb[0].mxu0 %v3312
    %v3539 = vpop.f32.mrb[0].mxu0
    %v3540 = vadd.f32 0.0, %v3539
    %v3541 = vpop.f32.mrb[0].mxu0
    %v3542 = vadd.f32 0.0, %v3541
    %v3543 = vpop.f32.mrb[0].mxu0
    %v3544 = vpop.f32.mrb[0].mxu0
    %3545 = vdwg.mxu0
    %3546 = vmatprep.subr.bf16.mxu0 %v3444
    %3547 = vmatpush1.bf16.msra.mxu0 %v3443
    %3548 = vmatprep.subr.bf16.mxu0 %v3448
    %3549 = vmatpush1.bf16.msra.mxu0 %v3447
    %3550 = vmatprep.subr.bf16.mxu0 %v3452
    %3551 = vmatpush1.bf16.msra.mxu0 %v3451
    %3552 = vmatprep.subr.bf16.mxu0 %v3456
    %3553 = vmatpush1.bf16.msra.mxu0 %v3455
    %3554 = vmatprep.subr.bf16.mxu0 %v3460
    %3555 = vmatpush1.bf16.msra.mxu0 %v3459
    %3556 = vmatprep.subr.bf16.mxu0 %v3464
    %3557 = vmatpush1.bf16.msra.mxu0 %v3463
    %3558 = vmatprep.subr.bf16.mxu0 %v3468
    %3559 = vmatpush1.bf16.msra.mxu0 %v3467
    %3560 = vmatprep.subr.bf16.mxu0 %v3472
    %3561 = vmatpush1.bf16.msra.mxu0 %v3471
    %3562 = vmatprep.subr.bf16.mxu0 0
    %3563 = vmatpush1.bf16.msra.mxu0 0
    %3564 = vmatprep.subr.bf16.mxu0 0
    %3565 = vmatpush1.bf16.msra.mxu0 0
    %3566 = vmatprep.subr.bf16.mxu0 0
    %3567 = vmatpush1.bf16.msra.mxu0 0
    %3568 = vmatprep.subr.bf16.mxu0 0
    %3569 = vmatpush1.bf16.msra.mxu0 0
    %3570 = vmatprep.subr.bf16.mxu0 0
    %3571 = vmatpush1.bf16.msra.mxu0 0
    %3572 = vmatprep.subr.bf16.mxu0 0
    %3573 = vmatpush1.bf16.msra.mxu0 0
    %3574 = vmatprep.subr.bf16.mxu0 0
    %3575 = vmatpush1.bf16.msra.mxu0 0
    %3576 = vmatprep.subr.bf16.mxu0 0
    %3577 = vmatpush1.bf16.msra.mxu0 0
    %3578 = vmatprep.mubr.bf16.mxu0 0
    %3579 = vmatmul.mubr.bf16.gmra.mrb[0].mxu0 %v3312
    %v3580 = vpop.f32.mrb[0].mxu0
    %v3581 = vadd.f32 0.0, %v3580
    %v3582 = vpop.f32.mrb[0].mxu0
    %v3583 = vadd.f32 0.0, %v3582
    %v3584 = vpop.f32.mrb[0].mxu0
    %v3585 = vpop.f32.mrb[0].mxu0
    %3586 = vdwg.mxu0
    %v3587 = vadd.f32 %v3308, %v3540
    %v3588 = vadd.f32 %v3309, %v3542
    %v3589 = vadd.f32 %v3310, %v3581
    %v3590 = vadd.f32 %v3311, %v3583
    %v3591 = vxor.u32 %v3587, 2147483648
    %v3592 = vxor.u32 %v3588, 2147483648
    %v3593 = vxor.u32 %v3589, 2147483648
    %v3594 = vmul.f32 %v3591, 1.442695
    %v3595 = vpow.pop %v3594
    %v3596 = vmul.f32 %v3592, 1.442695
    %v3597 = vpow.pop %v3596
    %v3598 = vmul.f32 %v3593, 1.442695
    %v3599 = vpow.pop %v3598
    %v3600 = vadd.f32 %v3595, 1.0
    %v3601 = vadd.f32 %v3597, 1.0
    %v3602 = vadd.f32 %v3599, 1.0
    %v3603 = vrcp.pop %v3600
    %v3604 = vmul.f32 1.0, %v3603
    %v3605 = vrcp.pop %v3601
    %v3606 = vmul.f32 1.0, %v3605
    %v3607 = vrcp.pop %v3602
    %v3608 = vmul.f32 1.0, %v3607
    %v3609 = vtanh.pop %v3590
    %v3610 = vmul.f32 %v3606, %v3300
    %v3611 = vmul.f32 %v3604, %v3609
    %v3612 = vadd.f32 %v3610, %v3611
    %v3613 = vtanh.pop %v3612
    %v3614 = vmul.f32 %v3608, %v3613
    %s3615 = scalar_lea.vmem [#allocation3], 72
    %3616 = vst [vmem:[%s3615] sm:$0xff] %v3614
    %s3617 = smul.u32 10, 4
    %s3618 = smul.addr %s3617, 8
    %s3619 = scalar_lea.vmem [#allocation2], %s3618
    %v3620 = vld [vmem:[%s3619] sm:$0xff]
    %v3621 = vld [vmem:[%s3619 + $0x8] sm:$0xff]
    %v3622 = vld [vmem:[%s3619 + $0x10] sm:$0xff]
    %v3623 = vld [vmem:[%s3619 + $0x18] sm:$0xff]
    %v3624 = vpack.c.bf16 %v3614, %v3614
    %v3625 = vld [vmem:[#allocation4] sm:$0xff]
    %v3626 = vld [vmem:[#allocation4 + $0x8] sm:$0xff]
    %v3627 = vld [vmem:[#allocation4 + $0x10] sm:$0xff]
    %v3628 = vld [vmem:[#allocation4 + $0x18] sm:$0xff]
    %v3629 = vld [vmem:[#allocation4 + $0x20] sm:$0xff]
    %v3630 = vld [vmem:[#allocation4 + $0x28] sm:$0xff]
    %v3631 = vld [vmem:[#allocation4 + $0x30] sm:$0xff]
    %v3632 = vld [vmem:[#allocation4 + $0x38] sm:$0xff]
    %v3633 = vld [vmem:[#allocation4 + $0x40] sm:$0xff]
    %v3634 = vld [vmem:[#allocation4 + $0x48] sm:$0xff]
    %v3635 = vld [vmem:[#allocation4 + $0x50] sm:$0xff]
    %v3636 = vld [vmem:[#allocation4 + $0x58] sm:$0xff]
    %v3637 = vld [vmem:[#allocation4 + $0x60] sm:$0xff]
    %v3638 = vld [vmem:[#allocation4 + $0x68] sm:$0xff]
    %v3639 = vld [vmem:[#allocation4 + $0x70] sm:$0xff]
    %v3640 = vld [vmem:[#allocation4 + $0x78] sm:$0xff]
    %v3641 = vld [vmem:[#allocation4 + $0x80] sm:$0xff]
    %v3642 = vld [vmem:[#allocation4 + $0x88] sm:$0xff]
    %v3643 = vld [vmem:[#allocation4 + $0x90] sm:$0xff]
    %v3644 = vld [vmem:[#allocation4 + $0x98] sm:$0xff]
    %v3645 = vld [vmem:[#allocation4 + $0xa0] sm:$0xff]
    %v3646 = vld [vmem:[#allocation4 + $0xa8] sm:$0xff]
    %v3647 = vld [vmem:[#allocation4 + $0xb0] sm:$0xff]
    %v3648 = vld [vmem:[#allocation4 + $0xb8] sm:$0xff]
    %v3649 = vld [vmem:[#allocation4 + $0xc0] sm:$0xff]
    %v3650 = vld [vmem:[#allocation4 + $0xc8] sm:$0xff]
    %v3651 = vld [vmem:[#allocation4 + $0xd0] sm:$0xff]
    %v3652 = vld [vmem:[#allocation4 + $0xd8] sm:$0xff]
    %v3653 = vld [vmem:[#allocation4 + $0xe0] sm:$0xff]
    %v3654 = vld [vmem:[#allocation4 + $0xe8] sm:$0xff]
    %v3655 = vld [vmem:[#allocation4 + $0xf0] sm:$0xff]
    %v3656 = vld [vmem:[#allocation4 + $0xf8] sm:$0xff]
    %v3689 = vunpack.c.l.b16 %v3625
    %v3690 = vunpack.c.h.b16 %v3625
    %v3691 = vunpack.c.l.b16 %v3626
    %v3692 = vunpack.c.h.b16 %v3626
    %v3693 = vunpack.c.l.b16 %v3627
    %v3694 = vunpack.c.h.b16 %v3627
    %v3695 = vunpack.c.l.b16 %v3628
    %v3696 = vunpack.c.h.b16 %v3628
    %v3697 = vunpack.c.l.b16 %v3629
    %v3698 = vunpack.c.h.b16 %v3629
    %v3699 = vunpack.c.l.b16 %v3630
    %v3700 = vunpack.c.h.b16 %v3630
    %v3701 = vunpack.c.l.b16 %v3631
    %v3702 = vunpack.c.h.b16 %v3631
    %v3703 = vunpack.c.l.b16 %v3632
    %v3704 = vunpack.c.h.b16 %v3632
    %v3705 = vunpack.c.l.b16 %v3633
    %v3706 = vunpack.c.h.b16 %v3633
    %v3707 = vunpack.c.l.b16 %v3634
    %v3708 = vunpack.c.h.b16 %v3634
    %v3709 = vunpack.c.l.b16 %v3635
    %v3710 = vunpack.c.h.b16 %v3635
    %v3711 = vunpack.c.l.b16 %v3636
    %v3712 = vunpack.c.h.b16 %v3636
    %v3713 = vunpack.c.l.b16 %v3637
    %v3714 = vunpack.c.h.b16 %v3637
    %v3715 = vunpack.c.l.b16 %v3638
    %v3716 = vunpack.c.h.b16 %v3638
    %v3717 = vunpack.c.l.b16 %v3639
    %v3718 = vunpack.c.h.b16 %v3639
    %v3719 = vunpack.c.l.b16 %v3640
    %v3720 = vunpack.c.h.b16 %v3640
    %v3721 = vunpack.c.l.b16 %v3641
    %v3722 = vunpack.c.h.b16 %v3641
    %v3723 = vunpack.c.l.b16 %v3642
    %v3724 = vunpack.c.h.b16 %v3642
    %v3725 = vunpack.c.l.b16 %v3643
    %v3726 = vunpack.c.h.b16 %v3643
    %v3727 = vunpack.c.l.b16 %v3644
    %v3728 = vunpack.c.h.b16 %v3644
    %v3729 = vunpack.c.l.b16 %v3645
    %v3730 = vunpack.c.h.b16 %v3645
    %v3731 = vunpack.c.l.b16 %v3646
    %v3732 = vunpack.c.h.b16 %v3646
    %v3733 = vunpack.c.l.b16 %v3647
    %v3734 = vunpack.c.h.b16 %v3647
    %v3735 = vunpack.c.l.b16 %v3648
    %v3736 = vunpack.c.h.b16 %v3648
    %v3737 = vunpack.c.l.b16 %v3649
    %v3738 = vunpack.c.h.b16 %v3649
    %v3739 = vunpack.c.l.b16 %v3650
    %v3740 = vunpack.c.h.b16 %v3650
    %v3741 = vunpack.c.l.b16 %v3651
    %v3742 = vunpack.c.h.b16 %v3651
    %v3743 = vunpack.c.l.b16 %v3652
    %v3744 = vunpack.c.h.b16 %v3652
    %v3745 = vunpack.c.l.b16 %v3653
    %v3746 = vunpack.c.h.b16 %v3653
    %v3747 = vunpack.c.l.b16 %v3654
    %v3748 = vunpack.c.h.b16 %v3654
    %v3749 = vunpack.c.l.b16 %v3655
    %v3750 = vunpack.c.h.b16 %v3655
    %v3751 = vunpack.c.l.b16 %v3656
    %v3752 = vunpack.c.h.b16 %v3656
    %v3753 = vpack.c.b16 %v3693, %v3689
    %v3754 = vpack.c.b16 %v3694, %v3690
    %v3755 = vpack.c.b16 %v3695, %v3691
    %v3756 = vpack.c.b16 %v3696, %v3692
    %v3757 = vpack.c.b16 %v3701, %v3697
    %v3758 = vpack.c.b16 %v3702, %v3698
    %v3759 = vpack.c.b16 %v3703, %v3699
    %v3760 = vpack.c.b16 %v3704, %v3700
    %v3761 = vpack.c.b16 %v3709, %v3705
    %v3762 = vpack.c.b16 %v3710, %v3706
    %v3763 = vpack.c.b16 %v3711, %v3707
    %v3764 = vpack.c.b16 %v3712, %v3708
    %v3765 = vpack.c.b16 %v3717, %v3713
    %v3766 = vpack.c.b16 %v3718, %v3714
    %v3767 = vpack.c.b16 %v3719, %v3715
    %v3768 = vpack.c.b16 %v3720, %v3716
    %v3769 = vpack.c.b16 %v3725, %v3721
    %v3770 = vpack.c.b16 %v3726, %v3722
    %v3771 = vpack.c.b16 %v3727, %v3723
    %v3772 = vpack.c.b16 %v3728, %v3724
    %v3773 = vpack.c.b16 %v3733, %v3729
    %v3774 = vpack.c.b16 %v3734, %v3730
    %v3775 = vpack.c.b16 %v3735, %v3731
    %v3776 = vpack.c.b16 %v3736, %v3732
    %v3777 = vpack.c.b16 %v3741, %v3737
    %v3778 = vpack.c.b16 %v3742, %v3738
    %v3779 = vpack.c.b16 %v3743, %v3739
    %v3780 = vpack.c.b16 %v3744, %v3740
    %v3781 = vpack.c.b16 %v3749, %v3745
    %v3782 = vpack.c.b16 %v3750, %v3746
    %v3783 = vpack.c.b16 %v3751, %v3747
    %v3784 = vpack.c.b16 %v3752, %v3748
    %3817 = vmatprep.subr.bf16.mxu0 %v3754
    %3818 = vmatpush1.bf16.msra.mxu0 %v3753
    %3819 = vmatprep.subr.bf16.mxu0 %v3758
    %3820 = vmatpush1.bf16.msra.mxu0 %v3757
    %3821 = vmatprep.subr.bf16.mxu0 %v3762
    %3822 = vmatpush1.bf16.msra.mxu0 %v3761
    %3823 = vmatprep.subr.bf16.mxu0 %v3766
    %3824 = vmatpush1.bf16.msra.mxu0 %v3765
    %3825 = vmatprep.subr.bf16.mxu0 %v3770
    %3826 = vmatpush1.bf16.msra.mxu0 %v3769
    %3827 = vmatprep.subr.bf16.mxu0 %v3774
    %3828 = vmatpush1.bf16.msra.mxu0 %v3773
    %3829 = vmatprep.subr.bf16.mxu0 %v3778
    %3830 = vmatpush1.bf16.msra.mxu0 %v3777
    %3831 = vmatprep.subr.bf16.mxu0 %v3782
    %3832 = vmatpush1.bf16.msra.mxu0 %v3781
    %3833 = vmatprep.subr.bf16.mxu0 0
    %3834 = vmatpush1.bf16.msra.mxu0 0
    %3835 = vmatprep.subr.bf16.mxu0 0
    %3836 = vmatpush1.bf16.msra.mxu0 0
    %3837 = vmatprep.subr.bf16.mxu0 0
    %3838 = vmatpush1.bf16.msra.mxu0 0
    %3839 = vmatprep.subr.bf16.mxu0 0
    %3840 = vmatpush1.bf16.msra.mxu0 0
    %3841 = vmatprep.subr.bf16.mxu0 0
    %3842 = vmatpush1.bf16.msra.mxu0 0
    %3843 = vmatprep.subr.bf16.mxu0 0
    %3844 = vmatpush1.bf16.msra.mxu0 0
    %3845 = vmatprep.subr.bf16.mxu0 0
    %3846 = vmatpush1.bf16.msra.mxu0 0
    %3847 = vmatprep.subr.bf16.mxu0 0
    %3848 = vmatpush1.bf16.msra.mxu0 0
    %3849 = vmatprep.mubr.bf16.mxu0 0
    %3850 = vmatmul.mubr.bf16.gmra.mrb[0].mxu0 %v3624
    %v3851 = vpop.f32.mrb[0].mxu0
    %v3852 = vadd.f32 0.0, %v3851
    %v3853 = vpop.f32.mrb[0].mxu0
    %v3854 = vadd.f32 0.0, %v3853
    %v3855 = vpop.f32.mrb[0].mxu0
    %v3856 = vpop.f32.mrb[0].mxu0
    %3857 = vdwg.mxu0
    %3858 = vmatprep.subr.bf16.mxu0 %v3756
    %3859 = vmatpush1.bf16.msra.mxu0 %v3755
    %3860 = vmatprep.subr.bf16.mxu0 %v3760
    %3861 = vmatpush1.bf16.msra.mxu0 %v3759
    %3862 = vmatprep.subr.bf16.mxu0 %v3764
    %3863 = vmatpush1.bf16.msra.mxu0 %v3763
    %3864 = vmatprep.subr.bf16.mxu0 %v3768
    %3865 = vmatpush1.bf16.msra.mxu0 %v3767
    %3866 = vmatprep.subr.bf16.mxu0 %v3772
    %3867 = vmatpush1.bf16.msra.mxu0 %v3771
    %3868 = vmatprep.subr.bf16.mxu0 %v3776
    %3869 = vmatpush1.bf16.msra.mxu0 %v3775
    %3870 = vmatprep.subr.bf16.mxu0 %v3780
    %3871 = vmatpush1.bf16.msra.mxu0 %v3779
    %3872 = vmatprep.subr.bf16.mxu0 %v3784
    %3873 = vmatpush1.bf16.msra.mxu0 %v3783
    %3874 = vmatprep.subr.bf16.mxu0 0
    %3875 = vmatpush1.bf16.msra.mxu0 0
    %3876 = vmatprep.subr.bf16.mxu0 0
    %3877 = vmatpush1.bf16.msra.mxu0 0
    %3878 = vmatprep.subr.bf16.mxu0 0
    %3879 = vmatpush1.bf16.msra.mxu0 0
    %3880 = vmatprep.subr.bf16.mxu0 0
    %3881 = vmatpush1.bf16.msra.mxu0 0
    %3882 = vmatprep.subr.bf16.mxu0 0
    %3883 = vmatpush1.bf16.msra.mxu0 0
    %3884 = vmatprep.subr.bf16.mxu0 0
    %3885 = vmatpush1.bf16.msra.mxu0 0
    %3886 = vmatprep.subr.bf16.mxu0 0
    %3887 = vmatpush1.bf16.msra.mxu0 0
    %3888 = vmatprep.subr.bf16.mxu0 0
    %3889 = vmatpush1.bf16.msra.mxu0 0
    %3890 = vmatprep.mubr.bf16.mxu0 0
    %3891 = vmatmul.mubr.bf16.gmra.mrb[0].mxu0 %v3624
    %v3892 = vpop.f32.mrb[0].mxu0
    %v3893 = vadd.f32 0.0, %v3892
    %v3894 = vpop.f32.mrb[0].mxu0
    %v3895 = vadd.f32 0.0, %v3894
    %v3896 = vpop.f32.mrb[0].mxu0
    %v3897 = vpop.f32.mrb[0].mxu0
    %3898 = vdwg.mxu0
    %v3899 = vadd.f32 %v3620, %v3852
    %v3900 = vadd.f32 %v3621, %v3854
    %v3901 = vadd.f32 %v3622, %v3893
    %v3902 = vadd.f32 %v3623, %v3895
    %v3903 = vxor.u32 %v3899, 2147483648
    %v3904 = vxor.u32 %v3900, 2147483648
    %v3905 = vxor.u32 %v3901, 2147483648
    %v3906 = vmul.f32 %v3903, 1.442695
    %v3907 = vpow.pop %v3906
    %v3908 = vmul.f32 %v3904, 1.442695
    %v3909 = vpow.pop %v3908
    %v3910 = vmul.f32 %v3905, 1.442695
    %v3911 = vpow.pop %v3910
    %v3912 = vadd.f32 %v3907, 1.0
    %v3913 = vadd.f32 %v3909, 1.0
    %v3914 = vadd.f32 %v3911, 1.0
    %v3915 = vrcp.pop %v3912
    %v3916 = vmul.f32 1.0, %v3915
    %v3917 = vrcp.pop %v3913
    %v3918 = vmul.f32 1.0, %v3917
    %v3919 = vrcp.pop %v3914
    %v3920 = vmul.f32 1.0, %v3919
    %v3921 = vtanh.pop %v3902
    %v3922 = vmul.f32 %v3918, %v3612
    %v3923 = vmul.f32 %v3916, %v3921
    %v3924 = vadd.f32 %v3922, %v3923
    %v3925 = vtanh.pop %v3924
    %v3926 = vmul.f32 %v3920, %v3925
    %s3927 = scalar_lea.vmem [#allocation3], 80
    %3928 = vst [vmem:[%s3927] sm:$0xff] %v3926
    %s3929 = smul.u32 11, 4
    %s3930 = smul.addr %s3929, 8
    %s3931 = scalar_lea.vmem [#allocation2], %s3930
    %v3932 = vld [vmem:[%s3931] sm:$0xff]
    %v3933 = vld [vmem:[%s3931 + $0x8] sm:$0xff]
    %v3934 = vld [vmem:[%s3931 + $0x10] sm:$0xff]
    %v3935 = vld [vmem:[%s3931 + $0x18] sm:$0xff]
    %v3936 = vpack.c.bf16 %v3926, %v3926
    %v3937 = vld [vmem:[#allocation4] sm:$0xff]
    %v3938 = vld [vmem:[#allocation4 + $0x8] sm:$0xff]
    %v3939 = vld [vmem:[#allocation4 + $0x10] sm:$0xff]
    %v3940 = vld [vmem:[#allocation4 + $0x18] sm:$0xff]
    %v3941 = vld [vmem:[#allocation4 + $0x20] sm:$0xff]
    %v3942 = vld [vmem:[#allocation4 + $0x28] sm:$0xff]
    %v3943 = vld [vmem:[#allocation4 + $0x30] sm:$0xff]
    %v3944 = vld [vmem:[#allocation4 + $0x38] sm:$0xff]
    %v3945 = vld [vmem:[#allocation4 + $0x40] sm:$0xff]
    %v3946 = vld [vmem:[#allocation4 + $0x48] sm:$0xff]
    %v3947 = vld [vmem:[#allocation4 + $0x50] sm:$0xff]
    %v3948 = vld [vmem:[#allocation4 + $0x58] sm:$0xff]
    %v3949 = vld [vmem:[#allocation4 + $0x60] sm:$0xff]
    %v3950 = vld [vmem:[#allocation4 + $0x68] sm:$0xff]
    %v3951 = vld [vmem:[#allocation4 + $0x70] sm:$0xff]
    %v3952 = vld [vmem:[#allocation4 + $0x78] sm:$0xff]
    %v3953 = vld [vmem:[#allocation4 + $0x80] sm:$0xff]
    %v3954 = vld [vmem:[#allocation4 + $0x88] sm:$0xff]
    %v3955 = vld [vmem:[#allocation4 + $0x90] sm:$0xff]
    %v3956 = vld [vmem:[#allocation4 + $0x98] sm:$0xff]
    %v3957 = vld [vmem:[#allocation4 + $0xa0] sm:$0xff]
    %v3958 = vld [vmem:[#allocation4 + $0xa8] sm:$0xff]
    %v3959 = vld [vmem:[#allocation4 + $0xb0] sm:$0xff]
    %v3960 = vld [vmem:[#allocation4 + $0xb8] sm:$0xff]
    %v3961 = vld [vmem:[#allocation4 + $0xc0] sm:$0xff]
    %v3962 = vld [vmem:[#allocation4 + $0xc8] sm:$0xff]
    %v3963 = vld [vmem:[#allocation4 + $0xd0] sm:$0xff]
    %v3964 = vld [vmem:[#allocation4 + $0xd8] sm:$0xff]
    %v3965 = vld [vmem:[#allocation4 + $0xe0] sm:$0xff]
    %v3966 = vld [vmem:[#allocation4 + $0xe8] sm:$0xff]
    %v3967 = vld [vmem:[#allocation4 + $0xf0] sm:$0xff]
    %v3968 = vld [vmem:[#allocation4 + $0xf8] sm:$0xff]
    %v4001 = vunpack.c.l.b16 %v3937
    %v4002 = vunpack.c.h.b16 %v3937
    %v4003 = vunpack.c.l.b16 %v3938
    %v4004 = vunpack.c.h.b16 %v3938
    %v4005 = vunpack.c.l.b16 %v3939
    %v4006 = vunpack.c.h.b16 %v3939
    %v4007 = vunpack.c.l.b16 %v3940
    %v4008 = vunpack.c.h.b16 %v3940
    %v4009 = vunpack.c.l.b16 %v3941
    %v4010 = vunpack.c.h.b16 %v3941
    %v4011 = vunpack.c.l.b16 %v3942
    %v4012 = vunpack.c.h.b16 %v3942
    %v4013 = vunpack.c.l.b16 %v3943
    %v4014 = vunpack.c.h.b16 %v3943
    %v4015 = vunpack.c.l.b16 %v3944
    %v4016 = vunpack.c.h.b16 %v3944
    %v4017 = vunpack.c.l.b16 %v3945
    %v4018 = vunpack.c.h.b16 %v3945
    %v4019 = vunpack.c.l.b16 %v3946
    %v4020 = vunpack.c.h.b16 %v3946
    %v4021 = vunpack.c.l.b16 %v3947
    %v4022 = vunpack.c.h.b16 %v3947
    %v4023 = vunpack.c.l.b16 %v3948
    %v4024 = vunpack.c.h.b16 %v3948
    %v4025 = vunpack.c.l.b16 %v3949
    %v4026 = vunpack.c.h.b16 %v3949
    %v4027 = vunpack.c.l.b16 %v3950
    %v4028 = vunpack.c.h.b16 %v3950
    %v4029 = vunpack.c.l.b16 %v3951
    %v4030 = vunpack.c.h.b16 %v3951
    %v4031 = vunpack.c.l.b16 %v3952
    %v4032 = vunpack.c.h.b16 %v3952
    %v4033 = vunpack.c.l.b16 %v3953
    %v4034 = vunpack.c.h.b16 %v3953
    %v4035 = vunpack.c.l.b16 %v3954
    %v4036 = vunpack.c.h.b16 %v3954
    %v4037 = vunpack.c.l.b16 %v3955
    %v4038 = vunpack.c.h.b16 %v3955
    %v4039 = vunpack.c.l.b16 %v3956
    %v4040 = vunpack.c.h.b16 %v3956
    %v4041 = vunpack.c.l.b16 %v3957
    %v4042 = vunpack.c.h.b16 %v3957
    %v4043 = vunpack.c.l.b16 %v3958
    %v4044 = vunpack.c.h.b16 %v3958
    %v4045 = vunpack.c.l.b16 %v3959
    %v4046 = vunpack.c.h.b16 %v3959
    %v4047 = vunpack.c.l.b16 %v3960
    %v4048 = vunpack.c.h.b16 %v3960
    %v4049 = vunpack.c.l.b16 %v3961
    %v4050 = vunpack.c.h.b16 %v3961
    %v4051 = vunpack.c.l.b16 %v3962
    %v4052 = vunpack.c.h.b16 %v3962
    %v4053 = vunpack.c.l.b16 %v3963
    %v4054 = vunpack.c.h.b16 %v3963
    %v4055 = vunpack.c.l.b16 %v3964
    %v4056 = vunpack.c.h.b16 %v3964
    %v4057 = vunpack.c.l.b16 %v3965
    %v4058 = vunpack.c.h.b16 %v3965
    %v4059 = vunpack.c.l.b16 %v3966
    %v4060 = vunpack.c.h.b16 %v3966
    %v4061 = vunpack.c.l.b16 %v3967
    %v4062 = vunpack.c.h.b16 %v3967
    %v4063 = vunpack.c.l.b16 %v3968
    %v4064 = vunpack.c.h.b16 %v3968
    %v4065 = vpack.c.b16 %v4005, %v4001
    %v4066 = vpack.c.b16 %v4006, %v4002
    %v4067 = vpack.c.b16 %v4007, %v4003
    %v4068 = vpack.c.b16 %v4008, %v4004
    %v4069 = vpack.c.b16 %v4013, %v4009
    %v4070 = vpack.c.b16 %v4014, %v4010
    %v4071 = vpack.c.b16 %v4015, %v4011
    %v4072 = vpack.c.b16 %v4016, %v4012
    %v4073 = vpack.c.b16 %v4021, %v4017
    %v4074 = vpack.c.b16 %v4022, %v4018
    %v4075 = vpack.c.b16 %v4023, %v4019
    %v4076 = vpack.c.b16 %v4024, %v4020
    %v4077 = vpack.c.b16 %v4029, %v4025
    %v4078 = vpack.c.b16 %v4030, %v4026
    %v4079 = vpack.c.b16 %v4031, %v4027
    %v4080 = vpack.c.b16 %v4032, %v4028
    %v4081 = vpack.c.b16 %v4037, %v4033
    %v4082 = vpack.c.b16 %v4038, %v4034
    %v4083 = vpack.c.b16 %v4039, %v4035
    %v4084 = vpack.c.b16 %v4040, %v4036
    %v4085 = vpack.c.b16 %v4045, %v4041
    %v4086 = vpack.c.b16 %v4046, %v4042
    %v4087 = vpack.c.b16 %v4047, %v4043
    %v4088 = vpack.c.b16 %v4048, %v4044
    %v4089 = vpack.c.b16 %v4053, %v4049
    %v4090 = vpack.c.b16 %v4054, %v4050
    %v4091 = vpack.c.b16 %v4055, %v4051
    %v4092 = vpack.c.b16 %v4056, %v4052
    %v4093 = vpack.c.b16 %v4061, %v4057
    %v4094 = vpack.c.b16 %v4062, %v4058
    %v4095 = vpack.c.b16 %v4063, %v4059
    %v4096 = vpack.c.b16 %v4064, %v4060
    %4129 = vmatprep.subr.bf16.mxu0 %v4066
    %4130 = vmatpush1.bf16.msra.mxu0 %v4065
    %4131 = vmatprep.subr.bf16.mxu0 %v4070
    %4132 = vmatpush1.bf16.msra.mxu0 %v4069
    %4133 = vmatprep.subr.bf16.mxu0 %v4074
    %4134 = vmatpush1.bf16.msra.mxu0 %v4073
    %4135 = vmatprep.subr.bf16.mxu0 %v4078
    %4136 = vmatpush1.bf16.msra.mxu0 %v4077
    %4137 = vmatprep.subr.bf16.mxu0 %v4082
    %4138 = vmatpush1.bf16.msra.mxu0 %v4081
    %4139 = vmatprep.subr.bf16.mxu0 %v4086
    %4140 = vmatpush1.bf16.msra.mxu0 %v4085
    %4141 = vmatprep.subr.bf16.mxu0 %v4090
    %4142 = vmatpush1.bf16.msra.mxu0 %v4089
    %4143 = vmatprep.subr.bf16.mxu0 %v4094
    %4144 = vmatpush1.bf16.msra.mxu0 %v4093
    %4145 = vmatprep.subr.bf16.mxu0 0
    %4146 = vmatpush1.bf16.msra.mxu0 0
    %4147 = vmatprep.subr.bf16.mxu0 0
    %4148 = vmatpush1.bf16.msra.mxu0 0
    %4149 = vmatprep.subr.bf16.mxu0 0
    %4150 = vmatpush1.bf16.msra.mxu0 0
    %4151 = vmatprep.subr.bf16.mxu0 0
    %4152 = vmatpush1.bf16.msra.mxu0 0
    %4153 = vmatprep.subr.bf16.mxu0 0
    %4154 = vmatpush1.bf16.msra.mxu0 0
    %4155 = vmatprep.subr.bf16.mxu0 0
    %4156 = vmatpush1.bf16.msra.mxu0 0
    %4157 = vmatprep.subr.bf16.mxu0 0
    %4158 = vmatpush1.bf16.msra.mxu0 0
    %4159 = vmatprep.subr.bf16.mxu0 0
    %4160 = vmatpush1.bf16.msra.mxu0 0
    %4161 = vmatprep.mubr.bf16.mxu0 0
    %4162 = vmatmul.mubr.bf16.gmra.mrb[0].mxu0 %v3936
    %v4163 = vpop.f32.mrb[0].mxu0
    %v4164 = vadd.f32 0.0, %v4163
    %v4165 = vpop.f32.mrb[0].mxu0
    %v4166 = vadd.f32 0.0, %v4165
    %v4167 = vpop.f32.mrb[0].mxu0
    %v4168 = vpop.f32.mrb[0].mxu0
    %4169 = vdwg.mxu0
    %4170 = vmatprep.subr.bf16.mxu0 %v4068
    %4171 = vmatpush1.bf16.msra.mxu0 %v4067
    %4172 = vmatprep.subr.bf16.mxu0 %v4072
    %4173 = vmatpush1.bf16.msra.mxu0 %v4071
    %4174 = vmatprep.subr.bf16.mxu0 %v4076
    %4175 = vmatpush1.bf16.msra.mxu0 %v4075
    %4176 = vmatprep.subr.bf16.mxu0 %v4080
    %4177 = vmatpush1.bf16.msra.mxu0 %v4079
    %4178 = vmatprep.subr.bf16.mxu0 %v4084
    %4179 = vmatpush1.bf16.msra.mxu0 %v4083
    %4180 = vmatprep.subr.bf16.mxu0 %v4088
    %4181 = vmatpush1.bf16.msra.mxu0 %v4087
    %4182 = vmatprep.subr.bf16.mxu0 %v4092
    %4183 = vmatpush1.bf16.msra.mxu0 %v4091
    %4184 = vmatprep.subr.bf16.mxu0 %v4096
    %4185 = vmatpush1.bf16.msra.mxu0 %v4095
    %4186 = vmatprep.subr.bf16.mxu0 0
    %4187 = vmatpush1.bf16.msra.mxu0 0
    %4188 = vmatprep.subr.bf16.mxu0 0
    %4189 = vmatpush1.bf16.msra.mxu0 0
    %4190 = vmatprep.subr.bf16.mxu0 0
    %4191 = vmatpush1.bf16.msra.mxu0 0
    %4192 = vmatprep.subr.bf16.mxu0 0
    %4193 = vmatpush1.bf16.msra.mxu0 0
    %4194 = vmatprep.subr.bf16.mxu0 0
    %4195 = vmatpush1.bf16.msra.mxu0 0
    %4196 = vmatprep.subr.bf16.mxu0 0
    %4197 = vmatpush1.bf16.msra.mxu0 0
    %4198 = vmatprep.subr.bf16.mxu0 0
    %4199 = vmatpush1.bf16.msra.mxu0 0
    %4200 = vmatprep.subr.bf16.mxu0 0
    %4201 = vmatpush1.bf16.msra.mxu0 0
    %4202 = vmatprep.mubr.bf16.mxu0 0
    %4203 = vmatmul.mubr.bf16.gmra.mrb[0].mxu0 %v3936
    %v4204 = vpop.f32.mrb[0].mxu0
    %v4205 = vadd.f32 0.0, %v4204
    %v4206 = vpop.f32.mrb[0].mxu0
    %v4207 = vadd.f32 0.0, %v4206
    %v4208 = vpop.f32.mrb[0].mxu0
    %v4209 = vpop.f32.mrb[0].mxu0
    %4210 = vdwg.mxu0
    %v4211 = vadd.f32 %v3932, %v4164
    %v4212 = vadd.f32 %v3933, %v4166
    %v4213 = vadd.f32 %v3934, %v4205
    %v4214 = vadd.f32 %v3935, %v4207
    %v4215 = vxor.u32 %v4211, 2147483648
    %v4216 = vxor.u32 %v4212, 2147483648
    %v4217 = vxor.u32 %v4213, 2147483648
    %v4218 = vmul.f32 %v4215, 1.442695
    %v4219 = vpow.pop %v4218
    %v4220 = vmul.f32 %v4216, 1.442695
    %v4221 = vpow.pop %v4220
    %v4222 = vmul.f32 %v4217, 1.442695
    %v4223 = vpow.pop %v4222
    %v4224 = vadd.f32 %v4219, 1.0
    %v4225 = vadd.f32 %v4221, 1.0
    %v4226 = vadd.f32 %v4223, 1.0
    %v4227 = vrcp.pop %v4224
    %v4228 = vmul.f32 1.0, %v4227
    %v4229 = vrcp.pop %v4225
    %v4230 = vmul.f32 1.0, %v4229
    %v4231 = vrcp.pop %v4226
    %v4232 = vmul.f32 1.0, %v4231
    %v4233 = vtanh.pop %v4214
    %v4234 = vmul.f32 %v4230, %v3924
    %v4235 = vmul.f32 %v4228, %v4233
    %v4236 = vadd.f32 %v4234, %v4235
    %v4237 = vtanh.pop %v4236
    %v4238 = vmul.f32 %v4232, %v4237
    %s4239 = scalar_lea.vmem [#allocation3], 88
    %4240 = vst [vmem:[%s4239] sm:$0xff] %v4238
    %s4241 = smul.u32 12, 4
    %s4242 = smul.addr %s4241, 8
    %s4243 = scalar_lea.vmem [#allocation2], %s4242
    %v4244 = vld [vmem:[%s4243] sm:$0xff]
    %v4245 = vld [vmem:[%s4243 + $0x8] sm:$0xff]
    %v4246 = vld [vmem:[%s4243 + $0x10] sm:$0xff]
    %v4247 = vld [vmem:[%s4243 + $0x18] sm:$0xff]
    %v4248 = vpack.c.bf16 %v4238, %v4238
    %v4249 = vld [vmem:[#allocation4] sm:$0xff]
    %v4250 = vld [vmem:[#allocation4 + $0x8] sm:$0xff]
    %v4251 = vld [vmem:[#allocation4 + $0x10] sm:$0xff]
    %v4252 = vld [vmem:[#allocation4 + $0x18] sm:$0xff]
    %v4253 = vld [vmem:[#allocation4 + $0x20] sm:$0xff]
    %v4254 = vld [vmem:[#allocation4 + $0x28] sm:$0xff]
    %v4255 = vld [vmem:[#allocation4 + $0x30] sm:$0xff]
    %v4256 = vld [vmem:[#allocation4 + $0x38] sm:$0xff]
    %v4257 = vld [vmem:[#allocation4 + $0x40] sm:$0xff]
    %v4258 = vld [vmem:[#allocation4 + $0x48] sm:$0xff]
    %v4259 = vld [vmem:[#allocation4 + $0x50] sm:$0xff]
    %v4260 = vld [vmem:[#allocation4 + $0x58] sm:$0xff]
    %v4261 = vld [vmem:[#allocation4 + $0x60] sm:$0xff]
    %v4262 = vld [vmem:[#allocation4 + $0x68] sm:$0xff]
    %v4263 = vld [vmem:[#allocation4 + $0x70] sm:$0xff]
    %v4264 = vld [vmem:[#allocation4 + $0x78] sm:$0xff]
    %v4265 = vld [vmem:[#allocation4 + $0x80] sm:$0xff]
    %v4266 = vld [vmem:[#allocation4 + $0x88] sm:$0xff]
    %v4267 = vld [vmem:[#allocation4 + $0x90] sm:$0xff]
    %v4268 = vld [vmem:[#allocation4 + $0x98] sm:$0xff]
    %v4269 = vld [vmem:[#allocation4 + $0xa0] sm:$0xff]
    %v4270 = vld [vmem:[#allocation4 + $0xa8] sm:$0xff]
    %v4271 = vld [vmem:[#allocation4 + $0xb0] sm:$0xff]
    %v4272 = vld [vmem:[#allocation4 + $0xb8] sm:$0xff]
    %v4273 = vld [vmem:[#allocation4 + $0xc0] sm:$0xff]
    %v4274 = vld [vmem:[#allocation4 + $0xc8] sm:$0xff]
    %v4275 = vld [vmem:[#allocation4 + $0xd0] sm:$0xff]
    %v4276 = vld [vmem:[#allocation4 + $0xd8] sm:$0xff]
    %v4277 = vld [vmem:[#allocation4 + $0xe0] sm:$0xff]
    %v4278 = vld [vmem:[#allocation4 + $0xe8] sm:$0xff]
    %v4279 = vld [vmem:[#allocation4 + $0xf0] sm:$0xff]
    %v4280 = vld [vmem:[#allocation4 + $0xf8] sm:$0xff]
    %v4313 = vunpack.c.l.b16 %v4249
    %v4314 = vunpack.c.h.b16 %v4249
    %v4315 = vunpack.c.l.b16 %v4250
    %v4316 = vunpack.c.h.b16 %v4250
    %v4317 = vunpack.c.l.b16 %v4251
    %v4318 = vunpack.c.h.b16 %v4251
    %v4319 = vunpack.c.l.b16 %v4252
    %v4320 = vunpack.c.h.b16 %v4252
    %v4321 = vunpack.c.l.b16 %v4253
    %v4322 = vunpack.c.h.b16 %v4253
    %v4323 = vunpack.c.l.b16 %v4254
    %v4324 = vunpack.c.h.b16 %v4254
    %v4325 = vunpack.c.l.b16 %v4255
    %v4326 = vunpack.c.h.b16 %v4255
    %v4327 = vunpack.c.l.b16 %v4256
    %v4328 = vunpack.c.h.b16 %v4256
    %v4329 = vunpack.c.l.b16 %v4257
    %v4330 = vunpack.c.h.b16 %v4257
    %v4331 = vunpack.c.l.b16 %v4258
    %v4332 = vunpack.c.h.b16 %v4258
    %v4333 = vunpack.c.l.b16 %v4259
    %v4334 = vunpack.c.h.b16 %v4259
    %v4335 = vunpack.c.l.b16 %v4260
    %v4336 = vunpack.c.h.b16 %v4260
    %v4337 = vunpack.c.l.b16 %v4261
    %v4338 = vunpack.c.h.b16 %v4261
    %v4339 = vunpack.c.l.b16 %v4262
    %v4340 = vunpack.c.h.b16 %v4262
    %v4341 = vunpack.c.l.b16 %v4263
    %v4342 = vunpack.c.h.b16 %v4263
    %v4343 = vunpack.c.l.b16 %v4264
    %v4344 = vunpack.c.h.b16 %v4264
    %v4345 = vunpack.c.l.b16 %v4265
    %v4346 = vunpack.c.h.b16 %v4265
    %v4347 = vunpack.c.l.b16 %v4266
    %v4348 = vunpack.c.h.b16 %v4266
    %v4349 = vunpack.c.l.b16 %v4267
    %v4350 = vunpack.c.h.b16 %v4267
    %v4351 = vunpack.c.l.b16 %v4268
    %v4352 = vunpack.c.h.b16 %v4268
    %v4353 = vunpack.c.l.b16 %v4269
    %v4354 = vunpack.c.h.b16 %v4269
    %v4355 = vunpack.c.l.b16 %v4270
    %v4356 = vunpack.c.h.b16 %v4270
    %v4357 = vunpack.c.l.b16 %v4271
    %v4358 = vunpack.c.h.b16 %v4271
    %v4359 = vunpack.c.l.b16 %v4272
    %v4360 = vunpack.c.h.b16 %v4272
    %v4361 = vunpack.c.l.b16 %v4273
    %v4362 = vunpack.c.h.b16 %v4273
    %v4363 = vunpack.c.l.b16 %v4274
    %v4364 = vunpack.c.h.b16 %v4274
    %v4365 = vunpack.c.l.b16 %v4275
    %v4366 = vunpack.c.h.b16 %v4275
    %v4367 = vunpack.c.l.b16 %v4276
    %v4368 = vunpack.c.h.b16 %v4276
    %v4369 = vunpack.c.l.b16 %v4277
    %v4370 = vunpack.c.h.b16 %v4277
    %v4371 = vunpack.c.l.b16 %v4278
    %v4372 = vunpack.c.h.b16 %v4278
    %v4373 = vunpack.c.l.b16 %v4279
    %v4374 = vunpack.c.h.b16 %v4279
    %v4375 = vunpack.c.l.b16 %v4280
    %v4376 = vunpack.c.h.b16 %v4280
    %v4377 = vpack.c.b16 %v4317, %v4313
    %v4378 = vpack.c.b16 %v4318, %v4314
    %v4379 = vpack.c.b16 %v4319, %v4315
    %v4380 = vpack.c.b16 %v4320, %v4316
    %v4381 = vpack.c.b16 %v4325, %v4321
    %v4382 = vpack.c.b16 %v4326, %v4322
    %v4383 = vpack.c.b16 %v4327, %v4323
    %v4384 = vpack.c.b16 %v4328, %v4324
    %v4385 = vpack.c.b16 %v4333, %v4329
    %v4386 = vpack.c.b16 %v4334, %v4330
    %v4387 = vpack.c.b16 %v4335, %v4331
    %v4388 = vpack.c.b16 %v4336, %v4332
    %v4389 = vpack.c.b16 %v4341, %v4337
    %v4390 = vpack.c.b16 %v4342, %v4338
    %v4391 = vpack.c.b16 %v4343, %v4339
    %v4392 = vpack.c.b16 %v4344, %v4340
    %v4393 = vpack.c.b16 %v4349, %v4345
    %v4394 = vpack.c.b16 %v4350, %v4346
    %v4395 = vpack.c.b16 %v4351, %v4347
    %v4396 = vpack.c.b16 %v4352, %v4348
    %v4397 = vpack.c.b16 %v4357, %v4353
    %v4398 = vpack.c.b16 %v4358, %v4354
    %v4399 = vpack.c.b16 %v4359, %v4355
    %v4400 = vpack.c.b16 %v4360, %v4356
    %v4401 = vpack.c.b16 %v4365, %v4361
    %v4402 = vpack.c.b16 %v4366, %v4362
    %v4403 = vpack.c.b16 %v4367, %v4363
    %v4404 = vpack.c.b16 %v4368, %v4364
    %v4405 = vpack.c.b16 %v4373, %v4369
    %v4406 = vpack.c.b16 %v4374, %v4370
    %v4407 = vpack.c.b16 %v4375, %v4371
    %v4408 = vpack.c.b16 %v4376, %v4372
    %4441 = vmatprep.subr.bf16.mxu0 %v4378
    %4442 = vmatpush1.bf16.msra.mxu0 %v4377
    %4443 = vmatprep.subr.bf16.mxu0 %v4382
    %4444 = vmatpush1.bf16.msra.mxu0 %v4381
    %4445 = vmatprep.subr.bf16.mxu0 %v4386
    %4446 = vmatpush1.bf16.msra.mxu0 %v4385
    %4447 = vmatprep.subr.bf16.mxu0 %v4390
    %4448 = vmatpush1.bf16.msra.mxu0 %v4389
    %4449 = vmatprep.subr.bf16.mxu0 %v4394
    %4450 = vmatpush1.bf16.msra.mxu0 %v4393
    %4451 = vmatprep.subr.bf16.mxu0 %v4398
    %4452 = vmatpush1.bf16.msra.mxu0 %v4397
    %4453 = vmatprep.subr.bf16.mxu0 %v4402
    %4454 = vmatpush1.bf16.msra.mxu0 %v4401
    %4455 = vmatprep.subr.bf16.mxu0 %v4406
    %4456 = vmatpush1.bf16.msra.mxu0 %v4405
    %4457 = vmatprep.subr.bf16.mxu0 0
    %4458 = vmatpush1.bf16.msra.mxu0 0
    %4459 = vmatprep.subr.bf16.mxu0 0
    %4460 = vmatpush1.bf16.msra.mxu0 0
    %4461 = vmatprep.subr.bf16.mxu0 0
    %4462 = vmatpush1.bf16.msra.mxu0 0
    %4463 = vmatprep.subr.bf16.mxu0 0
    %4464 = vmatpush1.bf16.msra.mxu0 0
    %4465 = vmatprep.subr.bf16.mxu0 0
    %4466 = vmatpush1.bf16.msra.mxu0 0
    %4467 = vmatprep.subr.bf16.mxu0 0
    %4468 = vmatpush1.bf16.msra.mxu0 0
    %4469 = vmatprep.subr.bf16.mxu0 0
    %4470 = vmatpush1.bf16.msra.mxu0 0
    %4471 = vmatprep.subr.bf16.mxu0 0
    %4472 = vmatpush1.bf16.msra.mxu0 0
    %4473 = vmatprep.mubr.bf16.mxu0 0
    %4474 = vmatmul.mubr.bf16.gmra.mrb[0].mxu0 %v4248
    %v4475 = vpop.f32.mrb[0].mxu0
    %v4476 = vadd.f32 0.0, %v4475
    %v4477 = vpop.f32.mrb[0].mxu0
    %v4478 = vadd.f32 0.0, %v4477
    %v4479 = vpop.f32.mrb[0].mxu0
    %v4480 = vpop.f32.mrb[0].mxu0
    %4481 = vdwg.mxu0
    %4482 = vmatprep.subr.bf16.mxu0 %v4380
    %4483 = vmatpush1.bf16.msra.mxu0 %v4379
    %4484 = vmatprep.subr.bf16.mxu0 %v4384
    %4485 = vmatpush1.bf16.msra.mxu0 %v4383
    %4486 = vmatprep.subr.bf16.mxu0 %v4388
    %4487 = vmatpush1.bf16.msra.mxu0 %v4387
    %4488 = vmatprep.subr.bf16.mxu0 %v4392
    %4489 = vmatpush1.bf16.msra.mxu0 %v4391
    %4490 = vmatprep.subr.bf16.mxu0 %v4396
    %4491 = vmatpush1.bf16.msra.mxu0 %v4395
    %4492 = vmatprep.subr.bf16.mxu0 %v4400
    %4493 = vmatpush1.bf16.msra.mxu0 %v4399
    %4494 = vmatprep.subr.bf16.mxu0 %v4404
    %4495 = vmatpush1.bf16.msra.mxu0 %v4403
    %4496 = vmatprep.subr.bf16.mxu0 %v4408
    %4497 = vmatpush1.bf16.msra.mxu0 %v4407
    %4498 = vmatprep.subr.bf16.mxu0 0
    %4499 = vmatpush1.bf16.msra.mxu0 0
    %4500 = vmatprep.subr.bf16.mxu0 0
    %4501 = vmatpush1.bf16.msra.mxu0 0
    %4502 = vmatprep.subr.bf16.mxu0 0
    %4503 = vmatpush1.bf16.msra.mxu0 0
    %4504 = vmatprep.subr.bf16.mxu0 0
    %4505 = vmatpush1.bf16.msra.mxu0 0
    %4506 = vmatprep.subr.bf16.mxu0 0
    %4507 = vmatpush1.bf16.msra.mxu0 0
    %4508 = vmatprep.subr.bf16.mxu0 0
    %4509 = vmatpush1.bf16.msra.mxu0 0
    %4510 = vmatprep.subr.bf16.mxu0 0
    %4511 = vmatpush1.bf16.msra.mxu0 0
    %4512 = vmatprep.subr.bf16.mxu0 0
    %4513 = vmatpush1.bf16.msra.mxu0 0
    %4514 = vmatprep.mubr.bf16.mxu0 0
    %4515 = vmatmul.mubr.bf16.gmra.mrb[0].mxu0 %v4248
    %v4516 = vpop.f32.mrb[0].mxu0
    %v4517 = vadd.f32 0.0, %v4516
    %v4518 = vpop.f32.mrb[0].mxu0
    %v4519 = vadd.f32 0.0, %v4518
    %v4520 = vpop.f32.mrb[0].mxu0
    %v4521 = vpop.f32.mrb[0].mxu0
    %4522 = vdwg.mxu0
    %v4523 = vadd.f32 %v4244, %v4476
    %v4524 = vadd.f32 %v4245, %v4478
    %v4525 = vadd.f32 %v4246, %v4517
    %v4526 = vadd.f32 %v4247, %v4519
    %v4527 = vxor.u32 %v4523, 2147483648
    %v4528 = vxor.u32 %v4524, 2147483648
    %v4529 = vxor.u32 %v4525, 2147483648
    %v4530 = vmul.f32 %v4527, 1.442695
    %v4531 = vpow.pop %v4530
    %v4532 = vmul.f32 %v4528, 1.442695
    %v4533 = vpow.pop %v4532
    %v4534 = vmul.f32 %v4529, 1.442695
    %v4535 = vpow.pop %v4534
    %v4536 = vadd.f32 %v4531, 1.0
    %v4537 = vadd.f32 %v4533, 1.0
    %v4538 = vadd.f32 %v4535, 1.0
    %v4539 = vrcp.pop %v4536
    %v4540 = vmul.f32 1.0, %v4539
    %v4541 = vrcp.pop %v4537
    %v4542 = vmul.f32 1.0, %v4541
    %v4543 = vrcp.pop %v4538
    %v4544 = vmul.f32 1.0, %v4543
    %v4545 = vtanh.pop %v4526
    %v4546 = vmul.f32 %v4542, %v4236
    %v4547 = vmul.f32 %v4540, %v4545
    %v4548 = vadd.f32 %v4546, %v4547
    %v4549 = vtanh.pop %v4548
    %v4550 = vmul.f32 %v4544, %v4549
    %s4551 = scalar_lea.vmem [#allocation3], 96
    %4552 = vst [vmem:[%s4551] sm:$0xff] %v4550
    %s4553 = smul.u32 13, 4
    %s4554 = smul.addr %s4553, 8
    %s4555 = scalar_lea.vmem [#allocation2], %s4554
    %v4556 = vld [vmem:[%s4555] sm:$0xff]
    %v4557 = vld [vmem:[%s4555 + $0x8] sm:$0xff]
    %v4558 = vld [vmem:[%s4555 + $0x10] sm:$0xff]
    %v4559 = vld [vmem:[%s4555 + $0x18] sm:$0xff]
    %v4560 = vpack.c.bf16 %v4550, %v4550
    %v4561 = vld [vmem:[#allocation4] sm:$0xff]
    %v4562 = vld [vmem:[#allocation4 + $0x8] sm:$0xff]
    %v4563 = vld [vmem:[#allocation4 + $0x10] sm:$0xff]
    %v4564 = vld [vmem:[#allocation4 + $0x18] sm:$0xff]
    %v4565 = vld [vmem:[#allocation4 + $0x20] sm:$0xff]
    %v4566 = vld [vmem:[#allocation4 + $0x28] sm:$0xff]
    %v4567 = vld [vmem:[#allocation4 + $0x30] sm:$0xff]
    %v4568 = vld [vmem:[#allocation4 + $0x38] sm:$0xff]
    %v4569 = vld [vmem:[#allocation4 + $0x40] sm:$0xff]
    %v4570 = vld [vmem:[#allocation4 + $0x48] sm:$0xff]
    %v4571 = vld [vmem:[#allocation4 + $0x50] sm:$0xff]
    %v4572 = vld [vmem:[#allocation4 + $0x58] sm:$0xff]
    %v4573 = vld [vmem:[#allocation4 + $0x60] sm:$0xff]
    %v4574 = vld [vmem:[#allocation4 + $0x68] sm:$0xff]
    %v4575 = vld [vmem:[#allocation4 + $0x70] sm:$0xff]
    %v4576 = vld [vmem:[#allocation4 + $0x78] sm:$0xff]
    %v4577 = vld [vmem:[#allocation4 + $0x80] sm:$0xff]
    %v4578 = vld [vmem:[#allocation4 + $0x88] sm:$0xff]
    %v4579 = vld [vmem:[#allocation4 + $0x90] sm:$0xff]
    %v4580 = vld [vmem:[#allocation4 + $0x98] sm:$0xff]
    %v4581 = vld [vmem:[#allocation4 + $0xa0] sm:$0xff]
    %v4582 = vld [vmem:[#allocation4 + $0xa8] sm:$0xff]
    %v4583 = vld [vmem:[#allocation4 + $0xb0] sm:$0xff]
    %v4584 = vld [vmem:[#allocation4 + $0xb8] sm:$0xff]
    %v4585 = vld [vmem:[#allocation4 + $0xc0] sm:$0xff]
    %v4586 = vld [vmem:[#allocation4 + $0xc8] sm:$0xff]
    %v4587 = vld [vmem:[#allocation4 + $0xd0] sm:$0xff]
    %v4588 = vld [vmem:[#allocation4 + $0xd8] sm:$0xff]
    %v4589 = vld [vmem:[#allocation4 + $0xe0] sm:$0xff]
    %v4590 = vld [vmem:[#allocation4 + $0xe8] sm:$0xff]
    %v4591 = vld [vmem:[#allocation4 + $0xf0] sm:$0xff]
    %v4592 = vld [vmem:[#allocation4 + $0xf8] sm:$0xff]
    %v4625 = vunpack.c.l.b16 %v4561
    %v4626 = vunpack.c.h.b16 %v4561
    %v4627 = vunpack.c.l.b16 %v4562
    %v4628 = vunpack.c.h.b16 %v4562
    %v4629 = vunpack.c.l.b16 %v4563
    %v4630 = vunpack.c.h.b16 %v4563
    %v4631 = vunpack.c.l.b16 %v4564
    %v4632 = vunpack.c.h.b16 %v4564
    %v4633 = vunpack.c.l.b16 %v4565
    %v4634 = vunpack.c.h.b16 %v4565
    %v4635 = vunpack.c.l.b16 %v4566
    %v4636 = vunpack.c.h.b16 %v4566
    %v4637 = vunpack.c.l.b16 %v4567
    %v4638 = vunpack.c.h.b16 %v4567
    %v4639 = vunpack.c.l.b16 %v4568
    %v4640 = vunpack.c.h.b16 %v4568
    %v4641 = vunpack.c.l.b16 %v4569
    %v4642 = vunpack.c.h.b16 %v4569
    %v4643 = vunpack.c.l.b16 %v4570
    %v4644 = vunpack.c.h.b16 %v4570
    %v4645 = vunpack.c.l.b16 %v4571
    %v4646 = vunpack.c.h.b16 %v4571
    %v4647 = vunpack.c.l.b16 %v4572
    %v4648 = vunpack.c.h.b16 %v4572
    %v4649 = vunpack.c.l.b16 %v4573
    %v4650 = vunpack.c.h.b16 %v4573
    %v4651 = vunpack.c.l.b16 %v4574
    %v4652 = vunpack.c.h.b16 %v4574
    %v4653 = vunpack.c.l.b16 %v4575
    %v4654 = vunpack.c.h.b16 %v4575
    %v4655 = vunpack.c.l.b16 %v4576
    %v4656 = vunpack.c.h.b16 %v4576
    %v4657 = vunpack.c.l.b16 %v4577
    %v4658 = vunpack.c.h.b16 %v4577
    %v4659 = vunpack.c.l.b16 %v4578
    %v4660 = vunpack.c.h.b16 %v4578
    %v4661 = vunpack.c.l.b16 %v4579
    %v4662 = vunpack.c.h.b16 %v4579
    %v4663 = vunpack.c.l.b16 %v4580
    %v4664 = vunpack.c.h.b16 %v4580
    %v4665 = vunpack.c.l.b16 %v4581
    %v4666 = vunpack.c.h.b16 %v4581
    %v4667 = vunpack.c.l.b16 %v4582
    %v4668 = vunpack.c.h.b16 %v4582
    %v4669 = vunpack.c.l.b16 %v4583
    %v4670 = vunpack.c.h.b16 %v4583
    %v4671 = vunpack.c.l.b16 %v4584
    %v4672 = vunpack.c.h.b16 %v4584
    %v4673 = vunpack.c.l.b16 %v4585
    %v4674 = vunpack.c.h.b16 %v4585
    %v4675 = vunpack.c.l.b16 %v4586
    %v4676 = vunpack.c.h.b16 %v4586
    %v4677 = vunpack.c.l.b16 %v4587
    %v4678 = vunpack.c.h.b16 %v4587
    %v4679 = vunpack.c.l.b16 %v4588
    %v4680 = vunpack.c.h.b16 %v4588
    %v4681 = vunpack.c.l.b16 %v4589
    %v4682 = vunpack.c.h.b16 %v4589
    %v4683 = vunpack.c.l.b16 %v4590
    %v4684 = vunpack.c.h.b16 %v4590
    %v4685 = vunpack.c.l.b16 %v4591
    %v4686 = vunpack.c.h.b16 %v4591
    %v4687 = vunpack.c.l.b16 %v4592
    %v4688 = vunpack.c.h.b16 %v4592
    %v4689 = vpack.c.b16 %v4629, %v4625
    %v4690 = vpack.c.b16 %v4630, %v4626
    %v4691 = vpack.c.b16 %v4631, %v4627
    %v4692 = vpack.c.b16 %v4632, %v4628
    %v4693 = vpack.c.b16 %v4637, %v4633
    %v4694 = vpack.c.b16 %v4638, %v4634
    %v4695 = vpack.c.b16 %v4639, %v4635
    %v4696 = vpack.c.b16 %v4640, %v4636
    %v4697 = vpack.c.b16 %v4645, %v4641
    %v4698 = vpack.c.b16 %v4646, %v4642
    %v4699 = vpack.c.b16 %v4647, %v4643
    %v4700 = vpack.c.b16 %v4648, %v4644
    %v4701 = vpack.c.b16 %v4653, %v4649
    %v4702 = vpack.c.b16 %v4654, %v4650
    %v4703 = vpack.c.b16 %v4655, %v4651
    %v4704 = vpack.c.b16 %v4656, %v4652
    %v4705 = vpack.c.b16 %v4661, %v4657
    %v4706 = vpack.c.b16 %v4662, %v4658
    %v4707 = vpack.c.b16 %v4663, %v4659
    %v4708 = vpack.c.b16 %v4664, %v4660
    %v4709 = vpack.c.b16 %v4669, %v4665
    %v4710 = vpack.c.b16 %v4670, %v4666
    %v4711 = vpack.c.b16 %v4671, %v4667
    %v4712 = vpack.c.b16 %v4672, %v4668
    %v4713 = vpack.c.b16 %v4677, %v4673
    %v4714 = vpack.c.b16 %v4678, %v4674
    %v4715 = vpack.c.b16 %v4679, %v4675
    %v4716 = vpack.c.b16 %v4680, %v4676
    %v4717 = vpack.c.b16 %v4685, %v4681
    %v4718 = vpack.c.b16 %v4686, %v4682
    %v4719 = vpack.c.b16 %v4687, %v4683
    %v4720 = vpack.c.b16 %v4688, %v4684
    %4753 = vmatprep.subr.bf16.mxu0 %v4690
    %4754 = vmatpush1.bf16.msra.mxu0 %v4689
    %4755 = vmatprep.subr.bf16.mxu0 %v4694
    %4756 = vmatpush1.bf16.msra.mxu0 %v4693
    %4757 = vmatprep.subr.bf16.mxu0 %v4698
    %4758 = vmatpush1.bf16.msra.mxu0 %v4697
    %4759 = vmatprep.subr.bf16.mxu0 %v4702
    %4760 = vmatpush1.bf16.msra.mxu0 %v4701
    %4761 = vmatprep.subr.bf16.mxu0 %v4706
    %4762 = vmatpush1.bf16.msra.mxu0 %v4705
    %4763 = vmatprep.subr.bf16.mxu0 %v4710
    %4764 = vmatpush1.bf16.msra.mxu0 %v4709
    %4765 = vmatprep.subr.bf16.mxu0 %v4714
    %4766 = vmatpush1.bf16.msra.mxu0 %v4713
    %4767 = vmatprep.subr.bf16.mxu0 %v4718
    %4768 = vmatpush1.bf16.msra.mxu0 %v4717
    %4769 = vmatprep.subr.bf16.mxu0 0
    %4770 = vmatpush1.bf16.msra.mxu0 0
    %4771 = vmatprep.subr.bf16.mxu0 0
    %4772 = vmatpush1.bf16.msra.mxu0 0
    %4773 = vmatprep.subr.bf16.mxu0 0
    %4774 = vmatpush1.bf16.msra.mxu0 0
    %4775 = vmatprep.subr.bf16.mxu0 0
    %4776 = vmatpush1.bf16.msra.mxu0 0
    %4777 = vmatprep.subr.bf16.mxu0 0
    %4778 = vmatpush1.bf16.msra.mxu0 0
    %4779 = vmatprep.subr.bf16.mxu0 0
    %4780 = vmatpush1.bf16.msra.mxu0 0
    %4781 = vmatprep.subr.bf16.mxu0 0
    %4782 = vmatpush1.bf16.msra.mxu0 0
    %4783 = vmatprep.subr.bf16.mxu0 0
    %4784 = vmatpush1.bf16.msra.mxu0 0
    %4785 = vmatprep.mubr.bf16.mxu0 0
    %4786 = vmatmul.mubr.bf16.gmra.mrb[0].mxu0 %v4560
    %v4787 = vpop.f32.mrb[0].mxu0
    %v4788 = vadd.f32 0.0, %v4787
    %v4789 = vpop.f32.mrb[0].mxu0
    %v4790 = vadd.f32 0.0, %v4789
    %v4791 = vpop.f32.mrb[0].mxu0
    %v4792 = vpop.f32.mrb[0].mxu0
    %4793 = vdwg.mxu0
    %4794 = vmatprep.subr.bf16.mxu0 %v4692
    %4795 = vmatpush1.bf16.msra.mxu0 %v4691
    %4796 = vmatprep.subr.bf16.mxu0 %v4696
    %4797 = vmatpush1.bf16.msra.mxu0 %v4695
    %4798 = vmatprep.subr.bf16.mxu0 %v4700
    %4799 = vmatpush1.bf16.msra.mxu0 %v4699
    %4800 = vmatprep.subr.bf16.mxu0 %v4704
    %4801 = vmatpush1.bf16.msra.mxu0 %v4703
    %4802 = vmatprep.subr.bf16.mxu0 %v4708
    %4803 = vmatpush1.bf16.msra.mxu0 %v4707
    %4804 = vmatprep.subr.bf16.mxu0 %v4712
    %4805 = vmatpush1.bf16.msra.mxu0 %v4711
    %4806 = vmatprep.subr.bf16.mxu0 %v4716
    %4807 = vmatpush1.bf16.msra.mxu0 %v4715
    %4808 = vmatprep.subr.bf16.mxu0 %v4720
    %4809 = vmatpush1.bf16.msra.mxu0 %v4719
    %4810 = vmatprep.subr.bf16.mxu0 0
    %4811 = vmatpush1.bf16.msra.mxu0 0
    %4812 = vmatprep.subr.bf16.mxu0 0
    %4813 = vmatpush1.bf16.msra.mxu0 0
    %4814 = vmatprep.subr.bf16.mxu0 0
    %4815 = vmatpush1.bf16.msra.mxu0 0
    %4816 = vmatprep.subr.bf16.mxu0 0
    %4817 = vmatpush1.bf16.msra.mxu0 0
    %4818 = vmatprep.subr.bf16.mxu0 0
    %4819 = vmatpush1.bf16.msra.mxu0 0
    %4820 = vmatprep.subr.bf16.mxu0 0
    %4821 = vmatpush1.bf16.msra.mxu0 0
    %4822 = vmatprep.subr.bf16.mxu0 0
    %4823 = vmatpush1.bf16.msra.mxu0 0
    %4824 = vmatprep.subr.bf16.mxu0 0
    %4825 = vmatpush1.bf16.msra.mxu0 0
    %4826 = vmatprep.mubr.bf16.mxu0 0
    %4827 = vmatmul.mubr.bf16.gmra.mrb[0].mxu0 %v4560
    %v4828 = vpop.f32.mrb[0].mxu0
    %v4829 = vadd.f32 0.0, %v4828
    %v4830 = vpop.f32.mrb[0].mxu0
    %v4831 = vadd.f32 0.0, %v4830
    %v4832 = vpop.f32.mrb[0].mxu0
    %v4833 = vpop.f32.mrb[0].mxu0
    %4834 = vdwg.mxu0
    %v4835 = vadd.f32 %v4556, %v4788
    %v4836 = vadd.f32 %v4557, %v4790
    %v4837 = vadd.f32 %v4558, %v4829
    %v4838 = vadd.f32 %v4559, %v4831
    %v4839 = vxor.u32 %v4835, 2147483648
    %v4840 = vxor.u32 %v4836, 2147483648
    %v4841 = vxor.u32 %v4837, 2147483648
    %v4842 = vmul.f32 %v4839, 1.442695
    %v4843 = vpow.pop %v4842
    %v4844 = vmul.f32 %v4840, 1.442695
    %v4845 = vpow.pop %v4844
    %v4846 = vmul.f32 %v4841, 1.442695
    %v4847 = vpow.pop %v4846
    %v4848 = vadd.f32 %v4843, 1.0
    %v4849 = vadd.f32 %v4845, 1.0
    %v4850 = vadd.f32 %v4847, 1.0
    %v4851 = vrcp.pop %v4848
    %v4852 = vmul.f32 1.0, %v4851
    %v4853 = vrcp.pop %v4849
    %v4854 = vmul.f32 1.0, %v4853
    %v4855 = vrcp.pop %v4850
    %v4856 = vmul.f32 1.0, %v4855
    %v4857 = vtanh.pop %v4838
    %v4858 = vmul.f32 %v4854, %v4548
    %v4859 = vmul.f32 %v4852, %v4857
    %v4860 = vadd.f32 %v4858, %v4859
    %v4861 = vtanh.pop %v4860
    %v4862 = vmul.f32 %v4856, %v4861
    %s4863 = scalar_lea.vmem [#allocation3], 104
    %4864 = vst [vmem:[%s4863] sm:$0xff] %v4862
    %s4865 = smul.u32 14, 4
    %s4866 = smul.addr %s4865, 8
    %s4867 = scalar_lea.vmem [#allocation2], %s4866
    %v4868 = vld [vmem:[%s4867] sm:$0xff]
    %v4869 = vld [vmem:[%s4867 + $0x8] sm:$0xff]
    %v4870 = vld [vmem:[%s4867 + $0x10] sm:$0xff]
    %v4871 = vld [vmem:[%s4867 + $0x18] sm:$0xff]
    %v4872 = vpack.c.bf16 %v4862, %v4862
    %v4873 = vld [vmem:[#allocation4] sm:$0xff]
    %v4874 = vld [vmem:[#allocation4 + $0x8] sm:$0xff]
    %v4875 = vld [vmem:[#allocation4 + $0x10] sm:$0xff]
    %v4876 = vld [vmem:[#allocation4 + $0x18] sm:$0xff]
    %v4877 = vld [vmem:[#allocation4 + $0x20] sm:$0xff]
    %v4878 = vld [vmem:[#allocation4 + $0x28] sm:$0xff]
    %v4879 = vld [vmem:[#allocation4 + $0x30] sm:$0xff]
    %v4880 = vld [vmem:[#allocation4 + $0x38] sm:$0xff]
    %v4881 = vld [vmem:[#allocation4 + $0x40] sm:$0xff]
    %v4882 = vld [vmem:[#allocation4 + $0x48] sm:$0xff]
    %v4883 = vld [vmem:[#allocation4 + $0x50] sm:$0xff]
    %v4884 = vld [vmem:[#allocation4 + $0x58] sm:$0xff]
    %v4885 = vld [vmem:[#allocation4 + $0x60] sm:$0xff]
    %v4886 = vld [vmem:[#allocation4 + $0x68] sm:$0xff]
    %v4887 = vld [vmem:[#allocation4 + $0x70] sm:$0xff]
    %v4888 = vld [vmem:[#allocation4 + $0x78] sm:$0xff]
    %v4889 = vld [vmem:[#allocation4 + $0x80] sm:$0xff]
    %v4890 = vld [vmem:[#allocation4 + $0x88] sm:$0xff]
    %v4891 = vld [vmem:[#allocation4 + $0x90] sm:$0xff]
    %v4892 = vld [vmem:[#allocation4 + $0x98] sm:$0xff]
    %v4893 = vld [vmem:[#allocation4 + $0xa0] sm:$0xff]
    %v4894 = vld [vmem:[#allocation4 + $0xa8] sm:$0xff]
    %v4895 = vld [vmem:[#allocation4 + $0xb0] sm:$0xff]
    %v4896 = vld [vmem:[#allocation4 + $0xb8] sm:$0xff]
    %v4897 = vld [vmem:[#allocation4 + $0xc0] sm:$0xff]
    %v4898 = vld [vmem:[#allocation4 + $0xc8] sm:$0xff]
    %v4899 = vld [vmem:[#allocation4 + $0xd0] sm:$0xff]
    %v4900 = vld [vmem:[#allocation4 + $0xd8] sm:$0xff]
    %v4901 = vld [vmem:[#allocation4 + $0xe0] sm:$0xff]
    %v4902 = vld [vmem:[#allocation4 + $0xe8] sm:$0xff]
    %v4903 = vld [vmem:[#allocation4 + $0xf0] sm:$0xff]
    %v4904 = vld [vmem:[#allocation4 + $0xf8] sm:$0xff]
    %v4937 = vunpack.c.l.b16 %v4873
    %v4938 = vunpack.c.h.b16 %v4873
    %v4939 = vunpack.c.l.b16 %v4874
    %v4940 = vunpack.c.h.b16 %v4874
    %v4941 = vunpack.c.l.b16 %v4875
    %v4942 = vunpack.c.h.b16 %v4875
    %v4943 = vunpack.c.l.b16 %v4876
    %v4944 = vunpack.c.h.b16 %v4876
    %v4945 = vunpack.c.l.b16 %v4877
    %v4946 = vunpack.c.h.b16 %v4877
    %v4947 = vunpack.c.l.b16 %v4878
    %v4948 = vunpack.c.h.b16 %v4878
    %v4949 = vunpack.c.l.b16 %v4879
    %v4950 = vunpack.c.h.b16 %v4879
    %v4951 = vunpack.c.l.b16 %v4880
    %v4952 = vunpack.c.h.b16 %v4880
    %v4953 = vunpack.c.l.b16 %v4881
    %v4954 = vunpack.c.h.b16 %v4881
    %v4955 = vunpack.c.l.b16 %v4882
    %v4956 = vunpack.c.h.b16 %v4882
    %v4957 = vunpack.c.l.b16 %v4883
    %v4958 = vunpack.c.h.b16 %v4883
    %v4959 = vunpack.c.l.b16 %v4884
    %v4960 = vunpack.c.h.b16 %v4884
    %v4961 = vunpack.c.l.b16 %v4885
    %v4962 = vunpack.c.h.b16 %v4885
    %v4963 = vunpack.c.l.b16 %v4886
    %v4964 = vunpack.c.h.b16 %v4886
    %v4965 = vunpack.c.l.b16 %v4887
    %v4966 = vunpack.c.h.b16 %v4887
    %v4967 = vunpack.c.l.b16 %v4888
    %v4968 = vunpack.c.h.b16 %v4888
    %v4969 = vunpack.c.l.b16 %v4889
    %v4970 = vunpack.c.h.b16 %v4889
    %v4971 = vunpack.c.l.b16 %v4890
    %v4972 = vunpack.c.h.b16 %v4890
    %v4973 = vunpack.c.l.b16 %v4891
    %v4974 = vunpack.c.h.b16 %v4891
    %v4975 = vunpack.c.l.b16 %v4892
    %v4976 = vunpack.c.h.b16 %v4892
    %v4977 = vunpack.c.l.b16 %v4893
    %v4978 = vunpack.c.h.b16 %v4893
    %v4979 = vunpack.c.l.b16 %v4894
    %v4980 = vunpack.c.h.b16 %v4894
    %v4981 = vunpack.c.l.b16 %v4895
    %v4982 = vunpack.c.h.b16 %v4895
    %v4983 = vunpack.c.l.b16 %v4896
    %v4984 = vunpack.c.h.b16 %v4896
    %v4985 = vunpack.c.l.b16 %v4897
    %v4986 = vunpack.c.h.b16 %v4897
    %v4987 = vunpack.c.l.b16 %v4898
    %v4988 = vunpack.c.h.b16 %v4898
    %v4989 = vunpack.c.l.b16 %v4899
    %v4990 = vunpack.c.h.b16 %v4899
    %v4991 = vunpack.c.l.b16 %v4900
    %v4992 = vunpack.c.h.b16 %v4900
    %v4993 = vunpack.c.l.b16 %v4901
    %v4994 = vunpack.c.h.b16 %v4901
    %v4995 = vunpack.c.l.b16 %v4902
    %v4996 = vunpack.c.h.b16 %v4902
    %v4997 = vunpack.c.l.b16 %v4903
    %v4998 = vunpack.c.h.b16 %v4903
    %v4999 = vunpack.c.l.b16 %v4904
    %v5000 = vunpack.c.h.b16 %v4904
    %v5001 = vpack.c.b16 %v4941, %v4937
    %v5002 = vpack.c.b16 %v4942, %v4938
    %v5003 = vpack.c.b16 %v4943, %v4939
    %v5004 = vpack.c.b16 %v4944, %v4940
    %v5005 = vpack.c.b16 %v4949, %v4945
    %v5006 = vpack.c.b16 %v4950, %v4946
    %v5007 = vpack.c.b16 %v4951, %v4947
    %v5008 = vpack.c.b16 %v4952, %v4948
    %v5009 = vpack.c.b16 %v4957, %v4953
    %v5010 = vpack.c.b16 %v4958, %v4954
    %v5011 = vpack.c.b16 %v4959, %v4955
    %v5012 = vpack.c.b16 %v4960, %v4956
    %v5013 = vpack.c.b16 %v4965, %v4961
    %v5014 = vpack.c.b16 %v4966, %v4962
    %v5015 = vpack.c.b16 %v4967, %v4963
    %v5016 = vpack.c.b16 %v4968, %v4964
    %v5017 = vpack.c.b16 %v4973, %v4969
    %v5018 = vpack.c.b16 %v4974, %v4970
    %v5019 = vpack.c.b16 %v4975, %v4971
    %v5020 = vpack.c.b16 %v4976, %v4972
    %v5021 = vpack.c.b16 %v4981, %v4977
    %v5022 = vpack.c.b16 %v4982, %v4978
    %v5023 = vpack.c.b16 %v4983, %v4979
    %v5024 = vpack.c.b16 %v4984, %v4980
    %v5025 = vpack.c.b16 %v4989, %v4985
    %v5026 = vpack.c.b16 %v4990, %v4986
    %v5027 = vpack.c.b16 %v4991, %v4987
    %v5028 = vpack.c.b16 %v4992, %v4988
    %v5029 = vpack.c.b16 %v4997, %v4993
    %v5030 = vpack.c.b16 %v4998, %v4994
    %v5031 = vpack.c.b16 %v4999, %v4995
    %v5032 = vpack.c.b16 %v5000, %v4996
    %5065 = vmatprep.subr.bf16.mxu0 %v5002
    %5066 = vmatpush1.bf16.msra.mxu0 %v5001
    %5067 = vmatprep.subr.bf16.mxu0 %v5006
    %5068 = vmatpush1.bf16.msra.mxu0 %v5005
    %5069 = vmatprep.subr.bf16.mxu0 %v5010
    %5070 = vmatpush1.bf16.msra.mxu0 %v5009
    %5071 = vmatprep.subr.bf16.mxu0 %v5014
    %5072 = vmatpush1.bf16.msra.mxu0 %v5013
    %5073 = vmatprep.subr.bf16.mxu0 %v5018
    %5074 = vmatpush1.bf16.msra.mxu0 %v5017
    %5075 = vmatprep.subr.bf16.mxu0 %v5022
    %5076 = vmatpush1.bf16.msra.mxu0 %v5021
    %5077 = vmatprep.subr.bf16.mxu0 %v5026
    %5078 = vmatpush1.bf16.msra.mxu0 %v5025
    %5079 = vmatprep.subr.bf16.mxu0 %v5030
    %5080 = vmatpush1.bf16.msra.mxu0 %v5029
    %5081 = vmatprep.subr.bf16.mxu0 0
    %5082 = vmatpush1.bf16.msra.mxu0 0
    %5083 = vmatprep.subr.bf16.mxu0 0
    %5084 = vmatpush1.bf16.msra.mxu0 0
    %5085 = vmatprep.subr.bf16.mxu0 0
    %5086 = vmatpush1.bf16.msra.mxu0 0
    %5087 = vmatprep.subr.bf16.mxu0 0
    %5088 = vmatpush1.bf16.msra.mxu0 0
    %5089 = vmatprep.subr.bf16.mxu0 0
    %5090 = vmatpush1.bf16.msra.mxu0 0
    %5091 = vmatprep.subr.bf16.mxu0 0
    %5092 = vmatpush1.bf16.msra.mxu0 0
    %5093 = vmatprep.subr.bf16.mxu0 0
    %5094 = vmatpush1.bf16.msra.mxu0 0
    %5095 = vmatprep.subr.bf16.mxu0 0
    %5096 = vmatpush1.bf16.msra.mxu0 0
    %5097 = vmatprep.mubr.bf16.mxu0 0
    %5098 = vmatmul.mubr.bf16.gmra.mrb[0].mxu0 %v4872
    %v5099 = vpop.f32.mrb[0].mxu0
    %v5100 = vadd.f32 0.0, %v5099
    %v5101 = vpop.f32.mrb[0].mxu0
    %v5102 = vadd.f32 0.0, %v5101
    %v5103 = vpop.f32.mrb[0].mxu0
    %v5104 = vpop.f32.mrb[0].mxu0
    %5105 = vdwg.mxu0
    %5106 = vmatprep.subr.bf16.mxu0 %v5004
    %5107 = vmatpush1.bf16.msra.mxu0 %v5003
    %5108 = vmatprep.subr.bf16.mxu0 %v5008
    %5109 = vmatpush1.bf16.msra.mxu0 %v5007
    %5110 = vmatprep.subr.bf16.mxu0 %v5012
    %5111 = vmatpush1.bf16.msra.mxu0 %v5011
    %5112 = vmatprep.subr.bf16.mxu0 %v5016
    %5113 = vmatpush1.bf16.msra.mxu0 %v5015
    %5114 = vmatprep.subr.bf16.mxu0 %v5020
    %5115 = vmatpush1.bf16.msra.mxu0 %v5019
    %5116 = vmatprep.subr.bf16.mxu0 %v5024
    %5117 = vmatpush1.bf16.msra.mxu0 %v5023
    %5118 = vmatprep.subr.bf16.mxu0 %v5028
    %5119 = vmatpush1.bf16.msra.mxu0 %v5027
    %5120 = vmatprep.subr.bf16.mxu0 %v5032
    %5121 = vmatpush1.bf16.msra.mxu0 %v5031
    %5122 = vmatprep.subr.bf16.mxu0 0
    %5123 = vmatpush1.bf16.msra.mxu0 0
    %5124 = vmatprep.subr.bf16.mxu0 0
    %5125 = vmatpush1.bf16.msra.mxu0 0
    %5126 = vmatprep.subr.bf16.mxu0 0
    %5127 = vmatpush1.bf16.msra.mxu0 0
    %5128 = vmatprep.subr.bf16.mxu0 0
    %5129 = vmatpush1.bf16.msra.mxu0 0
    %5130 = vmatprep.subr.bf16.mxu0 0
    %5131 = vmatpush1.bf16.msra.mxu0 0
    %5132 = vmatprep.subr.bf16.mxu0 0
    %5133 = vmatpush1.bf16.msra.mxu0 0
    %5134 = vmatprep.subr.bf16.mxu0 0
    %5135 = vmatpush1.bf16.msra.mxu0 0
    %5136 = vmatprep.subr.bf16.mxu0 0
    %5137 = vmatpush1.bf16.msra.mxu0 0
    %5138 = vmatprep.mubr.bf16.mxu0 0
    %5139 = vmatmul.mubr.bf16.gmra.mrb[0].mxu0 %v4872
    %v5140 = vpop.f32.mrb[0].mxu0
    %v5141 = vadd.f32 0.0, %v5140
    %v5142 = vpop.f32.mrb[0].mxu0
    %v5143 = vadd.f32 0.0, %v5142
    %v5144 = vpop.f32.mrb[0].mxu0
    %v5145 = vpop.f32.mrb[0].mxu0
    %5146 = vdwg.mxu0
    %v5147 = vadd.f32 %v4868, %v5100
    %v5148 = vadd.f32 %v4869, %v5102
    %v5149 = vadd.f32 %v4870, %v5141
    %v5150 = vadd.f32 %v4871, %v5143
    %v5151 = vxor.u32 %v5147, 2147483648
    %v5152 = vxor.u32 %v5148, 2147483648
    %v5153 = vxor.u32 %v5149, 2147483648
    %v5154 = vmul.f32 %v5151, 1.442695
    %v5155 = vpow.pop %v5154
    %v5156 = vmul.f32 %v5152, 1.442695
    %v5157 = vpow.pop %v5156
    %v5158 = vmul.f32 %v5153, 1.442695
    %v5159 = vpow.pop %v5158
    %v5160 = vadd.f32 %v5155, 1.0
    %v5161 = vadd.f32 %v5157, 1.0
    %v5162 = vadd.f32 %v5159, 1.0
    %v5163 = vrcp.pop %v5160
    %v5164 = vmul.f32 1.0, %v5163
    %v5165 = vrcp.pop %v5161
    %v5166 = vmul.f32 1.0, %v5165
    %v5167 = vrcp.pop %v5162
    %v5168 = vmul.f32 1.0, %v5167
    %v5169 = vtanh.pop %v5150
    %v5170 = vmul.f32 %v5166, %v4860
    %v5171 = vmul.f32 %v5164, %v5169
    %v5172 = vadd.f32 %v5170, %v5171
    %v5173 = vtanh.pop %v5172
    %v5174 = vmul.f32 %v5168, %v5173
    %s5175 = scalar_lea.vmem [#allocation3], 112
    %5176 = vst [vmem:[%s5175] sm:$0xff] %v5174
    %s5177 = smul.u32 15, 4
    %s5178 = smul.addr %s5177, 8
    %s5179 = scalar_lea.vmem [#allocation2], %s5178
    %v5180 = vld [vmem:[%s5179] sm:$0xff]
    %v5181 = vld [vmem:[%s5179 + $0x8] sm:$0xff]
    %v5182 = vld [vmem:[%s5179 + $0x10] sm:$0xff]
    %v5183 = vld [vmem:[%s5179 + $0x18] sm:$0xff]
    %v5184 = vpack.c.bf16 %v5174, %v5174
    %v5185 = vld [vmem:[#allocation4] sm:$0xff]
    %v5186 = vld [vmem:[#allocation4 + $0x8] sm:$0xff]
    %v5187 = vld [vmem:[#allocation4 + $0x10] sm:$0xff]
    %v5188 = vld [vmem:[#allocation4 + $0x18] sm:$0xff]
    %v5189 = vld [vmem:[#allocation4 + $0x20] sm:$0xff]
    %v5190 = vld [vmem:[#allocation4 + $0x28] sm:$0xff]
    %v5191 = vld [vmem:[#allocation4 + $0x30] sm:$0xff]
    %v5192 = vld [vmem:[#allocation4 + $0x38] sm:$0xff]
    %v5193 = vld [vmem:[#allocation4 + $0x40] sm:$0xff]
    %v5194 = vld [vmem:[#allocation4 + $0x48] sm:$0xff]
    %v5195 = vld [vmem:[#allocation4 + $0x50] sm:$0xff]
    %v5196 = vld [vmem:[#allocation4 + $0x58] sm:$0xff]
    %v5197 = vld [vmem:[#allocation4 + $0x60] sm:$0xff]
    %v5198 = vld [vmem:[#allocation4 + $0x68] sm:$0xff]
    %v5199 = vld [vmem:[#allocation4 + $0x70] sm:$0xff]
    %v5200 = vld [vmem:[#allocation4 + $0x78] sm:$0xff]
    %v5201 = vld [vmem:[#allocation4 + $0x80] sm:$0xff]
    %v5202 = vld [vmem:[#allocation4 + $0x88] sm:$0xff]
    %v5203 = vld [vmem:[#allocation4 + $0x90] sm:$0xff]
    %v5204 = vld [vmem:[#allocation4 + $0x98] sm:$0xff]
    %v5205 = vld [vmem:[#allocation4 + $0xa0] sm:$0xff]
    %v5206 = vld [vmem:[#allocation4 + $0xa8] sm:$0xff]
    %v5207 = vld [vmem:[#allocation4 + $0xb0] sm:$0xff]
    %v5208 = vld [vmem:[#allocation4 + $0xb8] sm:$0xff]
    %v5209 = vld [vmem:[#allocation4 + $0xc0] sm:$0xff]
    %v5210 = vld [vmem:[#allocation4 + $0xc8] sm:$0xff]
    %v5211 = vld [vmem:[#allocation4 + $0xd0] sm:$0xff]
    %v5212 = vld [vmem:[#allocation4 + $0xd8] sm:$0xff]
    %v5213 = vld [vmem:[#allocation4 + $0xe0] sm:$0xff]
    %v5214 = vld [vmem:[#allocation4 + $0xe8] sm:$0xff]
    %v5215 = vld [vmem:[#allocation4 + $0xf0] sm:$0xff]
    %v5216 = vld [vmem:[#allocation4 + $0xf8] sm:$0xff]
    %v5249 = vunpack.c.l.b16 %v5185
    %v5250 = vunpack.c.h.b16 %v5185
    %v5251 = vunpack.c.l.b16 %v5186
    %v5252 = vunpack.c.h.b16 %v5186
    %v5253 = vunpack.c.l.b16 %v5187
    %v5254 = vunpack.c.h.b16 %v5187
    %v5255 = vunpack.c.l.b16 %v5188
    %v5256 = vunpack.c.h.b16 %v5188
    %v5257 = vunpack.c.l.b16 %v5189
    %v5258 = vunpack.c.h.b16 %v5189
    %v5259 = vunpack.c.l.b16 %v5190
    %v5260 = vunpack.c.h.b16 %v5190
    %v5261 = vunpack.c.l.b16 %v5191
    %v5262 = vunpack.c.h.b16 %v5191
    %v5263 = vunpack.c.l.b16 %v5192
    %v5264 = vunpack.c.h.b16 %v5192
    %v5265 = vunpack.c.l.b16 %v5193
    %v5266 = vunpack.c.h.b16 %v5193
    %v5267 = vunpack.c.l.b16 %v5194
    %v5268 = vunpack.c.h.b16 %v5194
    %v5269 = vunpack.c.l.b16 %v5195
    %v5270 = vunpack.c.h.b16 %v5195
    %v5271 = vunpack.c.l.b16 %v5196
    %v5272 = vunpack.c.h.b16 %v5196
    %v5273 = vunpack.c.l.b16 %v5197
    %v5274 = vunpack.c.h.b16 %v5197
    %v5275 = vunpack.c.l.b16 %v5198
    %v5276 = vunpack.c.h.b16 %v5198
    %v5277 = vunpack.c.l.b16 %v5199
    %v5278 = vunpack.c.h.b16 %v5199
    %v5279 = vunpack.c.l.b16 %v5200
    %v5280 = vunpack.c.h.b16 %v5200
    %v5281 = vunpack.c.l.b16 %v5201
    %v5282 = vunpack.c.h.b16 %v5201
    %v5283 = vunpack.c.l.b16 %v5202
    %v5284 = vunpack.c.h.b16 %v5202
    %v5285 = vunpack.c.l.b16 %v5203
    %v5286 = vunpack.c.h.b16 %v5203
    %v5287 = vunpack.c.l.b16 %v5204
    %v5288 = vunpack.c.h.b16 %v5204
    %v5289 = vunpack.c.l.b16 %v5205
    %v5290 = vunpack.c.h.b16 %v5205
    %v5291 = vunpack.c.l.b16 %v5206
    %v5292 = vunpack.c.h.b16 %v5206
    %v5293 = vunpack.c.l.b16 %v5207
    %v5294 = vunpack.c.h.b16 %v5207
    %v5295 = vunpack.c.l.b16 %v5208
    %v5296 = vunpack.c.h.b16 %v5208
    %v5297 = vunpack.c.l.b16 %v5209
    %v5298 = vunpack.c.h.b16 %v5209
    %v5299 = vunpack.c.l.b16 %v5210
    %v5300 = vunpack.c.h.b16 %v5210
    %v5301 = vunpack.c.l.b16 %v5211
    %v5302 = vunpack.c.h.b16 %v5211
    %v5303 = vunpack.c.l.b16 %v5212
    %v5304 = vunpack.c.h.b16 %v5212
    %v5305 = vunpack.c.l.b16 %v5213
    %v5306 = vunpack.c.h.b16 %v5213
    %v5307 = vunpack.c.l.b16 %v5214
    %v5308 = vunpack.c.h.b16 %v5214
    %v5309 = vunpack.c.l.b16 %v5215
    %v5310 = vunpack.c.h.b16 %v5215
    %v5311 = vunpack.c.l.b16 %v5216
    %v5312 = vunpack.c.h.b16 %v5216
    %v5313 = vpack.c.b16 %v5253, %v5249
    %v5314 = vpack.c.b16 %v5254, %v5250
    %v5315 = vpack.c.b16 %v5255, %v5251
    %v5316 = vpack.c.b16 %v5256, %v5252
    %v5317 = vpack.c.b16 %v5261, %v5257
    %v5318 = vpack.c.b16 %v5262, %v5258
    %v5319 = vpack.c.b16 %v5263, %v5259
    %v5320 = vpack.c.b16 %v5264, %v5260
    %v5321 = vpack.c.b16 %v5269, %v5265
    %v5322 = vpack.c.b16 %v5270, %v5266
    %v5323 = vpack.c.b16 %v5271, %v5267
    %v5324 = vpack.c.b16 %v5272, %v5268
    %v5325 = vpack.c.b16 %v5277, %v5273
    %v5326 = vpack.c.b16 %v5278, %v5274
    %v5327 = vpack.c.b16 %v5279, %v5275
    %v5328 = vpack.c.b16 %v5280, %v5276
    %v5329 = vpack.c.b16 %v5285, %v5281
    %v5330 = vpack.c.b16 %v5286, %v5282
    %v5331 = vpack.c.b16 %v5287, %v5283
    %v5332 = vpack.c.b16 %v5288, %v5284
    %v5333 = vpack.c.b16 %v5293, %v5289
    %v5334 = vpack.c.b16 %v5294, %v5290
    %v5335 = vpack.c.b16 %v5295, %v5291
    %v5336 = vpack.c.b16 %v5296, %v5292
    %v5337 = vpack.c.b16 %v5301, %v5297
    %v5338 = vpack.c.b16 %v5302, %v5298
    %v5339 = vpack.c.b16 %v5303, %v5299
    %v5340 = vpack.c.b16 %v5304, %v5300
    %v5341 = vpack.c.b16 %v5309, %v5305
    %v5342 = vpack.c.b16 %v5310, %v5306
    %v5343 = vpack.c.b16 %v5311, %v5307
    %v5344 = vpack.c.b16 %v5312, %v5308
    %5377 = vmatprep.subr.bf16.mxu0 %v5314
    %5378 = vmatpush1.bf16.msra.mxu0 %v5313
    %5379 = vmatprep.subr.bf16.mxu0 %v5318
    %5380 = vmatpush1.bf16.msra.mxu0 %v5317
    %5381 = vmatprep.subr.bf16.mxu0 %v5322
    %5382 = vmatpush1.bf16.msra.mxu0 %v5321
    %5383 = vmatprep.subr.bf16.mxu0 %v5326
    %5384 = vmatpush1.bf16.msra.mxu0 %v5325
    %5385 = vmatprep.subr.bf16.mxu0 %v5330
    %5386 = vmatpush1.bf16.msra.mxu0 %v5329
    %5387 = vmatprep.subr.bf16.mxu0 %v5334
    %5388 = vmatpush1.bf16.msra.mxu0 %v5333
    %5389 = vmatprep.subr.bf16.mxu0 %v5338
    %5390 = vmatpush1.bf16.msra.mxu0 %v5337
    %5391 = vmatprep.subr.bf16.mxu0 %v5342
    %5392 = vmatpush1.bf16.msra.mxu0 %v5341
    %5393 = vmatprep.subr.bf16.mxu0 0
    %5394 = vmatpush1.bf16.msra.mxu0 0
    %5395 = vmatprep.subr.bf16.mxu0 0
    %5396 = vmatpush1.bf16.msra.mxu0 0
    %5397 = vmatprep.subr.bf16.mxu0 0
    %5398 = vmatpush1.bf16.msra.mxu0 0
    %5399 = vmatprep.subr.bf16.mxu0 0
    %5400 = vmatpush1.bf16.msra.mxu0 0
    %5401 = vmatprep.subr.bf16.mxu0 0
    %5402 = vmatpush1.bf16.msra.mxu0 0
    %5403 = vmatprep.subr.bf16.mxu0 0
    %5404 = vmatpush1.bf16.msra.mxu0 0
    %5405 = vmatprep.subr.bf16.mxu0 0
    %5406 = vmatpush1.bf16.msra.mxu0 0
    %5407 = vmatprep.subr.bf16.mxu0 0
    %5408 = vmatpush1.bf16.msra.mxu0 0
    %5409 = vmatprep.mubr.bf16.mxu0 0
    %5410 = vmatmul.mubr.bf16.gmra.mrb[0].mxu0 %v5184
    %v5411 = vpop.f32.mrb[0].mxu0
    %v5412 = vadd.f32 0.0, %v5411
    %v5413 = vpop.f32.mrb[0].mxu0
    %v5414 = vadd.f32 0.0, %v5413
    %v5415 = vpop.f32.mrb[0].mxu0
    %v5416 = vpop.f32.mrb[0].mxu0
    %5417 = vdwg.mxu0
    %5418 = vmatprep.subr.bf16.mxu0 %v5316
    %5419 = vmatpush1.bf16.msra.mxu0 %v5315
    %5420 = vmatprep.subr.bf16.mxu0 %v5320
    %5421 = vmatpush1.bf16.msra.mxu0 %v5319
    %5422 = vmatprep.subr.bf16.mxu0 %v5324
    %5423 = vmatpush1.bf16.msra.mxu0 %v5323
    %5424 = vmatprep.subr.bf16.mxu0 %v5328
    %5425 = vmatpush1.bf16.msra.mxu0 %v5327
    %5426 = vmatprep.subr.bf16.mxu0 %v5332
    %5427 = vmatpush1.bf16.msra.mxu0 %v5331
    %5428 = vmatprep.subr.bf16.mxu0 %v5336
    %5429 = vmatpush1.bf16.msra.mxu0 %v5335
    %5430 = vmatprep.subr.bf16.mxu0 %v5340
    %5431 = vmatpush1.bf16.msra.mxu0 %v5339
    %5432 = vmatprep.subr.bf16.mxu0 %v5344
    %5433 = vmatpush1.bf16.msra.mxu0 %v5343
    %5434 = vmatprep.subr.bf16.mxu0 0
    %5435 = vmatpush1.bf16.msra.mxu0 0
    %5436 = vmatprep.subr.bf16.mxu0 0
    %5437 = vmatpush1.bf16.msra.mxu0 0
    %5438 = vmatprep.subr.bf16.mxu0 0
    %5439 = vmatpush1.bf16.msra.mxu0 0
    %5440 = vmatprep.subr.bf16.mxu0 0
    %5441 = vmatpush1.bf16.msra.mxu0 0
    %5442 = vmatprep.subr.bf16.mxu0 0
    %5443 = vmatpush1.bf16.msra.mxu0 0
    %5444 = vmatprep.subr.bf16.mxu0 0
    %5445 = vmatpush1.bf16.msra.mxu0 0
    %5446 = vmatprep.subr.bf16.mxu0 0
    %5447 = vmatpush1.bf16.msra.mxu0 0
    %5448 = vmatprep.subr.bf16.mxu0 0
    %5449 = vmatpush1.bf16.msra.mxu0 0
    %5450 = vmatprep.mubr.bf16.mxu0 0
    %5451 = vmatmul.mubr.bf16.gmra.mrb[0].mxu0 %v5184
    %v5452 = vpop.f32.mrb[0].mxu0
    %v5453 = vadd.f32 0.0, %v5452
    %v5454 = vpop.f32.mrb[0].mxu0
    %v5455 = vadd.f32 0.0, %v5454
    %v5456 = vpop.f32.mrb[0].mxu0
    %v5457 = vpop.f32.mrb[0].mxu0
    %5458 = vdwg.mxu0
    %v5459 = vadd.f32 %v5180, %v5412
    %v5460 = vadd.f32 %v5181, %v5414
    %v5461 = vadd.f32 %v5182, %v5453
    %v5462 = vadd.f32 %v5183, %v5455
    %v5463 = vxor.u32 %v5459, 2147483648
    %v5464 = vxor.u32 %v5460, 2147483648
    %v5465 = vxor.u32 %v5461, 2147483648
    %v5466 = vmul.f32 %v5463, 1.442695
    %v5467 = vpow.pop %v5466
    %v5468 = vmul.f32 %v5464, 1.442695
    %v5469 = vpow.pop %v5468
    %v5470 = vmul.f32 %v5465, 1.442695
    %v5471 = vpow.pop %v5470
    %v5472 = vadd.f32 %v5467, 1.0
    %v5473 = vadd.f32 %v5469, 1.0
    %v5474 = vadd.f32 %v5471, 1.0
    %v5475 = vrcp.pop %v5472
    %v5476 = vmul.f32 1.0, %v5475
    %v5477 = vrcp.pop %v5473
    %v5478 = vmul.f32 1.0, %v5477
    %v5479 = vrcp.pop %v5474
    %v5480 = vmul.f32 1.0, %v5479
    %v5481 = vtanh.pop %v5462
    %v5482 = vmul.f32 %v5478, %v5172
    %v5483 = vmul.f32 %v5476, %v5481
    %v5484 = vadd.f32 %v5482, %v5483
    %v5485 = vtanh.pop %v5484
    %v5486 = vmul.f32 %v5480, %v5485
    %s5487 = scalar_lea.vmem [#allocation3], 120
    %5488 = vst [vmem:[%s5487] sm:$0xff] %v5486
    %v5489 = vld [vmem:[#allocation3] sm:$0xff]
    %v5490 = vld [vmem:[#allocation3 + $0x8] sm:$0xff]
    %v5491 = vld [vmem:[#allocation3 + $0x10] sm:$0xff]
    %v5492 = vld [vmem:[#allocation3 + $0x18] sm:$0xff]
    %v5493 = vld [vmem:[#allocation3 + $0x20] sm:$0xff]
    %v5494 = vld [vmem:[#allocation3 + $0x28] sm:$0xff]
    %v5495 = vld [vmem:[#allocation3 + $0x30] sm:$0xff]
    %v5496 = vld [vmem:[#allocation3 + $0x38] sm:$0xff]
    %v5497 = vld [vmem:[#allocation3 + $0x40] sm:$0xff]
    %v5498 = vld [vmem:[#allocation3 + $0x48] sm:$0xff]
    %v5499 = vld [vmem:[#allocation3 + $0x50] sm:$0xff]
    %v5500 = vld [vmem:[#allocation3 + $0x58] sm:$0xff]
    %v5501 = vld [vmem:[#allocation3 + $0x60] sm:$0xff]
    %v5502 = vld [vmem:[#allocation3 + $0x68] sm:$0xff]
    %v5503 = vld [vmem:[#allocation3 + $0x70] sm:$0xff]
    %v5504 = vld [vmem:[#allocation3 + $0x78] sm:$0xff]
    %v5505 = vpack.c.bf16 %v5490, %v5489
    %v5506 = vpack.c.bf16 %v5492, %v5491
    %v5507 = vpack.c.bf16 %v5494, %v5493
    %v5508 = vpack.c.bf16 %v5496, %v5495
    %v5509 = vpack.c.bf16 %v5498, %v5497
    %v5510 = vpack.c.bf16 %v5500, %v5499
    %v5511 = vpack.c.bf16 %v5502, %v5501
    %v5512 = vpack.c.bf16 %v5504, %v5503
    %v5513 = vld [vmem:[#allocation6] sm:$0xff]
    %v5514 = vld [vmem:[#allocation6 + $0x8] sm:$0xff]
    %v5515 = vld [vmem:[#allocation6 + $0x10] sm:$0xff]
    %v5516 = vld [vmem:[#allocation6 + $0x18] sm:$0xff]
    %v5517 = vld [vmem:[#allocation6 + $0x20] sm:$0xff]
    %v5518 = vld [vmem:[#allocation6 + $0x28] sm:$0xff]
    %v5519 = vld [vmem:[#allocation6 + $0x30] sm:$0xff]
    %v5520 = vld [vmem:[#allocation6 + $0x38] sm:$0xff]
    %v5521 = vld [vmem:[#allocation6 + $0x40] sm:$0xff]
    %v5522 = vld [vmem:[#allocation6 + $0x48] sm:$0xff]
    %v5523 = vld [vmem:[#allocation6 + $0x50] sm:$0xff]
    %v5524 = vld [vmem:[#allocation6 + $0x58] sm:$0xff]
    %v5525 = vld [vmem:[#allocation6 + $0x60] sm:$0xff]
    %v5526 = vld [vmem:[#allocation6 + $0x68] sm:$0xff]
    %v5527 = vld [vmem:[#allocation6 + $0x70] sm:$0xff]
    %v5528 = vld [vmem:[#allocation6 + $0x78] sm:$0xff]
    %v5529 = vld [vmem:[#allocation6 + $0x80] sm:$0xff]
    %v5530 = vld [vmem:[#allocation6 + $0x88] sm:$0xff]
    %v5531 = vld [vmem:[#allocation6 + $0x90] sm:$0xff]
    %v5532 = vld [vmem:[#allocation6 + $0x98] sm:$0xff]
    %v5533 = vld [vmem:[#allocation6 + $0xa0] sm:$0xff]
    %v5534 = vld [vmem:[#allocation6 + $0xa8] sm:$0xff]
    %v5535 = vld [vmem:[#allocation6 + $0xb0] sm:$0xff]
    %v5536 = vld [vmem:[#allocation6 + $0xb8] sm:$0xff]
    %v5537 = vld [vmem:[#allocation6 + $0xc0] sm:$0xff]
    %v5538 = vld [vmem:[#allocation6 + $0xc8] sm:$0xff]
    %v5539 = vld [vmem:[#allocation6 + $0xd0] sm:$0xff]
    %v5540 = vld [vmem:[#allocation6 + $0xd8] sm:$0xff]
    %v5541 = vld [vmem:[#allocation6 + $0xe0] sm:$0xff]
    %v5542 = vld [vmem:[#allocation6 + $0xe8] sm:$0xff]
    %v5543 = vld [vmem:[#allocation6 + $0xf0] sm:$0xff]
    %v5544 = vld [vmem:[#allocation6 + $0xf8] sm:$0xff]
    %v5545 = vld [vmem:[%s6] sm:$0xf]
    %v5547 = vlaneseq
    %v5548 = vshrl.u32 %v5547, 7
    %v5549 = vsub.s32 0, %v5548
    %v5550 = vrot.slane %v5545, %v5549
    %v5551 = vlaneseq
    %v5552 = vshrl.u32 %v5551, 7
    %v5553 = vsub.s32 1, %v5552
    %v5554 = vrot.slane %v5545, %v5553
    %v5555 = vlaneseq
    %v5556 = vshrl.u32 %v5555, 7
    %v5557 = vsub.s32 2, %v5556
    %v5558 = vrot.slane %v5545, %v5557
    %v5559 = vlaneseq
    %v5560 = vshrl.u32 %v5559, 7
    %v5561 = vsub.s32 3, %v5560
    %v5562 = vrot.slane %v5545, %v5561
    %v5599 = vunpack.c.l.b16 %v5513
    %v5600 = vunpack.c.h.b16 %v5513
    %v5601 = vunpack.c.l.b16 %v5514
    %v5602 = vunpack.c.h.b16 %v5514
    %v5603 = vunpack.c.l.b16 %v5515
    %v5604 = vunpack.c.h.b16 %v5515
    %v5605 = vunpack.c.l.b16 %v5516
    %v5606 = vunpack.c.h.b16 %v5516
    %v5607 = vunpack.c.l.b16 %v5517
    %v5608 = vunpack.c.h.b16 %v5517
    %v5609 = vunpack.c.l.b16 %v5518
    %v5610 = vunpack.c.h.b16 %v5518
    %v5611 = vunpack.c.l.b16 %v5519
    %v5612 = vunpack.c.h.b16 %v5519
    %v5613 = vunpack.c.l.b16 %v5520
    %v5614 = vunpack.c.h.b16 %v5520
    %v5615 = vunpack.c.l.b16 %v5521
    %v5616 = vunpack.c.h.b16 %v5521
    %v5617 = vunpack.c.l.b16 %v5522
    %v5618 = vunpack.c.h.b16 %v5522
    %v5619 = vunpack.c.l.b16 %v5523
    %v5620 = vunpack.c.h.b16 %v5523
    %v5621 = vunpack.c.l.b16 %v5524
    %v5622 = vunpack.c.h.b16 %v5524
    %v5623 = vunpack.c.l.b16 %v5525
    %v5624 = vunpack.c.h.b16 %v5525
    %v5625 = vunpack.c.l.b16 %v5526
    %v5626 = vunpack.c.h.b16 %v5526
    %v5627 = vunpack.c.l.b16 %v5527
    %v5628 = vunpack.c.h.b16 %v5527
    %v5629 = vunpack.c.l.b16 %v5528
    %v5630 = vunpack.c.h.b16 %v5528
    %v5631 = vunpack.c.l.b16 %v5529
    %v5632 = vunpack.c.h.b16 %v5529
    %v5633 = vunpack.c.l.b16 %v5530
    %v5634 = vunpack.c.h.b16 %v5530
    %v5635 = vunpack.c.l.b16 %v5531
    %v5636 = vunpack.c.h.b16 %v5531
    %v5637 = vunpack.c.l.b16 %v5532
    %v5638 = vunpack.c.h.b16 %v5532
    %v5639 = vunpack.c.l.b16 %v5533
    %v5640 = vunpack.c.h.b16 %v5533
    %v5641 = vunpack.c.l.b16 %v5534
    %v5642 = vunpack.c.h.b16 %v5534
    %v5643 = vunpack.c.l.b16 %v5535
    %v5644 = vunpack.c.h.b16 %v5535
    %v5645 = vunpack.c.l.b16 %v5536
    %v5646 = vunpack.c.h.b16 %v5536
    %v5647 = vunpack.c.l.b16 %v5537
    %v5648 = vunpack.c.h.b16 %v5537
    %v5649 = vunpack.c.l.b16 %v5538
    %v5650 = vunpack.c.h.b16 %v5538
    %v5651 = vunpack.c.l.b16 %v5539
    %v5652 = vunpack.c.h.b16 %v5539
    %v5653 = vunpack.c.l.b16 %v5540
    %v5654 = vunpack.c.h.b16 %v5540
    %v5655 = vunpack.c.l.b16 %v5541
    %v5656 = vunpack.c.h.b16 %v5541
    %v5657 = vunpack.c.l.b16 %v5542
    %v5658 = vunpack.c.h.b16 %v5542
    %v5659 = vunpack.c.l.b16 %v5543
    %v5660 = vunpack.c.h.b16 %v5543
    %v5661 = vunpack.c.l.b16 %v5544
    %v5662 = vunpack.c.h.b16 %v5544
    %v5663 = vpack.c.b16 %v5603, %v5599
    %v5664 = vpack.c.b16 %v5604, %v5600
    %v5665 = vpack.c.b16 %v5605, %v5601
    %v5666 = vpack.c.b16 %v5606, %v5602
    %v5667 = vpack.c.b16 %v5611, %v5607
    %v5668 = vpack.c.b16 %v5612, %v5608
    %v5669 = vpack.c.b16 %v5613, %v5609
    %v5670 = vpack.c.b16 %v5614, %v5610
    %v5671 = vpack.c.b16 %v5619, %v5615
    %v5672 = vpack.c.b16 %v5620, %v5616
    %v5673 = vpack.c.b16 %v5621, %v5617
    %v5674 = vpack.c.b16 %v5622, %v5618
    %v5675 = vpack.c.b16 %v5627, %v5623
    %v5676 = vpack.c.b16 %v5628, %v5624
    %v5677 = vpack.c.b16 %v5629, %v5625
    %v5678 = vpack.c.b16 %v5630, %v5626
    %v5679 = vpack.c.b16 %v5635, %v5631
    %v5680 = vpack.c.b16 %v5636, %v5632
    %v5681 = vpack.c.b16 %v5637, %v5633
    %v5682 = vpack.c.b16 %v5638, %v5634
    %v5683 = vpack.c.b16 %v5643, %v5639
    %v5684 = vpack.c.b16 %v5644, %v5640
    %v5685 = vpack.c.b16 %v5645, %v5641
    %v5686 = vpack.c.b16 %v5646, %v5642
    %v5687 = vpack.c.b16 %v5651, %v5647
    %v5688 = vpack.c.b16 %v5652, %v5648
    %v5689 = vpack.c.b16 %v5653, %v5649
    %v5690 = vpack.c.b16 %v5654, %v5650
    %v5691 = vpack.c.b16 %v5659, %v5655
    %v5692 = vpack.c.b16 %v5660, %v5656
    %v5693 = vpack.c.b16 %v5661, %v5657
    %v5694 = vpack.c.b16 %v5662, %v5658
    %5727 = vmatprep.subr.bf16.mxu0 %v5664
    %5728 = vmatpush1.bf16.msra.mxu0 %v5663
    %5729 = vmatprep.subr.bf16.mxu0 %v5668
    %5730 = vmatpush1.bf16.msra.mxu0 %v5667
    %5731 = vmatprep.subr.bf16.mxu0 %v5672
    %5732 = vmatpush1.bf16.msra.mxu0 %v5671
    %5733 = vmatprep.subr.bf16.mxu0 %v5676
    %5734 = vmatpush1.bf16.msra.mxu0 %v5675
    %5735 = vmatprep.subr.bf16.mxu0 %v5680
    %5736 = vmatpush1.bf16.msra.mxu0 %v5679
    %5737 = vmatprep.subr.bf16.mxu0 %v5684
    %5738 = vmatpush1.bf16.msra.mxu0 %v5683
    %5739 = vmatprep.subr.bf16.mxu0 %v5688
    %5740 = vmatpush1.bf16.msra.mxu0 %v5687
    %5741 = vmatprep.subr.bf16.mxu0 %v5692
    %5742 = vmatpush1.bf16.msra.mxu0 %v5691
    %5743 = vmatprep.subr.bf16.mxu0 0
    %5744 = vmatpush1.bf16.msra.mxu0 0
    %5745 = vmatprep.subr.bf16.mxu0 0
    %5746 = vmatpush1.bf16.msra.mxu0 0
    %5747 = vmatprep.subr.bf16.mxu0 0
    %5748 = vmatpush1.bf16.msra.mxu0 0
    %5749 = vmatprep.subr.bf16.mxu0 0
    %5750 = vmatpush1.bf16.msra.mxu0 0
    %5751 = vmatprep.subr.bf16.mxu0 0
    %5752 = vmatpush1.bf16.msra.mxu0 0
    %5753 = vmatprep.subr.bf16.mxu0 0
    %5754 = vmatpush1.bf16.msra.mxu0 0
    %5755 = vmatprep.subr.bf16.mxu0 0
    %5756 = vmatpush1.bf16.msra.mxu0 0
    %5757 = vmatprep.subr.bf16.mxu0 0
    %5758 = vmatpush1.bf16.msra.mxu0 0
    %5759 = vmatprep.mubr.bf16.mxu0 0
    %5760 = vmatmul.mubr.bf16.gmra.mrb[0].mxu0 %v5505
    %v5761 = vpop.f32.mrb[0].mxu0
    %v5762 = vadd.f32 %v5550, %v5761
    %v5763 = vpop.f32.mrb[0].mxu0
    %v5764 = vadd.f32 %v5554, %v5763
    %v5765 = vpop.f32.mrb[0].mxu0
    %v5766 = vadd.f32 %v5550, %v5765
    %v5767 = vpop.f32.mrb[0].mxu0
    %v5768 = vadd.f32 %v5554, %v5767
    %5769 = vmatprep.mubr.bf16.mxu0 0
    %5770 = vmatmul.mubr.bf16.gmra.mrb[0].mxu0 %v5506
    %v5771 = vpop.f32.mrb[0].mxu0
    %v5772 = vadd.f32 %v5550, %v5771
    %v5773 = vpop.f32.mrb[0].mxu0
    %v5774 = vadd.f32 %v5554, %v5773
    %v5775 = vpop.f32.mrb[0].mxu0
    %v5776 = vadd.f32 %v5550, %v5775
    %v5777 = vpop.f32.mrb[0].mxu0
    %v5778 = vadd.f32 %v5554, %v5777
    %5779 = vmatprep.mubr.bf16.mxu0 0
    %5780 = vmatmul.mubr.bf16.gmra.mrb[0].mxu0 %v5507
    %v5781 = vpop.f32.mrb[0].mxu0
    %v5782 = vadd.f32 %v5550, %v5781
    %v5783 = vpop.f32.mrb[0].mxu0
    %v5784 = vadd.f32 %v5554, %v5783
    %v5785 = vpop.f32.mrb[0].mxu0
    %v5786 = vadd.f32 %v5550, %v5785
    %v5787 = vpop.f32.mrb[0].mxu0
    %v5788 = vadd.f32 %v5554, %v5787
    %5789 = vmatprep.mubr.bf16.mxu0 0
    %5790 = vmatmul.mubr.bf16.gmra.mrb[0].mxu0 %v5508
    %v5791 = vpop.f32.mrb[0].mxu0
    %v5792 = vadd.f32 %v5550, %v5791
    %v5793 = vpop.f32.mrb[0].mxu0
    %v5794 = vadd.f32 %v5554, %v5793
    %v5795 = vpop.f32.mrb[0].mxu0
    %v5796 = vadd.f32 %v5550, %v5795
    %v5797 = vpop.f32.mrb[0].mxu0
    %v5798 = vadd.f32 %v5554, %v5797
    %5799 = vmatprep.mubr.bf16.mxu0 0
    %5800 = vmatmul.mubr.bf16.gmra.mrb[0].mxu0 %v5509
    %v5801 = vpop.f32.mrb[0].mxu0
    %v5802 = vadd.f32 %v5550, %v5801
    %v5803 = vpop.f32.mrb[0].mxu0
    %v5804 = vadd.f32 %v5554, %v5803
    %v5805 = vpop.f32.mrb[0].mxu0
    %v5806 = vadd.f32 %v5550, %v5805
    %v5807 = vpop.f32.mrb[0].mxu0
    %v5808 = vadd.f32 %v5554, %v5807
    %5809 = vmatprep.mubr.bf16.mxu0 0
    %5810 = vmatmul.mubr.bf16.gmra.mrb[0].mxu0 %v5510
    %v5811 = vpop.f32.mrb[0].mxu0
    %v5812 = vadd.f32 %v5550, %v5811
    %v5813 = vpop.f32.mrb[0].mxu0
    %v5814 = vadd.f32 %v5554, %v5813
    %v5815 = vpop.f32.mrb[0].mxu0
    %v5816 = vadd.f32 %v5550, %v5815
    %v5817 = vpop.f32.mrb[0].mxu0
    %v5818 = vadd.f32 %v5554, %v5817
    %5819 = vmatprep.mubr.bf16.mxu0 0
    %5820 = vmatmul.mubr.bf16.gmra.mrb[0].mxu0 %v5511
    %v5821 = vpop.f32.mrb[0].mxu0
    %v5822 = vadd.f32 %v5550, %v5821
    %v5823 = vpop.f32.mrb[0].mxu0
    %v5824 = vadd.f32 %v5554, %v5823
    %v5825 = vpop.f32.mrb[0].mxu0
    %v5826 = vadd.f32 %v5550, %v5825
    %v5827 = vpop.f32.mrb[0].mxu0
    %v5828 = vadd.f32 %v5554, %v5827
    %5829 = vmatprep.mubr.bf16.mxu0 0
    %5830 = vmatmul.mubr.bf16.gmra.mrb[0].mxu0 %v5512
    %v5831 = vpop.f32.mrb[0].mxu0
    %v5832 = vadd.f32 %v5550, %v5831
    %v5833 = vpop.f32.mrb[0].mxu0
    %v5834 = vadd.f32 %v5554, %v5833
    %v5835 = vpop.f32.mrb[0].mxu0
    %v5836 = vadd.f32 %v5550, %v5835
    %v5837 = vpop.f32.mrb[0].mxu0
    %v5838 = vadd.f32 %v5554, %v5837
    %5839 = vdwg.mxu0
    %5840 = vmatprep.subr.bf16.mxu0 %v5666
    %5841 = vmatpush1.bf16.msra.mxu0 %v5665
    %5842 = vmatprep.subr.bf16.mxu0 %v5670
    %5843 = vmatpush1.bf16.msra.mxu0 %v5669
    %5844 = vmatprep.subr.bf16.mxu0 %v5674
    %5845 = vmatpush1.bf16.msra.mxu0 %v5673
    %5846 = vmatprep.subr.bf16.mxu0 %v5678
    %5847 = vmatpush1.bf16.msra.mxu0 %v5677
    %5848 = vmatprep.subr.bf16.mxu0 %v5682
    %5849 = vmatpush1.bf16.msra.mxu0 %v5681
    %5850 = vmatprep.subr.bf16.mxu0 %v5686
    %5851 = vmatpush1.bf16.msra.mxu0 %v5685
    %5852 = vmatprep.subr.bf16.mxu0 %v5690
    %5853 = vmatpush1.bf16.msra.mxu0 %v5689
    %5854 = vmatprep.subr.bf16.mxu0 %v5694
    %5855 = vmatpush1.bf16.msra.mxu0 %v5693
    %5856 = vmatprep.subr.bf16.mxu0 0
    %5857 = vmatpush1.bf16.msra.mxu0 0
    %5858 = vmatprep.subr.bf16.mxu0 0
    %5859 = vmatpush1.bf16.msra.mxu0 0
    %5860 = vmatprep.subr.bf16.mxu0 0
    %5861 = vmatpush1.bf16.msra.mxu0 0
    %5862 = vmatprep.subr.bf16.mxu0 0
    %5863 = vmatpush1.bf16.msra.mxu0 0
    %5864 = vmatprep.subr.bf16.mxu0 0
    %5865 = vmatpush1.bf16.msra.mxu0 0
    %5866 = vmatprep.subr.bf16.mxu0 0
    %5867 = vmatpush1.bf16.msra.mxu0 0
    %5868 = vmatprep.subr.bf16.mxu0 0
    %5869 = vmatpush1.bf16.msra.mxu0 0
    %5870 = vmatprep.subr.bf16.mxu0 0
    %5871 = vmatpush1.bf16.msra.mxu0 0
    %5872 = vmatprep.mubr.bf16.mxu0 0
    %5873 = vmatmul.mubr.bf16.gmra.mrb[0].mxu0 %v5505
    %v5874 = vpop.f32.mrb[0].mxu0
    %v5875 = vadd.f32 %v5558, %v5874
    %v5876 = vpop.f32.mrb[0].mxu0
    %v5877 = vadd.f32 %v5562, %v5876
    %v5878 = vpop.f32.mrb[0].mxu0
    %v5879 = vadd.f32 %v5558, %v5878
    %v5880 = vpop.f32.mrb[0].mxu0
    %v5881 = vadd.f32 %v5562, %v5880
    %5882 = vmatprep.mubr.bf16.mxu0 0
    %5883 = vmatmul.mubr.bf16.gmra.mrb[0].mxu0 %v5506
    %v5884 = vpop.f32.mrb[0].mxu0
    %v5885 = vadd.f32 %v5558, %v5884
    %v5886 = vpop.f32.mrb[0].mxu0
    %v5887 = vadd.f32 %v5562, %v5886
    %v5888 = vpop.f32.mrb[0].mxu0
    %v5889 = vadd.f32 %v5558, %v5888
    %v5890 = vpop.f32.mrb[0].mxu0
    %v5891 = vadd.f32 %v5562, %v5890
    %5892 = vmatprep.mubr.bf16.mxu0 0
    %5893 = vmatmul.mubr.bf16.gmra.mrb[0].mxu0 %v5507
    %v5894 = vpop.f32.mrb[0].mxu0
    %v5895 = vadd.f32 %v5558, %v5894
    %v5896 = vpop.f32.mrb[0].mxu0
    %v5897 = vadd.f32 %v5562, %v5896
    %v5898 = vpop.f32.mrb[0].mxu0
    %v5899 = vadd.f32 %v5558, %v5898
    %v5900 = vpop.f32.mrb[0].mxu0
    %v5901 = vadd.f32 %v5562, %v5900
    %5902 = vmatprep.mubr.bf16.mxu0 0
    %5903 = vmatmul.mubr.bf16.gmra.mrb[0].mxu0 %v5508
    %v5904 = vpop.f32.mrb[0].mxu0
    %v5905 = vadd.f32 %v5558, %v5904
    %v5906 = vpop.f32.mrb[0].mxu0
    %v5907 = vadd.f32 %v5562, %v5906
    %v5908 = vpop.f32.mrb[0].mxu0
    %v5909 = vadd.f32 %v5558, %v5908
    %v5910 = vpop.f32.mrb[0].mxu0
    %v5911 = vadd.f32 %v5562, %v5910
    %5912 = vmatprep.mubr.bf16.mxu0 0
    %5913 = vmatmul.mubr.bf16.gmra.mrb[0].mxu0 %v5509
    %v5914 = vpop.f32.mrb[0].mxu0
    %v5915 = vadd.f32 %v5558, %v5914
    %v5916 = vpop.f32.mrb[0].mxu0
    %v5917 = vadd.f32 %v5562, %v5916
    %v5918 = vpop.f32.mrb[0].mxu0
    %v5919 = vadd.f32 %v5558, %v5918
    %v5920 = vpop.f32.mrb[0].mxu0
    %v5921 = vadd.f32 %v5562, %v5920
    %5922 = vmatprep.mubr.bf16.mxu0 0
    %5923 = vmatmul.mubr.bf16.gmra.mrb[0].mxu0 %v5510
    %v5924 = vpop.f32.mrb[0].mxu0
    %v5925 = vadd.f32 %v5558, %v5924
    %v5926 = vpop.f32.mrb[0].mxu0
    %v5927 = vadd.f32 %v5562, %v5926
    %v5928 = vpop.f32.mrb[0].mxu0
    %v5929 = vadd.f32 %v5558, %v5928
    %v5930 = vpop.f32.mrb[0].mxu0
    %v5931 = vadd.f32 %v5562, %v5930
    %5932 = vmatprep.mubr.bf16.mxu0 0
    %5933 = vmatmul.mubr.bf16.gmra.mrb[0].mxu0 %v5511
    %v5934 = vpop.f32.mrb[0].mxu0
    %v5935 = vadd.f32 %v5558, %v5934
    %v5936 = vpop.f32.mrb[0].mxu0
    %v5937 = vadd.f32 %v5562, %v5936
    %v5938 = vpop.f32.mrb[0].mxu0
    %v5939 = vadd.f32 %v5558, %v5938
    %v5940 = vpop.f32.mrb[0].mxu0
    %v5941 = vadd.f32 %v5562, %v5940
    %5942 = vmatprep.mubr.bf16.mxu0 0
    %5943 = vmatmul.mubr.bf16.gmra.mrb[0].mxu0 %v5512
    %v5944 = vpop.f32.mrb[0].mxu0
    %v5945 = vadd.f32 %v5558, %v5944
    %v5946 = vpop.f32.mrb[0].mxu0
    %v5947 = vadd.f32 %v5562, %v5946
    %v5948 = vpop.f32.mrb[0].mxu0
    %v5949 = vadd.f32 %v5558, %v5948
    %v5950 = vpop.f32.mrb[0].mxu0
    %v5951 = vadd.f32 %v5562, %v5950
    %5952 = vdwg.mxu0
    %5953 = vst [vmem:[#allocation2] sm:$0xff] %v5762
    %5954 = vst [vmem:[#allocation2 + $0x8] sm:$0xff] %v5764
    %5955 = vst [vmem:[#allocation2 + $0x10] sm:$0xff] %v5875
    %5956 = vst [vmem:[#allocation2 + $0x18] sm:$0xff] %v5877
    %5957 = vst [vmem:[#allocation2 + $0x20] sm:$0xff] %v5766
    %5958 = vst [vmem:[#allocation2 + $0x28] sm:$0xff] %v5768
    %5959 = vst [vmem:[#allocation2 + $0x30] sm:$0xff] %v5879
    %5960 = vst [vmem:[#allocation2 + $0x38] sm:$0xff] %v5881
    %5961 = vst [vmem:[#allocation2 + $0x40] sm:$0xff] %v5772
    %5962 = vst [vmem:[#allocation2 + $0x48] sm:$0xff] %v5774
    %5963 = vst [vmem:[#allocation2 + $0x50] sm:$0xff] %v5885
    %5964 = vst [vmem:[#allocation2 + $0x58] sm:$0xff] %v5887
    %5965 = vst [vmem:[#allocation2 + $0x60] sm:$0xff] %v5776
    %5966 = vst [vmem:[#allocation2 + $0x68] sm:$0xff] %v5778
    %5967 = vst [vmem:[#allocation2 + $0x70] sm:$0xff] %v5889
    %5968 = vst [vmem:[#allocation2 + $0x78] sm:$0xff] %v5891
    %5969 = vst [vmem:[#allocation2 + $0x80] sm:$0xff] %v5782
    %5970 = vst [vmem:[#allocation2 + $0x88] sm:$0xff] %v5784
    %5971 = vst [vmem:[#allocation2 + $0x90] sm:$0xff] %v5895
    %5972 = vst [vmem:[#allocation2 + $0x98] sm:$0xff] %v5897
    %5973 = vst [vmem:[#allocation2 + $0xa0] sm:$0xff] %v5786
    %5974 = vst [vmem:[#allocation2 + $0xa8] sm:$0xff] %v5788
    %5975 = vst [vmem:[#allocation2 + $0xb0] sm:$0xff] %v5899
    %5976 = vst [vmem:[#allocation2 + $0xb8] sm:$0xff] %v5901
    %5977 = vst [vmem:[#allocation2 + $0xc0] sm:$0xff] %v5792
    %5978 = vst [vmem:[#allocation2 + $0xc8] sm:$0xff] %v5794
    %5979 = vst [vmem:[#allocation2 + $0xd0] sm:$0xff] %v5905
    %5980 = vst [vmem:[#allocation2 + $0xd8] sm:$0xff] %v5907
    %5981 = vst [vmem:[#allocation2 + $0xe0] sm:$0xff] %v5796
    %5982 = vst [vmem:[#allocation2 + $0xe8] sm:$0xff] %v5798
    %5983 = vst [vmem:[#allocation2 + $0xf0] sm:$0xff] %v5909
    %5984 = vst [vmem:[#allocation2 + $0xf8] sm:$0xff] %v5911
    %5985 = vst [vmem:[#allocation2 + $0x100] sm:$0xff] %v5802
    %5986 = vst [vmem:[#allocation2 + $0x108] sm:$0xff] %v5804
    %5987 = vst [vmem:[#allocation2 + $0x110] sm:$0xff] %v5915
    %5988 = vst [vmem:[#allocation2 + $0x118] sm:$0xff] %v5917
    %5989 = vst [vmem:[#allocation2 + $0x120] sm:$0xff] %v5806
    %5990 = vst [vmem:[#allocation2 + $0x128] sm:$0xff] %v5808
    %5991 = vst [vmem:[#allocation2 + $0x130] sm:$0xff] %v5919
    %5992 = vst [vmem:[#allocation2 + $0x138] sm:$0xff] %v5921
    %5993 = vst [vmem:[#allocation2 + $0x140] sm:$0xff] %v5812
    %5994 = vst [vmem:[#allocation2 + $0x148] sm:$0xff] %v5814
    %5995 = vst [vmem:[#allocation2 + $0x150] sm:$0xff] %v5925
    %5996 = vst [vmem:[#allocation2 + $0x158] sm:$0xff] %v5927
    %5997 = vst [vmem:[#allocation2 + $0x160] sm:$0xff] %v5816
    %5998 = vst [vmem:[#allocation2 + $0x168] sm:$0xff] %v5818
    %5999 = vst [vmem:[#allocation2 + $0x170] sm:$0xff] %v5929
    %6000 = vst [vmem:[#allocation2 + $0x178] sm:$0xff] %v5931
    %6001 = vst [vmem:[#allocation2 + $0x180] sm:$0xff] %v5822
    %6002 = vst [vmem:[#allocation2 + $0x188] sm:$0xff] %v5824
    %6003 = vst [vmem:[#allocation2 + $0x190] sm:$0xff] %v5935
    %6004 = vst [vmem:[#allocation2 + $0x198] sm:$0xff] %v5937
    %6005 = vst [vmem:[#allocation2 + $0x1a0] sm:$0xff] %v5826
    %6006 = vst [vmem:[#allocation2 + $0x1a8] sm:$0xff] %v5828
    %6007 = vst [vmem:[#allocation2 + $0x1b0] sm:$0xff] %v5939
    %6008 = vst [vmem:[#allocation2 + $0x1b8] sm:$0xff] %v5941
    %6009 = vst [vmem:[#allocation2 + $0x1c0] sm:$0xff] %v5832
    %6010 = vst [vmem:[#allocation2 + $0x1c8] sm:$0xff] %v5834
    %6011 = vst [vmem:[#allocation2 + $0x1d0] sm:$0xff] %v5945
    %6012 = vst [vmem:[#allocation2 + $0x1d8] sm:$0xff] %v5947
    %6013 = vst [vmem:[#allocation2 + $0x1e0] sm:$0xff] %v5836
    %6014 = vst [vmem:[#allocation2 + $0x1e8] sm:$0xff] %v5838
    %6015 = vst [vmem:[#allocation2 + $0x1f0] sm:$0xff] %v5949
    %6016 = vst [vmem:[#allocation2 + $0x1f8] sm:$0xff] %v5951
    %v6017 = vld [vmem:[%s501] sm:$0xff]
    %v6018 = vld [vmem:[%s501 + $0x8] sm:$0xff]
    %v6019 = vld [vmem:[%s501 + $0x10] sm:$0xff]
    %v6020 = vld [vmem:[%s501 + $0x18] sm:$0xff]
    %v6021 = vld [vmem:[#allocation8] sm:$0xff]
    %v6022 = vld [vmem:[#allocation8 + $0x8] sm:$0xff]
    %v6023 = vld [vmem:[#allocation8 + $0x10] sm:$0xff]
    %v6024 = vld [vmem:[#allocation8 + $0x18] sm:$0xff]
    %v6025 = vld [vmem:[#allocation8 + $0x20] sm:$0xff]
    %v6026 = vld [vmem:[#allocation8 + $0x28] sm:$0xff]
    %v6027 = vld [vmem:[#allocation8 + $0x30] sm:$0xff]
    %v6028 = vld [vmem:[#allocation8 + $0x38] sm:$0xff]
    %v6029 = vld [vmem:[#allocation8 + $0x40] sm:$0xff]
    %v6030 = vld [vmem:[#allocation8 + $0x48] sm:$0xff]
    %v6031 = vld [vmem:[#allocation8 + $0x50] sm:$0xff]
    %v6032 = vld [vmem:[#allocation8 + $0x58] sm:$0xff]
    %v6033 = vld [vmem:[#allocation8 + $0x60] sm:$0xff]
    %v6034 = vld [vmem:[#allocation8 + $0x68] sm:$0xff]
    %v6035 = vld [vmem:[#allocation8 + $0x70] sm:$0xff]
    %v6036 = vld [vmem:[#allocation8 + $0x78] sm:$0xff]
    %v6037 = vld [vmem:[#allocation8 + $0x80] sm:$0xff]
    %v6038 = vld [vmem:[#allocation8 + $0x88] sm:$0xff]
    %v6039 = vld [vmem:[#allocation8 + $0x90] sm:$0xff]
    %v6040 = vld [vmem:[#allocation8 + $0x98] sm:$0xff]
    %v6041 = vld [vmem:[#allocation8 + $0xa0] sm:$0xff]
    %v6042 = vld [vmem:[#allocation8 + $0xa8] sm:$0xff]
    %v6043 = vld [vmem:[#allocation8 + $0xb0] sm:$0xff]
    %v6044 = vld [vmem:[#allocation8 + $0xb8] sm:$0xff]
    %v6045 = vld [vmem:[#allocation8 + $0xc0] sm:$0xff]
    %v6046 = vld [vmem:[#allocation8 + $0xc8] sm:$0xff]
    %v6047 = vld [vmem:[#allocation8 + $0xd0] sm:$0xff]
    %v6048 = vld [vmem:[#allocation8 + $0xd8] sm:$0xff]
    %v6049 = vld [vmem:[#allocation8 + $0xe0] sm:$0xff]
    %v6050 = vld [vmem:[#allocation8 + $0xe8] sm:$0xff]
    %v6051 = vld [vmem:[#allocation8 + $0xf0] sm:$0xff]
    %v6052 = vld [vmem:[#allocation8 + $0xf8] sm:$0xff]
    %v6085 = vunpack.c.l.b16 %v6021
    %v6086 = vunpack.c.h.b16 %v6021
    %v6087 = vunpack.c.l.b16 %v6022
    %v6088 = vunpack.c.h.b16 %v6022
    %v6089 = vunpack.c.l.b16 %v6023
    %v6090 = vunpack.c.h.b16 %v6023
    %v6091 = vunpack.c.l.b16 %v6024
    %v6092 = vunpack.c.h.b16 %v6024
    %v6093 = vunpack.c.l.b16 %v6025
    %v6094 = vunpack.c.h.b16 %v6025
    %v6095 = vunpack.c.l.b16 %v6026
    %v6096 = vunpack.c.h.b16 %v6026
    %v6097 = vunpack.c.l.b16 %v6027
    %v6098 = vunpack.c.h.b16 %v6027
    %v6099 = vunpack.c.l.b16 %v6028
    %v6100 = vunpack.c.h.b16 %v6028
    %v6101 = vunpack.c.l.b16 %v6029
    %v6102 = vunpack.c.h.b16 %v6029
    %v6103 = vunpack.c.l.b16 %v6030
    %v6104 = vunpack.c.h.b16 %v6030
    %v6105 = vunpack.c.l.b16 %v6031
    %v6106 = vunpack.c.h.b16 %v6031
    %v6107 = vunpack.c.l.b16 %v6032
    %v6108 = vunpack.c.h.b16 %v6032
    %v6109 = vunpack.c.l.b16 %v6033
    %v6110 = vunpack.c.h.b16 %v6033
    %v6111 = vunpack.c.l.b16 %v6034
    %v6112 = vunpack.c.h.b16 %v6034
    %v6113 = vunpack.c.l.b16 %v6035
    %v6114 = vunpack.c.h.b16 %v6035
    %v6115 = vunpack.c.l.b16 %v6036
    %v6116 = vunpack.c.h.b16 %v6036
    %v6117 = vunpack.c.l.b16 %v6037
    %v6118 = vunpack.c.h.b16 %v6037
    %v6119 = vunpack.c.l.b16 %v6038
    %v6120 = vunpack.c.h.b16 %v6038
    %v6121 = vunpack.c.l.b16 %v6039
    %v6122 = vunpack.c.h.b16 %v6039
    %v6123 = vunpack.c.l.b16 %v6040
    %v6124 = vunpack.c.h.b16 %v6040
    %v6125 = vunpack.c.l.b16 %v6041
    %v6126 = vunpack.c.h.b16 %v6041
    %v6127 = vunpack.c.l.b16 %v6042
    %v6128 = vunpack.c.h.b16 %v6042
    %v6129 = vunpack.c.l.b16 %v6043
    %v6130 = vunpack.c.h.b16 %v6043
    %v6131 = vunpack.c.l.b16 %v6044
    %v6132 = vunpack.c.h.b16 %v6044
    %v6133 = vunpack.c.l.b16 %v6045
    %v6134 = vunpack.c.h.b16 %v6045
    %v6135 = vunpack.c.l.b16 %v6046
    %v6136 = vunpack.c.h.b16 %v6046
    %v6137 = vunpack.c.l.b16 %v6047
    %v6138 = vunpack.c.h.b16 %v6047
    %v6139 = vunpack.c.l.b16 %v6048
    %v6140 = vunpack.c.h.b16 %v6048
    %v6141 = vunpack.c.l.b16 %v6049
    %v6142 = vunpack.c.h.b16 %v6049
    %v6143 = vunpack.c.l.b16 %v6050
    %v6144 = vunpack.c.h.b16 %v6050
    %v6145 = vunpack.c.l.b16 %v6051
    %v6146 = vunpack.c.h.b16 %v6051
    %v6147 = vunpack.c.l.b16 %v6052
    %v6148 = vunpack.c.h.b16 %v6052
    %v6149 = vpack.c.b16 %v6089, %v6085
    %v6150 = vpack.c.b16 %v6090, %v6086
    %v6151 = vpack.c.b16 %v6091, %v6087
    %v6152 = vpack.c.b16 %v6092, %v6088
    %v6153 = vpack.c.b16 %v6097, %v6093
    %v6154 = vpack.c.b16 %v6098, %v6094
    %v6155 = vpack.c.b16 %v6099, %v6095
    %v6156 = vpack.c.b16 %v6100, %v6096
    %v6157 = vpack.c.b16 %v6105, %v6101
    %v6158 = vpack.c.b16 %v6106, %v6102
    %v6159 = vpack.c.b16 %v6107, %v6103
    %v6160 = vpack.c.b16 %v6108, %v6104
    %v6161 = vpack.c.b16 %v6113, %v6109
    %v6162 = vpack.c.b16 %v6114, %v6110
    %v6163 = vpack.c.b16 %v6115, %v6111
    %v6164 = vpack.c.b16 %v6116, %v6112
    %v6165 = vpack.c.b16 %v6121, %v6117
    %v6166 = vpack.c.b16 %v6122, %v6118
    %v6167 = vpack.c.b16 %v6123, %v6119
    %v6168 = vpack.c.b16 %v6124, %v6120
    %v6169 = vpack.c.b16 %v6129, %v6125
    %v6170 = vpack.c.b16 %v6130, %v6126
    %v6171 = vpack.c.b16 %v6131, %v6127
    %v6172 = vpack.c.b16 %v6132, %v6128
    %v6173 = vpack.c.b16 %v6137, %v6133
    %v6174 = vpack.c.b16 %v6138, %v6134
    %v6175 = vpack.c.b16 %v6139, %v6135
    %v6176 = vpack.c.b16 %v6140, %v6136
    %v6177 = vpack.c.b16 %v6145, %v6141
    %v6178 = vpack.c.b16 %v6146, %v6142
    %v6179 = vpack.c.b16 %v6147, %v6143
    %v6180 = vpack.c.b16 %v6148, %v6144
    %6213 = vmatprep.subr.bf16.mxu0 %v6150
    %6214 = vmatpush1.bf16.msra.mxu0 %v6149
    %6215 = vmatprep.subr.bf16.mxu0 %v6154
    %6216 = vmatpush1.bf16.msra.mxu0 %v6153
    %6217 = vmatprep.subr.bf16.mxu0 %v6158
    %6218 = vmatpush1.bf16.msra.mxu0 %v6157
    %6219 = vmatprep.subr.bf16.mxu0 %v6162
    %6220 = vmatpush1.bf16.msra.mxu0 %v6161
    %6221 = vmatprep.subr.bf16.mxu0 %v6166
    %6222 = vmatpush1.bf16.msra.mxu0 %v6165
    %6223 = vmatprep.subr.bf16.mxu0 %v6170
    %6224 = vmatpush1.bf16.msra.mxu0 %v6169
    %6225 = vmatprep.subr.bf16.mxu0 %v6174
    %6226 = vmatpush1.bf16.msra.mxu0 %v6173
    %6227 = vmatprep.subr.bf16.mxu0 %v6178
    %6228 = vmatpush1.bf16.msra.mxu0 %v6177
    %6229 = vmatprep.subr.bf16.mxu0 0
    %6230 = vmatpush1.bf16.msra.mxu0 0
    %6231 = vmatprep.subr.bf16.mxu0 0
    %6232 = vmatpush1.bf16.msra.mxu0 0
    %6233 = vmatprep.subr.bf16.mxu0 0
    %6234 = vmatpush1.bf16.msra.mxu0 0
    %6235 = vmatprep.subr.bf16.mxu0 0
    %6236 = vmatpush1.bf16.msra.mxu0 0
    %6237 = vmatprep.subr.bf16.mxu0 0
    %6238 = vmatpush1.bf16.msra.mxu0 0
    %6239 = vmatprep.subr.bf16.mxu0 0
    %6240 = vmatpush1.bf16.msra.mxu0 0
    %6241 = vmatprep.subr.bf16.mxu0 0
    %6242 = vmatpush1.bf16.msra.mxu0 0
    %6243 = vmatprep.subr.bf16.mxu0 0
    %6244 = vmatpush1.bf16.msra.mxu0 0
    %6245 = vmatprep.mubr.bf16.mxu0 0
    %6246 = vmatmul.mubr.bf16.gmra.mrb[0].mxu0 0
    %v6247 = vpop.f32.mrb[0].mxu0
    %v6248 = vadd.f32 0.0, %v6247
    %v6249 = vpop.f32.mrb[0].mxu0
    %v6250 = vadd.f32 0.0, %v6249
    %v6251 = vpop.f32.mrb[0].mxu0
    %v6252 = vpop.f32.mrb[0].mxu0
    %6253 = vdwg.mxu0
    %6254 = vmatprep.subr.bf16.mxu0 %v6152
    %6255 = vmatpush1.bf16.msra.mxu0 %v6151
    %6256 = vmatprep.subr.bf16.mxu0 %v6156
    %6257 = vmatpush1.bf16.msra.mxu0 %v6155
    %6258 = vmatprep.subr.bf16.mxu0 %v6160
    %6259 = vmatpush1.bf16.msra.mxu0 %v6159
    %6260 = vmatprep.subr.bf16.mxu0 %v6164
    %6261 = vmatpush1.bf16.msra.mxu0 %v6163
    %6262 = vmatprep.subr.bf16.mxu0 %v6168
    %6263 = vmatpush1.bf16.msra.mxu0 %v6167
    %6264 = vmatprep.subr.bf16.mxu0 %v6172
    %6265 = vmatpush1.bf16.msra.mxu0 %v6171
    %6266 = vmatprep.subr.bf16.mxu0 %v6176
    %6267 = vmatpush1.bf16.msra.mxu0 %v6175
    %6268 = vmatprep.subr.bf16.mxu0 %v6180
    %6269 = vmatpush1.bf16.msra.mxu0 %v6179
    %6270 = vmatprep.subr.bf16.mxu0 0
    %6271 = vmatpush1.bf16.msra.mxu0 0
    %6272 = vmatprep.subr.bf16.mxu0 0
    %6273 = vmatpush1.bf16.msra.mxu0 0
    %6274 = vmatprep.subr.bf16.mxu0 0
    %6275 = vmatpush1.bf16.msra.mxu0 0
    %6276 = vmatprep.subr.bf16.mxu0 0
    %6277 = vmatpush1.bf16.msra.mxu0 0
    %6278 = vmatprep.subr.bf16.mxu0 0
    %6279 = vmatpush1.bf16.msra.mxu0 0
    %6280 = vmatprep.subr.bf16.mxu0 0
    %6281 = vmatpush1.bf16.msra.mxu0 0
    %6282 = vmatprep.subr.bf16.mxu0 0
    %6283 = vmatpush1.bf16.msra.mxu0 0
    %6284 = vmatprep.subr.bf16.mxu0 0
    %6285 = vmatpush1.bf16.msra.mxu0 0
    %6286 = vmatprep.mubr.bf16.mxu0 0
    %6287 = vmatmul.mubr.bf16.gmra.mrb[0].mxu0 0
    %v6288 = vpop.f32.mrb[0].mxu0
    %v6289 = vadd.f32 0.0, %v6288
    %v6290 = vpop.f32.mrb[0].mxu0
    %v6291 = vadd.f32 0.0, %v6290
    %v6292 = vpop.f32.mrb[0].mxu0
    %v6293 = vpop.f32.mrb[0].mxu0
    %6294 = vdwg.mxu0
    %v6295 = vadd.f32 %v6017, %v6248
    %v6296 = vadd.f32 %v6018, %v6250
    %v6297 = vadd.f32 %v6019, %v6289
    %v6298 = vadd.f32 %v6020, %v6291
    %v6299 = vxor.u32 %v6295, 2147483648
    %v6300 = vxor.u32 %v6296, 2147483648
    %v6301 = vxor.u32 %v6297, 2147483648
    %v6302 = vmul.f32 %v6299, 1.442695
    %v6303 = vpow.pop %v6302
    %v6304 = vmul.f32 %v6300, 1.442695
    %v6305 = vpow.pop %v6304
    %v6306 = vmul.f32 %v6301, 1.442695
    %v6307 = vpow.pop %v6306
    %v6308 = vadd.f32 %v6303, 1.0
    %v6309 = vadd.f32 %v6305, 1.0
    %v6310 = vadd.f32 %v6307, 1.0
    %v6311 = vrcp.pop %v6308
    %v6312 = vmul.f32 1.0, %v6311
    %v6313 = vrcp.pop %v6309
    %v6314 = vmul.f32 1.0, %v6313
    %v6315 = vrcp.pop %v6310
    %v6316 = vmul.f32 1.0, %v6315
    %v6317 = vtanh.pop %v6298
    %v6318 = vmul.f32 %v6314, 0.0
    %v6319 = vmul.f32 %v6312, %v6317
    %v6320 = vadd.f32 %v6318, %v6319
    %v6321 = vtanh.pop %v6320
    %v6322 = vmul.f32 %v6316, %v6321
    %v6323 = vld [vmem:[%s811] sm:$0xff]
    %v6324 = vld [vmem:[%s811 + $0x8] sm:$0xff]
    %v6325 = vld [vmem:[%s811 + $0x10] sm:$0xff]
    %v6326 = vld [vmem:[%s811 + $0x18] sm:$0xff]
    %v6327 = vpack.c.bf16 %v6322, %v6322
    %6328 = vmatprep.subr.bf16.mxu0 %v6150
    %6329 = vmatpush1.bf16.msra.mxu0 %v6149
    %6330 = vmatprep.subr.bf16.mxu0 %v6154
    %6331 = vmatpush1.bf16.msra.mxu0 %v6153
    %6332 = vmatprep.subr.bf16.mxu0 %v6158
    %6333 = vmatpush1.bf16.msra.mxu0 %v6157
    %6334 = vmatprep.subr.bf16.mxu0 %v6162
    %6335 = vmatpush1.bf16.msra.mxu0 %v6161
    %6336 = vmatprep.subr.bf16.mxu0 %v6166
    %6337 = vmatpush1.bf16.msra.mxu0 %v6165
    %6338 = vmatprep.subr.bf16.mxu0 %v6170
    %6339 = vmatpush1.bf16.msra.mxu0 %v6169
    %6340 = vmatprep.subr.bf16.mxu0 %v6174
    %6341 = vmatpush1.bf16.msra.mxu0 %v6173
    %6342 = vmatprep.subr.bf16.mxu0 %v6178
    %6343 = vmatpush1.bf16.msra.mxu0 %v6177
    %6344 = vmatprep.subr.bf16.mxu0 0
    %6345 = vmatpush1.bf16.msra.mxu0 0
    %6346 = vmatprep.subr.bf16.mxu0 0
    %6347 = vmatpush1.bf16.msra.mxu0 0
    %6348 = vmatprep.subr.bf16.mxu0 0
    %6349 = vmatpush1.bf16.msra.mxu0 0
    %6350 = vmatprep.subr.bf16.mxu0 0
    %6351 = vmatpush1.bf16.msra.mxu0 0
    %6352 = vmatprep.subr.bf16.mxu0 0
    %6353 = vmatpush1.bf16.msra.mxu0 0
    %6354 = vmatprep.subr.bf16.mxu0 0
    %6355 = vmatpush1.bf16.msra.mxu0 0
    %6356 = vmatprep.subr.bf16.mxu0 0
    %6357 = vmatpush1.bf16.msra.mxu0 0
    %6358 = vmatprep.subr.bf16.mxu0 0
    %6359 = vmatpush1.bf16.msra.mxu0 0
    %6360 = vmatprep.mubr.bf16.mxu0 0
    %6361 = vmatmul.mubr.bf16.gmra.mrb[0].mxu0 %v6327
    %v6362 = vpop.f32.mrb[0].mxu0
    %v6363 = vadd.f32 0.0, %v6362
    %v6364 = vpop.f32.mrb[0].mxu0
    %v6365 = vadd.f32 0.0, %v6364
    %v6366 = vpop.f32.mrb[0].mxu0
    %v6367 = vpop.f32.mrb[0].mxu0
    %6368 = vdwg.mxu0
    %6369 = vmatprep.subr.bf16.mxu0 %v6152
    %6370 = vmatpush1.bf16.msra.mxu0 %v6151
    %6371 = vmatprep.subr.bf16.mxu0 %v6156
    %6372 = vmatpush1.bf16.msra.mxu0 %v6155
    %6373 = vmatprep.subr.bf16.mxu0 %v6160
    %6374 = vmatpush1.bf16.msra.mxu0 %v6159
    %6375 = vmatprep.subr.bf16.mxu0 %v6164
    %6376 = vmatpush1.bf16.msra.mxu0 %v6163
    %6377 = vmatprep.subr.bf16.mxu0 %v6168
    %6378 = vmatpush1.bf16.msra.mxu0 %v6167
    %6379 = vmatprep.subr.bf16.mxu0 %v6172
    %6380 = vmatpush1.bf16.msra.mxu0 %v6171
    %6381 = vmatprep.subr.bf16.mxu0 %v6176
    %6382 = vmatpush1.bf16.msra.mxu0 %v6175
    %6383 = vmatprep.subr.bf16.mxu0 %v6180
    %6384 = vmatpush1.bf16.msra.mxu0 %v6179
    %6385 = vmatprep.subr.bf16.mxu0 0
    %6386 = vmatpush1.bf16.msra.mxu0 0
    %6387 = vmatprep.subr.bf16.mxu0 0
    %6388 = vmatpush1.bf16.msra.mxu0 0
    %6389 = vmatprep.subr.bf16.mxu0 0
    %6390 = vmatpush1.bf16.msra.mxu0 0
    %6391 = vmatprep.subr.bf16.mxu0 0
    %6392 = vmatpush1.bf16.msra.mxu0 0
    %6393 = vmatprep.subr.bf16.mxu0 0
    %6394 = vmatpush1.bf16.msra.mxu0 0
    %6395 = vmatprep.subr.bf16.mxu0 0
    %6396 = vmatpush1.bf16.msra.mxu0 0
    %6397 = vmatprep.subr.bf16.mxu0 0
    %6398 = vmatpush1.bf16.msra.mxu0 0
    %6399 = vmatprep.subr.bf16.mxu0 0
    %6400 = vmatpush1.bf16.msra.mxu0 0
    %6401 = vmatprep.mubr.bf16.mxu0 0
    %6402 = vmatmul.mubr.bf16.gmra.mrb[0].mxu0 %v6327
    %v6403 = vpop.f32.mrb[0].mxu0
    %v6404 = vadd.f32 0.0, %v6403
    %v6405 = vpop.f32.mrb[0].mxu0
    %v6406 = vadd.f32 0.0, %v6405
    %v6407 = vpop.f32.mrb[0].mxu0
    %v6408 = vpop.f32.mrb[0].mxu0
    %6409 = vdwg.mxu0
    %v6410 = vadd.f32 %v6323, %v6363
    %v6411 = vadd.f32 %v6324, %v6365
    %v6412 = vadd.f32 %v6325, %v6404
    %v6413 = vadd.f32 %v6326, %v6406
    %v6414 = vxor.u32 %v6410, 2147483648
    %v6415 = vxor.u32 %v6411, 2147483648
    %v6416 = vxor.u32 %v6412, 2147483648
    %v6417 = vmul.f32 %v6414, 1.442695
    %v6418 = vpow.pop %v6417
    %v6419 = vmul.f32 %v6415, 1.442695
    %v6420 = vpow.pop %v6419
    %v6421 = vmul.f32 %v6416, 1.442695
    %v6422 = vpow.pop %v6421
    %v6423 = vadd.f32 %v6418, 1.0
    %v6424 = vadd.f32 %v6420, 1.0
    %v6425 = vadd.f32 %v6422, 1.0
    %v6426 = vrcp.pop %v6423
    %v6427 = vmul.f32 1.0, %v6426
    %v6428 = vrcp.pop %v6424
    %v6429 = vmul.f32 1.0, %v6428
    %v6430 = vrcp.pop %v6425
    %v6431 = vmul.f32 1.0, %v6430
    %v6432 = vtanh.pop %v6413
    %v6433 = vmul.f32 %v6429, %v6320
    %v6434 = vmul.f32 %v6427, %v6432
    %v6435 = vadd.f32 %v6433, %v6434
    %v6436 = vtanh.pop %v6435
    %v6437 = vmul.f32 %v6431, %v6436
    %v6438 = vld [vmem:[%s1123] sm:$0xff]
    %v6439 = vld [vmem:[%s1123 + $0x8] sm:$0xff]
    %v6440 = vld [vmem:[%s1123 + $0x10] sm:$0xff]
    %v6441 = vld [vmem:[%s1123 + $0x18] sm:$0xff]
    %v6442 = vpack.c.bf16 %v6437, %v6437
    %6443 = vmatprep.subr.bf16.mxu0 %v6150
    %6444 = vmatpush1.bf16.msra.mxu0 %v6149
    %6445 = vmatprep.subr.bf16.mxu0 %v6154
    %6446 = vmatpush1.bf16.msra.mxu0 %v6153
    %6447 = vmatprep.subr.bf16.mxu0 %v6158
    %6448 = vmatpush1.bf16.msra.mxu0 %v6157
    %6449 = vmatprep.subr.bf16.mxu0 %v6162
    %6450 = vmatpush1.bf16.msra.mxu0 %v6161
    %6451 = vmatprep.subr.bf16.mxu0 %v6166
    %6452 = vmatpush1.bf16.msra.mxu0 %v6165
    %6453 = vmatprep.subr.bf16.mxu0 %v6170
    %6454 = vmatpush1.bf16.msra.mxu0 %v6169
    %6455 = vmatprep.subr.bf16.mxu0 %v6174
    %6456 = vmatpush1.bf16.msra.mxu0 %v6173
    %6457 = vmatprep.subr.bf16.mxu0 %v6178
    %6458 = vmatpush1.bf16.msra.mxu0 %v6177
    %6459 = vmatprep.subr.bf16.mxu0 0
    %6460 = vmatpush1.bf16.msra.mxu0 0
    %6461 = vmatprep.subr.bf16.mxu0 0
    %6462 = vmatpush1.bf16.msra.mxu0 0
    %6463 = vmatprep.subr.bf16.mxu0 0
    %6464 = vmatpush1.bf16.msra.mxu0 0
    %6465 = vmatprep.subr.bf16.mxu0 0
    %6466 = vmatpush1.bf16.msra.mxu0 0
    %6467 = vmatprep.subr.bf16.mxu0 0
    %6468 = vmatpush1.bf16.msra.mxu0 0
    %6469 = vmatprep.subr.bf16.mxu0 0
    %6470 = vmatpush1.bf16.msra.mxu0 0
    %6471 = vmatprep.subr.bf16.mxu0 0
    %6472 = vmatpush1.bf16.msra.mxu0 0
    %6473 = vmatprep.subr.bf16.mxu0 0
    %6474 = vmatpush1.bf16.msra.mxu0 0
    %6475 = vmatprep.mubr.bf16.mxu0 0
    %6476 = vmatmul.mubr.bf16.gmra.mrb[0].mxu0 %v6442
    %v6477 = vpop.f32.mrb[0].mxu0
    %v6478 = vadd.f32 0.0, %v6477
    %v6479 = vpop.f32.mrb[0].mxu0
    %v6480 = vadd.f32 0.0, %v6479
    %v6481 = vpop.f32.mrb[0].mxu0
    %v6482 = vpop.f32.mrb[0].mxu0
    %6483 = vdwg.mxu0
    %6484 = vmatprep.subr.bf16.mxu0 %v6152
    %6485 = vmatpush1.bf16.msra.mxu0 %v6151
    %6486 = vmatprep.subr.bf16.mxu0 %v6156
    %6487 = vmatpush1.bf16.msra.mxu0 %v6155
    %6488 = vmatprep.subr.bf16.mxu0 %v6160
    %6489 = vmatpush1.bf16.msra.mxu0 %v6159
    %6490 = vmatprep.subr.bf16.mxu0 %v6164
    %6491 = vmatpush1.bf16.msra.mxu0 %v6163
    %6492 = vmatprep.subr.bf16.mxu0 %v6168
    %6493 = vmatpush1.bf16.msra.mxu0 %v6167
    %6494 = vmatprep.subr.bf16.mxu0 %v6172
    %6495 = vmatpush1.bf16.msra.mxu0 %v6171
    %6496 = vmatprep.subr.bf16.mxu0 %v6176
    %6497 = vmatpush1.bf16.msra.mxu0 %v6175
    %6498 = vmatprep.subr.bf16.mxu0 %v6180
    %6499 = vmatpush1.bf16.msra.mxu0 %v6179
    %6500 = vmatprep.subr.bf16.mxu0 0
    %6501 = vmatpush1.bf16.msra.mxu0 0
    %6502 = vmatprep.subr.bf16.mxu0 0
    %6503 = vmatpush1.bf16.msra.mxu0 0
    %6504 = vmatprep.subr.bf16.mxu0 0
    %6505 = vmatpush1.bf16.msra.mxu0 0
    %6506 = vmatprep.subr.bf16.mxu0 0
    %6507 = vmatpush1.bf16.msra.mxu0 0
    %6508 = vmatprep.subr.bf16.mxu0 0
    %6509 = vmatpush1.bf16.msra.mxu0 0
    %6510 = vmatprep.subr.bf16.mxu0 0
    %6511 = vmatpush1.bf16.msra.mxu0 0
    %6512 = vmatprep.subr.bf16.mxu0 0
    %6513 = vmatpush1.bf16.msra.mxu0 0
    %6514 = vmatprep.subr.bf16.mxu0 0
    %6515 = vmatpush1.bf16.msra.mxu0 0
    %6516 = vmatprep.mubr.bf16.mxu0 0
    %6517 = vmatmul.mubr.bf16.gmra.mrb[0].mxu0 %v6442
    %v6518 = vpop.f32.mrb[0].mxu0
    %v6519 = vadd.f32 0.0, %v6518
    %v6520 = vpop.f32.mrb[0].mxu0
    %v6521 = vadd.f32 0.0, %v6520
    %v6522 = vpop.f32.mrb[0].mxu0
    %v6523 = vpop.f32.mrb[0].mxu0
    %6524 = vdwg.mxu0
    %v6525 = vadd.f32 %v6438, %v6478
    %v6526 = vadd.f32 %v6439, %v6480
    %v6527 = vadd.f32 %v6440, %v6519
    %v6528 = vadd.f32 %v6441, %v6521
    %v6529 = vxor.u32 %v6525, 2147483648
    %v6530 = vxor.u32 %v6526, 2147483648
    %v6531 = vxor.u32 %v6527, 2147483648
    %v6532 = vmul.f32 %v6529, 1.442695
    %v6533 = vpow.pop %v6532
    %v6534 = vmul.f32 %v6530, 1.442695
    %v6535 = vpow.pop %v6534
    %v6536 = vmul.f32 %v6531, 1.442695
    %v6537 = vpow.pop %v6536
    %v6538 = vadd.f32 %v6533, 1.0
    %v6539 = vadd.f32 %v6535, 1.0
    %v6540 = vadd.f32 %v6537, 1.0
    %v6541 = vrcp.pop %v6538
    %v6542 = vmul.f32 1.0, %v6541
    %v6543 = vrcp.pop %v6539
    %v6544 = vmul.f32 1.0, %v6543
    %v6545 = vrcp.pop %v6540
    %v6546 = vmul.f32 1.0, %v6545
    %v6547 = vtanh.pop %v6528
    %v6548 = vmul.f32 %v6544, %v6435
    %v6549 = vmul.f32 %v6542, %v6547
    %v6550 = vadd.f32 %v6548, %v6549
    %v6551 = vtanh.pop %v6550
    %v6552 = vmul.f32 %v6546, %v6551
    %v6553 = vld [vmem:[%s1435] sm:$0xff]
    %v6554 = vld [vmem:[%s1435 + $0x8] sm:$0xff]
    %v6555 = vld [vmem:[%s1435 + $0x10] sm:$0xff]
    %v6556 = vld [vmem:[%s1435 + $0x18] sm:$0xff]
    %v6557 = vpack.c.bf16 %v6552, %v6552
    %6558 = vmatprep.subr.bf16.mxu0 %v6150
    %6559 = vmatpush1.bf16.msra.mxu0 %v6149
    %6560 = vmatprep.subr.bf16.mxu0 %v6154
    %6561 = vmatpush1.bf16.msra.mxu0 %v6153
    %6562 = vmatprep.subr.bf16.mxu0 %v6158
    %6563 = vmatpush1.bf16.msra.mxu0 %v6157
    %6564 = vmatprep.subr.bf16.mxu0 %v6162
    %6565 = vmatpush1.bf16.msra.mxu0 %v6161
    %6566 = vmatprep.subr.bf16.mxu0 %v6166
    %6567 = vmatpush1.bf16.msra.mxu0 %v6165
    %6568 = vmatprep.subr.bf16.mxu0 %v6170
    %6569 = vmatpush1.bf16.msra.mxu0 %v6169
    %6570 = vmatprep.subr.bf16.mxu0 %v6174
    %6571 = vmatpush1.bf16.msra.mxu0 %v6173
    %6572 = vmatprep.subr.bf16.mxu0 %v6178
    %6573 = vmatpush1.bf16.msra.mxu0 %v6177
    %6574 = vmatprep.subr.bf16.mxu0 0
    %6575 = vmatpush1.bf16.msra.mxu0 0
    %6576 = vmatprep.subr.bf16.mxu0 0
    %6577 = vmatpush1.bf16.msra.mxu0 0
    %6578 = vmatprep.subr.bf16.mxu0 0
    %6579 = vmatpush1.bf16.msra.mxu0 0
    %6580 = vmatprep.subr.bf16.mxu0 0
    %6581 = vmatpush1.bf16.msra.mxu0 0
    %6582 = vmatprep.subr.bf16.mxu0 0
    %6583 = vmatpush1.bf16.msra.mxu0 0
    %6584 = vmatprep.subr.bf16.mxu0 0
    %6585 = vmatpush1.bf16.msra.mxu0 0
    %6586 = vmatprep.subr.bf16.mxu0 0
    %6587 = vmatpush1.bf16.msra.mxu0 0
    %6588 = vmatprep.subr.bf16.mxu0 0
    %6589 = vmatpush1.bf16.msra.mxu0 0
    %6590 = vmatprep.mubr.bf16.mxu0 0
    %6591 = vmatmul.mubr.bf16.gmra.mrb[0].mxu0 %v6557
    %v6592 = vpop.f32.mrb[0].mxu0
    %v6593 = vadd.f32 0.0, %v6592
    %v6594 = vpop.f32.mrb[0].mxu0
    %v6595 = vadd.f32 0.0, %v6594
    %v6596 = vpop.f32.mrb[0].mxu0
    %v6597 = vpop.f32.mrb[0].mxu0
    %6598 = vdwg.mxu0
    %6599 = vmatprep.subr.bf16.mxu0 %v6152
    %6600 = vmatpush1.bf16.msra.mxu0 %v6151
    %6601 = vmatprep.subr.bf16.mxu0 %v6156
    %6602 = vmatpush1.bf16.msra.mxu0 %v6155
    %6603 = vmatprep.subr.bf16.mxu0 %v6160
    %6604 = vmatpush1.bf16.msra.mxu0 %v6159
    %6605 = vmatprep.subr.bf16.mxu0 %v6164
    %6606 = vmatpush1.bf16.msra.mxu0 %v6163
    %6607 = vmatprep.subr.bf16.mxu0 %v6168
    %6608 = vmatpush1.bf16.msra.mxu0 %v6167
    %6609 = vmatprep.subr.bf16.mxu0 %v6172
    %6610 = vmatpush1.bf16.msra.mxu0 %v6171
    %6611 = vmatprep.subr.bf16.mxu0 %v6176
    %6612 = vmatpush1.bf16.msra.mxu0 %v6175
    %6613 = vmatprep.subr.bf16.mxu0 %v6180
    %6614 = vmatpush1.bf16.msra.mxu0 %v6179
    %6615 = vmatprep.subr.bf16.mxu0 0
    %6616 = vmatpush1.bf16.msra.mxu0 0
    %6617 = vmatprep.subr.bf16.mxu0 0
    %6618 = vmatpush1.bf16.msra.mxu0 0
    %6619 = vmatprep.subr.bf16.mxu0 0
    %6620 = vmatpush1.bf16.msra.mxu0 0
    %6621 = vmatprep.subr.bf16.mxu0 0
    %6622 = vmatpush1.bf16.msra.mxu0 0
    %6623 = vmatprep.subr.bf16.mxu0 0
    %6624 = vmatpush1.bf16.msra.mxu0 0
    %6625 = vmatprep.subr.bf16.mxu0 0
    %6626 = vmatpush1.bf16.msra.mxu0 0
    %6627 = vmatprep.subr.bf16.mxu0 0
    %6628 = vmatpush1.bf16.msra.mxu0 0
    %6629 = vmatprep.subr.bf16.mxu0 0
    %6630 = vmatpush1.bf16.msra.mxu0 0
    %6631 = vmatprep.mubr.bf16.mxu0 0
    %6632 = vmatmul.mubr.bf16.gmra.mrb[0].mxu0 %v6557
    %v6633 = vpop.f32.mrb[0].mxu0
    %v6634 = vadd.f32 0.0, %v6633
    %v6635 = vpop.f32.mrb[0].mxu0
    %v6636 = vadd.f32 0.0, %v6635
    %v6637 = vpop.f32.mrb[0].mxu0
    %v6638 = vpop.f32.mrb[0].mxu0
    %6639 = vdwg.mxu0
    %v6640 = vadd.f32 %v6553, %v6593
    %v6641 = vadd.f32 %v6554, %v6595
    %v6642 = vadd.f32 %v6555, %v6634
    %v6643 = vadd.f32 %v6556, %v6636
    %v6644 = vxor.u32 %v6640, 2147483648
    %v6645 = vxor.u32 %v6641, 2147483648
    %v6646 = vxor.u32 %v6642, 2147483648
    %v6647 = vmul.f32 %v6644, 1.442695
    %v6648 = vpow.pop %v6647
    %v6649 = vmul.f32 %v6645, 1.442695
    %v6650 = vpow.pop %v6649
    %v6651 = vmul.f32 %v6646, 1.442695
    %v6652 = vpow.pop %v6651
    %v6653 = vadd.f32 %v6648, 1.0
    %v6654 = vadd.f32 %v6650, 1.0
    %v6655 = vadd.f32 %v6652, 1.0
    %v6656 = vrcp.pop %v6653
    %v6657 = vmul.f32 1.0, %v6656
    %v6658 = vrcp.pop %v6654
    %v6659 = vmul.f32 1.0, %v6658
    %v6660 = vrcp.pop %v6655
    %v6661 = vmul.f32 1.0, %v6660
    %v6662 = vtanh.pop %v6643
    %v6663 = vmul.f32 %v6659, %v6550
    %v6664 = vmul.f32 %v6657, %v6662
    %v6665 = vadd.f32 %v6663, %v6664
    %v6666 = vtanh.pop %v6665
    %v6667 = vmul.f32 %v6661, %v6666
    %v6668 = vld [vmem:[%s1747] sm:$0xff]
    %v6669 = vld [vmem:[%s1747 + $0x8] sm:$0xff]
    %v6670 = vld [vmem:[%s1747 + $0x10] sm:$0xff]
    %v6671 = vld [vmem:[%s1747 + $0x18] sm:$0xff]
    %v6672 = vpack.c.bf16 %v6667, %v6667
    %6673 = vmatprep.subr.bf16.mxu0 %v6150
    %6674 = vmatpush1.bf16.msra.mxu0 %v6149
    %6675 = vmatprep.subr.bf16.mxu0 %v6154
    %6676 = vmatpush1.bf16.msra.mxu0 %v6153
    %6677 = vmatprep.subr.bf16.mxu0 %v6158
    %6678 = vmatpush1.bf16.msra.mxu0 %v6157
    %6679 = vmatprep.subr.bf16.mxu0 %v6162
    %6680 = vmatpush1.bf16.msra.mxu0 %v6161
    %6681 = vmatprep.subr.bf16.mxu0 %v6166
    %6682 = vmatpush1.bf16.msra.mxu0 %v6165
    %6683 = vmatprep.subr.bf16.mxu0 %v6170
    %6684 = vmatpush1.bf16.msra.mxu0 %v6169
    %6685 = vmatprep.subr.bf16.mxu0 %v6174
    %6686 = vmatpush1.bf16.msra.mxu0 %v6173
    %6687 = vmatprep.subr.bf16.mxu0 %v6178
    %6688 = vmatpush1.bf16.msra.mxu0 %v6177
    %6689 = vmatprep.subr.bf16.mxu0 0
    %6690 = vmatpush1.bf16.msra.mxu0 0
    %6691 = vmatprep.subr.bf16.mxu0 0
    %6692 = vmatpush1.bf16.msra.mxu0 0
    %6693 = vmatprep.subr.bf16.mxu0 0
    %6694 = vmatpush1.bf16.msra.mxu0 0
    %6695 = vmatprep.subr.bf16.mxu0 0
    %6696 = vmatpush1.bf16.msra.mxu0 0
    %6697 = vmatprep.subr.bf16.mxu0 0
    %6698 = vmatpush1.bf16.msra.mxu0 0
    %6699 = vmatprep.subr.bf16.mxu0 0
    %6700 = vmatpush1.bf16.msra.mxu0 0
    %6701 = vmatprep.subr.bf16.mxu0 0
    %6702 = vmatpush1.bf16.msra.mxu0 0
    %6703 = vmatprep.subr.bf16.mxu0 0
    %6704 = vmatpush1.bf16.msra.mxu0 0
    %6705 = vmatprep.mubr.bf16.mxu0 0
    %6706 = vmatmul.mubr.bf16.gmra.mrb[0].mxu0 %v6672
    %v6707 = vpop.f32.mrb[0].mxu0
    %v6708 = vadd.f32 0.0, %v6707
    %v6709 = vpop.f32.mrb[0].mxu0
    %v6710 = vadd.f32 0.0, %v6709
    %v6711 = vpop.f32.mrb[0].mxu0
    %v6712 = vpop.f32.mrb[0].mxu0
    %6713 = vdwg.mxu0
    %6714 = vmatprep.subr.bf16.mxu0 %v6152
    %6715 = vmatpush1.bf16.msra.mxu0 %v6151
    %6716 = vmatprep.subr.bf16.mxu0 %v6156
    %6717 = vmatpush1.bf16.msra.mxu0 %v6155
    %6718 = vmatprep.subr.bf16.mxu0 %v6160
    %6719 = vmatpush1.bf16.msra.mxu0 %v6159
    %6720 = vmatprep.subr.bf16.mxu0 %v6164
    %6721 = vmatpush1.bf16.msra.mxu0 %v6163
    %6722 = vmatprep.subr.bf16.mxu0 %v6168
    %6723 = vmatpush1.bf16.msra.mxu0 %v6167
    %6724 = vmatprep.subr.bf16.mxu0 %v6172
    %6725 = vmatpush1.bf16.msra.mxu0 %v6171
    %6726 = vmatprep.subr.bf16.mxu0 %v6176
    %6727 = vmatpush1.bf16.msra.mxu0 %v6175
    %6728 = vmatprep.subr.bf16.mxu0 %v6180
    %6729 = vmatpush1.bf16.msra.mxu0 %v6179
    %6730 = vmatprep.subr.bf16.mxu0 0
    %6731 = vmatpush1.bf16.msra.mxu0 0
    %6732 = vmatprep.subr.bf16.mxu0 0
    %6733 = vmatpush1.bf16.msra.mxu0 0
    %6734 = vmatprep.subr.bf16.mxu0 0
    %6735 = vmatpush1.bf16.msra.mxu0 0
    %6736 = vmatprep.subr.bf16.mxu0 0
    %6737 = vmatpush1.bf16.msra.mxu0 0
    %6738 = vmatprep.subr.bf16.mxu0 0
    %6739 = vmatpush1.bf16.msra.mxu0 0
    %6740 = vmatprep.subr.bf16.mxu0 0
    %6741 = vmatpush1.bf16.msra.mxu0 0
    %6742 = vmatprep.subr.bf16.mxu0 0
    %6743 = vmatpush1.bf16.msra.mxu0 0
    %6744 = vmatprep.subr.bf16.mxu0 0
    %6745 = vmatpush1.bf16.msra.mxu0 0
    %6746 = vmatprep.mubr.bf16.mxu0 0
    %6747 = vmatmul.mubr.bf16.gmra.mrb[0].mxu0 %v6672
    %v6748 = vpop.f32.mrb[0].mxu0
    %v6749 = vadd.f32 0.0, %v6748
    %v6750 = vpop.f32.mrb[0].mxu0
    %v6751 = vadd.f32 0.0, %v6750
    %v6752 = vpop.f32.mrb[0].mxu0
    %v6753 = vpop.f32.mrb[0].mxu0
    %6754 = vdwg.mxu0
    %v6755 = vadd.f32 %v6668, %v6708
    %v6756 = vadd.f32 %v6669, %v6710
    %v6757 = vadd.f32 %v6670, %v6749
    %v6758 = vadd.f32 %v6671, %v6751
    %v6759 = vxor.u32 %v6755, 2147483648
    %v6760 = vxor.u32 %v6756, 2147483648
    %v6761 = vxor.u32 %v6757, 2147483648
    %v6762 = vmul.f32 %v6759, 1.442695
    %v6763 = vpow.pop %v6762
    %v6764 = vmul.f32 %v6760, 1.442695
    %v6765 = vpow.pop %v6764
    %v6766 = vmul.f32 %v6761, 1.442695
    %v6767 = vpow.pop %v6766
    %v6768 = vadd.f32 %v6763, 1.0
    %v6769 = vadd.f32 %v6765, 1.0
    %v6770 = vadd.f32 %v6767, 1.0
    %v6771 = vrcp.pop %v6768
    %v6772 = vmul.f32 1.0, %v6771
    %v6773 = vrcp.pop %v6769
    %v6774 = vmul.f32 1.0, %v6773
    %v6775 = vrcp.pop %v6770
    %v6776 = vmul.f32 1.0, %v6775
    %v6777 = vtanh.pop %v6758
    %v6778 = vmul.f32 %v6774, %v6665
    %v6779 = vmul.f32 %v6772, %v6777
    %v6780 = vadd.f32 %v6778, %v6779
    %v6781 = vtanh.pop %v6780
    %v6782 = vmul.f32 %v6776, %v6781
    %v6783 = vld [vmem:[%s2059] sm:$0xff]
    %v6784 = vld [vmem:[%s2059 + $0x8] sm:$0xff]
    %v6785 = vld [vmem:[%s2059 + $0x10] sm:$0xff]
    %v6786 = vld [vmem:[%s2059 + $0x18] sm:$0xff]
    %v6787 = vpack.c.bf16 %v6782, %v6782
    %6788 = vmatprep.subr.bf16.mxu0 %v6150
    %6789 = vmatpush1.bf16.msra.mxu0 %v6149
    %6790 = vmatprep.subr.bf16.mxu0 %v6154
    %6791 = vmatpush1.bf16.msra.mxu0 %v6153
    %6792 = vmatprep.subr.bf16.mxu0 %v6158
    %6793 = vmatpush1.bf16.msra.mxu0 %v6157
    %6794 = vmatprep.subr.bf16.mxu0 %v6162
    %6795 = vmatpush1.bf16.msra.mxu0 %v6161
    %6796 = vmatprep.subr.bf16.mxu0 %v6166
    %6797 = vmatpush1.bf16.msra.mxu0 %v6165
    %6798 = vmatprep.subr.bf16.mxu0 %v6170
    %6799 = vmatpush1.bf16.msra.mxu0 %v6169
    %6800 = vmatprep.subr.bf16.mxu0 %v6174
    %6801 = vmatpush1.bf16.msra.mxu0 %v6173
    %6802 = vmatprep.subr.bf16.mxu0 %v6178
    %6803 = vmatpush1.bf16.msra.mxu0 %v6177
    %6804 = vmatprep.subr.bf16.mxu0 0
    %6805 = vmatpush1.bf16.msra.mxu0 0
    %6806 = vmatprep.subr.bf16.mxu0 0
    %6807 = vmatpush1.bf16.msra.mxu0 0
    %6808 = vmatprep.subr.bf16.mxu0 0
    %6809 = vmatpush1.bf16.msra.mxu0 0
    %6810 = vmatprep.subr.bf16.mxu0 0
    %6811 = vmatpush1.bf16.msra.mxu0 0
    %6812 = vmatprep.subr.bf16.mxu0 0
    %6813 = vmatpush1.bf16.msra.mxu0 0
    %6814 = vmatprep.subr.bf16.mxu0 0
    %6815 = vmatpush1.bf16.msra.mxu0 0
    %6816 = vmatprep.subr.bf16.mxu0 0
    %6817 = vmatpush1.bf16.msra.mxu0 0
    %6818 = vmatprep.subr.bf16.mxu0 0
    %6819 = vmatpush1.bf16.msra.mxu0 0
    %6820 = vmatprep.mubr.bf16.mxu0 0
    %6821 = vmatmul.mubr.bf16.gmra.mrb[0].mxu0 %v6787
    %v6822 = vpop.f32.mrb[0].mxu0
    %v6823 = vadd.f32 0.0, %v6822
    %v6824 = vpop.f32.mrb[0].mxu0
    %v6825 = vadd.f32 0.0, %v6824
    %v6826 = vpop.f32.mrb[0].mxu0
    %v6827 = vpop.f32.mrb[0].mxu0
    %6828 = vdwg.mxu0
    %6829 = vmatprep.subr.bf16.mxu0 %v6152
    %6830 = vmatpush1.bf16.msra.mxu0 %v6151
    %6831 = vmatprep.subr.bf16.mxu0 %v6156
    %6832 = vmatpush1.bf16.msra.mxu0 %v6155
    %6833 = vmatprep.subr.bf16.mxu0 %v6160
    %6834 = vmatpush1.bf16.msra.mxu0 %v6159
    %6835 = vmatprep.subr.bf16.mxu0 %v6164
    %6836 = vmatpush1.bf16.msra.mxu0 %v6163
    %6837 = vmatprep.subr.bf16.mxu0 %v6168
    %6838 = vmatpush1.bf16.msra.mxu0 %v6167
    %6839 = vmatprep.subr.bf16.mxu0 %v6172
    %6840 = vmatpush1.bf16.msra.mxu0 %v6171
    %6841 = vmatprep.subr.bf16.mxu0 %v6176
    %6842 = vmatpush1.bf16.msra.mxu0 %v6175
    %6843 = vmatprep.subr.bf16.mxu0 %v6180
    %6844 = vmatpush1.bf16.msra.mxu0 %v6179
    %6845 = vmatprep.subr.bf16.mxu0 0
    %6846 = vmatpush1.bf16.msra.mxu0 0
    %6847 = vmatprep.subr.bf16.mxu0 0
    %6848 = vmatpush1.bf16.msra.mxu0 0
    %6849 = vmatprep.subr.bf16.mxu0 0
    %6850 = vmatpush1.bf16.msra.mxu0 0
    %6851 = vmatprep.subr.bf16.mxu0 0
    %6852 = vmatpush1.bf16.msra.mxu0 0
    %6853 = vmatprep.subr.bf16.mxu0 0
    %6854 = vmatpush1.bf16.msra.mxu0 0
    %6855 = vmatprep.subr.bf16.mxu0 0
    %6856 = vmatpush1.bf16.msra.mxu0 0
    %6857 = vmatprep.subr.bf16.mxu0 0
    %6858 = vmatpush1.bf16.msra.mxu0 0
    %6859 = vmatprep.subr.bf16.mxu0 0
    %6860 = vmatpush1.bf16.msra.mxu0 0
    %6861 = vmatprep.mubr.bf16.mxu0 0
    %6862 = vmatmul.mubr.bf16.gmra.mrb[0].mxu0 %v6787
    %v6863 = vpop.f32.mrb[0].mxu0
    %v6864 = vadd.f32 0.0, %v6863
    %v6865 = vpop.f32.mrb[0].mxu0
    %v6866 = vadd.f32 0.0, %v6865
    %v6867 = vpop.f32.mrb[0].mxu0
    %v6868 = vpop.f32.mrb[0].mxu0
    %6869 = vdwg.mxu0
    %v6870 = vadd.f32 %v6783, %v6823
    %v6871 = vadd.f32 %v6784, %v6825
    %v6872 = vadd.f32 %v6785, %v6864
    %v6873 = vadd.f32 %v6786, %v6866
    %v6874 = vxor.u32 %v6870, 2147483648
    %v6875 = vxor.u32 %v6871, 2147483648
    %v6876 = vxor.u32 %v6872, 2147483648
    %v6877 = vmul.f32 %v6874, 1.442695
    %v6878 = vpow.pop %v6877
    %v6879 = vmul.f32 %v6875, 1.442695
    %v6880 = vpow.pop %v6879
    %v6881 = vmul.f32 %v6876, 1.442695
    %v6882 = vpow.pop %v6881
    %v6883 = vadd.f32 %v6878, 1.0
    %v6884 = vadd.f32 %v6880, 1.0
    %v6885 = vadd.f32 %v6882, 1.0
    %v6886 = vrcp.pop %v6883
    %v6887 = vmul.f32 1.0, %v6886
    %v6888 = vrcp.pop %v6884
    %v6889 = vmul.f32 1.0, %v6888
    %v6890 = vrcp.pop %v6885
    %v6891 = vmul.f32 1.0, %v6890
    %v6892 = vtanh.pop %v6873
    %v6893 = vmul.f32 %v6889, %v6780
    %v6894 = vmul.f32 %v6887, %v6892
    %v6895 = vadd.f32 %v6893, %v6894
    %v6896 = vtanh.pop %v6895
    %v6897 = vmul.f32 %v6891, %v6896
    %v6898 = vld [vmem:[%s2371] sm:$0xff]
    %v6899 = vld [vmem:[%s2371 + $0x8] sm:$0xff]
    %v6900 = vld [vmem:[%s2371 + $0x10] sm:$0xff]
    %v6901 = vld [vmem:[%s2371 + $0x18] sm:$0xff]
    %v6902 = vpack.c.bf16 %v6897, %v6897
    %6903 = vmatprep.subr.bf16.mxu0 %v6150
    %6904 = vmatpush1.bf16.msra.mxu0 %v6149
    %6905 = vmatprep.subr.bf16.mxu0 %v6154
    %6906 = vmatpush1.bf16.msra.mxu0 %v6153
    %6907 = vmatprep.subr.bf16.mxu0 %v6158
    %6908 = vmatpush1.bf16.msra.mxu0 %v6157
    %6909 = vmatprep.subr.bf16.mxu0 %v6162
    %6910 = vmatpush1.bf16.msra.mxu0 %v6161
    %6911 = vmatprep.subr.bf16.mxu0 %v6166
    %6912 = vmatpush1.bf16.msra.mxu0 %v6165
    %6913 = vmatprep.subr.bf16.mxu0 %v6170
    %6914 = vmatpush1.bf16.msra.mxu0 %v6169
    %6915 = vmatprep.subr.bf16.mxu0 %v6174
    %6916 = vmatpush1.bf16.msra.mxu0 %v6173
    %6917 = vmatprep.subr.bf16.mxu0 %v6178
    %6918 = vmatpush1.bf16.msra.mxu0 %v6177
    %6919 = vmatprep.subr.bf16.mxu0 0
    %6920 = vmatpush1.bf16.msra.mxu0 0
    %6921 = vmatprep.subr.bf16.mxu0 0
    %6922 = vmatpush1.bf16.msra.mxu0 0
    %6923 = vmatprep.subr.bf16.mxu0 0
    %6924 = vmatpush1.bf16.msra.mxu0 0
    %6925 = vmatprep.subr.bf16.mxu0 0
    %6926 = vmatpush1.bf16.msra.mxu0 0
    %6927 = vmatprep.subr.bf16.mxu0 0
    %6928 = vmatpush1.bf16.msra.mxu0 0
    %6929 = vmatprep.subr.bf16.mxu0 0
    %6930 = vmatpush1.bf16.msra.mxu0 0
    %6931 = vmatprep.subr.bf16.mxu0 0
    %6932 = vmatpush1.bf16.msra.mxu0 0
    %6933 = vmatprep.subr.bf16.mxu0 0
    %6934 = vmatpush1.bf16.msra.mxu0 0
    %6935 = vmatprep.mubr.bf16.mxu0 0
    %6936 = vmatmul.mubr.bf16.gmra.mrb[0].mxu0 %v6902
    %v6937 = vpop.f32.mrb[0].mxu0
    %v6938 = vadd.f32 0.0, %v6937
    %v6939 = vpop.f32.mrb[0].mxu0
    %v6940 = vadd.f32 0.0, %v6939
    %v6941 = vpop.f32.mrb[0].mxu0
    %v6942 = vpop.f32.mrb[0].mxu0
    %6943 = vdwg.mxu0
    %6944 = vmatprep.subr.bf16.mxu0 %v6152
    %6945 = vmatpush1.bf16.msra.mxu0 %v6151
    %6946 = vmatprep.subr.bf16.mxu0 %v6156
    %6947 = vmatpush1.bf16.msra.mxu0 %v6155
    %6948 = vmatprep.subr.bf16.mxu0 %v6160
    %6949 = vmatpush1.bf16.msra.mxu0 %v6159
    %6950 = vmatprep.subr.bf16.mxu0 %v6164
    %6951 = vmatpush1.bf16.msra.mxu0 %v6163
    %6952 = vmatprep.subr.bf16.mxu0 %v6168
    %6953 = vmatpush1.bf16.msra.mxu0 %v6167
    %6954 = vmatprep.subr.bf16.mxu0 %v6172
    %6955 = vmatpush1.bf16.msra.mxu0 %v6171
    %6956 = vmatprep.subr.bf16.mxu0 %v6176
    %6957 = vmatpush1.bf16.msra.mxu0 %v6175
    %6958 = vmatprep.subr.bf16.mxu0 %v6180
    %6959 = vmatpush1.bf16.msra.mxu0 %v6179
    %6960 = vmatprep.subr.bf16.mxu0 0
    %6961 = vmatpush1.bf16.msra.mxu0 0
    %6962 = vmatprep.subr.bf16.mxu0 0
    %6963 = vmatpush1.bf16.msra.mxu0 0
    %6964 = vmatprep.subr.bf16.mxu0 0
    %6965 = vmatpush1.bf16.msra.mxu0 0
    %6966 = vmatprep.subr.bf16.mxu0 0
    %6967 = vmatpush1.bf16.msra.mxu0 0
    %6968 = vmatprep.subr.bf16.mxu0 0
    %6969 = vmatpush1.bf16.msra.mxu0 0
    %6970 = vmatprep.subr.bf16.mxu0 0
    %6971 = vmatpush1.bf16.msra.mxu0 0
    %6972 = vmatprep.subr.bf16.mxu0 0
    %6973 = vmatpush1.bf16.msra.mxu0 0
    %6974 = vmatprep.subr.bf16.mxu0 0
    %6975 = vmatpush1.bf16.msra.mxu0 0
    %6976 = vmatprep.mubr.bf16.mxu0 0
    %6977 = vmatmul.mubr.bf16.gmra.mrb[0].mxu0 %v6902
    %v6978 = vpop.f32.mrb[0].mxu0
    %v6979 = vadd.f32 0.0, %v6978
    %v6980 = vpop.f32.mrb[0].mxu0
    %v6981 = vadd.f32 0.0, %v6980
    %v6982 = vpop.f32.mrb[0].mxu0
    %v6983 = vpop.f32.mrb[0].mxu0
    %6984 = vdwg.mxu0
    %v6985 = vadd.f32 %v6898, %v6938
    %v6986 = vadd.f32 %v6899, %v6940
    %v6987 = vadd.f32 %v6900, %v6979
    %v6988 = vadd.f32 %v6901, %v6981
    %v6989 = vxor.u32 %v6985, 2147483648
    %v6990 = vxor.u32 %v6986, 2147483648
    %v6991 = vxor.u32 %v6987, 2147483648
    %v6992 = vmul.f32 %v6989, 1.442695
    %v6993 = vpow.pop %v6992
    %v6994 = vmul.f32 %v6990, 1.442695
    %v6995 = vpow.pop %v6994
    %v6996 = vmul.f32 %v6991, 1.442695
    %v6997 = vpow.pop %v6996
    %v6998 = vadd.f32 %v6993, 1.0
    %v6999 = vadd.f32 %v6995, 1.0
    %v7000 = vadd.f32 %v6997, 1.0
    %v7001 = vrcp.pop %v6998
    %v7002 = vmul.f32 1.0, %v7001
    %v7003 = vrcp.pop %v6999
    %v7004 = vmul.f32 1.0, %v7003
    %v7005 = vrcp.pop %v7000
    %v7006 = vmul.f32 1.0, %v7005
    %v7007 = vtanh.pop %v6988
    %v7008 = vmul.f32 %v7004, %v6895
    %v7009 = vmul.f32 %v7002, %v7007
    %v7010 = vadd.f32 %v7008, %v7009
    %v7011 = vtanh.pop %v7010
    %v7012 = vmul.f32 %v7006, %v7011
    %v7013 = vld [vmem:[%s2683] sm:$0xff]
    %v7014 = vld [vmem:[%s2683 + $0x8] sm:$0xff]
    %v7015 = vld [vmem:[%s2683 + $0x10] sm:$0xff]
    %v7016 = vld [vmem:[%s2683 + $0x18] sm:$0xff]
    %v7017 = vpack.c.bf16 %v7012, %v7012
    %7018 = vmatprep.subr.bf16.mxu0 %v6150
    %7019 = vmatpush1.bf16.msra.mxu0 %v6149
    %7020 = vmatprep.subr.bf16.mxu0 %v6154
    %7021 = vmatpush1.bf16.msra.mxu0 %v6153
    %7022 = vmatprep.subr.bf16.mxu0 %v6158
    %7023 = vmatpush1.bf16.msra.mxu0 %v6157
    %7024 = vmatprep.subr.bf16.mxu0 %v6162
    %7025 = vmatpush1.bf16.msra.mxu0 %v6161
    %7026 = vmatprep.subr.bf16.mxu0 %v6166
    %7027 = vmatpush1.bf16.msra.mxu0 %v6165
    %7028 = vmatprep.subr.bf16.mxu0 %v6170
    %7029 = vmatpush1.bf16.msra.mxu0 %v6169
    %7030 = vmatprep.subr.bf16.mxu0 %v6174
    %7031 = vmatpush1.bf16.msra.mxu0 %v6173
    %7032 = vmatprep.subr.bf16.mxu0 %v6178
    %7033 = vmatpush1.bf16.msra.mxu0 %v6177
    %7034 = vmatprep.subr.bf16.mxu0 0
    %7035 = vmatpush1.bf16.msra.mxu0 0
    %7036 = vmatprep.subr.bf16.mxu0 0
    %7037 = vmatpush1.bf16.msra.mxu0 0
    %7038 = vmatprep.subr.bf16.mxu0 0
    %7039 = vmatpush1.bf16.msra.mxu0 0
    %7040 = vmatprep.subr.bf16.mxu0 0
    %7041 = vmatpush1.bf16.msra.mxu0 0
    %7042 = vmatprep.subr.bf16.mxu0 0
    %7043 = vmatpush1.bf16.msra.mxu0 0
    %7044 = vmatprep.subr.bf16.mxu0 0
    %7045 = vmatpush1.bf16.msra.mxu0 0
    %7046 = vmatprep.subr.bf16.mxu0 0
    %7047 = vmatpush1.bf16.msra.mxu0 0
    %7048 = vmatprep.subr.bf16.mxu0 0
    %7049 = vmatpush1.bf16.msra.mxu0 0
    %7050 = vmatprep.mubr.bf16.mxu0 0
    %7051 = vmatmul.mubr.bf16.gmra.mrb[0].mxu0 %v7017
    %v7052 = vpop.f32.mrb[0].mxu0
    %v7053 = vadd.f32 0.0, %v7052
    %v7054 = vpop.f32.mrb[0].mxu0
    %v7055 = vadd.f32 0.0, %v7054
    %v7056 = vpop.f32.mrb[0].mxu0
    %v7057 = vpop.f32.mrb[0].mxu0
    %7058 = vdwg.mxu0
    %7059 = vmatprep.subr.bf16.mxu0 %v6152
    %7060 = vmatpush1.bf16.msra.mxu0 %v6151
    %7061 = vmatprep.subr.bf16.mxu0 %v6156
    %7062 = vmatpush1.bf16.msra.mxu0 %v6155
    %7063 = vmatprep.subr.bf16.mxu0 %v6160
    %7064 = vmatpush1.bf16.msra.mxu0 %v6159
    %7065 = vmatprep.subr.bf16.mxu0 %v6164
    %7066 = vmatpush1.bf16.msra.mxu0 %v6163
    %7067 = vmatprep.subr.bf16.mxu0 %v6168
    %7068 = vmatpush1.bf16.msra.mxu0 %v6167
    %7069 = vmatprep.subr.bf16.mxu0 %v6172
    %7070 = vmatpush1.bf16.msra.mxu0 %v6171
    %7071 = vmatprep.subr.bf16.mxu0 %v6176
    %7072 = vmatpush1.bf16.msra.mxu0 %v6175
    %7073 = vmatprep.subr.bf16.mxu0 %v6180
    %7074 = vmatpush1.bf16.msra.mxu0 %v6179
    %7075 = vmatprep.subr.bf16.mxu0 0
    %7076 = vmatpush1.bf16.msra.mxu0 0
    %7077 = vmatprep.subr.bf16.mxu0 0
    %7078 = vmatpush1.bf16.msra.mxu0 0
    %7079 = vmatprep.subr.bf16.mxu0 0
    %7080 = vmatpush1.bf16.msra.mxu0 0
    %7081 = vmatprep.subr.bf16.mxu0 0
    %7082 = vmatpush1.bf16.msra.mxu0 0
    %7083 = vmatprep.subr.bf16.mxu0 0
    %7084 = vmatpush1.bf16.msra.mxu0 0
    %7085 = vmatprep.subr.bf16.mxu0 0
    %7086 = vmatpush1.bf16.msra.mxu0 0
    %7087 = vmatprep.subr.bf16.mxu0 0
    %7088 = vmatpush1.bf16.msra.mxu0 0
    %7089 = vmatprep.subr.bf16.mxu0 0
    %7090 = vmatpush1.bf16.msra.mxu0 0
    %7091 = vmatprep.mubr.bf16.mxu0 0
    %7092 = vmatmul.mubr.bf16.gmra.mrb[0].mxu0 %v7017
    %v7093 = vpop.f32.mrb[0].mxu0
    %v7094 = vadd.f32 0.0, %v7093
    %v7095 = vpop.f32.mrb[0].mxu0
    %v7096 = vadd.f32 0.0, %v7095
    %v7097 = vpop.f32.mrb[0].mxu0
    %v7098 = vpop.f32.mrb[0].mxu0
    %7099 = vdwg.mxu0
    %v7100 = vadd.f32 %v7013, %v7053
    %v7101 = vadd.f32 %v7014, %v7055
    %v7102 = vadd.f32 %v7015, %v7094
    %v7103 = vadd.f32 %v7016, %v7096
    %v7104 = vxor.u32 %v7100, 2147483648
    %v7105 = vxor.u32 %v7101, 2147483648
    %v7106 = vxor.u32 %v7102, 2147483648
    %v7107 = vmul.f32 %v7104, 1.442695
    %v7108 = vpow.pop %v7107
    %v7109 = vmul.f32 %v7105, 1.442695
    %v7110 = vpow.pop %v7109
    %v7111 = vmul.f32 %v7106, 1.442695
    %v7112 = vpow.pop %v7111
    %v7113 = vadd.f32 %v7108, 1.0
    %v7114 = vadd.f32 %v7110, 1.0
    %v7115 = vadd.f32 %v7112, 1.0
    %v7116 = vrcp.pop %v7113
    %v7117 = vmul.f32 1.0, %v7116
    %v7118 = vrcp.pop %v7114
    %v7119 = vmul.f32 1.0, %v7118
    %v7120 = vrcp.pop %v7115
    %v7121 = vmul.f32 1.0, %v7120
    %v7122 = vtanh.pop %v7103
    %v7123 = vmul.f32 %v7119, %v7010
    %v7124 = vmul.f32 %v7117, %v7122
    %v7125 = vadd.f32 %v7123, %v7124
    %v7126 = vtanh.pop %v7125
    %v7127 = vmul.f32 %v7121, %v7126
    %v7128 = vld [vmem:[%s2995] sm:$0xff]
    %v7129 = vld [vmem:[%s2995 + $0x8] sm:$0xff]
    %v7130 = vld [vmem:[%s2995 + $0x10] sm:$0xff]
    %v7131 = vld [vmem:[%s2995 + $0x18] sm:$0xff]
    %v7132 = vpack.c.bf16 %v7127, %v7127
    %7133 = vmatprep.subr.bf16.mxu0 %v6150
    %7134 = vmatpush1.bf16.msra.mxu0 %v6149
    %7135 = vmatprep.subr.bf16.mxu0 %v6154
    %7136 = vmatpush1.bf16.msra.mxu0 %v6153
    %7137 = vmatprep.subr.bf16.mxu0 %v6158
    %7138 = vmatpush1.bf16.msra.mxu0 %v6157
    %7139 = vmatprep.subr.bf16.mxu0 %v6162
    %7140 = vmatpush1.bf16.msra.mxu0 %v6161
    %7141 = vmatprep.subr.bf16.mxu0 %v6166
    %7142 = vmatpush1.bf16.msra.mxu0 %v6165
    %7143 = vmatprep.subr.bf16.mxu0 %v6170
    %7144 = vmatpush1.bf16.msra.mxu0 %v6169
    %7145 = vmatprep.subr.bf16.mxu0 %v6174
    %7146 = vmatpush1.bf16.msra.mxu0 %v6173
    %7147 = vmatprep.subr.bf16.mxu0 %v6178
    %7148 = vmatpush1.bf16.msra.mxu0 %v6177
    %7149 = vmatprep.subr.bf16.mxu0 0
    %7150 = vmatpush1.bf16.msra.mxu0 0
    %7151 = vmatprep.subr.bf16.mxu0 0
    %7152 = vmatpush1.bf16.msra.mxu0 0
    %7153 = vmatprep.subr.bf16.mxu0 0
    %7154 = vmatpush1.bf16.msra.mxu0 0
    %7155 = vmatprep.subr.bf16.mxu0 0
    %7156 = vmatpush1.bf16.msra.mxu0 0
    %7157 = vmatprep.subr.bf16.mxu0 0
    %7158 = vmatpush1.bf16.msra.mxu0 0
    %7159 = vmatprep.subr.bf16.mxu0 0
    %7160 = vmatpush1.bf16.msra.mxu0 0
    %7161 = vmatprep.subr.bf16.mxu0 0
    %7162 = vmatpush1.bf16.msra.mxu0 0
    %7163 = vmatprep.subr.bf16.mxu0 0
    %7164 = vmatpush1.bf16.msra.mxu0 0
    %7165 = vmatprep.mubr.bf16.mxu0 0
    %7166 = vmatmul.mubr.bf16.gmra.mrb[0].mxu0 %v7132
    %v7167 = vpop.f32.mrb[0].mxu0
    %v7168 = vadd.f32 0.0, %v7167
    %v7169 = vpop.f32.mrb[0].mxu0
    %v7170 = vadd.f32 0.0, %v7169
    %v7171 = vpop.f32.mrb[0].mxu0
    %v7172 = vpop.f32.mrb[0].mxu0
    %7173 = vdwg.mxu0
    %7174 = vmatprep.subr.bf16.mxu0 %v6152
    %7175 = vmatpush1.bf16.msra.mxu0 %v6151
    %7176 = vmatprep.subr.bf16.mxu0 %v6156
    %7177 = vmatpush1.bf16.msra.mxu0 %v6155
    %7178 = vmatprep.subr.bf16.mxu0 %v6160
    %7179 = vmatpush1.bf16.msra.mxu0 %v6159
    %7180 = vmatprep.subr.bf16.mxu0 %v6164
    %7181 = vmatpush1.bf16.msra.mxu0 %v6163
    %7182 = vmatprep.subr.bf16.mxu0 %v6168
    %7183 = vmatpush1.bf16.msra.mxu0 %v6167
    %7184 = vmatprep.subr.bf16.mxu0 %v6172
    %7185 = vmatpush1.bf16.msra.mxu0 %v6171
    %7186 = vmatprep.subr.bf16.mxu0 %v6176
    %7187 = vmatpush1.bf16.msra.mxu0 %v6175
    %7188 = vmatprep.subr.bf16.mxu0 %v6180
    %7189 = vmatpush1.bf16.msra.mxu0 %v6179
    %7190 = vmatprep.subr.bf16.mxu0 0
    %7191 = vmatpush1.bf16.msra.mxu0 0
    %7192 = vmatprep.subr.bf16.mxu0 0
    %7193 = vmatpush1.bf16.msra.mxu0 0
    %7194 = vmatprep.subr.bf16.mxu0 0
    %7195 = vmatpush1.bf16.msra.mxu0 0
    %7196 = vmatprep.subr.bf16.mxu0 0
    %7197 = vmatpush1.bf16.msra.mxu0 0
    %7198 = vmatprep.subr.bf16.mxu0 0
    %7199 = vmatpush1.bf16.msra.mxu0 0
    %7200 = vmatprep.subr.bf16.mxu0 0
    %7201 = vmatpush1.bf16.msra.mxu0 0
    %7202 = vmatprep.subr.bf16.mxu0 0
    %7203 = vmatpush1.bf16.msra.mxu0 0
    %7204 = vmatprep.subr.bf16.mxu0 0
    %7205 = vmatpush1.bf16.msra.mxu0 0
    %7206 = vmatprep.mubr.bf16.mxu0 0
    %7207 = vmatmul.mubr.bf16.gmra.mrb[0].mxu0 %v7132
    %v7208 = vpop.f32.mrb[0].mxu0
    %v7209 = vadd.f32 0.0, %v7208
    %v7210 = vpop.f32.mrb[0].mxu0
    %v7211 = vadd.f32 0.0, %v7210
    %v7212 = vpop.f32.mrb[0].mxu0
    %v7213 = vpop.f32.mrb[0].mxu0
    %7214 = vdwg.mxu0
    %v7215 = vadd.f32 %v7128, %v7168
    %v7216 = vadd.f32 %v7129, %v7170
    %v7217 = vadd.f32 %v7130, %v7209
    %v7218 = vadd.f32 %v7131, %v7211
    %v7219 = vxor.u32 %v7215, 2147483648
    %v7220 = vxor.u32 %v7216, 2147483648
    %v7221 = vxor.u32 %v7217, 2147483648
    %v7222 = vmul.f32 %v7219, 1.442695
    %v7223 = vpow.pop %v7222
    %v7224 = vmul.f32 %v7220, 1.442695
    %v7225 = vpow.pop %v7224
    %v7226 = vmul.f32 %v7221, 1.442695
    %v7227 = vpow.pop %v7226
    %v7228 = vadd.f32 %v7223, 1.0
    %v7229 = vadd.f32 %v7225, 1.0
    %v7230 = vadd.f32 %v7227, 1.0
    %v7231 = vrcp.pop %v7228
    %v7232 = vmul.f32 1.0, %v7231
    %v7233 = vrcp.pop %v7229
    %v7234 = vmul.f32 1.0, %v7233
    %v7235 = vrcp.pop %v7230
    %v7236 = vmul.f32 1.0, %v7235
    %v7237 = vtanh.pop %v7218
    %v7238 = vmul.f32 %v7234, %v7125
    %v7239 = vmul.f32 %v7232, %v7237
    %v7240 = vadd.f32 %v7238, %v7239
    %v7241 = vtanh.pop %v7240
    %v7242 = vmul.f32 %v7236, %v7241
    %v7243 = vld [vmem:[%s3307] sm:$0xff]
    %v7244 = vld [vmem:[%s3307 + $0x8] sm:$0xff]
    %v7245 = vld [vmem:[%s3307 + $0x10] sm:$0xff]
    %v7246 = vld [vmem:[%s3307 + $0x18] sm:$0xff]
    %v7247 = vpack.c.bf16 %v7242, %v7242
    %7248 = vmatprep.subr.bf16.mxu0 %v6150
    %7249 = vmatpush1.bf16.msra.mxu0 %v6149
    %7250 = vmatprep.subr.bf16.mxu0 %v6154
    %7251 = vmatpush1.bf16.msra.mxu0 %v6153
    %7252 = vmatprep.subr.bf16.mxu0 %v6158
    %7253 = vmatpush1.bf16.msra.mxu0 %v6157
    %7254 = vmatprep.subr.bf16.mxu0 %v6162
    %7255 = vmatpush1.bf16.msra.mxu0 %v6161
    %7256 = vmatprep.subr.bf16.mxu0 %v6166
    %7257 = vmatpush1.bf16.msra.mxu0 %v6165
    %7258 = vmatprep.subr.bf16.mxu0 %v6170
    %7259 = vmatpush1.bf16.msra.mxu0 %v6169
    %7260 = vmatprep.subr.bf16.mxu0 %v6174
    %7261 = vmatpush1.bf16.msra.mxu0 %v6173
    %7262 = vmatprep.subr.bf16.mxu0 %v6178
    %7263 = vmatpush1.bf16.msra.mxu0 %v6177
    %7264 = vmatprep.subr.bf16.mxu0 0
    %7265 = vmatpush1.bf16.msra.mxu0 0
    %7266 = vmatprep.subr.bf16.mxu0 0
    %7267 = vmatpush1.bf16.msra.mxu0 0
    %7268 = vmatprep.subr.bf16.mxu0 0
    %7269 = vmatpush1.bf16.msra.mxu0 0
    %7270 = vmatprep.subr.bf16.mxu0 0
    %7271 = vmatpush1.bf16.msra.mxu0 0
    %7272 = vmatprep.subr.bf16.mxu0 0
    %7273 = vmatpush1.bf16.msra.mxu0 0
    %7274 = vmatprep.subr.bf16.mxu0 0
    %7275 = vmatpush1.bf16.msra.mxu0 0
    %7276 = vmatprep.subr.bf16.mxu0 0
    %7277 = vmatpush1.bf16.msra.mxu0 0
    %7278 = vmatprep.subr.bf16.mxu0 0
    %7279 = vmatpush1.bf16.msra.mxu0 0
    %7280 = vmatprep.mubr.bf16.mxu0 0
    %7281 = vmatmul.mubr.bf16.gmra.mrb[0].mxu0 %v7247
    %v7282 = vpop.f32.mrb[0].mxu0
    %v7283 = vadd.f32 0.0, %v7282
    %v7284 = vpop.f32.mrb[0].mxu0
    %v7285 = vadd.f32 0.0, %v7284
    %v7286 = vpop.f32.mrb[0].mxu0
    %v7287 = vpop.f32.mrb[0].mxu0
    %7288 = vdwg.mxu0
    %7289 = vmatprep.subr.bf16.mxu0 %v6152
    %7290 = vmatpush1.bf16.msra.mxu0 %v6151
    %7291 = vmatprep.subr.bf16.mxu0 %v6156
    %7292 = vmatpush1.bf16.msra.mxu0 %v6155
    %7293 = vmatprep.subr.bf16.mxu0 %v6160
    %7294 = vmatpush1.bf16.msra.mxu0 %v6159
    %7295 = vmatprep.subr.bf16.mxu0 %v6164
    %7296 = vmatpush1.bf16.msra.mxu0 %v6163
    %7297 = vmatprep.subr.bf16.mxu0 %v6168
    %7298 = vmatpush1.bf16.msra.mxu0 %v6167
    %7299 = vmatprep.subr.bf16.mxu0 %v6172
    %7300 = vmatpush1.bf16.msra.mxu0 %v6171
    %7301 = vmatprep.subr.bf16.mxu0 %v6176
    %7302 = vmatpush1.bf16.msra.mxu0 %v6175
    %7303 = vmatprep.subr.bf16.mxu0 %v6180
    %7304 = vmatpush1.bf16.msra.mxu0 %v6179
    %7305 = vmatprep.subr.bf16.mxu0 0
    %7306 = vmatpush1.bf16.msra.mxu0 0
    %7307 = vmatprep.subr.bf16.mxu0 0
    %7308 = vmatpush1.bf16.msra.mxu0 0
    %7309 = vmatprep.subr.bf16.mxu0 0
    %7310 = vmatpush1.bf16.msra.mxu0 0
    %7311 = vmatprep.subr.bf16.mxu0 0
    %7312 = vmatpush1.bf16.msra.mxu0 0
    %7313 = vmatprep.subr.bf16.mxu0 0
    %7314 = vmatpush1.bf16.msra.mxu0 0
    %7315 = vmatprep.subr.bf16.mxu0 0
    %7316 = vmatpush1.bf16.msra.mxu0 0
    %7317 = vmatprep.subr.bf16.mxu0 0
    %7318 = vmatpush1.bf16.msra.mxu0 0
    %7319 = vmatprep.subr.bf16.mxu0 0
    %7320 = vmatpush1.bf16.msra.mxu0 0
    %7321 = vmatprep.mubr.bf16.mxu0 0
    %7322 = vmatmul.mubr.bf16.gmra.mrb[0].mxu0 %v7247
    %v7323 = vpop.f32.mrb[0].mxu0
    %v7324 = vadd.f32 0.0, %v7323
    %v7325 = vpop.f32.mrb[0].mxu0
    %v7326 = vadd.f32 0.0, %v7325
    %v7327 = vpop.f32.mrb[0].mxu0
    %v7328 = vpop.f32.mrb[0].mxu0
    %7329 = vdwg.mxu0
    %v7330 = vadd.f32 %v7243, %v7283
    %v7331 = vadd.f32 %v7244, %v7285
    %v7332 = vadd.f32 %v7245, %v7324
    %v7333 = vadd.f32 %v7246, %v7326
    %v7334 = vxor.u32 %v7330, 2147483648
    %v7335 = vxor.u32 %v7331, 2147483648
    %v7336 = vxor.u32 %v7332, 2147483648
    %v7337 = vmul.f32 %v7334, 1.442695
    %v7338 = vpow.pop %v7337
    %v7339 = vmul.f32 %v7335, 1.442695
    %v7340 = vpow.pop %v7339
    %v7341 = vmul.f32 %v7336, 1.442695
    %v7342 = vpow.pop %v7341
    %v7343 = vadd.f32 %v7338, 1.0
    %v7344 = vadd.f32 %v7340, 1.0
    %v7345 = vadd.f32 %v7342, 1.0
    %v7346 = vrcp.pop %v7343
    %v7347 = vmul.f32 1.0, %v7346
    %v7348 = vrcp.pop %v7344
    %v7349 = vmul.f32 1.0, %v7348
    %v7350 = vrcp.pop %v7345
    %v7351 = vmul.f32 1.0, %v7350
    %v7352 = vtanh.pop %v7333
    %v7353 = vmul.f32 %v7349, %v7240
    %v7354 = vmul.f32 %v7347, %v7352
    %v7355 = vadd.f32 %v7353, %v7354
    %v7356 = vtanh.pop %v7355
    %v7357 = vmul.f32 %v7351, %v7356
    %v7358 = vld [vmem:[%s3619] sm:$0xff]
    %v7359 = vld [vmem:[%s3619 + $0x8] sm:$0xff]
    %v7360 = vld [vmem:[%s3619 + $0x10] sm:$0xff]
    %v7361 = vld [vmem:[%s3619 + $0x18] sm:$0xff]
    %v7362 = vpack.c.bf16 %v7357, %v7357
    %7363 = vmatprep.subr.bf16.mxu0 %v6150
    %7364 = vmatpush1.bf16.msra.mxu0 %v6149
    %7365 = vmatprep.subr.bf16.mxu0 %v6154
    %7366 = vmatpush1.bf16.msra.mxu0 %v6153
    %7367 = vmatprep.subr.bf16.mxu0 %v6158
    %7368 = vmatpush1.bf16.msra.mxu0 %v6157
    %7369 = vmatprep.subr.bf16.mxu0 %v6162
    %7370 = vmatpush1.bf16.msra.mxu0 %v6161
    %7371 = vmatprep.subr.bf16.mxu0 %v6166
    %7372 = vmatpush1.bf16.msra.mxu0 %v6165
    %7373 = vmatprep.subr.bf16.mxu0 %v6170
    %7374 = vmatpush1.bf16.msra.mxu0 %v6169
    %7375 = vmatprep.subr.bf16.mxu0 %v6174
    %7376 = vmatpush1.bf16.msra.mxu0 %v6173
    %7377 = vmatprep.subr.bf16.mxu0 %v6178
    %7378 = vmatpush1.bf16.msra.mxu0 %v6177
    %7379 = vmatprep.subr.bf16.mxu0 0
    %7380 = vmatpush1.bf16.msra.mxu0 0
    %7381 = vmatprep.subr.bf16.mxu0 0
    %7382 = vmatpush1.bf16.msra.mxu0 0
    %7383 = vmatprep.subr.bf16.mxu0 0
    %7384 = vmatpush1.bf16.msra.mxu0 0
    %7385 = vmatprep.subr.bf16.mxu0 0
    %7386 = vmatpush1.bf16.msra.mxu0 0
    %7387 = vmatprep.subr.bf16.mxu0 0
    %7388 = vmatpush1.bf16.msra.mxu0 0
    %7389 = vmatprep.subr.bf16.mxu0 0
    %7390 = vmatpush1.bf16.msra.mxu0 0
    %7391 = vmatprep.subr.bf16.mxu0 0
    %7392 = vmatpush1.bf16.msra.mxu0 0
    %7393 = vmatprep.subr.bf16.mxu0 0
    %7394 = vmatpush1.bf16.msra.mxu0 0
    %7395 = vmatprep.mubr.bf16.mxu0 0
    %7396 = vmatmul.mubr.bf16.gmra.mrb[0].mxu0 %v7362
    %v7397 = vpop.f32.mrb[0].mxu0
    %v7398 = vadd.f32 0.0, %v7397
    %v7399 = vpop.f32.mrb[0].mxu0
    %v7400 = vadd.f32 0.0, %v7399
    %v7401 = vpop.f32.mrb[0].mxu0
    %v7402 = vpop.f32.mrb[0].mxu0
    %7403 = vdwg.mxu0
    %7404 = vmatprep.subr.bf16.mxu0 %v6152
    %7405 = vmatpush1.bf16.msra.mxu0 %v6151
    %7406 = vmatprep.subr.bf16.mxu0 %v6156
    %7407 = vmatpush1.bf16.msra.mxu0 %v6155
    %7408 = vmatprep.subr.bf16.mxu0 %v6160
    %7409 = vmatpush1.bf16.msra.mxu0 %v6159
    %7410 = vmatprep.subr.bf16.mxu0 %v6164
    %7411 = vmatpush1.bf16.msra.mxu0 %v6163
    %7412 = vmatprep.subr.bf16.mxu0 %v6168
    %7413 = vmatpush1.bf16.msra.mxu0 %v6167
    %7414 = vmatprep.subr.bf16.mxu0 %v6172
    %7415 = vmatpush1.bf16.msra.mxu0 %v6171
    %7416 = vmatprep.subr.bf16.mxu0 %v6176
    %7417 = vmatpush1.bf16.msra.mxu0 %v6175
    %7418 = vmatprep.subr.bf16.mxu0 %v6180
    %7419 = vmatpush1.bf16.msra.mxu0 %v6179
    %7420 = vmatprep.subr.bf16.mxu0 0
    %7421 = vmatpush1.bf16.msra.mxu0 0
    %7422 = vmatprep.subr.bf16.mxu0 0
    %7423 = vmatpush1.bf16.msra.mxu0 0
    %7424 = vmatprep.subr.bf16.mxu0 0
    %7425 = vmatpush1.bf16.msra.mxu0 0
    %7426 = vmatprep.subr.bf16.mxu0 0
    %7427 = vmatpush1.bf16.msra.mxu0 0
    %7428 = vmatprep.subr.bf16.mxu0 0
    %7429 = vmatpush1.bf16.msra.mxu0 0
    %7430 = vmatprep.subr.bf16.mxu0 0
    %7431 = vmatpush1.bf16.msra.mxu0 0
    %7432 = vmatprep.subr.bf16.mxu0 0
    %7433 = vmatpush1.bf16.msra.mxu0 0
    %7434 = vmatprep.subr.bf16.mxu0 0
    %7435 = vmatpush1.bf16.msra.mxu0 0
    %7436 = vmatprep.mubr.bf16.mxu0 0
    %7437 = vmatmul.mubr.bf16.gmra.mrb[0].mxu0 %v7362
    %v7438 = vpop.f32.mrb[0].mxu0
    %v7439 = vadd.f32 0.0, %v7438
    %v7440 = vpop.f32.mrb[0].mxu0
    %v7441 = vadd.f32 0.0, %v7440
    %v7442 = vpop.f32.mrb[0].mxu0
    %v7443 = vpop.f32.mrb[0].mxu0
    %7444 = vdwg.mxu0
    %v7445 = vadd.f32 %v7358, %v7398
    %v7446 = vadd.f32 %v7359, %v7400
    %v7447 = vadd.f32 %v7360, %v7439
    %v7448 = vadd.f32 %v7361, %v7441
    %v7449 = vxor.u32 %v7445, 2147483648
    %v7450 = vxor.u32 %v7446, 2147483648
    %v7451 = vxor.u32 %v7447, 2147483648
    %v7452 = vmul.f32 %v7449, 1.442695
    %v7453 = vpow.pop %v7452
    %v7454 = vmul.f32 %v7450, 1.442695
    %v7455 = vpow.pop %v7454
    %v7456 = vmul.f32 %v7451, 1.442695
    %v7457 = vpow.pop %v7456
    %v7458 = vadd.f32 %v7453, 1.0
    %v7459 = vadd.f32 %v7455, 1.0
    %v7460 = vadd.f32 %v7457, 1.0
    %v7461 = vrcp.pop %v7458
    %v7462 = vmul.f32 1.0, %v7461
    %v7463 = vrcp.pop %v7459
    %v7464 = vmul.f32 1.0, %v7463
    %v7465 = vrcp.pop %v7460
    %v7466 = vmul.f32 1.0, %v7465
    %v7467 = vtanh.pop %v7448
    %v7468 = vmul.f32 %v7464, %v7355
    %v7469 = vmul.f32 %v7462, %v7467
    %v7470 = vadd.f32 %v7468, %v7469
    %v7471 = vtanh.pop %v7470
    %v7472 = vmul.f32 %v7466, %v7471
    %v7473 = vld [vmem:[%s3931] sm:$0xff]
    %v7474 = vld [vmem:[%s3931 + $0x8] sm:$0xff]
    %v7475 = vld [vmem:[%s3931 + $0x10] sm:$0xff]
    %v7476 = vld [vmem:[%s3931 + $0x18] sm:$0xff]
    %v7477 = vpack.c.bf16 %v7472, %v7472
    %7478 = vmatprep.subr.bf16.mxu0 %v6150
    %7479 = vmatpush1.bf16.msra.mxu0 %v6149
    %7480 = vmatprep.subr.bf16.mxu0 %v6154
    %7481 = vmatpush1.bf16.msra.mxu0 %v6153
    %7482 = vmatprep.subr.bf16.mxu0 %v6158
    %7483 = vmatpush1.bf16.msra.mxu0 %v6157
    %7484 = vmatprep.subr.bf16.mxu0 %v6162
    %7485 = vmatpush1.bf16.msra.mxu0 %v6161
    %7486 = vmatprep.subr.bf16.mxu0 %v6166
    %7487 = vmatpush1.bf16.msra.mxu0 %v6165
    %7488 = vmatprep.subr.bf16.mxu0 %v6170
    %7489 = vmatpush1.bf16.msra.mxu0 %v6169
    %7490 = vmatprep.subr.bf16.mxu0 %v6174
    %7491 = vmatpush1.bf16.msra.mxu0 %v6173
    %7492 = vmatprep.subr.bf16.mxu0 %v6178
    %7493 = vmatpush1.bf16.msra.mxu0 %v6177
    %7494 = vmatprep.subr.bf16.mxu0 0
    %7495 = vmatpush1.bf16.msra.mxu0 0
    %7496 = vmatprep.subr.bf16.mxu0 0
    %7497 = vmatpush1.bf16.msra.mxu0 0
    %7498 = vmatprep.subr.bf16.mxu0 0
    %7499 = vmatpush1.bf16.msra.mxu0 0
    %7500 = vmatprep.subr.bf16.mxu0 0
    %7501 = vmatpush1.bf16.msra.mxu0 0
    %7502 = vmatprep.subr.bf16.mxu0 0
    %7503 = vmatpush1.bf16.msra.mxu0 0
    %7504 = vmatprep.subr.bf16.mxu0 0
    %7505 = vmatpush1.bf16.msra.mxu0 0
    %7506 = vmatprep.subr.bf16.mxu0 0
    %7507 = vmatpush1.bf16.msra.mxu0 0
    %7508 = vmatprep.subr.bf16.mxu0 0
    %7509 = vmatpush1.bf16.msra.mxu0 0
    %7510 = vmatprep.mubr.bf16.mxu0 0
    %7511 = vmatmul.mubr.bf16.gmra.mrb[0].mxu0 %v7477
    %v7512 = vpop.f32.mrb[0].mxu0
    %v7513 = vadd.f32 0.0, %v7512
    %v7514 = vpop.f32.mrb[0].mxu0
    %v7515 = vadd.f32 0.0, %v7514
    %v7516 = vpop.f32.mrb[0].mxu0
    %v7517 = vpop.f32.mrb[0].mxu0
    %7518 = vdwg.mxu0
    %7519 = vmatprep.subr.bf16.mxu0 %v6152
    %7520 = vmatpush1.bf16.msra.mxu0 %v6151
    %7521 = vmatprep.subr.bf16.mxu0 %v6156
    %7522 = vmatpush1.bf16.msra.mxu0 %v6155
    %7523 = vmatprep.subr.bf16.mxu0 %v6160
    %7524 = vmatpush1.bf16.msra.mxu0 %v6159
    %7525 = vmatprep.subr.bf16.mxu0 %v6164
    %7526 = vmatpush1.bf16.msra.mxu0 %v6163
    %7527 = vmatprep.subr.bf16.mxu0 %v6168
    %7528 = vmatpush1.bf16.msra.mxu0 %v6167
    %7529 = vmatprep.subr.bf16.mxu0 %v6172
    %7530 = vmatpush1.bf16.msra.mxu0 %v6171
    %7531 = vmatprep.subr.bf16.mxu0 %v6176
    %7532 = vmatpush1.bf16.msra.mxu0 %v6175
    %7533 = vmatprep.subr.bf16.mxu0 %v6180
    %7534 = vmatpush1.bf16.msra.mxu0 %v6179
    %7535 = vmatprep.subr.bf16.mxu0 0
    %7536 = vmatpush1.bf16.msra.mxu0 0
    %7537 = vmatprep.subr.bf16.mxu0 0
    %7538 = vmatpush1.bf16.msra.mxu0 0
    %7539 = vmatprep.subr.bf16.mxu0 0
    %7540 = vmatpush1.bf16.msra.mxu0 0
    %7541 = vmatprep.subr.bf16.mxu0 0
    %7542 = vmatpush1.bf16.msra.mxu0 0
    %7543 = vmatprep.subr.bf16.mxu0 0
    %7544 = vmatpush1.bf16.msra.mxu0 0
    %7545 = vmatprep.subr.bf16.mxu0 0
    %7546 = vmatpush1.bf16.msra.mxu0 0
    %7547 = vmatprep.subr.bf16.mxu0 0
    %7548 = vmatpush1.bf16.msra.mxu0 0
    %7549 = vmatprep.subr.bf16.mxu0 0
    %7550 = vmatpush1.bf16.msra.mxu0 0
    %7551 = vmatprep.mubr.bf16.mxu0 0
    %7552 = vmatmul.mubr.bf16.gmra.mrb[0].mxu0 %v7477
    %v7553 = vpop.f32.mrb[0].mxu0
    %v7554 = vadd.f32 0.0, %v7553
    %v7555 = vpop.f32.mrb[0].mxu0
    %v7556 = vadd.f32 0.0, %v7555
    %v7557 = vpop.f32.mrb[0].mxu0
    %v7558 = vpop.f32.mrb[0].mxu0
    %7559 = vdwg.mxu0
    %v7560 = vadd.f32 %v7473, %v7513
    %v7561 = vadd.f32 %v7474, %v7515
    %v7562 = vadd.f32 %v7475, %v7554
    %v7563 = vadd.f32 %v7476, %v7556
    %v7564 = vxor.u32 %v7560, 2147483648
    %v7565 = vxor.u32 %v7561, 2147483648
    %v7566 = vxor.u32 %v7562, 2147483648
    %v7567 = vmul.f32 %v7564, 1.442695
    %v7568 = vpow.pop %v7567
    %v7569 = vmul.f32 %v7565, 1.442695
    %v7570 = vpow.pop %v7569
    %v7571 = vmul.f32 %v7566, 1.442695
    %v7572 = vpow.pop %v7571
    %v7573 = vadd.f32 %v7568, 1.0
    %v7574 = vadd.f32 %v7570, 1.0
    %v7575 = vadd.f32 %v7572, 1.0
    %v7576 = vrcp.pop %v7573
    %v7577 = vmul.f32 1.0, %v7576
    %v7578 = vrcp.pop %v7574
    %v7579 = vmul.f32 1.0, %v7578
    %v7580 = vrcp.pop %v7575
    %v7581 = vmul.f32 1.0, %v7580
    %v7582 = vtanh.pop %v7563
    %v7583 = vmul.f32 %v7579, %v7470
    %v7584 = vmul.f32 %v7577, %v7582
    %v7585 = vadd.f32 %v7583, %v7584
    %v7586 = vtanh.pop %v7585
    %v7587 = vmul.f32 %v7581, %v7586
    %v7588 = vld [vmem:[%s4243] sm:$0xff]
    %v7589 = vld [vmem:[%s4243 + $0x8] sm:$0xff]
    %v7590 = vld [vmem:[%s4243 + $0x10] sm:$0xff]
    %v7591 = vld [vmem:[%s4243 + $0x18] sm:$0xff]
    %v7592 = vpack.c.bf16 %v7587, %v7587
    %7593 = vmatprep.subr.bf16.mxu0 %v6150
    %7594 = vmatpush1.bf16.msra.mxu0 %v6149
    %7595 = vmatprep.subr.bf16.mxu0 %v6154
    %7596 = vmatpush1.bf16.msra.mxu0 %v6153
    %7597 = vmatprep.subr.bf16.mxu0 %v6158
    %7598 = vmatpush1.bf16.msra.mxu0 %v6157
    %7599 = vmatprep.subr.bf16.mxu0 %v6162
    %7600 = vmatpush1.bf16.msra.mxu0 %v6161
    %7601 = vmatprep.subr.bf16.mxu0 %v6166
    %7602 = vmatpush1.bf16.msra.mxu0 %v6165
    %7603 = vmatprep.subr.bf16.mxu0 %v6170
    %7604 = vmatpush1.bf16.msra.mxu0 %v6169
    %7605 = vmatprep.subr.bf16.mxu0 %v6174
    %7606 = vmatpush1.bf16.msra.mxu0 %v6173
    %7607 = vmatprep.subr.bf16.mxu0 %v6178
    %7608 = vmatpush1.bf16.msra.mxu0 %v6177
    %7609 = vmatprep.subr.bf16.mxu0 0
    %7610 = vmatpush1.bf16.msra.mxu0 0
    %7611 = vmatprep.subr.bf16.mxu0 0
    %7612 = vmatpush1.bf16.msra.mxu0 0
    %7613 = vmatprep.subr.bf16.mxu0 0
    %7614 = vmatpush1.bf16.msra.mxu0 0
    %7615 = vmatprep.subr.bf16.mxu0 0
    %7616 = vmatpush1.bf16.msra.mxu0 0
    %7617 = vmatprep.subr.bf16.mxu0 0
    %7618 = vmatpush1.bf16.msra.mxu0 0
    %7619 = vmatprep.subr.bf16.mxu0 0
    %7620 = vmatpush1.bf16.msra.mxu0 0
    %7621 = vmatprep.subr.bf16.mxu0 0
    %7622 = vmatpush1.bf16.msra.mxu0 0
    %7623 = vmatprep.subr.bf16.mxu0 0
    %7624 = vmatpush1.bf16.msra.mxu0 0
    %7625 = vmatprep.mubr.bf16.mxu0 0
    %7626 = vmatmul.mubr.bf16.gmra.mrb[0].mxu0 %v7592
    %v7627 = vpop.f32.mrb[0].mxu0
    %v7628 = vadd.f32 0.0, %v7627
    %v7629 = vpop.f32.mrb[0].mxu0
    %v7630 = vadd.f32 0.0, %v7629
    %v7631 = vpop.f32.mrb[0].mxu0
    %v7632 = vpop.f32.mrb[0].mxu0
    %7633 = vdwg.mxu0
    %7634 = vmatprep.subr.bf16.mxu0 %v6152
    %7635 = vmatpush1.bf16.msra.mxu0 %v6151
    %7636 = vmatprep.subr.bf16.mxu0 %v6156
    %7637 = vmatpush1.bf16.msra.mxu0 %v6155
    %7638 = vmatprep.subr.bf16.mxu0 %v6160
    %7639 = vmatpush1.bf16.msra.mxu0 %v6159
    %7640 = vmatprep.subr.bf16.mxu0 %v6164
    %7641 = vmatpush1.bf16.msra.mxu0 %v6163
    %7642 = vmatprep.subr.bf16.mxu0 %v6168
    %7643 = vmatpush1.bf16.msra.mxu0 %v6167
    %7644 = vmatprep.subr.bf16.mxu0 %v6172
    %7645 = vmatpush1.bf16.msra.mxu0 %v6171
    %7646 = vmatprep.subr.bf16.mxu0 %v6176
    %7647 = vmatpush1.bf16.msra.mxu0 %v6175
    %7648 = vmatprep.subr.bf16.mxu0 %v6180
    %7649 = vmatpush1.bf16.msra.mxu0 %v6179
    %7650 = vmatprep.subr.bf16.mxu0 0
    %7651 = vmatpush1.bf16.msra.mxu0 0
    %7652 = vmatprep.subr.bf16.mxu0 0
    %7653 = vmatpush1.bf16.msra.mxu0 0
    %7654 = vmatprep.subr.bf16.mxu0 0
    %7655 = vmatpush1.bf16.msra.mxu0 0
    %7656 = vmatprep.subr.bf16.mxu0 0
    %7657 = vmatpush1.bf16.msra.mxu0 0
    %7658 = vmatprep.subr.bf16.mxu0 0
    %7659 = vmatpush1.bf16.msra.mxu0 0
    %7660 = vmatprep.subr.bf16.mxu0 0
    %7661 = vmatpush1.bf16.msra.mxu0 0
    %7662 = vmatprep.subr.bf16.mxu0 0
    %7663 = vmatpush1.bf16.msra.mxu0 0
    %7664 = vmatprep.subr.bf16.mxu0 0
    %7665 = vmatpush1.bf16.msra.mxu0 0
    %7666 = vmatprep.mubr.bf16.mxu0 0
    %7667 = vmatmul.mubr.bf16.gmra.mrb[0].mxu0 %v7592
    %v7668 = vpop.f32.mrb[0].mxu0
    %v7669 = vadd.f32 0.0, %v7668
    %v7670 = vpop.f32.mrb[0].mxu0
    %v7671 = vadd.f32 0.0, %v7670
    %v7672 = vpop.f32.mrb[0].mxu0
    %v7673 = vpop.f32.mrb[0].mxu0
    %7674 = vdwg.mxu0
    %v7675 = vadd.f32 %v7588, %v7628
    %v7676 = vadd.f32 %v7589, %v7630
    %v7677 = vadd.f32 %v7590, %v7669
    %v7678 = vadd.f32 %v7591, %v7671
    %v7679 = vxor.u32 %v7675, 2147483648
    %v7680 = vxor.u32 %v7676, 2147483648
    %v7681 = vxor.u32 %v7677, 2147483648
    %v7682 = vmul.f32 %v7679, 1.442695
    %v7683 = vpow.pop %v7682
    %v7684 = vmul.f32 %v7680, 1.442695
    %v7685 = vpow.pop %v7684
    %v7686 = vmul.f32 %v7681, 1.442695
    %v7687 = vpow.pop %v7686
    %v7688 = vadd.f32 %v7683, 1.0
    %v7689 = vadd.f32 %v7685, 1.0
    %v7690 = vadd.f32 %v7687, 1.0
    %v7691 = vrcp.pop %v7688
    %v7692 = vmul.f32 1.0, %v7691
    %v7693 = vrcp.pop %v7689
    %v7694 = vmul.f32 1.0, %v7693
    %v7695 = vrcp.pop %v7690
    %v7696 = vmul.f32 1.0, %v7695
    %v7697 = vtanh.pop %v7678
    %v7698 = vmul.f32 %v7694, %v7585
    %v7699 = vmul.f32 %v7692, %v7697
    %v7700 = vadd.f32 %v7698, %v7699
    %v7701 = vtanh.pop %v7700
    %v7702 = vmul.f32 %v7696, %v7701
    %v7703 = vld [vmem:[%s4555] sm:$0xff]
    %v7704 = vld [vmem:[%s4555 + $0x8] sm:$0xff]
    %v7705 = vld [vmem:[%s4555 + $0x10] sm:$0xff]
    %v7706 = vld [vmem:[%s4555 + $0x18] sm:$0xff]
    %v7707 = vpack.c.bf16 %v7702, %v7702
    %7708 = vmatprep.subr.bf16.mxu0 %v6150
    %7709 = vmatpush1.bf16.msra.mxu0 %v6149
    %7710 = vmatprep.subr.bf16.mxu0 %v6154
    %7711 = vmatpush1.bf16.msra.mxu0 %v6153
    %7712 = vmatprep.subr.bf16.mxu0 %v6158
    %7713 = vmatpush1.bf16.msra.mxu0 %v6157
    %7714 = vmatprep.subr.bf16.mxu0 %v6162
    %7715 = vmatpush1.bf16.msra.mxu0 %v6161
    %7716 = vmatprep.subr.bf16.mxu0 %v6166
    %7717 = vmatpush1.bf16.msra.mxu0 %v6165
    %7718 = vmatprep.subr.bf16.mxu0 %v6170
    %7719 = vmatpush1.bf16.msra.mxu0 %v6169
    %7720 = vmatprep.subr.bf16.mxu0 %v6174
    %7721 = vmatpush1.bf16.msra.mxu0 %v6173
    %7722 = vmatprep.subr.bf16.mxu0 %v6178
    %7723 = vmatpush1.bf16.msra.mxu0 %v6177
    %7724 = vmatprep.subr.bf16.mxu0 0
    %7725 = vmatpush1.bf16.msra.mxu0 0
    %7726 = vmatprep.subr.bf16.mxu0 0
    %7727 = vmatpush1.bf16.msra.mxu0 0
    %7728 = vmatprep.subr.bf16.mxu0 0
    %7729 = vmatpush1.bf16.msra.mxu0 0
    %7730 = vmatprep.subr.bf16.mxu0 0
    %7731 = vmatpush1.bf16.msra.mxu0 0
    %7732 = vmatprep.subr.bf16.mxu0 0
    %7733 = vmatpush1.bf16.msra.mxu0 0
    %7734 = vmatprep.subr.bf16.mxu0 0
    %7735 = vmatpush1.bf16.msra.mxu0 0
    %7736 = vmatprep.subr.bf16.mxu0 0
    %7737 = vmatpush1.bf16.msra.mxu0 0
    %7738 = vmatprep.subr.bf16.mxu0 0
    %7739 = vmatpush1.bf16.msra.mxu0 0
    %7740 = vmatprep.mubr.bf16.mxu0 0
    %7741 = vmatmul.mubr.bf16.gmra.mrb[0].mxu0 %v7707
    %v7742 = vpop.f32.mrb[0].mxu0
    %v7743 = vadd.f32 0.0, %v7742
    %v7744 = vpop.f32.mrb[0].mxu0
    %v7745 = vadd.f32 0.0, %v7744
    %v7746 = vpop.f32.mrb[0].mxu0
    %v7747 = vpop.f32.mrb[0].mxu0
    %7748 = vdwg.mxu0
    %7749 = vmatprep.subr.bf16.mxu0 %v6152
    %7750 = vmatpush1.bf16.msra.mxu0 %v6151
    %7751 = vmatprep.subr.bf16.mxu0 %v6156
    %7752 = vmatpush1.bf16.msra.mxu0 %v6155
    %7753 = vmatprep.subr.bf16.mxu0 %v6160
    %7754 = vmatpush1.bf16.msra.mxu0 %v6159
    %7755 = vmatprep.subr.bf16.mxu0 %v6164
    %7756 = vmatpush1.bf16.msra.mxu0 %v6163
    %7757 = vmatprep.subr.bf16.mxu0 %v6168
    %7758 = vmatpush1.bf16.msra.mxu0 %v6167
    %7759 = vmatprep.subr.bf16.mxu0 %v6172
    %7760 = vmatpush1.bf16.msra.mxu0 %v6171
    %7761 = vmatprep.subr.bf16.mxu0 %v6176
    %7762 = vmatpush1.bf16.msra.mxu0 %v6175
    %7763 = vmatprep.subr.bf16.mxu0 %v6180
    %7764 = vmatpush1.bf16.msra.mxu0 %v6179
    %7765 = vmatprep.subr.bf16.mxu0 0
    %7766 = vmatpush1.bf16.msra.mxu0 0
    %7767 = vmatprep.subr.bf16.mxu0 0
    %7768 = vmatpush1.bf16.msra.mxu0 0
    %7769 = vmatprep.subr.bf16.mxu0 0
    %7770 = vmatpush1.bf16.msra.mxu0 0
    %7771 = vmatprep.subr.bf16.mxu0 0
    %7772 = vmatpush1.bf16.msra.mxu0 0
    %7773 = vmatprep.subr.bf16.mxu0 0
    %7774 = vmatpush1.bf16.msra.mxu0 0
    %7775 = vmatprep.subr.bf16.mxu0 0
    %7776 = vmatpush1.bf16.msra.mxu0 0
    %7777 = vmatprep.subr.bf16.mxu0 0
    %7778 = vmatpush1.bf16.msra.mxu0 0
    %7779 = vmatprep.subr.bf16.mxu0 0
    %7780 = vmatpush1.bf16.msra.mxu0 0
    %7781 = vmatprep.mubr.bf16.mxu0 0
    %7782 = vmatmul.mubr.bf16.gmra.mrb[0].mxu0 %v7707
    %v7783 = vpop.f32.mrb[0].mxu0
    %v7784 = vadd.f32 0.0, %v7783
    %v7785 = vpop.f32.mrb[0].mxu0
    %v7786 = vadd.f32 0.0, %v7785
    %v7787 = vpop.f32.mrb[0].mxu0
    %v7788 = vpop.f32.mrb[0].mxu0
    %7789 = vdwg.mxu0
    %v7790 = vadd.f32 %v7703, %v7743
    %v7791 = vadd.f32 %v7704, %v7745
    %v7792 = vadd.f32 %v7705, %v7784
    %v7793 = vadd.f32 %v7706, %v7786
    %v7794 = vxor.u32 %v7790, 2147483648
    %v7795 = vxor.u32 %v7791, 2147483648
    %v7796 = vxor.u32 %v7792, 2147483648
    %v7797 = vmul.f32 %v7794, 1.442695
    %v7798 = vpow.pop %v7797
    %v7799 = vmul.f32 %v7795, 1.442695
    %v7800 = vpow.pop %v7799
    %v7801 = vmul.f32 %v7796, 1.442695
    %v7802 = vpow.pop %v7801
    %v7803 = vadd.f32 %v7798, 1.0
    %v7804 = vadd.f32 %v7800, 1.0
    %v7805 = vadd.f32 %v7802, 1.0
    %v7806 = vrcp.pop %v7803
    %v7807 = vmul.f32 1.0, %v7806
    %v7808 = vrcp.pop %v7804
    %v7809 = vmul.f32 1.0, %v7808
    %v7810 = vrcp.pop %v7805
    %v7811 = vmul.f32 1.0, %v7810
    %v7812 = vtanh.pop %v7793
    %v7813 = vmul.f32 %v7809, %v7700
    %v7814 = vmul.f32 %v7807, %v7812
    %v7815 = vadd.f32 %v7813, %v7814
    %v7816 = vtanh.pop %v7815
    %v7817 = vmul.f32 %v7811, %v7816
    %v7818 = vld [vmem:[%s4867] sm:$0xff]
    %v7819 = vld [vmem:[%s4867 + $0x8] sm:$0xff]
    %v7820 = vld [vmem:[%s4867 + $0x10] sm:$0xff]
    %v7821 = vld [vmem:[%s4867 + $0x18] sm:$0xff]
    %v7822 = vpack.c.bf16 %v7817, %v7817
    %7823 = vmatprep.subr.bf16.mxu0 %v6150
    %7824 = vmatpush1.bf16.msra.mxu0 %v6149
    %7825 = vmatprep.subr.bf16.mxu0 %v6154
    %7826 = vmatpush1.bf16.msra.mxu0 %v6153
    %7827 = vmatprep.subr.bf16.mxu0 %v6158
    %7828 = vmatpush1.bf16.msra.mxu0 %v6157
    %7829 = vmatprep.subr.bf16.mxu0 %v6162
    %7830 = vmatpush1.bf16.msra.mxu0 %v6161
    %7831 = vmatprep.subr.bf16.mxu0 %v6166
    %7832 = vmatpush1.bf16.msra.mxu0 %v6165
    %7833 = vmatprep.subr.bf16.mxu0 %v6170
    %7834 = vmatpush1.bf16.msra.mxu0 %v6169
    %7835 = vmatprep.subr.bf16.mxu0 %v6174
    %7836 = vmatpush1.bf16.msra.mxu0 %v6173
    %7837 = vmatprep.subr.bf16.mxu0 %v6178
    %7838 = vmatpush1.bf16.msra.mxu0 %v6177
    %7839 = vmatprep.subr.bf16.mxu0 0
    %7840 = vmatpush1.bf16.msra.mxu0 0
    %7841 = vmatprep.subr.bf16.mxu0 0
    %7842 = vmatpush1.bf16.msra.mxu0 0
    %7843 = vmatprep.subr.bf16.mxu0 0
    %7844 = vmatpush1.bf16.msra.mxu0 0
    %7845 = vmatprep.subr.bf16.mxu0 0
    %7846 = vmatpush1.bf16.msra.mxu0 0
    %7847 = vmatprep.subr.bf16.mxu0 0
    %7848 = vmatpush1.bf16.msra.mxu0 0
    %7849 = vmatprep.subr.bf16.mxu0 0
    %7850 = vmatpush1.bf16.msra.mxu0 0
    %7851 = vmatprep.subr.bf16.mxu0 0
    %7852 = vmatpush1.bf16.msra.mxu0 0
    %7853 = vmatprep.subr.bf16.mxu0 0
    %7854 = vmatpush1.bf16.msra.mxu0 0
    %7855 = vmatprep.mubr.bf16.mxu0 0
    %7856 = vmatmul.mubr.bf16.gmra.mrb[0].mxu0 %v7822
    %v7857 = vpop.f32.mrb[0].mxu0
    %v7858 = vadd.f32 0.0, %v7857
    %v7859 = vpop.f32.mrb[0].mxu0
    %v7860 = vadd.f32 0.0, %v7859
    %v7861 = vpop.f32.mrb[0].mxu0
    %v7862 = vpop.f32.mrb[0].mxu0
    %7863 = vdwg.mxu0
    %7864 = vmatprep.subr.bf16.mxu0 %v6152
    %7865 = vmatpush1.bf16.msra.mxu0 %v6151
    %7866 = vmatprep.subr.bf16.mxu0 %v6156
    %7867 = vmatpush1.bf16.msra.mxu0 %v6155
    %7868 = vmatprep.subr.bf16.mxu0 %v6160
    %7869 = vmatpush1.bf16.msra.mxu0 %v6159
    %7870 = vmatprep.subr.bf16.mxu0 %v6164
    %7871 = vmatpush1.bf16.msra.mxu0 %v6163
    %7872 = vmatprep.subr.bf16.mxu0 %v6168
    %7873 = vmatpush1.bf16.msra.mxu0 %v6167
    %7874 = vmatprep.subr.bf16.mxu0 %v6172
    %7875 = vmatpush1.bf16.msra.mxu0 %v6171
    %7876 = vmatprep.subr.bf16.mxu0 %v6176
    %7877 = vmatpush1.bf16.msra.mxu0 %v6175
    %7878 = vmatprep.subr.bf16.mxu0 %v6180
    %7879 = vmatpush1.bf16.msra.mxu0 %v6179
    %7880 = vmatprep.subr.bf16.mxu0 0
    %7881 = vmatpush1.bf16.msra.mxu0 0
    %7882 = vmatprep.subr.bf16.mxu0 0
    %7883 = vmatpush1.bf16.msra.mxu0 0
    %7884 = vmatprep.subr.bf16.mxu0 0
    %7885 = vmatpush1.bf16.msra.mxu0 0
    %7886 = vmatprep.subr.bf16.mxu0 0
    %7887 = vmatpush1.bf16.msra.mxu0 0
    %7888 = vmatprep.subr.bf16.mxu0 0
    %7889 = vmatpush1.bf16.msra.mxu0 0
    %7890 = vmatprep.subr.bf16.mxu0 0
    %7891 = vmatpush1.bf16.msra.mxu0 0
    %7892 = vmatprep.subr.bf16.mxu0 0
    %7893 = vmatpush1.bf16.msra.mxu0 0
    %7894 = vmatprep.subr.bf16.mxu0 0
    %7895 = vmatpush1.bf16.msra.mxu0 0
    %7896 = vmatprep.mubr.bf16.mxu0 0
    %7897 = vmatmul.mubr.bf16.gmra.mrb[0].mxu0 %v7822
    %v7898 = vpop.f32.mrb[0].mxu0
    %v7899 = vadd.f32 0.0, %v7898
    %v7900 = vpop.f32.mrb[0].mxu0
    %v7901 = vadd.f32 0.0, %v7900
    %v7902 = vpop.f32.mrb[0].mxu0
    %v7903 = vpop.f32.mrb[0].mxu0
    %7904 = vdwg.mxu0
    %v7905 = vadd.f32 %v7818, %v7858
    %v7906 = vadd.f32 %v7819, %v7860
    %v7907 = vadd.f32 %v7820, %v7899
    %v7908 = vadd.f32 %v7821, %v7901
    %v7909 = vxor.u32 %v7905, 2147483648
    %v7910 = vxor.u32 %v7906, 2147483648
    %v7911 = vxor.u32 %v7907, 2147483648
    %v7912 = vmul.f32 %v7909, 1.442695
    %v7913 = vpow.pop %v7912
    %v7914 = vmul.f32 %v7910, 1.442695
    %v7915 = vpow.pop %v7914
    %v7916 = vmul.f32 %v7911, 1.442695
    %v7917 = vpow.pop %v7916
    %v7918 = vadd.f32 %v7913, 1.0
    %v7919 = vadd.f32 %v7915, 1.0
    %v7920 = vadd.f32 %v7917, 1.0
    %v7921 = vrcp.pop %v7918
    %v7922 = vmul.f32 1.0, %v7921
    %v7923 = vrcp.pop %v7919
    %v7924 = vmul.f32 1.0, %v7923
    %v7925 = vrcp.pop %v7920
    %v7926 = vmul.f32 1.0, %v7925
    %v7927 = vtanh.pop %v7908
    %v7928 = vmul.f32 %v7924, %v7815
    %v7929 = vmul.f32 %v7922, %v7927
    %v7930 = vadd.f32 %v7928, %v7929
    %v7931 = vtanh.pop %v7930
    %v7932 = vmul.f32 %v7926, %v7931
    %v7933 = vld [vmem:[%s5179] sm:$0xff]
    %v7934 = vld [vmem:[%s5179 + $0x8] sm:$0xff]
    %v7935 = vld [vmem:[%s5179 + $0x10] sm:$0xff]
    %v7936 = vld [vmem:[%s5179 + $0x18] sm:$0xff]
    %v7937 = vpack.c.bf16 %v7932, %v7932
    %7938 = vmatprep.subr.bf16.mxu0 %v6150
    %7939 = vmatpush1.bf16.msra.mxu0 %v6149
    %7940 = vmatprep.subr.bf16.mxu0 %v6154
    %7941 = vmatpush1.bf16.msra.mxu0 %v6153
    %7942 = vmatprep.subr.bf16.mxu0 %v6158
    %7943 = vmatpush1.bf16.msra.mxu0 %v6157
    %7944 = vmatprep.subr.bf16.mxu0 %v6162
    %7945 = vmatpush1.bf16.msra.mxu0 %v6161
    %7946 = vmatprep.subr.bf16.mxu0 %v6166
    %7947 = vmatpush1.bf16.msra.mxu0 %v6165
    %7948 = vmatprep.subr.bf16.mxu0 %v6170
    %7949 = vmatpush1.bf16.msra.mxu0 %v6169
    %7950 = vmatprep.subr.bf16.mxu0 %v6174
    %7951 = vmatpush1.bf16.msra.mxu0 %v6173
    %7952 = vmatprep.subr.bf16.mxu0 %v6178
    %7953 = vmatpush1.bf16.msra.mxu0 %v6177
    %7954 = vmatprep.subr.bf16.mxu0 0
    %7955 = vmatpush1.bf16.msra.mxu0 0
    %7956 = vmatprep.subr.bf16.mxu0 0
    %7957 = vmatpush1.bf16.msra.mxu0 0
    %7958 = vmatprep.subr.bf16.mxu0 0
    %7959 = vmatpush1.bf16.msra.mxu0 0
    %7960 = vmatprep.subr.bf16.mxu0 0
    %7961 = vmatpush1.bf16.msra.mxu0 0
    %7962 = vmatprep.subr.bf16.mxu0 0
    %7963 = vmatpush1.bf16.msra.mxu0 0
    %7964 = vmatprep.subr.bf16.mxu0 0
    %7965 = vmatpush1.bf16.msra.mxu0 0
    %7966 = vmatprep.subr.bf16.mxu0 0
    %7967 = vmatpush1.bf16.msra.mxu0 0
    %7968 = vmatprep.subr.bf16.mxu0 0
    %7969 = vmatpush1.bf16.msra.mxu0 0
    %7970 = vmatprep.mubr.bf16.mxu0 0
    %7971 = vmatmul.mubr.bf16.gmra.mrb[0].mxu0 %v7937
    %v7972 = vpop.f32.mrb[0].mxu0
    %v7973 = vadd.f32 0.0, %v7972
    %v7974 = vpop.f32.mrb[0].mxu0
    %v7975 = vadd.f32 0.0, %v7974
    %v7976 = vpop.f32.mrb[0].mxu0
    %v7977 = vpop.f32.mrb[0].mxu0
    %7978 = vdwg.mxu0
    %7979 = vmatprep.subr.bf16.mxu0 %v6152
    %7980 = vmatpush1.bf16.msra.mxu0 %v6151
    %7981 = vmatprep.subr.bf16.mxu0 %v6156
    %7982 = vmatpush1.bf16.msra.mxu0 %v6155
    %7983 = vmatprep.subr.bf16.mxu0 %v6160
    %7984 = vmatpush1.bf16.msra.mxu0 %v6159
    %7985 = vmatprep.subr.bf16.mxu0 %v6164
    %7986 = vmatpush1.bf16.msra.mxu0 %v6163
    %7987 = vmatprep.subr.bf16.mxu0 %v6168
    %7988 = vmatpush1.bf16.msra.mxu0 %v6167
    %7989 = vmatprep.subr.bf16.mxu0 %v6172
    %7990 = vmatpush1.bf16.msra.mxu0 %v6171
    %7991 = vmatprep.subr.bf16.mxu0 %v6176
    %7992 = vmatpush1.bf16.msra.mxu0 %v6175
    %7993 = vmatprep.subr.bf16.mxu0 %v6180
    %7994 = vmatpush1.bf16.msra.mxu0 %v6179
    %7995 = vmatprep.subr.bf16.mxu0 0
    %7996 = vmatpush1.bf16.msra.mxu0 0
    %7997 = vmatprep.subr.bf16.mxu0 0
    %7998 = vmatpush1.bf16.msra.mxu0 0
    %7999 = vmatprep.subr.bf16.mxu0 0
    %8000 = vmatpush1.bf16.msra.mxu0 0
    %8001 = vmatprep.subr.bf16.mxu0 0
    %8002 = vmatpush1.bf16.msra.mxu0 0
    %8003 = vmatprep.subr.bf16.mxu0 0
    %8004 = vmatpush1.bf16.msra.mxu0 0
    %8005 = vmatprep.subr.bf16.mxu0 0
    %8006 = vmatpush1.bf16.msra.mxu0 0
    %8007 = vmatprep.subr.bf16.mxu0 0
    %8008 = vmatpush1.bf16.msra.mxu0 0
    %8009 = vmatprep.subr.bf16.mxu0 0
    %8010 = vmatpush1.bf16.msra.mxu0 0
    %8011 = vmatprep.mubr.bf16.mxu0 0
    %8012 = vmatmul.mubr.bf16.gmra.mrb[0].mxu0 %v7937
    %v8013 = vpop.f32.mrb[0].mxu0
    %v8014 = vadd.f32 0.0, %v8013
    %v8015 = vpop.f32.mrb[0].mxu0
    %v8016 = vadd.f32 0.0, %v8015
    %v8017 = vpop.f32.mrb[0].mxu0
    %v8018 = vpop.f32.mrb[0].mxu0
    %8019 = vdwg.mxu0
    %v8020 = vadd.f32 %v7933, %v7973
    %v8021 = vadd.f32 %v7934, %v7975
    %v8022 = vadd.f32 %v7935, %v8014
    %v8023 = vadd.f32 %v7936, %v8016
    %v8024 = vxor.u32 %v8020, 2147483648
    %v8025 = vxor.u32 %v8021, 2147483648
    %v8026 = vxor.u32 %v8022, 2147483648
    %v8027 = vmul.f32 %v8024, 1.442695
    %v8028 = vpow.pop %v8027
    %v8029 = vmul.f32 %v8025, 1.442695
    %v8030 = vpow.pop %v8029
    %v8031 = vmul.f32 %v8026, 1.442695
    %v8032 = vpow.pop %v8031
    %v8033 = vadd.f32 %v8028, 1.0
    %v8034 = vadd.f32 %v8030, 1.0
    %v8035 = vadd.f32 %v8032, 1.0
    %v8036 = vrcp.pop %v8033
    %v8037 = vmul.f32 1.0, %v8036
    %v8038 = vrcp.pop %v8034
    %v8039 = vmul.f32 1.0, %v8038
    %v8040 = vrcp.pop %v8035
    %v8041 = vmul.f32 1.0, %v8040
    %v8042 = vtanh.pop %v8023
    %v8043 = vmul.f32 %v8039, %v7930
    %v8044 = vmul.f32 %v8037, %v8042
    %v8045 = vadd.f32 %v8043, %v8044
    %v8046 = vtanh.pop %v8045
    %v8047 = vmul.f32 %v8041, %v8046
    %v8048 = vpack.c.bf16 %v8047, %v8047
    %v8049 = vld [vmem:[%s7] sm:$0xf]
    %v8050 = vld [vmem:[%s7 + $0x4] sm:$0xf]
    %v8051 = vld [vmem:[%s7 + $0x8] sm:$0xf]
    %v8052 = vld [vmem:[%s7 + $0xc] sm:$0xf]
    %v8053 = vld [vmem:[%s7 + $0x10] sm:$0xf]
    %v8054 = vld [vmem:[%s7 + $0x14] sm:$0xf]
    %v8055 = vld [vmem:[%s7 + $0x18] sm:$0xf]
    %v8056 = vld [vmem:[%s7 + $0x1c] sm:$0xf]
    %v8057 = vld [vmem:[%s7 + $0x20] sm:$0xf]
    %v8058 = vld [vmem:[%s7 + $0x24] sm:$0xf]
    %v8059 = vld [vmem:[%s7 + $0x28] sm:$0xf]
    %v8060 = vld [vmem:[%s7 + $0x2c] sm:$0xf]
    %v8061 = vld [vmem:[%s7 + $0x30] sm:$0xf]
    %v8062 = vld [vmem:[%s7 + $0x34] sm:$0xf]
    %v8063 = vld [vmem:[%s7 + $0x38] sm:$0xf]
    %v8064 = vld [vmem:[%s7 + $0x3c] sm:$0xf]
    %v8065 = vld [vmem:[%s8] sm:$0x1]
    %v8067 = vlaneseq
    %v8068 = vshrl.u32 %v8067, 7
    %v8069 = vsub.s32 0, %v8068
    %v8070 = vrot.slane %v8065, %v8069
    %v8088 = vunpack.c.l.b16 %v8049
    %v8089 = vunpack.c.l.b16 %v8050
    %v8090 = vunpack.c.l.b16 %v8051
    %v8091 = vunpack.c.l.b16 %v8052
    %v8092 = vunpack.c.l.b16 %v8053
    %v8093 = vunpack.c.l.b16 %v8054
    %v8094 = vunpack.c.l.b16 %v8055
    %v8095 = vunpack.c.l.b16 %v8056
    %v8096 = vunpack.c.l.b16 %v8057
    %v8097 = vunpack.c.l.b16 %v8058
    %v8098 = vunpack.c.l.b16 %v8059
    %v8099 = vunpack.c.l.b16 %v8060
    %v8100 = vunpack.c.l.b16 %v8061
    %v8101 = vunpack.c.l.b16 %v8062
    %v8102 = vunpack.c.l.b16 %v8063
    %v8103 = vunpack.c.l.b16 %v8064
    %v8104 = vpack.c.b16 %v8089, %v8088
    %v8105 = vpack.c.b16 %v8091, %v8090
    %v8106 = vpack.c.b16 %v8093, %v8092
    %v8107 = vpack.c.b16 %v8095, %v8094
    %v8108 = vpack.c.b16 %v8097, %v8096
    %v8109 = vpack.c.b16 %v8099, %v8098
    %v8110 = vpack.c.b16 %v8101, %v8100
    %v8111 = vpack.c.b16 %v8103, %v8102
    %8120 = vmatprep.subr.bf16.mxu0 0
    %8121 = vmatpush1.bf16.msra.mxu0 %v8104
    %8122 = vmatprep.subr.bf16.mxu0 0
    %8123 = vmatpush1.bf16.msra.mxu0 %v8105
    %8124 = vmatprep.subr.bf16.mxu0 0
    %8125 = vmatpush1.bf16.msra.mxu0 %v8106
    %8126 = vmatprep.subr.bf16.mxu0 0
    %8127 = vmatpush1.bf16.msra.mxu0 %v8107
    %8128 = vmatprep.subr.bf16.mxu0 0
    %8129 = vmatpush1.bf16.msra.mxu0 %v8108
    %8130 = vmatprep.subr.bf16.mxu0 0
    %8131 = vmatpush1.bf16.msra.mxu0 %v8109
    %8132 = vmatprep.subr.bf16.mxu0 0
    %8133 = vmatpush1.bf16.msra.mxu0 %v8110
    %8134 = vmatprep.subr.bf16.mxu0 0
    %8135 = vmatpush1.bf16.msra.mxu0 %v8111
    %8136 = vmatprep.subr.bf16.mxu0 0
    %8137 = vmatpush1.bf16.msra.mxu0 0
    %8138 = vmatprep.subr.bf16.mxu0 0
    %8139 = vmatpush1.bf16.msra.mxu0 0
    %8140 = vmatprep.subr.bf16.mxu0 0
    %8141 = vmatpush1.bf16.msra.mxu0 0
    %8142 = vmatprep.subr.bf16.mxu0 0
    %8143 = vmatpush1.bf16.msra.mxu0 0
    %8144 = vmatprep.subr.bf16.mxu0 0
    %8145 = vmatpush1.bf16.msra.mxu0 0
    %8146 = vmatprep.subr.bf16.mxu0 0
    %8147 = vmatpush1.bf16.msra.mxu0 0
    %8148 = vmatprep.subr.bf16.mxu0 0
    %8149 = vmatpush1.bf16.msra.mxu0 0
    %8150 = vmatprep.subr.bf16.mxu0 0
    %8151 = vmatpush1.bf16.msra.mxu0 0
    %8152 = vmatprep.mubr.bf16.mxu0 0
    %8153 = vmatmul.mubr.bf16.gmra.mrb[0].mxu0 %v8048
    %v8154 = vpop.f32.mrb[0].mxu0
    %v8155 = vadd.f32 %v8070, %v8154
    %v8156 = vpop.f32.mrb[0].mxu0
    %v8157 = vpop.f32.mrb[0].mxu0
    %v8158 = vpop.f32.mrb[0].mxu0
    %8159 = vdwg.mxu0
    %8160 = vst [vmem:[%s9] sm:$0xff] %v8155
    // Predicated region
    $region50: #{har_lstm_forward.1} parent=1 // pred_check
      _
    $region51: #{har_lstm_forward.1} parent=1 // pred_check_branch
      %8162 = sbr.rel (0) target = $region53
    $region52: #{har_lstm_forward.1} parent=1 // pred_region
      _
    $region53: #{har_lstm_forward.1} parent=1 // pred_fallthru
      _
    // Predicated region
    $region54: #{har_lstm_forward.1} parent=1 // pred_check
      _
    $region55: #{har_lstm_forward.1} parent=1 // pred_check_branch
      %8164 = sbr.rel (0) target = $region57
    $region56: #{har_lstm_forward.1} parent=1 // pred_region
      _
    $region57: #{har_lstm_forward.1} parent=1 // pred_fallthru
      _
    %8165 = vsyncpa [#allocation5], 1
    %8166 = vsyncpa [#allocation7], 1

</llo_original>
